<compile_context>
chip_gen: v7x
topology: tpu7x:2x2x1
jax: 0.10.0
libtpu: 0.0.40
codegen_flags: <defaults>
</compile_context>

<pallas_src>
import jax
import jax.numpy as jnp
from jax.experimental import pallas as pl
from jax.experimental.pallas import tpu as pltpu

NUM_HEADS = 8
LN_EPS = 1e-5
TARGET_SHAPE = (5, 8, 5)                                        # InterpolateAndProject((5, 8, 5), ...)
L_SKIP = TARGET_SHAPE[0] * TARGET_SHAPE[1] * TARGET_SHAPE[2]    # 200
MXU_DT = jnp.bfloat16                                           # MXU operand dtype (f32 accumulation)
NEG_BIG = -1e30                                                 # additive mask value (finite, no NaN risk)


# ---------------------------------------------------------------------------
# small matmul helpers (f32 accumulation on the MXU)
# ---------------------------------------------------------------------------
def _mm_nt(a, b):   # a @ b.T
    return jax.lax.dot_general(a, b, (((1,), (1,)), ((), ())),
                               preferred_element_type=jnp.float32)


def _mm_nn(a, b):   # a @ b
    return jax.lax.dot_general(a, b, (((1,), (0,)), ((), ())),
                               preferred_element_type=jnp.float32)


def _layernorm(x, g, b):
    mu = jnp.mean(x, axis=-1, keepdims=True)
    var = jnp.mean((x - mu) ** 2, axis=-1, keepdims=True)
    return (x - mu) * jax.lax.rsqrt(var + LN_EPS) * g + b


# ---------------------------------------------------------------------------
# Pallas kernel factory: one batch tile (bt elements) per grid step, fused
#   self-attn (batch-merged core), LN1, cross-attn, LN2.
# ---------------------------------------------------------------------------
def _build_kernel(bt, S, L, E, H):
    hd = E // H
    scale = 1.0 / (float(hd) ** 0.5)

    def kernel(mem_ref, skp_ref, w_ref, vec_ref, hms_ref, hmx_ref, bias_ref, out_ref):
        mem = mem_ref[...]          # (bt*S, E)       f32  memory rows (batch folded into rows)
        skp = skp_ref[...]          # (bt*L, E)       f32  interp + linear_proj + pos (from wrapper)
        W = w_ref[...]              # (8E, E)         bf16 packed attention weights
        vp = vec_ref[...]           # (16, E)         f32  packed biases / LayerNorm params
        hm_self = hms_ref[...]      # (H*bt*S, E)     f32  head-lane mask, rows ordered (h, b, s)
        hm_x = hmx_ref[...]         # (H*S, E)        f32  head-lane mask, rows ordered (h, s)
        bias = bias_ref[...]        # (H*bt*S, bt*S)  f32  block-diag batch bias (0 / -1e30)

        # --- unpack weights (bf16, sublane slices at multiples of E=32, aligned) ---
        wq1, wk1, wv1, wo1 = W[0:E], W[E:2 * E], W[2 * E:3 * E], W[3 * E:4 * E]
        wq2, wk2, wv2, wo2 = W[4 * E:5 * E], W[5 * E:6 * E], W[6 * E:7 * E], W[7 * E:8 * E]
        bq1, bk1, bv1, bo1 = vp[0:1], vp[1:2], vp[2:3], vp[3:4]
        g1, be1 = vp[4:5], vp[5:6]
        bq2, bk2, bv2, bo2 = vp[6:7], vp[7:8], vp[8:9], vp[9:10]
        g2, be2 = vp[10:11], vp[11:12]

        def softmax_rows(sc):
            sc = sc - jnp.max(sc, axis=-1, keepdims=True)
            p = jnp.exp(sc)
            return p * pl.reciprocal(jnp.sum(p, axis=-1, keepdims=True), approx=True)

        def fold_heads(o_stk, rows):
            # Heads occupy disjoint lanes after `* head_mask`, so summing the H row blocks is an
            # exact head re-merge (replaces the old f32 fold matmul with 7 cheap VPU adds).
            o = o_stk[0:rows]
            for h in range(1, H):
                o = o + o_stk[h * rows:(h + 1) * rows]
            return o

        mem_b = mem.astype(MXU_DT)

        # ---- self-attention: all bt batch elements x 8 heads in ONE score + ONE PV matmul ----
        q1 = _mm_nt(mem_b, wq1) + bq1                                             # (bt*S, E) f32
        k1 = _mm_nt(mem_b, wk1) + bk1
        v1 = _mm_nt(mem_b, wv1) + bv1
        # rows ordered (h, b, s): row r -> head r//(bt*S), batch (r//S)%bt
        q_stk = jnp.concatenate([q1] * H, axis=0) * hm_self                       # (H*bt*S, E)
        sc = _mm_nt(q_stk.astype(MXU_DT), k1.astype(MXU_DT)) * scale + bias       # (H*bt*S, bt*S)
        p = softmax_rows(sc)
        o_stk = _mm_nn(p.astype(MXU_DT), v1.astype(MXU_DT)) * hm_self             # (H*bt*S, E)
        o1 = fold_heads(o_stk, bt * S)                                            # (bt*S, E)
        a1 = _mm_nt(o1.astype(MXU_DT), wo1) + bo1
        m1 = _layernorm(mem + a1, g1, be1)

        # ---- cross-attention: Q = memory, K = V = projected skips (Lkv=200, per-batch core) ----
        skp_b = skp.astype(MXU_DT)
        q2 = _mm_nt(m1.astype(MXU_DT), wq2) + bq2                                 # (bt*S, E)
        k2 = _mm_nt(skp_b, wk2) + bk2                                             # (bt*L, E)
        v2 = _mm_nt(skp_b, wv2) + bv2
        outs = []
        for b in range(bt):
            qb = q2[b * S:(b + 1) * S]
            kb = k2[b * L:(b + 1) * L].astype(MXU_DT)
            vb = v2[b * L:(b + 1) * L].astype(MXU_DT)
            qs = jnp.concatenate([qb] * H, axis=0) * hm_x                         # (H*S, E)
            scb = _mm_nt(qs.astype(MXU_DT), kb) * scale                           # (H*S, L)
            pb = softmax_rows(scb)
            ob = _mm_nn(pb.astype(MXU_DT), vb) * hm_x                             # (H*S, E)
            outs.append(fold_heads(ob, S))                                        # (S, E)
        o2 = outs[0] if bt == 1 else jnp.concatenate(outs, axis=0)                # (bt*S, E)
        a2 = _mm_nt(o2.astype(MXU_DT), wo2) + bo2
        m2 = _layernorm(m1 + a2, g2, be2)

        out_ref[...] = m2

    return kernel


# ---------------------------------------------------------------------------
# glue: trilinear (align_corners=True) interpolation expressed as a matrix
# ---------------------------------------------------------------------------
def _interp_matrix_1d(in_size, out_size):
    if out_size == 1:
        src = jnp.zeros((1,), jnp.float32)
    else:
        src = jnp.arange(out_size, dtype=jnp.float32) * ((in_size - 1) / (out_size - 1))
    lo = jnp.clip(jnp.floor(src).astype(jnp.int32), 0, in_size - 1)
    hi = jnp.clip(lo + 1, 0, in_size - 1)
    w_hi = src - lo.astype(jnp.float32)
    w_lo = 1.0 - w_hi
    rows = jnp.arange(out_size)
    m = jnp.zeros((out_size, in_size), jnp.float32)
    m = m.at[rows, lo].add(w_lo)
    m = m.at[rows, hi].add(w_hi)
    return m


def make_trilinear_matrix(in_shape, out_shape):
    m0 = _interp_matrix_1d(in_shape[0], out_shape[0])
    m1 = _interp_matrix_1d(in_shape[1], out_shape[1])
    m2 = _interp_matrix_1d(in_shape[2], out_shape[2])
    return jnp.kron(m0, jnp.kron(m1, m2))     # (prod(out), prod(in)), row-major flatten order


# ---------------------------------------------------------------------------
# generation-aware default batch tile: grid=(1,) on single-TC chips (v5e/v6e),
# split over the 2 TensorCores only on v7x.
# ---------------------------------------------------------------------------
def _default_batch_tile(B):
    if B < 2 or B % 2 != 0:
        return B
    try:
        kind = (jax.devices()[0].device_kind or "").lower()
    except Exception:
        return B
    if "v7" in kind:       # dual-TensorCore chip: one grid step per core
        return B // 2
    return B               # 1 TC/chip: extra grid steps are pure per-step overhead


# ---------------------------------------------------------------------------
# wrapper
# ---------------------------------------------------------------------------
def attention_block_forward(memory, skips, params, *, batch_tile=None):
    B, S, E = memory.shape
    Cs = skips.shape[1]
    H = NUM_HEADS
    L = L_SKIP
    hd = E // H

    # ---- hoisted to plain XLA: trilinear interp + skip linear_proj + positional embedding ----
    interp_m = make_trilinear_matrix(skips.shape[2:], TARGET_SHAPE)       # (200, prod(spatial))
    skips_flat = skips.reshape(B, Cs, -1).astype(jnp.float32)
    z = jnp.einsum('lh,bch->blc', interp_m, skips_flat)                   # (B, 200, Cs)
    skp = (jnp.einsum('blc,ec->ble', z, params["w_proj"])
           + params["b_proj"][0] + params["pos_skip"])                    # (B, 200, E)

    if batch_tile is None:
        batch_tile = _default_batch_tile(B)
    bt = batch_tile
    assert B % bt == 0, "batch must be divisible by the batch tile"
    grid = (B // bt,)

    mem2d = memory.reshape(B * S, E).astype(jnp.float32)                  # fold B*S rows
    skp2d = skp.reshape(B * L, E).astype(jnp.float32)

    # ---- packed bf16 attention weights (halves weight DMA, bf16 MXU operands) ----
    w_pack = jnp.concatenate([params["w_in1"], params["w_out1"],
                              params["w_in2"], params["w_out2"]],
                             axis=0).astype(jnp.bfloat16)                 # (8E, E) bf16

    vec_rows = jnp.concatenate([
        params["b_in1"].reshape(3, E),                 # bq1, bk1, bv1
        params["b_out1"], params["ln1_g"], params["ln1_b"],
        params["b_in2"].reshape(3, E),                 # bq2, bk2, bv2
        params["b_out2"], params["ln2_g"], params["ln2_b"],
    ], axis=0)                                                              # (12, E)
    vec_pack = jnp.concatenate(
        [vec_rows, jnp.zeros((16 - vec_rows.shape[0], E), jnp.float32)], axis=0)  # pad to 16 rows

    # ---- precomputed masks (no per-step iota // % prologue work inside the kernel) ----
    lane_head = jnp.arange(E, dtype=jnp.int32) // hd
    row_head_self = jnp.arange(H * bt * S, dtype=jnp.int32) // (bt * S)
    hm_self = (lane_head[None, :] == row_head_self[:, None]).astype(jnp.float32)    # (H*bt*S, E)
    row_head_x = jnp.arange(H * S, dtype=jnp.int32) // S
    hm_x = (lane_head[None, :] == row_head_x[:, None]).astype(jnp.float32)          # (H*S, E)
    row_batch = (jnp.arange(H * bt * S, dtype=jnp.int32) // S) % bt
    col_batch = jnp.arange(bt * S, dtype=jnp.int32) // S
    bias_batch = jnp.where(row_batch[:, None] == col_batch[None, :],
                           0.0, NEG_BIG).astype(jnp.float32)                        # (H*bt*S, bt*S)

    kernel = _build_kernel(bt, S, L, E, H)

    out2d = pl.pallas_call(
        kernel,
        out_shape=jax.ShapeDtypeStruct((B * S, E), jnp.float32),
        grid=grid,
        in_specs=[
            pl.BlockSpec((bt * S, E), lambda b: (b, 0)),           # memory rows (per batch tile)
            pl.BlockSpec((bt * L, E), lambda b: (b, 0)),           # projected+embedded skips rows
            pl.BlockSpec((8 * E, E), lambda b: (0, 0)),            # packed bf16 attn weights (resident)
            pl.BlockSpec((16, E), lambda b: (0, 0)),               # packed biases / LN params (resident)
            pl.BlockSpec((H * bt * S, E), lambda b: (0, 0)),       # self-attn head mask (resident)
            pl.BlockSpec((H * S, E), lambda b: (0, 0)),            # cross-attn head mask (resident)
            pl.BlockSpec((H * bt * S, bt * S), lambda b: (0, 0)),  # self-attn batch bias (resident)
        ],
        out_specs=pl.BlockSpec((bt * S, E), lambda b: (b, 0)),
        compiler_params=pltpu.CompilerParams(dimension_semantics=("parallel",)),
    )(mem2d, skp2d, w_pack, vec_pack, hm_self, hm_x, bias_batch)

    return out2d.reshape(B, S, E)


# ---------------------------------------------------------------------------
# deterministic parameter init (shapes follow the module's __init__)
# ---------------------------------------------------------------------------
def init_params(key, E, Cs):
    ks = jax.random.split(key, 11)

    def w(k, shape, scale=0.05):
        return jax.random.normal(k, shape, jnp.float32) * scale

    return dict(
        pos_skip=w(ks[0], (L_SKIP, E), 0.02),   # InterpolateAndProject.pos_embedding (zeros in torch; random here)
        w_proj=w(ks[1], (E, Cs)),               # nn.Linear(dim_skips, dim_memory)
        b_proj=w(ks[2], (1, E), 0.02),
        w_in1=w(ks[3], (3 * E, E)),             # self_attn.in_proj_weight
        b_in1=w(ks[4], (1, 3 * E), 0.02),
        w_out1=w(ks[5], (E, E)),                # self_attn.out_proj
        b_out1=w(ks[6], (1, E), 0.02),
        ln1_g=jnp.ones((1, E), jnp.float32),
        ln1_b=jnp.zeros((1, E), jnp.float32),
        w_in2=w(ks[7], (3 * E, E)),             # cross_attn.in_proj_weight
        b_in2=w(ks[8], (1, 3 * E), 0.02),
        w_out2=w(ks[9], (E, E)),                # cross_attn.out_proj
        b_out2=w(ks[10], (1, E), 0.02),
        ln2_g=jnp.ones((1, E), jnp.float32),
        ln2_b=jnp.zeros((1, E), jnp.float32),
    )


# ---------------------------------------------------------------------------
# pure-JAX reference (independent f32 formulation) for validation
# ---------------------------------------------------------------------------
def _mha_ref(q_in, kv_in, w_in, b_in, w_out, b_out):
    E = q_in.shape[-1]
    hd = E // NUM_HEADS
    wq, wk, wv = w_in[:E], w_in[E:2 * E], w_in[2 * E:]
    bq, bk, bv = b_in[0, :E], b_in[0, E:2 * E], b_in[0, 2 * E:]
    q = jnp.einsum('ble,fe->blf', q_in, wq) + bq
    k = jnp.einsum('ble,fe->blf', kv_in, wk) + bk
    v = jnp.einsum('ble,fe->blf', kv_in, wv) + bv
    B, Lq, _ = q.shape
    Lkv = k.shape[1]
    qh = q.reshape(B, Lq, NUM_HEADS, hd)
    kh = k.reshape(B, Lkv, NUM_HEADS, hd)
    vh = v.reshape(B, Lkv, NUM_HEADS, hd)
    sc = jnp.einsum('bqhd,bkhd->bhqk', qh, kh) / (float(hd) ** 0.5)
    p = jax.nn.softmax(sc, axis=-1)
    o = jnp.einsum('bhqk,bkhd->bqhd', p, vh).reshape(B, Lq, E)
    return jnp.einsum('bqe,fe->bqf', o, w_out) + b_out[0]


def _ln_ref(x, g, b):
    mu = jnp.mean(x, axis=-1, keepdims=True)
    var = jnp.mean((x - mu) ** 2, axis=-1, keepdims=True)
    return (x - mu) / jnp.sqrt(var + LN_EPS) * g[0] + b[0]


def reference_forward(memory, skips, params):
    B, S, E = memory.shape
    Cs = skips.shape[1]
    interp_m = make_trilinear_matrix(skips.shape[2:], TARGET_SHAPE)
    skips_flat = skips.reshape(B, Cs, -1)
    z = jnp.einsum('lh,bch->blc', interp_m, skips_flat)                     # (B, 200, Cs)
    s = jnp.einsum('blc,ec->ble', z, params["w_proj"]) + params["b_proj"][0] + params["pos_skip"]
    a1 = _mha_ref(memory, memory, params["w_in1"], params["b_in1"],
                  params["w_out1"], params["b_out1"])
    m1 = _ln_ref(memory + a1, params["ln1_g"], params["ln1_b"])
    a2 = _mha_ref(m1, s, params["w_in2"], params["b_in2"],
                  params["w_out2"], params["b_out2"])
    m2 = _ln_ref(m1 + a2, params["ln2_g"], params["ln2_b"])
    return m2


# ---------------------------------------------------------------------------
if __name__ == "__main__":
    key = jax.random.PRNGKey(0)
    B, S, E, Cs = 4, 16, 32, 16          # dim_memory=32 (8 heads x 4), dim_skips=16
    in_spatial = (6, 10, 6)              # skips NCDHW spatial size before trilinear resize to (5, 8, 5)

    k_mem, k_skp, k_par = jax.random.split(key, 3)
    memory = jax.random.normal(k_mem, (B, S, E), jnp.float32)
    skips = jax.random.normal(k_skp, (B, Cs) + in_spatial, jnp.float32)
    params = init_params(k_par, E, Cs)

    out = attention_block_forward(memory, skips, params)
    out = jax.block_until_ready(out)

    ref = reference_forward(memory, skips, params)
    assert out.shape == (B, S, E)
    err = float(jnp.max(jnp.abs(out - ref)))
    # bf16 MXU operands in ALL matmuls (projections + attention, per perf review) plus the
    # approximate softmax reciprocal raise the error floor vs the all-f32 reference to a few 1e-3;
    # 2e-2 still catches any structural bug (those show up as O(0.1)+ errors).
    if err > 2e-2:
        raise AssertionError(f"kernel/reference mismatch, max abs err = {err}")
    print("KERNEL_OK")
</pallas_src>

<mosaic_0001>
module attributes {stable_mosaic.version = 11 : i64} {
  func.func @kernel(%arg0: i32, %arg1: memref<64x32xf32, #tpu.memory_space<vmem>>, %arg2: memref<800x32xf32, #tpu.memory_space<vmem>>, %arg3: memref<256x32xbf16, #tpu.memory_space<vmem>>, %arg4: memref<16x32xf32, #tpu.memory_space<vmem>>, %arg5: memref<512x32xf32, #tpu.memory_space<vmem>>, %arg6: memref<128x32xf32, #tpu.memory_space<vmem>>, %arg7: memref<512x64xf32, #tpu.memory_space<vmem>>, %arg8: memref<64x32xf32, #tpu.memory_space<vmem>>) attributes {dimension_semantics = [#tpu.dimension_semantics<parallel>], iteration_bounds = array<i64: 1>, scalar_prefetch = 0 : i64, scratch_operands = 0 : i64, tpu.core_type = #tpu.core_type<tc>, window_params = [{transform_indices = @transform_0, window_bounds = array<i64: 64, 32>}, {transform_indices = @transform_1, window_bounds = array<i64: 800, 32>}, {pipeline_mode = #tpu.pipeline_mode<synchronous>, transform_indices = @transform_2, window_bounds = array<i64: 256, 32>}, {pipeline_mode = #tpu.pipeline_mode<synchronous>, transform_indices = @transform_3, window_bounds = array<i64: 16, 32>}, {pipeline_mode = #tpu.pipeline_mode<synchronous>, transform_indices = @transform_4, window_bounds = array<i64: 512, 32>}, {pipeline_mode = #tpu.pipeline_mode<synchronous>, transform_indices = @transform_5, window_bounds = array<i64: 128, 32>}, {pipeline_mode = #tpu.pipeline_mode<synchronous>, transform_indices = @transform_6, window_bounds = array<i64: 512, 64>}, {transform_indices = @transform_7, window_bounds = array<i64: 64, 32>}]} {
    %c0 = arith.constant 0 : index
    %c0_0 = arith.constant 0 : index
    %0 = vector.load %arg1[%c0, %c0_0] : memref<64x32xf32, #tpu.memory_space<vmem>>, vector<64x32xf32>
    %c0_1 = arith.constant 0 : index
    %c0_2 = arith.constant 0 : index
    %1 = vector.load %arg2[%c0_1, %c0_2] : memref<800x32xf32, #tpu.memory_space<vmem>>, vector<800x32xf32>
    %c0_3 = arith.constant 0 : index
    %c0_4 = arith.constant 0 : index
    %2 = vector.load %arg3[%c0_3, %c0_4] : memref<256x32xbf16, #tpu.memory_space<vmem>>, vector<256x32xbf16>
    %c0_5 = arith.constant 0 : index
    %c0_6 = arith.constant 0 : index
    %3 = vector.load %arg4[%c0_5, %c0_6] : memref<16x32xf32, #tpu.memory_space<vmem>>, vector<16x32xf32>
    %c0_7 = arith.constant 0 : index
    %c0_8 = arith.constant 0 : index
    %4 = vector.load %arg5[%c0_7, %c0_8] : memref<512x32xf32, #tpu.memory_space<vmem>>, vector<512x32xf32>
    %c0_9 = arith.constant 0 : index
    %c0_10 = arith.constant 0 : index
    %5 = vector.load %arg6[%c0_9, %c0_10] : memref<128x32xf32, #tpu.memory_space<vmem>>, vector<128x32xf32>
    %c0_11 = arith.constant 0 : index
    %c0_12 = arith.constant 0 : index
    %6 = vector.load %arg7[%c0_11, %c0_12] : memref<512x64xf32, #tpu.memory_space<vmem>>, vector<512x64xf32>
    %7 = vector.extract_strided_slice %2 {offsets = [0, 0], sizes = [32, 32], strides = [1, 1]} : vector<256x32xbf16> to vector<32x32xbf16>
    %8 = vector.extract_strided_slice %2 {offsets = [32, 0], sizes = [32, 32], strides = [1, 1]} : vector<256x32xbf16> to vector<32x32xbf16>
    %9 = vector.extract_strided_slice %2 {offsets = [64, 0], sizes = [32, 32], strides = [1, 1]} : vector<256x32xbf16> to vector<32x32xbf16>
    %10 = vector.extract_strided_slice %2 {offsets = [96, 0], sizes = [32, 32], strides = [1, 1]} : vector<256x32xbf16> to vector<32x32xbf16>
    %11 = vector.extract_strided_slice %2 {offsets = [128, 0], sizes = [32, 32], strides = [1, 1]} : vector<256x32xbf16> to vector<32x32xbf16>
    %12 = vector.extract_strided_slice %2 {offsets = [160, 0], sizes = [32, 32], strides = [1, 1]} : vector<256x32xbf16> to vector<32x32xbf16>
    %13 = vector.extract_strided_slice %2 {offsets = [192, 0], sizes = [32, 32], strides = [1, 1]} : vector<256x32xbf16> to vector<32x32xbf16>
    %14 = vector.extract_strided_slice %2 {offsets = [224, 0], sizes = [32, 32], strides = [1, 1]} : vector<256x32xbf16> to vector<32x32xbf16>
    %15 = vector.extract_strided_slice %3 {offsets = [0, 0], sizes = [1, 32], strides = [1, 1]} : vector<16x32xf32> to vector<1x32xf32>
    %16 = vector.extract_strided_slice %3 {offsets = [1, 0], sizes = [1, 32], strides = [1, 1]} : vector<16x32xf32> to vector<1x32xf32>
    %17 = vector.extract_strided_slice %3 {offsets = [2, 0], sizes = [1, 32], strides = [1, 1]} : vector<16x32xf32> to vector<1x32xf32>
    %18 = vector.extract_strided_slice %3 {offsets = [3, 0], sizes = [1, 32], strides = [1, 1]} : vector<16x32xf32> to vector<1x32xf32>
    %19 = vector.extract_strided_slice %3 {offsets = [4, 0], sizes = [1, 32], strides = [1, 1]} : vector<16x32xf32> to vector<1x32xf32>
    %20 = vector.extract_strided_slice %3 {offsets = [5, 0], sizes = [1, 32], strides = [1, 1]} : vector<16x32xf32> to vector<1x32xf32>
    %21 = vector.extract_strided_slice %3 {offsets = [6, 0], sizes = [1, 32], strides = [1, 1]} : vector<16x32xf32> to vector<1x32xf32>
    %22 = vector.extract_strided_slice %3 {offsets = [7, 0], sizes = [1, 32], strides = [1, 1]} : vector<16x32xf32> to vector<1x32xf32>
    %23 = vector.extract_strided_slice %3 {offsets = [8, 0], sizes = [1, 32], strides = [1, 1]} : vector<16x32xf32> to vector<1x32xf32>
    %24 = vector.extract_strided_slice %3 {offsets = [9, 0], sizes = [1, 32], strides = [1, 1]} : vector<16x32xf32> to vector<1x32xf32>
    %25 = vector.extract_strided_slice %3 {offsets = [10, 0], sizes = [1, 32], strides = [1, 1]} : vector<16x32xf32> to vector<1x32xf32>
    %26 = vector.extract_strided_slice %3 {offsets = [11, 0], sizes = [1, 32], strides = [1, 1]} : vector<16x32xf32> to vector<1x32xf32>
    %27 = arith.truncf %0 : vector<64x32xf32> to vector<64x32xbf16>
    %cst = arith.constant dense<0.000000e+00> : vector<64x32xf32>
    %28 = tpu.matmul %27, %7, %cst {dimension_numbers = #tpu.dot_dimension_numbers<[1], [1], [0], [0], [0, 0, 1, 0], [], []>} : vector<64x32xbf16>, vector<32x32xbf16>, vector<64x32xf32> -> vector<64x32xf32>
    %29 = vector.broadcast %15 : vector<1x32xf32> to vector<64x32xf32>
    %30 = arith.addf %28, %29 : vector<64x32xf32>
    %cst_13 = arith.constant dense<0.000000e+00> : vector<64x32xf32>
    %31 = tpu.matmul %27, %8, %cst_13 {dimension_numbers = #tpu.dot_dimension_numbers<[1], [1], [0], [0], [0, 0, 1, 0], [], []>} : vector<64x32xbf16>, vector<32x32xbf16>, vector<64x32xf32> -> vector<64x32xf32>
    %32 = vector.broadcast %16 : vector<1x32xf32> to vector<64x32xf32>
    %33 = arith.addf %31, %32 : vector<64x32xf32>
    %cst_14 = arith.constant dense<0.000000e+00> : vector<64x32xf32>
    %34 = tpu.matmul %27, %9, %cst_14 {dimension_numbers = #tpu.dot_dimension_numbers<[1], [1], [0], [0], [0, 0, 1, 0], [], []>} : vector<64x32xbf16>, vector<32x32xbf16>, vector<64x32xf32> -> vector<64x32xf32>
    %35 = vector.broadcast %17 : vector<1x32xf32> to vector<64x32xf32>
    %36 = arith.addf %34, %35 : vector<64x32xf32>
    %37 = tpu.concatenate %30, %30, %30, %30, %30, %30, %30, %30 in 0 : vector<64x32xf32>, vector<64x32xf32>, vector<64x32xf32>, vector<64x32xf32>, vector<64x32xf32>, vector<64x32xf32>, vector<64x32xf32>, vector<64x32xf32> -> vector<512x32xf32>
    %38 = arith.mulf %37, %4 : vector<512x32xf32>
    %39 = arith.truncf %38 : vector<512x32xf32> to vector<512x32xbf16>
    %40 = arith.truncf %33 : vector<64x32xf32> to vector<64x32xbf16>
    %cst_15 = arith.constant dense<0.000000e+00> : vector<512x64xf32>
    %41 = tpu.matmul %39, %40, %cst_15 {dimension_numbers = #tpu.dot_dimension_numbers<[1], [1], [0], [0], [0, 0, 1, 0], [], []>} : vector<512x32xbf16>, vector<64x32xbf16>, vector<512x64xf32> -> vector<512x64xf32>
    %cst_16 = arith.constant 5.000000e-01 : f32
    %42 = vector.broadcast %cst_16 : f32 to vector<512x64xf32>
    %43 = arith.mulf %41, %42 : vector<512x64xf32>
    %44 = arith.addf %43, %6 : vector<512x64xf32>
    %cst_17 = arith.constant dense<0xFF800000> : vector<512xf32>
    %45 = vector.multi_reduction <maximumf>, %44, %cst_17 [1] : vector<512x64xf32> to vector<512xf32>
    %46 = vector.shape_cast %45 : vector<512xf32> to vector<512x1xf32>
    %47 = vector.broadcast %46 : vector<512x1xf32> to vector<512x64xf32>
    %48 = arith.subf %44, %47 : vector<512x64xf32>
    %49 = math.exp %48 : vector<512x64xf32>
    %cst_18 = arith.constant dense<0.000000e+00> : vector<512xf32>
    %50 = vector.multi_reduction <add>, %49, %cst_18 [1] : vector<512x64xf32> to vector<512xf32>
    %51 = vector.shape_cast %50 : vector<512xf32> to vector<512x1xf32>
    %52 = tpu.reciprocal %51 {approx = true} : vector<512x1xf32> -> vector<512x1xf32>
    %53 = vector.broadcast %52 : vector<512x1xf32> to vector<512x64xf32>
    %54 = arith.mulf %49, %53 : vector<512x64xf32>
    %55 = arith.truncf %54 : vector<512x64xf32> to vector<512x64xbf16>
    %56 = arith.truncf %36 : vector<64x32xf32> to vector<64x32xbf16>
    %cst_19 = arith.constant dense<0.000000e+00> : vector<512x32xf32>
    %57 = tpu.matmul %55, %56, %cst_19 {dimension_numbers = #tpu.dot_dimension_numbers<[1], [0], [0], [1], [0, 0, 1, 1], [], []>} : vector<512x64xbf16>, vector<64x32xbf16>, vector<512x32xf32> -> vector<512x32xf32>
    %58 = arith.mulf %57, %4 : vector<512x32xf32>
    %59 = vector.extract_strided_slice %58 {offsets = [0, 0], sizes = [64, 32], strides = [1, 1]} : vector<512x32xf32> to vector<64x32xf32>
    %60 = vector.extract_strided_slice %58 {offsets = [64, 0], sizes = [64, 32], strides = [1, 1]} : vector<512x32xf32> to vector<64x32xf32>
    %61 = arith.addf %59, %60 : vector<64x32xf32>
    %62 = vector.extract_strided_slice %58 {offsets = [128, 0], sizes = [64, 32], strides = [1, 1]} : vector<512x32xf32> to vector<64x32xf32>
    %63 = arith.addf %61, %62 : vector<64x32xf32>
    %64 = vector.extract_strided_slice %58 {offsets = [192, 0], sizes = [64, 32], strides = [1, 1]} : vector<512x32xf32> to vector<64x32xf32>
    %65 = arith.addf %63, %64 : vector<64x32xf32>
    %66 = vector.extract_strided_slice %58 {offsets = [256, 0], sizes = [64, 32], strides = [1, 1]} : vector<512x32xf32> to vector<64x32xf32>
    %67 = arith.addf %65, %66 : vector<64x32xf32>
    %68 = vector.extract_strided_slice %58 {offsets = [320, 0], sizes = [64, 32], strides = [1, 1]} : vector<512x32xf32> to vector<64x32xf32>
    %69 = arith.addf %67, %68 : vector<64x32xf32>
    %70 = vector.extract_strided_slice %58 {offsets = [384, 0], sizes = [64, 32], strides = [1, 1]} : vector<512x32xf32> to vector<64x32xf32>
    %71 = arith.addf %69, %70 : vector<64x32xf32>
    %72 = vector.extract_strided_slice %58 {offsets = [448, 0], sizes = [64, 32], strides = [1, 1]} : vector<512x32xf32> to vector<64x32xf32>
    %73 = arith.addf %71, %72 : vector<64x32xf32>
    %74 = arith.truncf %73 : vector<64x32xf32> to vector<64x32xbf16>
    %cst_20 = arith.constant dense<0.000000e+00> : vector<64x32xf32>
    %75 = tpu.matmul %74, %10, %cst_20 {dimension_numbers = #tpu.dot_dimension_numbers<[1], [1], [0], [0], [0, 0, 1, 0], [], []>} : vector<64x32xbf16>, vector<32x32xbf16>, vector<64x32xf32> -> vector<64x32xf32>
    %76 = vector.broadcast %18 : vector<1x32xf32> to vector<64x32xf32>
    %77 = arith.addf %75, %76 : vector<64x32xf32>
    %78 = arith.addf %0, %77 : vector<64x32xf32>
    %cst_21 = arith.constant dense<0.000000e+00> : vector<64xf32>
    %79 = vector.multi_reduction <add>, %78, %cst_21 [1] : vector<64x32xf32> to vector<64xf32>
    %80 = vector.shape_cast %79 : vector<64xf32> to vector<64x1xf32>
    %cst_22 = arith.constant 3.200000e+01 : f32
    %81 = vector.broadcast %cst_22 : f32 to vector<64x1xf32>
    %82 = arith.divf %80, %81 : vector<64x1xf32>
    %83 = vector.broadcast %82 : vector<64x1xf32> to vector<64x32xf32>
    %84 = arith.subf %78, %83 : vector<64x32xf32>
    %85 = arith.mulf %84, %84 : vector<64x32xf32>
    %cst_23 = arith.constant dense<0.000000e+00> : vector<64xf32>
    %86 = vector.multi_reduction <add>, %85, %cst_23 [1] : vector<64x32xf32> to vector<64xf32>
    %87 = vector.shape_cast %86 : vector<64xf32> to vector<64x1xf32>
    %cst_24 = arith.constant 3.200000e+01 : f32
    %88 = vector.broadcast %cst_24 : f32 to vector<64x1xf32>
    %89 = arith.divf %87, %88 : vector<64x1xf32>
    %90 = vector.broadcast %82 : vector<64x1xf32> to vector<64x32xf32>
    %91 = arith.subf %78, %90 : vector<64x32xf32>
    %cst_25 = arith.constant 9.99999974E-6 : f32
    %92 = vector.broadcast %cst_25 : f32 to vector<64x1xf32>
    %93 = arith.addf %89, %92 : vector<64x1xf32>
    %94 = math.rsqrt %93 : vector<64x1xf32>
    %95 = vector.broadcast %94 : vector<64x1xf32> to vector<64x32xf32>
    %96 = arith.mulf %91, %95 : vector<64x32xf32>
    %97 = vector.broadcast %19 : vector<1x32xf32> to vector<64x32xf32>
    %98 = arith.mulf %96, %97 : vector<64x32xf32>
    %99 = vector.broadcast %20 : vector<1x32xf32> to vector<64x32xf32>
    %100 = arith.addf %98, %99 : vector<64x32xf32>
    %101 = arith.truncf %1 : vector<800x32xf32> to vector<800x32xbf16>
    %102 = arith.truncf %100 : vector<64x32xf32> to vector<64x32xbf16>
    %cst_26 = arith.constant dense<0.000000e+00> : vector<64x32xf32>
    %103 = tpu.matmul %102, %11, %cst_26 {dimension_numbers = #tpu.dot_dimension_numbers<[1], [1], [0], [0], [0, 0, 1, 0], [], []>} : vector<64x32xbf16>, vector<32x32xbf16>, vector<64x32xf32> -> vector<64x32xf32>
    %104 = vector.broadcast %21 : vector<1x32xf32> to vector<64x32xf32>
    %105 = arith.addf %103, %104 : vector<64x32xf32>
    %cst_27 = arith.constant dense<0.000000e+00> : vector<800x32xf32>
    %106 = tpu.matmul %101, %12, %cst_27 {dimension_numbers = #tpu.dot_dimension_numbers<[1], [1], [0], [0], [0, 0, 1, 0], [], []>} : vector<800x32xbf16>, vector<32x32xbf16>, vector<800x32xf32> -> vector<800x32xf32>
    %107 = vector.broadcast %22 : vector<1x32xf32> to vector<800x32xf32>
    %108 = arith.addf %106, %107 : vector<800x32xf32>
    %cst_28 = arith.constant dense<0.000000e+00> : vector<800x32xf32>
    %109 = tpu.matmul %101, %13, %cst_28 {dimension_numbers = #tpu.dot_dimension_numbers<[1], [1], [0], [0], [0, 0, 1, 0], [], []>} : vector<800x32xbf16>, vector<32x32xbf16>, vector<800x32xf32> -> vector<800x32xf32>
    %110 = vector.broadcast %23 : vector<1x32xf32> to vector<800x32xf32>
    %111 = arith.addf %109, %110 : vector<800x32xf32>
    %112 = vector.extract_strided_slice %105 {offsets = [0, 0], sizes = [16, 32], strides = [1, 1]} : vector<64x32xf32> to vector<16x32xf32>
    %113 = vector.extract_strided_slice %108 {offsets = [0, 0], sizes = [200, 32], strides = [1, 1]} : vector<800x32xf32> to vector<200x32xf32>
    %114 = arith.truncf %113 : vector<200x32xf32> to vector<200x32xbf16>
    %115 = vector.extract_strided_slice %111 {offsets = [0, 0], sizes = [200, 32], strides = [1, 1]} : vector<800x32xf32> to vector<200x32xf32>
    %116 = arith.truncf %115 : vector<200x32xf32> to vector<200x32xbf16>
    %117 = tpu.concatenate %112, %112, %112, %112, %112, %112, %112, %112 in 0 : vector<16x32xf32>, vector<16x32xf32>, vector<16x32xf32>, vector<16x32xf32>, vector<16x32xf32>, vector<16x32xf32>, vector<16x32xf32>, vector<16x32xf32> -> vector<128x32xf32>
    %118 = arith.mulf %117, %5 : vector<128x32xf32>
    %119 = arith.truncf %118 : vector<128x32xf32> to vector<128x32xbf16>
    %cst_29 = arith.constant dense<0.000000e+00> : vector<128x200xf32>
    %120 = tpu.matmul %119, %114, %cst_29 {dimension_numbers = #tpu.dot_dimension_numbers<[1], [1], [0], [0], [0, 0, 1, 0], [], []>} : vector<128x32xbf16>, vector<200x32xbf16>, vector<128x200xf32> -> vector<128x200xf32>
    %cst_30 = arith.constant 5.000000e-01 : f32
    %121 = vector.broadcast %cst_30 : f32 to vector<128x200xf32>
    %122 = arith.mulf %120, %121 : vector<128x200xf32>
    %cst_31 = arith.constant dense<0xFF800000> : vector<128xf32>
    %123 = vector.multi_reduction <maximumf>, %122, %cst_31 [1] : vector<128x200xf32> to vector<128xf32>
    %124 = vector.shape_cast %123 : vector<128xf32> to vector<128x1xf32>
    %125 = vector.broadcast %124 : vector<128x1xf32> to vector<128x200xf32>
    %126 = arith.subf %122, %125 : vector<128x200xf32>
    %127 = math.exp %126 : vector<128x200xf32>
    %cst_32 = arith.constant dense<0.000000e+00> : vector<128xf32>
    %128 = vector.multi_reduction <add>, %127, %cst_32 [1] : vector<128x200xf32> to vector<128xf32>
    %129 = vector.shape_cast %128 : vector<128xf32> to vector<128x1xf32>
    %130 = tpu.reciprocal %129 {approx = true} : vector<128x1xf32> -> vector<128x1xf32>
    %131 = vector.broadcast %130 : vector<128x1xf32> to vector<128x200xf32>
    %132 = arith.mulf %127, %131 : vector<128x200xf32>
    %133 = arith.truncf %132 : vector<128x200xf32> to vector<128x200xbf16>
    %cst_33 = arith.constant dense<0.000000e+00> : vector<128x32xf32>
    %134 = tpu.matmul %133, %116, %cst_33 {dimension_numbers = #tpu.dot_dimension_numbers<[1], [0], [0], [1], [0, 0, 1, 1], [], []>} : vector<128x200xbf16>, vector<200x32xbf16>, vector<128x32xf32> -> vector<128x32xf32>
    %135 = arith.mulf %134, %5 : vector<128x32xf32>
    %136 = vector.extract_strided_slice %135 {offsets = [0, 0], sizes = [16, 32], strides = [1, 1]} : vector<128x32xf32> to vector<16x32xf32>
    %137 = vector.extract_strided_slice %135 {offsets = [16, 0], sizes = [16, 32], strides = [1, 1]} : vector<128x32xf32> to vector<16x32xf32>
    %138 = arith.addf %136, %137 : vector<16x32xf32>
    %139 = vector.extract_strided_slice %135 {offsets = [32, 0], sizes = [16, 32], strides = [1, 1]} : vector<128x32xf32> to vector<16x32xf32>
    %140 = arith.addf %138, %139 : vector<16x32xf32>
    %141 = vector.extract_strided_slice %135 {offsets = [48, 0], sizes = [16, 32], strides = [1, 1]} : vector<128x32xf32> to vector<16x32xf32>
    %142 = arith.addf %140, %141 : vector<16x32xf32>
    %143 = vector.extract_strided_slice %135 {offsets = [64, 0], sizes = [16, 32], strides = [1, 1]} : vector<128x32xf32> to vector<16x32xf32>
    %144 = arith.addf %142, %143 : vector<16x32xf32>
    %145 = vector.extract_strided_slice %135 {offsets = [80, 0], sizes = [16, 32], strides = [1, 1]} : vector<128x32xf32> to vector<16x32xf32>
    %146 = arith.addf %144, %145 : vector<16x32xf32>
    %147 = vector.extract_strided_slice %135 {offsets = [96, 0], sizes = [16, 32], strides = [1, 1]} : vector<128x32xf32> to vector<16x32xf32>
    %148 = arith.addf %146, %147 : vector<16x32xf32>
    %149 = vector.extract_strided_slice %135 {offsets = [112, 0], sizes = [16, 32], strides = [1, 1]} : vector<128x32xf32> to vector<16x32xf32>
    %150 = arith.addf %148, %149 : vector<16x32xf32>
    %151 = vector.extract_strided_slice %105 {offsets = [16, 0], sizes = [16, 32], strides = [1, 1]} : vector<64x32xf32> to vector<16x32xf32>
    %152 = vector.extract_strided_slice %108 {offsets = [200, 0], sizes = [200, 32], strides = [1, 1]} : vector<800x32xf32> to vector<200x32xf32>
    %153 = arith.truncf %152 : vector<200x32xf32> to vector<200x32xbf16>
    %154 = vector.extract_strided_slice %111 {offsets = [200, 0], sizes = [200, 32], strides = [1, 1]} : vector<800x32xf32> to vector<200x32xf32>
    %155 = arith.truncf %154 : vector<200x32xf32> to vector<200x32xbf16>
    %156 = tpu.concatenate %151, %151, %151, %151, %151, %151, %151, %151 in 0 : vector<16x32xf32>, vector<16x32xf32>, vector<16x32xf32>, vector<16x32xf32>, vector<16x32xf32>, vector<16x32xf32>, vector<16x32xf32>, vector<16x32xf32> -> vector<128x32xf32>
    %157 = arith.mulf %156, %5 : vector<128x32xf32>
    %158 = arith.truncf %157 : vector<128x32xf32> to vector<128x32xbf16>
    %cst_34 = arith.constant dense<0.000000e+00> : vector<128x200xf32>
    %159 = tpu.matmul %158, %153, %cst_34 {dimension_numbers = #tpu.dot_dimension_numbers<[1], [1], [0], [0], [0, 0, 1, 0], [], []>} : vector<128x32xbf16>, vector<200x32xbf16>, vector<128x200xf32> -> vector<128x200xf32>
    %cst_35 = arith.constant 5.000000e-01 : f32
    %160 = vector.broadcast %cst_35 : f32 to vector<128x200xf32>
    %161 = arith.mulf %159, %160 : vector<128x200xf32>
    %cst_36 = arith.constant dense<0xFF800000> : vector<128xf32>
    %162 = vector.multi_reduction <maximumf>, %161, %cst_36 [1] : vector<128x200xf32> to vector<128xf32>
    %163 = vector.shape_cast %162 : vector<128xf32> to vector<128x1xf32>
    %164 = vector.broadcast %163 : vector<128x1xf32> to vector<128x200xf32>
    %165 = arith.subf %161, %164 : vector<128x200xf32>
    %166 = math.exp %165 : vector<128x200xf32>
    %cst_37 = arith.constant dense<0.000000e+00> : vector<128xf32>
    %167 = vector.multi_reduction <add>, %166, %cst_37 [1] : vector<128x200xf32> to vector<128xf32>
    %168 = vector.shape_cast %167 : vector<128xf32> to vector<128x1xf32>
    %169 = tpu.reciprocal %168 {approx = true} : vector<128x1xf32> -> vector<128x1xf32>
    %170 = vector.broadcast %169 : vector<128x1xf32> to vector<128x200xf32>
    %171 = arith.mulf %166, %170 : vector<128x200xf32>
    %172 = arith.truncf %171 : vector<128x200xf32> to vector<128x200xbf16>
    %cst_38 = arith.constant dense<0.000000e+00> : vector<128x32xf32>
    %173 = tpu.matmul %172, %155, %cst_38 {dimension_numbers = #tpu.dot_dimension_numbers<[1], [0], [0], [1], [0, 0, 1, 1], [], []>} : vector<128x200xbf16>, vector<200x32xbf16>, vector<128x32xf32> -> vector<128x32xf32>
    %174 = arith.mulf %173, %5 : vector<128x32xf32>
    %175 = vector.extract_strided_slice %174 {offsets = [0, 0], sizes = [16, 32], strides = [1, 1]} : vector<128x32xf32> to vector<16x32xf32>
    %176 = vector.extract_strided_slice %174 {offsets = [16, 0], sizes = [16, 32], strides = [1, 1]} : vector<128x32xf32> to vector<16x32xf32>
    %177 = arith.addf %175, %176 : vector<16x32xf32>
    %178 = vector.extract_strided_slice %174 {offsets = [32, 0], sizes = [16, 32], strides = [1, 1]} : vector<128x32xf32> to vector<16x32xf32>
    %179 = arith.addf %177, %178 : vector<16x32xf32>
    %180 = vector.extract_strided_slice %174 {offsets = [48, 0], sizes = [16, 32], strides = [1, 1]} : vector<128x32xf32> to vector<16x32xf32>
    %181 = arith.addf %179, %180 : vector<16x32xf32>
    %182 = vector.extract_strided_slice %174 {offsets = [64, 0], sizes = [16, 32], strides = [1, 1]} : vector<128x32xf32> to vector<16x32xf32>
    %183 = arith.addf %181, %182 : vector<16x32xf32>
    %184 = vector.extract_strided_slice %174 {offsets = [80, 0], sizes = [16, 32], strides = [1, 1]} : vector<128x32xf32> to vector<16x32xf32>
    %185 = arith.addf %183, %184 : vector<16x32xf32>
    %186 = vector.extract_strided_slice %174 {offsets = [96, 0], sizes = [16, 32], strides = [1, 1]} : vector<128x32xf32> to vector<16x32xf32>
    %187 = arith.addf %185, %186 : vector<16x32xf32>
    %188 = vector.extract_strided_slice %174 {offsets = [112, 0], sizes = [16, 32], strides = [1, 1]} : vector<128x32xf32> to vector<16x32xf32>
    %189 = arith.addf %187, %188 : vector<16x32xf32>
    %190 = vector.extract_strided_slice %105 {offsets = [32, 0], sizes = [16, 32], strides = [1, 1]} : vector<64x32xf32> to vector<16x32xf32>
    %191 = vector.extract_strided_slice %108 {offsets = [400, 0], sizes = [200, 32], strides = [1, 1]} : vector<800x32xf32> to vector<200x32xf32>
    %192 = arith.truncf %191 : vector<200x32xf32> to vector<200x32xbf16>
    %193 = vector.extract_strided_slice %111 {offsets = [400, 0], sizes = [200, 32], strides = [1, 1]} : vector<800x32xf32> to vector<200x32xf32>
    %194 = arith.truncf %193 : vector<200x32xf32> to vector<200x32xbf16>
    %195 = tpu.concatenate %190, %190, %190, %190, %190, %190, %190, %190 in 0 : vector<16x32xf32>, vector<16x32xf32>, vector<16x32xf32>, vector<16x32xf32>, vector<16x32xf32>, vector<16x32xf32>, vector<16x32xf32>, vector<16x32xf32> -> vector<128x32xf32>
    %196 = arith.mulf %195, %5 : vector<128x32xf32>
    %197 = arith.truncf %196 : vector<128x32xf32> to vector<128x32xbf16>
    %cst_39 = arith.constant dense<0.000000e+00> : vector<128x200xf32>
    %198 = tpu.matmul %197, %192, %cst_39 {dimension_numbers = #tpu.dot_dimension_numbers<[1], [1], [0], [0], [0, 0, 1, 0], [], []>} : vector<128x32xbf16>, vector<200x32xbf16>, vector<128x200xf32> -> vector<128x200xf32>
    %cst_40 = arith.constant 5.000000e-01 : f32
    %199 = vector.broadcast %cst_40 : f32 to vector<128x200xf32>
    %200 = arith.mulf %198, %199 : vector<128x200xf32>
    %cst_41 = arith.constant dense<0xFF800000> : vector<128xf32>
    %201 = vector.multi_reduction <maximumf>, %200, %cst_41 [1] : vector<128x200xf32> to vector<128xf32>
    %202 = vector.shape_cast %201 : vector<128xf32> to vector<128x1xf32>
    %203 = vector.broadcast %202 : vector<128x1xf32> to vector<128x200xf32>
    %204 = arith.subf %200, %203 : vector<128x200xf32>
    %205 = math.exp %204 : vector<128x200xf32>
    %cst_42 = arith.constant dense<0.000000e+00> : vector<128xf32>
    %206 = vector.multi_reduction <add>, %205, %cst_42 [1] : vector<128x200xf32> to vector<128xf32>
    %207 = vector.shape_cast %206 : vector<128xf32> to vector<128x1xf32>
    %208 = tpu.reciprocal %207 {approx = true} : vector<128x1xf32> -> vector<128x1xf32>
    %209 = vector.broadcast %208 : vector<128x1xf32> to vector<128x200xf32>
    %210 = arith.mulf %205, %209 : vector<128x200xf32>
    %211 = arith.truncf %210 : vector<128x200xf32> to vector<128x200xbf16>
    %cst_43 = arith.constant dense<0.000000e+00> : vector<128x32xf32>
    %212 = tpu.matmul %211, %194, %cst_43 {dimension_numbers = #tpu.dot_dimension_numbers<[1], [0], [0], [1], [0, 0, 1, 1], [], []>} : vector<128x200xbf16>, vector<200x32xbf16>, vector<128x32xf32> -> vector<128x32xf32>
    %213 = arith.mulf %212, %5 : vector<128x32xf32>
    %214 = vector.extract_strided_slice %213 {offsets = [0, 0], sizes = [16, 32], strides = [1, 1]} : vector<128x32xf32> to vector<16x32xf32>
    %215 = vector.extract_strided_slice %213 {offsets = [16, 0], sizes = [16, 32], strides = [1, 1]} : vector<128x32xf32> to vector<16x32xf32>
    %216 = arith.addf %214, %215 : vector<16x32xf32>
    %217 = vector.extract_strided_slice %213 {offsets = [32, 0], sizes = [16, 32], strides = [1, 1]} : vector<128x32xf32> to vector<16x32xf32>
    %218 = arith.addf %216, %217 : vector<16x32xf32>
    %219 = vector.extract_strided_slice %213 {offsets = [48, 0], sizes = [16, 32], strides = [1, 1]} : vector<128x32xf32> to vector<16x32xf32>
    %220 = arith.addf %218, %219 : vector<16x32xf32>
    %221 = vector.extract_strided_slice %213 {offsets = [64, 0], sizes = [16, 32], strides = [1, 1]} : vector<128x32xf32> to vector<16x32xf32>
    %222 = arith.addf %220, %221 : vector<16x32xf32>
    %223 = vector.extract_strided_slice %213 {offsets = [80, 0], sizes = [16, 32], strides = [1, 1]} : vector<128x32xf32> to vector<16x32xf32>
    %224 = arith.addf %222, %223 : vector<16x32xf32>
    %225 = vector.extract_strided_slice %213 {offsets = [96, 0], sizes = [16, 32], strides = [1, 1]} : vector<128x32xf32> to vector<16x32xf32>
    %226 = arith.addf %224, %225 : vector<16x32xf32>
    %227 = vector.extract_strided_slice %213 {offsets = [112, 0], sizes = [16, 32], strides = [1, 1]} : vector<128x32xf32> to vector<16x32xf32>
    %228 = arith.addf %226, %227 : vector<16x32xf32>
    %229 = vector.extract_strided_slice %105 {offsets = [48, 0], sizes = [16, 32], strides = [1, 1]} : vector<64x32xf32> to vector<16x32xf32>
    %230 = vector.extract_strided_slice %108 {offsets = [600, 0], sizes = [200, 32], strides = [1, 1]} : vector<800x32xf32> to vector<200x32xf32>
    %231 = arith.truncf %230 : vector<200x32xf32> to vector<200x32xbf16>
    %232 = vector.extract_strided_slice %111 {offsets = [600, 0], sizes = [200, 32], strides = [1, 1]} : vector<800x32xf32> to vector<200x32xf32>
    %233 = arith.truncf %232 : vector<200x32xf32> to vector<200x32xbf16>
    %234 = tpu.concatenate %229, %229, %229, %229, %229, %229, %229, %229 in 0 : vector<16x32xf32>, vector<16x32xf32>, vector<16x32xf32>, vector<16x32xf32>, vector<16x32xf32>, vector<16x32xf32>, vector<16x32xf32>, vector<16x32xf32> -> vector<128x32xf32>
    %235 = arith.mulf %234, %5 : vector<128x32xf32>
    %236 = arith.truncf %235 : vector<128x32xf32> to vector<128x32xbf16>
    %cst_44 = arith.constant dense<0.000000e+00> : vector<128x200xf32>
    %237 = tpu.matmul %236, %231, %cst_44 {dimension_numbers = #tpu.dot_dimension_numbers<[1], [1], [0], [0], [0, 0, 1, 0], [], []>} : vector<128x32xbf16>, vector<200x32xbf16>, vector<128x200xf32> -> vector<128x200xf32>
    %cst_45 = arith.constant 5.000000e-01 : f32
    %238 = vector.broadcast %cst_45 : f32 to vector<128x200xf32>
    %239 = arith.mulf %237, %238 : vector<128x200xf32>
    %cst_46 = arith.constant dense<0xFF800000> : vector<128xf32>
    %240 = vector.multi_reduction <maximumf>, %239, %cst_46 [1] : vector<128x200xf32> to vector<128xf32>
    %241 = vector.shape_cast %240 : vector<128xf32> to vector<128x1xf32>
    %242 = vector.broadcast %241 : vector<128x1xf32> to vector<128x200xf32>
    %243 = arith.subf %239, %242 : vector<128x200xf32>
    %244 = math.exp %243 : vector<128x200xf32>
    %cst_47 = arith.constant dense<0.000000e+00> : vector<128xf32>
    %245 = vector.multi_reduction <add>, %244, %cst_47 [1] : vector<128x200xf32> to vector<128xf32>
    %246 = vector.shape_cast %245 : vector<128xf32> to vector<128x1xf32>
    %247 = tpu.reciprocal %246 {approx = true} : vector<128x1xf32> -> vector<128x1xf32>
    %248 = vector.broadcast %247 : vector<128x1xf32> to vector<128x200xf32>
    %249 = arith.mulf %244, %248 : vector<128x200xf32>
    %250 = arith.truncf %249 : vector<128x200xf32> to vector<128x200xbf16>
    %cst_48 = arith.constant dense<0.000000e+00> : vector<128x32xf32>
    %251 = tpu.matmul %250, %233, %cst_48 {dimension_numbers = #tpu.dot_dimension_numbers<[1], [0], [0], [1], [0, 0, 1, 1], [], []>} : vector<128x200xbf16>, vector<200x32xbf16>, vector<128x32xf32> -> vector<128x32xf32>
    %252 = arith.mulf %251, %5 : vector<128x32xf32>
    %253 = vector.extract_strided_slice %252 {offsets = [0, 0], sizes = [16, 32], strides = [1, 1]} : vector<128x32xf32> to vector<16x32xf32>
    %254 = vector.extract_strided_slice %252 {offsets = [16, 0], sizes = [16, 32], strides = [1, 1]} : vector<128x32xf32> to vector<16x32xf32>
    %255 = arith.addf %253, %254 : vector<16x32xf32>
    %256 = vector.extract_strided_slice %252 {offsets = [32, 0], sizes = [16, 32], strides = [1, 1]} : vector<128x32xf32> to vector<16x32xf32>
    %257 = arith.addf %255, %256 : vector<16x32xf32>
    %258 = vector.extract_strided_slice %252 {offsets = [48, 0], sizes = [16, 32], strides = [1, 1]} : vector<128x32xf32> to vector<16x32xf32>
    %259 = arith.addf %257, %258 : vector<16x32xf32>
    %260 = vector.extract_strided_slice %252 {offsets = [64, 0], sizes = [16, 32], strides = [1, 1]} : vector<128x32xf32> to vector<16x32xf32>
    %261 = arith.addf %259, %260 : vector<16x32xf32>
    %262 = vector.extract_strided_slice %252 {offsets = [80, 0], sizes = [16, 32], strides = [1, 1]} : vector<128x32xf32> to vector<16x32xf32>
    %263 = arith.addf %261, %262 : vector<16x32xf32>
    %264 = vector.extract_strided_slice %252 {offsets = [96, 0], sizes = [16, 32], strides = [1, 1]} : vector<128x32xf32> to vector<16x32xf32>
    %265 = arith.addf %263, %264 : vector<16x32xf32>
    %266 = vector.extract_strided_slice %252 {offsets = [112, 0], sizes = [16, 32], strides = [1, 1]} : vector<128x32xf32> to vector<16x32xf32>
    %267 = arith.addf %265, %266 : vector<16x32xf32>
    %268 = tpu.concatenate %150, %189, %228, %267 in 0 : vector<16x32xf32>, vector<16x32xf32>, vector<16x32xf32>, vector<16x32xf32> -> vector<64x32xf32>
    %269 = arith.truncf %268 : vector<64x32xf32> to vector<64x32xbf16>
    %cst_49 = arith.constant dense<0.000000e+00> : vector<64x32xf32>
    %270 = tpu.matmul %269, %14, %cst_49 {dimension_numbers = #tpu.dot_dimension_numbers<[1], [1], [0], [0], [0, 0, 1, 0], [], []>} : vector<64x32xbf16>, vector<32x32xbf16>, vector<64x32xf32> -> vector<64x32xf32>
    %271 = vector.broadcast %24 : vector<1x32xf32> to vector<64x32xf32>
    %272 = arith.addf %270, %271 : vector<64x32xf32>
    %273 = arith.addf %100, %272 : vector<64x32xf32>
    %cst_50 = arith.constant dense<0.000000e+00> : vector<64xf32>
    %274 = vector.multi_reduction <add>, %273, %cst_50 [1] : vector<64x32xf32> to vector<64xf32>
    %275 = vector.shape_cast %274 : vector<64xf32> to vector<64x1xf32>
    %cst_51 = arith.constant 3.200000e+01 : f32
    %276 = vector.broadcast %cst_51 : f32 to vector<64x1xf32>
    %277 = arith.divf %275, %276 : vector<64x1xf32>
    %278 = vector.broadcast %277 : vector<64x1xf32> to vector<64x32xf32>
    %279 = arith.subf %273, %278 : vector<64x32xf32>
    %280 = arith.mulf %279, %279 : vector<64x32xf32>
    %cst_52 = arith.constant dense<0.000000e+00> : vector<64xf32>
    %281 = vector.multi_reduction <add>, %280, %cst_52 [1] : vector<64x32xf32> to vector<64xf32>
    %282 = vector.shape_cast %281 : vector<64xf32> to vector<64x1xf32>
    %cst_53 = arith.constant 3.200000e+01 : f32
    %283 = vector.broadcast %cst_53 : f32 to vector<64x1xf32>
    %284 = arith.divf %282, %283 : vector<64x1xf32>
    %285 = vector.broadcast %277 : vector<64x1xf32> to vector<64x32xf32>
    %286 = arith.subf %273, %285 : vector<64x32xf32>
    %cst_54 = arith.constant 9.99999974E-6 : f32
    %287 = vector.broadcast %cst_54 : f32 to vector<64x1xf32>
    %288 = arith.addf %284, %287 : vector<64x1xf32>
    %289 = math.rsqrt %288 : vector<64x1xf32>
    %290 = vector.broadcast %289 : vector<64x1xf32> to vector<64x32xf32>
    %291 = arith.mulf %286, %290 : vector<64x32xf32>
    %292 = vector.broadcast %25 : vector<1x32xf32> to vector<64x32xf32>
    %293 = arith.mulf %291, %292 : vector<64x32xf32>
    %294 = vector.broadcast %26 : vector<1x32xf32> to vector<64x32xf32>
    %295 = arith.addf %293, %294 : vector<64x32xf32>
    %c0_55 = arith.constant 0 : index
    %c0_56 = arith.constant 0 : index
    %296 = vector.load %arg8[%c0_55, %c0_56] : memref<64x32xf32, #tpu.memory_space<vmem>>, vector<64x32xf32>
    tpu.vector_store %arg8[%c0_55, %c0_56], %295 {strides = array<i32>} : memref<64x32xf32, #tpu.memory_space<vmem>>, vector<64x32xf32>,
    return
  }
  func.func @transform_0(%arg0: i32) -> (i32, i32) {
    %c0_i32 = arith.constant 0 : i32
    %c0_i32_0 = arith.constant 0 : i32
    return %arg0, %c0_i32 : i32, i32
  }
  func.func @transform_1(%arg0: i32) -> (i32, i32) {
    %c0_i32 = arith.constant 0 : i32
    %c0_i32_0 = arith.constant 0 : i32
    return %arg0, %c0_i32 : i32, i32
  }
  func.func @transform_2(%arg0: i32) -> (i32, i32) {
    %c0_i32 = arith.constant 0 : i32
    %c0_i32_0 = arith.constant 0 : i32
    %c0_i32_1 = arith.constant 0 : i32
    return %c0_i32, %c0_i32_0 : i32, i32
  }
  func.func @transform_3(%arg0: i32) -> (i32, i32) {
    %c0_i32 = arith.constant 0 : i32
    %c0_i32_0 = arith.constant 0 : i32
    %c0_i32_1 = arith.constant 0 : i32
    return %c0_i32, %c0_i32_0 : i32, i32
  }
  func.func @transform_4(%arg0: i32) -> (i32, i32) {
    %c0_i32 = arith.constant 0 : i32
    %c0_i32_0 = arith.constant 0 : i32
    %c0_i32_1 = arith.constant 0 : i32
    return %c0_i32, %c0_i32_0 : i32, i32
  }
  func.func @transform_5(%arg0: i32) -> (i32, i32) {
    %c0_i32 = arith.constant 0 : i32
    %c0_i32_0 = arith.constant 0 : i32
    %c0_i32_1 = arith.constant 0 : i32
    return %c0_i32, %c0_i32_0 : i32, i32
  }
  func.func @transform_6(%arg0: i32) -> (i32, i32) {
    %c0_i32 = arith.constant 0 : i32
    %c0_i32_0 = arith.constant 0 : i32
    %c0_i32_1 = arith.constant 0 : i32
    return %c0_i32, %c0_i32_0 : i32, i32
  }
  func.func @transform_7(%arg0: i32) -> (i32, i32) {
    %c0_i32 = arith.constant 0 : i32
    %c0_i32_0 = arith.constant 0 : i32
    return %arg0, %c0_i32 : i32, i32
  }
}

</mosaic_0001>

<llo_original>
// kernel: tpu_custom_call.1
$region0: #{tpu_custom_call.1}
  #allocation0 [shape = 'u32[]', space=smem, size = 0x4, offset = 0x4, fixed_abs, tag = 'smem constant byte address 0x4 - core index']
  #allocation1 [shape = 'u32[144,128]{1,0:T(1,128)}', space=vmem, size = 0x12000, scoped, tag = 'internal scratch']
  %s0 = inlined_call_operand.vmem [shape: f32[64,32], index: 0, kind: input, shape index: {}]
  %s1 = inlined_call_operand.vmem [shape: f32[800,32], index: 1, kind: input, shape index: {}]
  %s2 = inlined_call_operand.vmem [shape: bf16[256,32], index: 2, kind: input, shape index: {}]
  %s3 = inlined_call_operand.vmem [shape: f32[16,32], index: 3, kind: input, shape index: {}]
  %s4 = inlined_call_operand.vmem [shape: f32[512,32], index: 4, kind: input, shape index: {}]
  %s5 = inlined_call_operand.vmem [shape: f32[128,32], index: 5, kind: input, shape index: {}]
  %s6 = inlined_call_operand.vmem [shape: f32[512,64], index: 6, kind: input, shape index: {}]
  %s7 = inlined_call_operand.vmem [shape: f32[64,32], index: 7, kind: output, shape index: {}]
  %s8 = sld [smem:[#allocation0]]
  $region38: #{tpu_custom_call.1} parent=0
    _
  %s10 = ssub.s32 1, %s8
  %s11 = scalar_select 0, %s10, %s8
  // Predicated region
  $region2: #{tpu_custom_call.1} parent=0 // pred_check
    _
  $region3: #{tpu_custom_call.1} parent=0 // pred_check_branch
    %13 = sbr.rel (0) target = $region5
  $region4: #{tpu_custom_call.1} parent=0 // pred_region
    _
  $region5: #{tpu_custom_call.1} parent=0 // pred_fallthru
    _
  // Predicated region
  $region6: #{tpu_custom_call.1} parent=0 // pred_check
    _
  $region7: #{tpu_custom_call.1} parent=0 // pred_check_branch
    %15 = sbr.rel (0) target = $region9
  $region8: #{tpu_custom_call.1} parent=0 // pred_region
    _
  $region9: #{tpu_custom_call.1} parent=0 // pred_fallthru
    _
  // Predicated region
  $region10: #{tpu_custom_call.1} parent=0 // pred_check
    _
  $region11: #{tpu_custom_call.1} parent=0 // pred_check_branch
    %17 = sbr.rel (0) target = $region13
  $region12: #{tpu_custom_call.1} parent=0 // pred_region
    _
  $region13: #{tpu_custom_call.1} parent=0 // pred_fallthru
    _
  // Predicated region
  $region14: #{tpu_custom_call.1} parent=0 // pred_check
    _
  $region15: #{tpu_custom_call.1} parent=0 // pred_check_branch
    %19 = sbr.rel (0) target = $region17
  $region16: #{tpu_custom_call.1} parent=0 // pred_region
    _
  $region17: #{tpu_custom_call.1} parent=0 // pred_fallthru
    _
  // Predicated region
  $region18: #{tpu_custom_call.1} parent=0 // pred_check
    _
  $region19: #{tpu_custom_call.1} parent=0 // pred_check_branch
    %21 = sbr.rel (0) target = $region21
  $region20: #{tpu_custom_call.1} parent=0 // pred_region
    _
  $region21: #{tpu_custom_call.1} parent=0 // pred_fallthru
    _
  // Predicated region
  $region22: #{tpu_custom_call.1} parent=0 // pred_check
    _
  $region23: #{tpu_custom_call.1} parent=0 // pred_check_branch
    %23 = sbr.rel (0) target = $region25
  $region24: #{tpu_custom_call.1} parent=0 // pred_region
    _
  $region25: #{tpu_custom_call.1} parent=0 // pred_fallthru
    _
  // Predicated region
  $region26: #{tpu_custom_call.1} parent=0 // pred_check
    _
  $region27: #{tpu_custom_call.1} parent=0 // pred_check_branch
    %25 = sbr.rel (0) target = $region29
  $region28: #{tpu_custom_call.1} parent=0 // pred_region
    _
  $region29: #{tpu_custom_call.1} parent=0 // pred_fallthru
    _
  %v27 = vld [vmem:[%s0] sm:$0xff]
  %v28 = vld [vmem:[%s0 + $0x8] sm:$0xff]
  %v29 = vld [vmem:[%s0 + $0x10] sm:$0xff]
  %v30 = vld [vmem:[%s0 + $0x18] sm:$0xff]
  %v31 = vld [vmem:[%s0 + $0x20] sm:$0xff]
  %v32 = vld [vmem:[%s0 + $0x28] sm:$0xff]
  %v33 = vld [vmem:[%s0 + $0x30] sm:$0xff]
  %v34 = vld [vmem:[%s0 + $0x38] sm:$0xff]
  %v35 = vld [vmem:[%s1] sm:$0xff]
  %v36 = vld [vmem:[%s1 + $0x8] sm:$0xff]
  %v37 = vld [vmem:[%s1 + $0x10] sm:$0xff]
  %v38 = vld [vmem:[%s1 + $0x18] sm:$0xff]
  %v39 = vld [vmem:[%s1 + $0x20] sm:$0xff]
  %v40 = vld [vmem:[%s1 + $0x28] sm:$0xff]
  %v41 = vld [vmem:[%s1 + $0x30] sm:$0xff]
  %v42 = vld [vmem:[%s1 + $0x38] sm:$0xff]
  %v43 = vld [vmem:[%s1 + $0x40] sm:$0xff]
  %v44 = vld [vmem:[%s1 + $0x48] sm:$0xff]
  %v45 = vld [vmem:[%s1 + $0x50] sm:$0xff]
  %v46 = vld [vmem:[%s1 + $0x58] sm:$0xff]
  %v47 = vld [vmem:[%s1 + $0x60] sm:$0xff]
  %v48 = vld [vmem:[%s1 + $0x68] sm:$0xff]
  %v49 = vld [vmem:[%s1 + $0x70] sm:$0xff]
  %v50 = vld [vmem:[%s1 + $0x78] sm:$0xff]
  %v51 = vld [vmem:[%s1 + $0x80] sm:$0xff]
  %v52 = vld [vmem:[%s1 + $0x88] sm:$0xff]
  %v53 = vld [vmem:[%s1 + $0x90] sm:$0xff]
  %v54 = vld [vmem:[%s1 + $0x98] sm:$0xff]
  %v55 = vld [vmem:[%s1 + $0xa0] sm:$0xff]
  %v56 = vld [vmem:[%s1 + $0xa8] sm:$0xff]
  %v57 = vld [vmem:[%s1 + $0xb0] sm:$0xff]
  %v58 = vld [vmem:[%s1 + $0xb8] sm:$0xff]
  %v59 = vld [vmem:[%s1 + $0xc0] sm:$0xff]
  %v60 = vld [vmem:[%s1 + $0xc8] sm:$0xff]
  %v61 = vld [vmem:[%s1 + $0xd0] sm:$0xff]
  %v62 = vld [vmem:[%s1 + $0xd8] sm:$0xff]
  %v63 = vld [vmem:[%s1 + $0xe0] sm:$0xff]
  %v64 = vld [vmem:[%s1 + $0xe8] sm:$0xff]
  %v65 = vld [vmem:[%s1 + $0xf0] sm:$0xff]
  %v66 = vld [vmem:[%s1 + $0xf8] sm:$0xff]
  %v67 = vld [vmem:[%s1 + $0x100] sm:$0xff]
  %v68 = vld [vmem:[%s1 + $0x108] sm:$0xff]
  %v69 = vld [vmem:[%s1 + $0x110] sm:$0xff]
  %v70 = vld [vmem:[%s1 + $0x118] sm:$0xff]
  %v71 = vld [vmem:[%s1 + $0x120] sm:$0xff]
  %v72 = vld [vmem:[%s1 + $0x128] sm:$0xff]
  %v73 = vld [vmem:[%s1 + $0x130] sm:$0xff]
  %v74 = vld [vmem:[%s1 + $0x138] sm:$0xff]
  %v75 = vld [vmem:[%s1 + $0x140] sm:$0xff]
  %v76 = vld [vmem:[%s1 + $0x148] sm:$0xff]
  %v77 = vld [vmem:[%s1 + $0x150] sm:$0xff]
  %v78 = vld [vmem:[%s1 + $0x158] sm:$0xff]
  %v79 = vld [vmem:[%s1 + $0x160] sm:$0xff]
  %v80 = vld [vmem:[%s1 + $0x168] sm:$0xff]
  %v81 = vld [vmem:[%s1 + $0x170] sm:$0xff]
  %v82 = vld [vmem:[%s1 + $0x178] sm:$0xff]
  %v83 = vld [vmem:[%s1 + $0x180] sm:$0xff]
  %v84 = vld [vmem:[%s1 + $0x188] sm:$0xff]
  %v85 = vld [vmem:[%s1 + $0x190] sm:$0xff]
  %v86 = vld [vmem:[%s1 + $0x198] sm:$0xff]
  %v87 = vld [vmem:[%s1 + $0x1a0] sm:$0xff]
  %v88 = vld [vmem:[%s1 + $0x1a8] sm:$0xff]
  %v89 = vld [vmem:[%s1 + $0x1b0] sm:$0xff]
  %v90 = vld [vmem:[%s1 + $0x1b8] sm:$0xff]
  %v91 = vld [vmem:[%s1 + $0x1c0] sm:$0xff]
  %v92 = vld [vmem:[%s1 + $0x1c8] sm:$0xff]
  %v93 = vld [vmem:[%s1 + $0x1d0] sm:$0xff]
  %v94 = vld [vmem:[%s1 + $0x1d8] sm:$0xff]
  %v95 = vld [vmem:[%s1 + $0x1e0] sm:$0xff]
  %v96 = vld [vmem:[%s1 + $0x1e8] sm:$0xff]
  %v97 = vld [vmem:[%s1 + $0x1f0] sm:$0xff]
  %v98 = vld [vmem:[%s1 + $0x1f8] sm:$0xff]
  %v99 = vld [vmem:[%s1 + $0x200] sm:$0xff]
  %v100 = vld [vmem:[%s1 + $0x208] sm:$0xff]
  %v101 = vld [vmem:[%s1 + $0x210] sm:$0xff]
  %v102 = vld [vmem:[%s1 + $0x218] sm:$0xff]
  %v103 = vld [vmem:[%s1 + $0x220] sm:$0xff]
  %v104 = vld [vmem:[%s1 + $0x228] sm:$0xff]
  %v105 = vld [vmem:[%s1 + $0x230] sm:$0xff]
  %v106 = vld [vmem:[%s1 + $0x238] sm:$0xff]
  %v107 = vld [vmem:[%s1 + $0x240] sm:$0xff]
  %v108 = vld [vmem:[%s1 + $0x248] sm:$0xff]
  %v109 = vld [vmem:[%s1 + $0x250] sm:$0xff]
  %v110 = vld [vmem:[%s1 + $0x258] sm:$0xff]
  %v111 = vld [vmem:[%s1 + $0x260] sm:$0xff]
  %v112 = vld [vmem:[%s1 + $0x268] sm:$0xff]
  %v113 = vld [vmem:[%s1 + $0x270] sm:$0xff]
  %v114 = vld [vmem:[%s1 + $0x278] sm:$0xff]
  %v115 = vld [vmem:[%s1 + $0x280] sm:$0xff]
  %v116 = vld [vmem:[%s1 + $0x288] sm:$0xff]
  %v117 = vld [vmem:[%s1 + $0x290] sm:$0xff]
  %v118 = vld [vmem:[%s1 + $0x298] sm:$0xff]
  %v119 = vld [vmem:[%s1 + $0x2a0] sm:$0xff]
  %v120 = vld [vmem:[%s1 + $0x2a8] sm:$0xff]
  %v121 = vld [vmem:[%s1 + $0x2b0] sm:$0xff]
  %v122 = vld [vmem:[%s1 + $0x2b8] sm:$0xff]
  %v123 = vld [vmem:[%s1 + $0x2c0] sm:$0xff]
  %v124 = vld [vmem:[%s1 + $0x2c8] sm:$0xff]
  %v125 = vld [vmem:[%s1 + $0x2d0] sm:$0xff]
  %v126 = vld [vmem:[%s1 + $0x2d8] sm:$0xff]
  %v127 = vld [vmem:[%s1 + $0x2e0] sm:$0xff]
  %v128 = vld [vmem:[%s1 + $0x2e8] sm:$0xff]
  %v129 = vld [vmem:[%s1 + $0x2f0] sm:$0xff]
  %v130 = vld [vmem:[%s1 + $0x2f8] sm:$0xff]
  %v131 = vld [vmem:[%s1 + $0x300] sm:$0xff]
  %v132 = vld [vmem:[%s1 + $0x308] sm:$0xff]
  %v133 = vld [vmem:[%s1 + $0x310] sm:$0xff]
  %v134 = vld [vmem:[%s1 + $0x318] sm:$0xff]
  %v135 = vld [vmem:[%s2] sm:$0xf]
  %v136 = vld [vmem:[%s2 + $0x4] sm:$0xf]
  %v137 = vld [vmem:[%s2 + $0x8] sm:$0xf]
  %v138 = vld [vmem:[%s2 + $0xc] sm:$0xf]
  %v139 = vld [vmem:[%s2 + $0x10] sm:$0xf]
  %v140 = vld [vmem:[%s2 + $0x14] sm:$0xf]
  %v141 = vld [vmem:[%s2 + $0x18] sm:$0xf]
  %v142 = vld [vmem:[%s2 + $0x1c] sm:$0xf]
  %v143 = vld [vmem:[%s2 + $0x20] sm:$0xf]
  %v144 = vld [vmem:[%s2 + $0x24] sm:$0xf]
  %v145 = vld [vmem:[%s2 + $0x28] sm:$0xf]
  %v146 = vld [vmem:[%s2 + $0x2c] sm:$0xf]
  %v147 = vld [vmem:[%s2 + $0x30] sm:$0xf]
  %v148 = vld [vmem:[%s2 + $0x34] sm:$0xf]
  %v149 = vld [vmem:[%s2 + $0x38] sm:$0xf]
  %v150 = vld [vmem:[%s2 + $0x3c] sm:$0xf]
  %v151 = vld [vmem:[%s2 + $0x40] sm:$0xf]
  %v152 = vld [vmem:[%s2 + $0x44] sm:$0xf]
  %v153 = vld [vmem:[%s2 + $0x48] sm:$0xf]
  %v154 = vld [vmem:[%s2 + $0x4c] sm:$0xf]
  %v155 = vld [vmem:[%s2 + $0x50] sm:$0xf]
  %v156 = vld [vmem:[%s2 + $0x54] sm:$0xf]
  %v157 = vld [vmem:[%s2 + $0x58] sm:$0xf]
  %v158 = vld [vmem:[%s2 + $0x5c] sm:$0xf]
  %v159 = vld [vmem:[%s2 + $0x60] sm:$0xf]
  %v160 = vld [vmem:[%s2 + $0x64] sm:$0xf]
  %v161 = vld [vmem:[%s2 + $0x68] sm:$0xf]
  %v162 = vld [vmem:[%s2 + $0x6c] sm:$0xf]
  %v163 = vld [vmem:[%s2 + $0x70] sm:$0xf]
  %v164 = vld [vmem:[%s2 + $0x74] sm:$0xf]
  %v165 = vld [vmem:[%s2 + $0x78] sm:$0xf]
  %v166 = vld [vmem:[%s2 + $0x7c] sm:$0xf]
  %v167 = vld [vmem:[%s3] sm:$0xff]
  %v168 = vld [vmem:[%s3 + $0x8] sm:$0xff]
  %v169 = vld [vmem:[%s4] sm:$0xff]
  %v170 = vld [vmem:[%s4 + $0x8] sm:$0xff]
  %v171 = vld [vmem:[%s4 + $0x10] sm:$0xff]
  %v172 = vld [vmem:[%s4 + $0x18] sm:$0xff]
  %v173 = vld [vmem:[%s4 + $0x20] sm:$0xff]
  %v174 = vld [vmem:[%s4 + $0x28] sm:$0xff]
  %v175 = vld [vmem:[%s4 + $0x30] sm:$0xff]
  %v176 = vld [vmem:[%s4 + $0x38] sm:$0xff]
  %v177 = vld [vmem:[%s4 + $0x40] sm:$0xff]
  %v178 = vld [vmem:[%s4 + $0x48] sm:$0xff]
  %v179 = vld [vmem:[%s4 + $0x50] sm:$0xff]
  %v180 = vld [vmem:[%s4 + $0x58] sm:$0xff]
  %v181 = vld [vmem:[%s4 + $0x60] sm:$0xff]
  %v182 = vld [vmem:[%s4 + $0x68] sm:$0xff]
  %v183 = vld [vmem:[%s4 + $0x70] sm:$0xff]
  %v184 = vld [vmem:[%s4 + $0x78] sm:$0xff]
  %v185 = vld [vmem:[%s4 + $0x80] sm:$0xff]
  %v186 = vld [vmem:[%s4 + $0x88] sm:$0xff]
  %v187 = vld [vmem:[%s4 + $0x90] sm:$0xff]
  %v188 = vld [vmem:[%s4 + $0x98] sm:$0xff]
  %v189 = vld [vmem:[%s4 + $0xa0] sm:$0xff]
  %v190 = vld [vmem:[%s4 + $0xa8] sm:$0xff]
  %v191 = vld [vmem:[%s4 + $0xb0] sm:$0xff]
  %v192 = vld [vmem:[%s4 + $0xb8] sm:$0xff]
  %v193 = vld [vmem:[%s4 + $0xc0] sm:$0xff]
  %v194 = vld [vmem:[%s4 + $0xc8] sm:$0xff]
  %v195 = vld [vmem:[%s4 + $0xd0] sm:$0xff]
  %v196 = vld [vmem:[%s4 + $0xd8] sm:$0xff]
  %v197 = vld [vmem:[%s4 + $0xe0] sm:$0xff]
  %v198 = vld [vmem:[%s4 + $0xe8] sm:$0xff]
  %v199 = vld [vmem:[%s4 + $0xf0] sm:$0xff]
  %v200 = vld [vmem:[%s4 + $0xf8] sm:$0xff]
  %v201 = vld [vmem:[%s4 + $0x100] sm:$0xff]
  %v202 = vld [vmem:[%s4 + $0x108] sm:$0xff]
  %v203 = vld [vmem:[%s4 + $0x110] sm:$0xff]
  %v204 = vld [vmem:[%s4 + $0x118] sm:$0xff]
  %v205 = vld [vmem:[%s4 + $0x120] sm:$0xff]
  %v206 = vld [vmem:[%s4 + $0x128] sm:$0xff]
  %v207 = vld [vmem:[%s4 + $0x130] sm:$0xff]
  %v208 = vld [vmem:[%s4 + $0x138] sm:$0xff]
  %v209 = vld [vmem:[%s4 + $0x140] sm:$0xff]
  %v210 = vld [vmem:[%s4 + $0x148] sm:$0xff]
  %v211 = vld [vmem:[%s4 + $0x150] sm:$0xff]
  %v212 = vld [vmem:[%s4 + $0x158] sm:$0xff]
  %v213 = vld [vmem:[%s4 + $0x160] sm:$0xff]
  %v214 = vld [vmem:[%s4 + $0x168] sm:$0xff]
  %v215 = vld [vmem:[%s4 + $0x170] sm:$0xff]
  %v216 = vld [vmem:[%s4 + $0x178] sm:$0xff]
  %v217 = vld [vmem:[%s4 + $0x180] sm:$0xff]
  %v218 = vld [vmem:[%s4 + $0x188] sm:$0xff]
  %v219 = vld [vmem:[%s4 + $0x190] sm:$0xff]
  %v220 = vld [vmem:[%s4 + $0x198] sm:$0xff]
  %v221 = vld [vmem:[%s4 + $0x1a0] sm:$0xff]
  %v222 = vld [vmem:[%s4 + $0x1a8] sm:$0xff]
  %v223 = vld [vmem:[%s4 + $0x1b0] sm:$0xff]
  %v224 = vld [vmem:[%s4 + $0x1b8] sm:$0xff]
  %v225 = vld [vmem:[%s4 + $0x1c0] sm:$0xff]
  %v226 = vld [vmem:[%s4 + $0x1c8] sm:$0xff]
  %v227 = vld [vmem:[%s4 + $0x1d0] sm:$0xff]
  %v228 = vld [vmem:[%s4 + $0x1d8] sm:$0xff]
  %v229 = vld [vmem:[%s4 + $0x1e0] sm:$0xff]
  %v230 = vld [vmem:[%s4 + $0x1e8] sm:$0xff]
  %v231 = vld [vmem:[%s4 + $0x1f0] sm:$0xff]
  %v232 = vld [vmem:[%s4 + $0x1f8] sm:$0xff]
  %v233 = vld [vmem:[%s5] sm:$0xff]
  %v234 = vld [vmem:[%s5 + $0x8] sm:$0xff]
  %v235 = vld [vmem:[%s5 + $0x10] sm:$0xff]
  %v236 = vld [vmem:[%s5 + $0x18] sm:$0xff]
  %v237 = vld [vmem:[%s5 + $0x20] sm:$0xff]
  %v238 = vld [vmem:[%s5 + $0x28] sm:$0xff]
  %v239 = vld [vmem:[%s5 + $0x30] sm:$0xff]
  %v240 = vld [vmem:[%s5 + $0x38] sm:$0xff]
  %v241 = vld [vmem:[%s5 + $0x40] sm:$0xff]
  %v242 = vld [vmem:[%s5 + $0x48] sm:$0xff]
  %v243 = vld [vmem:[%s5 + $0x50] sm:$0xff]
  %v244 = vld [vmem:[%s5 + $0x58] sm:$0xff]
  %v245 = vld [vmem:[%s5 + $0x60] sm:$0xff]
  %v246 = vld [vmem:[%s5 + $0x68] sm:$0xff]
  %v247 = vld [vmem:[%s5 + $0x70] sm:$0xff]
  %v248 = vld [vmem:[%s5 + $0x78] sm:$0xff]
  %v249 = vld [vmem:[%s6] sm:$0xff]
  %v250 = vld [vmem:[%s6 + $0x8] sm:$0xff]
  %v251 = vld [vmem:[%s6 + $0x10] sm:$0xff]
  %v252 = vld [vmem:[%s6 + $0x18] sm:$0xff]
  %v253 = vld [vmem:[%s6 + $0x20] sm:$0xff]
  %v254 = vld [vmem:[%s6 + $0x28] sm:$0xff]
  %v255 = vld [vmem:[%s6 + $0x30] sm:$0xff]
  %v256 = vld [vmem:[%s6 + $0x38] sm:$0xff]
  %v257 = vld [vmem:[%s6 + $0x40] sm:$0xff]
  %v258 = vld [vmem:[%s6 + $0x48] sm:$0xff]
  %v259 = vld [vmem:[%s6 + $0x50] sm:$0xff]
  %v260 = vld [vmem:[%s6 + $0x58] sm:$0xff]
  %v261 = vld [vmem:[%s6 + $0x60] sm:$0xff]
  %v262 = vld [vmem:[%s6 + $0x68] sm:$0xff]
  %v263 = vld [vmem:[%s6 + $0x70] sm:$0xff]
  %v264 = vld [vmem:[%s6 + $0x78] sm:$0xff]
  %v265 = vld [vmem:[%s6 + $0x80] sm:$0xff]
  %v266 = vld [vmem:[%s6 + $0x88] sm:$0xff]
  %v267 = vld [vmem:[%s6 + $0x90] sm:$0xff]
  %v268 = vld [vmem:[%s6 + $0x98] sm:$0xff]
  %v269 = vld [vmem:[%s6 + $0xa0] sm:$0xff]
  %v270 = vld [vmem:[%s6 + $0xa8] sm:$0xff]
  %v271 = vld [vmem:[%s6 + $0xb0] sm:$0xff]
  %v272 = vld [vmem:[%s6 + $0xb8] sm:$0xff]
  %v273 = vld [vmem:[%s6 + $0xc0] sm:$0xff]
  %v274 = vld [vmem:[%s6 + $0xc8] sm:$0xff]
  %v275 = vld [vmem:[%s6 + $0xd0] sm:$0xff]
  %v276 = vld [vmem:[%s6 + $0xd8] sm:$0xff]
  %v277 = vld [vmem:[%s6 + $0xe0] sm:$0xff]
  %v278 = vld [vmem:[%s6 + $0xe8] sm:$0xff]
  %v279 = vld [vmem:[%s6 + $0xf0] sm:$0xff]
  %v280 = vld [vmem:[%s6 + $0xf8] sm:$0xff]
  %v281 = vld [vmem:[%s6 + $0x100] sm:$0xff]
  %v282 = vld [vmem:[%s6 + $0x108] sm:$0xff]
  %v283 = vld [vmem:[%s6 + $0x110] sm:$0xff]
  %v284 = vld [vmem:[%s6 + $0x118] sm:$0xff]
  %v285 = vld [vmem:[%s6 + $0x120] sm:$0xff]
  %v286 = vld [vmem:[%s6 + $0x128] sm:$0xff]
  %v287 = vld [vmem:[%s6 + $0x130] sm:$0xff]
  %v288 = vld [vmem:[%s6 + $0x138] sm:$0xff]
  %v289 = vld [vmem:[%s6 + $0x140] sm:$0xff]
  %v290 = vld [vmem:[%s6 + $0x148] sm:$0xff]
  %v291 = vld [vmem:[%s6 + $0x150] sm:$0xff]
  %v292 = vld [vmem:[%s6 + $0x158] sm:$0xff]
  %v293 = vld [vmem:[%s6 + $0x160] sm:$0xff]
  %v294 = vld [vmem:[%s6 + $0x168] sm:$0xff]
  %v295 = vld [vmem:[%s6 + $0x170] sm:$0xff]
  %v296 = vld [vmem:[%s6 + $0x178] sm:$0xff]
  %v297 = vld [vmem:[%s6 + $0x180] sm:$0xff]
  %v298 = vld [vmem:[%s6 + $0x188] sm:$0xff]
  %v299 = vld [vmem:[%s6 + $0x190] sm:$0xff]
  %v300 = vld [vmem:[%s6 + $0x198] sm:$0xff]
  %v301 = vld [vmem:[%s6 + $0x1a0] sm:$0xff]
  %v302 = vld [vmem:[%s6 + $0x1a8] sm:$0xff]
  %v303 = vld [vmem:[%s6 + $0x1b0] sm:$0xff]
  %v304 = vld [vmem:[%s6 + $0x1b8] sm:$0xff]
  %v305 = vld [vmem:[%s6 + $0x1c0] sm:$0xff]
  %v306 = vld [vmem:[%s6 + $0x1c8] sm:$0xff]
  %v307 = vld [vmem:[%s6 + $0x1d0] sm:$0xff]
  %v308 = vld [vmem:[%s6 + $0x1d8] sm:$0xff]
  %v309 = vld [vmem:[%s6 + $0x1e0] sm:$0xff]
  %v310 = vld [vmem:[%s6 + $0x1e8] sm:$0xff]
  %v311 = vld [vmem:[%s6 + $0x1f0] sm:$0xff]
  %v312 = vld [vmem:[%s6 + $0x1f8] sm:$0xff]
  %v313 = vpack.c.bf16 %v28, %v27
  %v314 = vpack.c.bf16 %v30, %v29
  %v315 = vpack.c.bf16 %v32, %v31
  %v316 = vpack.c.bf16 %v34, %v33
  %v317 = vlaneseq
  %v318 = vshrl.u32 %v317, 7
  %v319 = vsub.s32 0, %v318
  %v320 = vrot.slane %v167, %v319
  %v325 = vunpack.c.l.b16 %v135
  %v326 = vunpack.c.l.b16 %v136
  %v327 = vunpack.c.l.b16 %v137
  %v328 = vunpack.c.l.b16 %v138
  %v329 = vpack.c.b16 %v326, %v325
  %v330 = vpack.c.b16 %v328, %v327
  %vm331 = vcmask 261120
  %v333 = vsel %vm331, %v313, 0
  %v336 = vsel %vm331, %v314, 0
  %v339 = vsel %vm331, %v315, 0
  %v342 = vsel %vm331, %v316, 0
  %v345 = vsel %vm331, %v329, 0
  %v348 = vsel %vm331, %v330, 0
  %350 = vmatprep.subr.bf16.mxu0 0
  %351 = vmatpush1.bf16.xpose.msra.mxu0 %v345
  %352 = vmatprep.subr.bf16.mxu0 0
  %353 = vmatpush1.bf16.xpose.msra.mxu0 %v348
  %354 = vmatprep.subr.bf16.mxu0 0
  %355 = vmatpush1.bf16.xpose.msra.mxu0 0
  %356 = vmatprep.subr.bf16.mxu0 0
  %357 = vmatpush1.bf16.xpose.msra.mxu0 0
  %358 = vmatprep.subr.bf16.mxu0 0
  %359 = vmatpush1.bf16.xpose.msra.mxu0 0
  %360 = vmatprep.subr.bf16.mxu0 0
  %361 = vmatpush1.bf16.xpose.msra.mxu0 0
  %362 = vmatprep.subr.bf16.mxu0 0
  %363 = vmatpush1.bf16.xpose.msra.mxu0 0
  %364 = vmatprep.subr.bf16.mxu0 0
  %365 = vmatpush1.bf16.xpose.msra.mxu0 0
  %366 = vmatprep.subr.bf16.mxu0 0
  %367 = vmatpush1.bf16.xpose.msra.mxu0 0
  %368 = vmatprep.subr.bf16.mxu0 0
  %369 = vmatpush1.bf16.xpose.msra.mxu0 0
  %370 = vmatprep.subr.bf16.mxu0 0
  %371 = vmatpush1.bf16.xpose.msra.mxu0 0
  %372 = vmatprep.subr.bf16.mxu0 0
  %373 = vmatpush1.bf16.xpose.msra.mxu0 0
  %374 = vmatprep.subr.bf16.mxu0 0
  %375 = vmatpush1.bf16.xpose.msra.mxu0 0
  %376 = vmatprep.subr.bf16.mxu0 0
  %377 = vmatpush1.bf16.xpose.msra.mxu0 0
  %378 = vmatprep.subr.bf16.mxu0 0
  %379 = vmatpush1.bf16.xpose.msra.mxu0 0
  %380 = vmatprep.subr.bf16.mxu0 0
  %381 = vmatpush1.bf16.xpose.msra.mxu0 0
  %382 = vmatprep.mubr.bf16.mxu0 0
  %383 = vmatmul.mubr.bf16.gmra.mrb[0].mxu0 %v333
  %v384 = vpop.f32.mrb[0].mxu0
  %v385 = vadd.f32 %v320, %v384
  %v386 = vpop.f32.mrb[0].mxu0
  %v387 = vpop.f32.mrb[0].mxu0
  %v388 = vadd.f32 %v320, %v387
  %v389 = vpop.f32.mrb[0].mxu0
  %390 = vmatprep.mubr.bf16.mxu0 0
  %391 = vmatmul.mubr.bf16.gmra.mrb[0].mxu0 %v336
  %v392 = vpop.f32.mrb[0].mxu0
  %v393 = vadd.f32 %v320, %v392
  %v394 = vpop.f32.mrb[0].mxu0
  %v395 = vpop.f32.mrb[0].mxu0
  %v396 = vadd.f32 %v320, %v395
  %v397 = vpop.f32.mrb[0].mxu0
  %398 = vmatprep.mubr.bf16.mxu0 0
  %399 = vmatmul.mubr.bf16.gmra.mrb[0].mxu0 %v339
  %v400 = vpop.f32.mrb[0].mxu0
  %v401 = vadd.f32 %v320, %v400
  %v402 = vpop.f32.mrb[0].mxu0
  %v403 = vpop.f32.mrb[0].mxu0
  %v404 = vadd.f32 %v320, %v403
  %v405 = vpop.f32.mrb[0].mxu0
  %406 = vmatprep.mubr.bf16.mxu0 0
  %407 = vmatmul.mubr.bf16.gmra.mrb[0].mxu0 %v342
  %v408 = vpop.f32.mrb[0].mxu0
  %v409 = vadd.f32 %v320, %v408
  %v410 = vpop.f32.mrb[0].mxu0
  %v411 = vpop.f32.mrb[0].mxu0
  %v412 = vadd.f32 %v320, %v411
  %v413 = vpop.f32.mrb[0].mxu0
  %414 = vdwg.mxu0
  %v415 = vlaneseq
  %v416 = vshrl.u32 %v415, 7
  %v417 = vsub.s32 1, %v416
  %v418 = vrot.slane %v167, %v417
  %v423 = vunpack.c.l.b16 %v139
  %v424 = vunpack.c.l.b16 %v140
  %v425 = vunpack.c.l.b16 %v141
  %v426 = vunpack.c.l.b16 %v142
  %v427 = vpack.c.b16 %v424, %v423
  %v428 = vpack.c.b16 %v426, %v425
  %v430 = vsel %vm331, %v427, 0
  %v433 = vsel %vm331, %v428, 0
  %435 = vmatprep.subr.bf16.mxu0 0
  %436 = vmatpush1.bf16.xpose.msra.mxu0 %v430
  %437 = vmatprep.subr.bf16.mxu0 0
  %438 = vmatpush1.bf16.xpose.msra.mxu0 %v433
  %439 = vmatprep.subr.bf16.mxu0 0
  %440 = vmatpush1.bf16.xpose.msra.mxu0 0
  %441 = vmatprep.subr.bf16.mxu0 0
  %442 = vmatpush1.bf16.xpose.msra.mxu0 0
  %443 = vmatprep.subr.bf16.mxu0 0
  %444 = vmatpush1.bf16.xpose.msra.mxu0 0
  %445 = vmatprep.subr.bf16.mxu0 0
  %446 = vmatpush1.bf16.xpose.msra.mxu0 0
  %447 = vmatprep.subr.bf16.mxu0 0
  %448 = vmatpush1.bf16.xpose.msra.mxu0 0
  %449 = vmatprep.subr.bf16.mxu0 0
  %450 = vmatpush1.bf16.xpose.msra.mxu0 0
  %451 = vmatprep.subr.bf16.mxu0 0
  %452 = vmatpush1.bf16.xpose.msra.mxu0 0
  %453 = vmatprep.subr.bf16.mxu0 0
  %454 = vmatpush1.bf16.xpose.msra.mxu0 0
  %455 = vmatprep.subr.bf16.mxu0 0
  %456 = vmatpush1.bf16.xpose.msra.mxu0 0
  %457 = vmatprep.subr.bf16.mxu0 0
  %458 = vmatpush1.bf16.xpose.msra.mxu0 0
  %459 = vmatprep.subr.bf16.mxu0 0
  %460 = vmatpush1.bf16.xpose.msra.mxu0 0
  %461 = vmatprep.subr.bf16.mxu0 0
  %462 = vmatpush1.bf16.xpose.msra.mxu0 0
  %463 = vmatprep.subr.bf16.mxu0 0
  %464 = vmatpush1.bf16.xpose.msra.mxu0 0
  %465 = vmatprep.subr.bf16.mxu0 0
  %466 = vmatpush1.bf16.xpose.msra.mxu0 0
  %467 = vmatprep.mubr.bf16.mxu0 0
  %468 = vmatmul.mubr.bf16.gmra.mrb[0].mxu0 %v333
  %v469 = vpop.f32.mrb[0].mxu0
  %v470 = vadd.f32 %v418, %v469
  %v471 = vpop.f32.mrb[0].mxu0
  %v472 = vpop.f32.mrb[0].mxu0
  %v473 = vadd.f32 %v418, %v472
  %v474 = vpop.f32.mrb[0].mxu0
  %475 = vmatprep.mubr.bf16.mxu0 0
  %476 = vmatmul.mubr.bf16.gmra.mrb[0].mxu0 %v336
  %v477 = vpop.f32.mrb[0].mxu0
  %v478 = vadd.f32 %v418, %v477
  %v479 = vpop.f32.mrb[0].mxu0
  %v480 = vpop.f32.mrb[0].mxu0
  %v481 = vadd.f32 %v418, %v480
  %v482 = vpop.f32.mrb[0].mxu0
  %483 = vmatprep.mubr.bf16.mxu0 0
  %484 = vmatmul.mubr.bf16.gmra.mrb[0].mxu0 %v339
  %v485 = vpop.f32.mrb[0].mxu0
  %v486 = vadd.f32 %v418, %v485
  %v487 = vpop.f32.mrb[0].mxu0
  %v488 = vpop.f32.mrb[0].mxu0
  %v489 = vadd.f32 %v418, %v488
  %v490 = vpop.f32.mrb[0].mxu0
  %491 = vmatprep.mubr.bf16.mxu0 0
  %492 = vmatmul.mubr.bf16.gmra.mrb[0].mxu0 %v342
  %v493 = vpop.f32.mrb[0].mxu0
  %v494 = vadd.f32 %v418, %v493
  %v495 = vpop.f32.mrb[0].mxu0
  %v496 = vpop.f32.mrb[0].mxu0
  %v497 = vadd.f32 %v418, %v496
  %v498 = vpop.f32.mrb[0].mxu0
  %499 = vdwg.mxu0
  %v500 = vlaneseq
  %v501 = vshrl.u32 %v500, 7
  %v502 = vsub.s32 2, %v501
  %v503 = vrot.slane %v167, %v502
  %v508 = vunpack.c.l.b16 %v143
  %v509 = vunpack.c.l.b16 %v144
  %v510 = vunpack.c.l.b16 %v145
  %v511 = vunpack.c.l.b16 %v146
  %v512 = vpack.c.b16 %v509, %v508
  %v513 = vpack.c.b16 %v511, %v510
  %v515 = vsel %vm331, %v512, 0
  %v518 = vsel %vm331, %v513, 0
  %520 = vmatprep.subr.bf16.mxu0 0
  %521 = vmatpush1.bf16.xpose.msra.mxu0 %v515
  %522 = vmatprep.subr.bf16.mxu0 0
  %523 = vmatpush1.bf16.xpose.msra.mxu0 %v518
  %524 = vmatprep.subr.bf16.mxu0 0
  %525 = vmatpush1.bf16.xpose.msra.mxu0 0
  %526 = vmatprep.subr.bf16.mxu0 0
  %527 = vmatpush1.bf16.xpose.msra.mxu0 0
  %528 = vmatprep.subr.bf16.mxu0 0
  %529 = vmatpush1.bf16.xpose.msra.mxu0 0
  %530 = vmatprep.subr.bf16.mxu0 0
  %531 = vmatpush1.bf16.xpose.msra.mxu0 0
  %532 = vmatprep.subr.bf16.mxu0 0
  %533 = vmatpush1.bf16.xpose.msra.mxu0 0
  %534 = vmatprep.subr.bf16.mxu0 0
  %535 = vmatpush1.bf16.xpose.msra.mxu0 0
  %536 = vmatprep.subr.bf16.mxu0 0
  %537 = vmatpush1.bf16.xpose.msra.mxu0 0
  %538 = vmatprep.subr.bf16.mxu0 0
  %539 = vmatpush1.bf16.xpose.msra.mxu0 0
  %540 = vmatprep.subr.bf16.mxu0 0
  %541 = vmatpush1.bf16.xpose.msra.mxu0 0
  %542 = vmatprep.subr.bf16.mxu0 0
  %543 = vmatpush1.bf16.xpose.msra.mxu0 0
  %544 = vmatprep.subr.bf16.mxu0 0
  %545 = vmatpush1.bf16.xpose.msra.mxu0 0
  %546 = vmatprep.subr.bf16.mxu0 0
  %547 = vmatpush1.bf16.xpose.msra.mxu0 0
  %548 = vmatprep.subr.bf16.mxu0 0
  %549 = vmatpush1.bf16.xpose.msra.mxu0 0
  %550 = vmatprep.subr.bf16.mxu0 0
  %551 = vmatpush1.bf16.xpose.msra.mxu0 0
  %552 = vmatprep.mubr.bf16.mxu0 0
  %553 = vmatmul.mubr.bf16.gmra.mrb[0].mxu0 %v333
  %v554 = vpop.f32.mrb[0].mxu0
  %v555 = vadd.f32 %v503, %v554
  %v556 = vpop.f32.mrb[0].mxu0
  %v557 = vpop.f32.mrb[0].mxu0
  %v558 = vadd.f32 %v503, %v557
  %v559 = vpop.f32.mrb[0].mxu0
  %560 = vmatprep.mubr.bf16.mxu0 0
  %561 = vmatmul.mubr.bf16.gmra.mrb[0].mxu0 %v336
  %v562 = vpop.f32.mrb[0].mxu0
  %v563 = vadd.f32 %v503, %v562
  %v564 = vpop.f32.mrb[0].mxu0
  %v565 = vpop.f32.mrb[0].mxu0
  %v566 = vadd.f32 %v503, %v565
  %v567 = vpop.f32.mrb[0].mxu0
  %568 = vmatprep.mubr.bf16.mxu0 0
  %569 = vmatmul.mubr.bf16.gmra.mrb[0].mxu0 %v339
  %v570 = vpop.f32.mrb[0].mxu0
  %v571 = vadd.f32 %v503, %v570
  %v572 = vpop.f32.mrb[0].mxu0
  %v573 = vpop.f32.mrb[0].mxu0
  %v574 = vadd.f32 %v503, %v573
  %v575 = vpop.f32.mrb[0].mxu0
  %576 = vmatprep.mubr.bf16.mxu0 0
  %577 = vmatmul.mubr.bf16.gmra.mrb[0].mxu0 %v342
  %v578 = vpop.f32.mrb[0].mxu0
  %v579 = vadd.f32 %v503, %v578
  %v580 = vpop.f32.mrb[0].mxu0
  %v581 = vpop.f32.mrb[0].mxu0
  %v582 = vadd.f32 %v503, %v581
  %v583 = vpop.f32.mrb[0].mxu0
  %584 = vdwg.mxu0
  %v585 = vmul.f32 %v385, %v169
  %v586 = vmul.f32 %v388, %v170
  %v587 = vmul.f32 %v393, %v171
  %v588 = vmul.f32 %v396, %v172
  %v589 = vmul.f32 %v401, %v173
  %v590 = vmul.f32 %v404, %v174
  %v591 = vmul.f32 %v409, %v175
  %v592 = vmul.f32 %v412, %v176
  %v593 = vmul.f32 %v385, %v177
  %v594 = vmul.f32 %v388, %v178
  %v595 = vmul.f32 %v393, %v179
  %v596 = vmul.f32 %v396, %v180
  %v597 = vmul.f32 %v401, %v181
  %v598 = vmul.f32 %v404, %v182
  %v599 = vmul.f32 %v409, %v183
  %v600 = vmul.f32 %v412, %v184
  %v601 = vmul.f32 %v385, %v185
  %v602 = vmul.f32 %v388, %v186
  %v603 = vmul.f32 %v393, %v187
  %v604 = vmul.f32 %v396, %v188
  %v605 = vmul.f32 %v401, %v189
  %v606 = vmul.f32 %v404, %v190
  %v607 = vmul.f32 %v409, %v191
  %v608 = vmul.f32 %v412, %v192
  %v609 = vmul.f32 %v385, %v193
  %v610 = vmul.f32 %v388, %v194
  %v611 = vmul.f32 %v393, %v195
  %v612 = vmul.f32 %v396, %v196
  %v613 = vmul.f32 %v401, %v197
  %v614 = vmul.f32 %v404, %v198
  %v615 = vmul.f32 %v409, %v199
  %v616 = vmul.f32 %v412, %v200
  %v617 = vmul.f32 %v385, %v201
  %v618 = vmul.f32 %v388, %v202
  %v619 = vmul.f32 %v393, %v203
  %v620 = vmul.f32 %v396, %v204
  %v621 = vmul.f32 %v401, %v205
  %v622 = vmul.f32 %v404, %v206
  %v623 = vmul.f32 %v409, %v207
  %v624 = vmul.f32 %v412, %v208
  %v625 = vmul.f32 %v385, %v209
  %v626 = vmul.f32 %v388, %v210
  %v627 = vmul.f32 %v393, %v211
  %v628 = vmul.f32 %v396, %v212
  %v629 = vmul.f32 %v401, %v213
  %v630 = vmul.f32 %v404, %v214
  %v631 = vmul.f32 %v409, %v215
  %v632 = vmul.f32 %v412, %v216
  %v633 = vmul.f32 %v385, %v217
  %v634 = vmul.f32 %v388, %v218
  %v635 = vmul.f32 %v393, %v219
  %v636 = vmul.f32 %v396, %v220
  %v637 = vmul.f32 %v401, %v221
  %v638 = vmul.f32 %v404, %v222
  %v639 = vmul.f32 %v409, %v223
  %v640 = vmul.f32 %v412, %v224
  %v641 = vmul.f32 %v385, %v225
  %v642 = vmul.f32 %v388, %v226
  %v643 = vmul.f32 %v393, %v227
  %v644 = vmul.f32 %v396, %v228
  %v645 = vmul.f32 %v401, %v229
  %v646 = vmul.f32 %v404, %v230
  %v647 = vmul.f32 %v409, %v231
  %v648 = vmul.f32 %v412, %v232
  %v649 = vpack.c.bf16 %v586, %v585
  %v650 = vpack.c.bf16 %v588, %v587
  %v651 = vpack.c.bf16 %v590, %v589
  %v652 = vpack.c.bf16 %v592, %v591
  %v653 = vpack.c.bf16 %v594, %v593
  %v654 = vpack.c.bf16 %v596, %v595
  %v655 = vpack.c.bf16 %v598, %v597
  %v656 = vpack.c.bf16 %v600, %v599
  %v657 = vpack.c.bf16 %v602, %v601
  %v658 = vpack.c.bf16 %v604, %v603
  %v659 = vpack.c.bf16 %v606, %v605
  %v660 = vpack.c.bf16 %v608, %v607
  %v661 = vpack.c.bf16 %v610, %v609
  %v662 = vpack.c.bf16 %v612, %v611
  %v663 = vpack.c.bf16 %v614, %v613
  %v664 = vpack.c.bf16 %v616, %v615
  %v665 = vpack.c.bf16 %v618, %v617
  %v666 = vpack.c.bf16 %v620, %v619
  %v667 = vpack.c.bf16 %v622, %v621
  %v668 = vpack.c.bf16 %v624, %v623
  %v669 = vpack.c.bf16 %v626, %v625
  %v670 = vpack.c.bf16 %v628, %v627
  %v671 = vpack.c.bf16 %v630, %v629
  %v672 = vpack.c.bf16 %v632, %v631
  %v673 = vpack.c.bf16 %v634, %v633
  %v674 = vpack.c.bf16 %v636, %v635
  %v675 = vpack.c.bf16 %v638, %v637
  %v676 = vpack.c.bf16 %v640, %v639
  %v677 = vpack.c.bf16 %v642, %v641
  %v678 = vpack.c.bf16 %v644, %v643
  %v679 = vpack.c.bf16 %v646, %v645
  %v680 = vpack.c.bf16 %v648, %v647
  %v681 = vpack.c.bf16 %v473, %v470
  %v682 = vpack.c.bf16 %v481, %v478
  %v683 = vpack.c.bf16 %v489, %v486
  %v684 = vpack.c.bf16 %v497, %v494
  %v686 = vsel %vm331, %v649, 0
  %v689 = vsel %vm331, %v650, 0
  %v692 = vsel %vm331, %v651, 0
  %v695 = vsel %vm331, %v652, 0
  %v698 = vsel %vm331, %v653, 0
  %v701 = vsel %vm331, %v654, 0
  %v704 = vsel %vm331, %v655, 0
  %v707 = vsel %vm331, %v656, 0
  %v710 = vsel %vm331, %v657, 0
  %v713 = vsel %vm331, %v658, 0
  %v716 = vsel %vm331, %v659, 0
  %v719 = vsel %vm331, %v660, 0
  %v722 = vsel %vm331, %v661, 0
  %v725 = vsel %vm331, %v662, 0
  %v728 = vsel %vm331, %v663, 0
  %v731 = vsel %vm331, %v664, 0
  %v734 = vsel %vm331, %v665, 0
  %v737 = vsel %vm331, %v666, 0
  %v740 = vsel %vm331, %v667, 0
  %v743 = vsel %vm331, %v668, 0
  %v746 = vsel %vm331, %v669, 0
  %v749 = vsel %vm331, %v670, 0
  %v752 = vsel %vm331, %v671, 0
  %v755 = vsel %vm331, %v672, 0
  %v758 = vsel %vm331, %v673, 0
  %v761 = vsel %vm331, %v674, 0
  %v764 = vsel %vm331, %v675, 0
  %v767 = vsel %vm331, %v676, 0
  %v770 = vsel %vm331, %v677, 0
  %v773 = vsel %vm331, %v678, 0
  %v776 = vsel %vm331, %v679, 0
  %v779 = vsel %vm331, %v680, 0
  %v782 = vsel %vm331, %v681, 0
  %v785 = vsel %vm331, %v682, 0
  %v788 = vsel %vm331, %v683, 0
  %v791 = vsel %vm331, %v684, 0
  %793 = vmatprep.subr.bf16.mxu0 0
  %794 = vmatpush1.bf16.xpose.msra.mxu0 %v782
  %795 = vmatprep.subr.bf16.mxu0 0
  %796 = vmatpush1.bf16.xpose.msra.mxu0 %v785
  %797 = vmatprep.subr.bf16.mxu0 0
  %798 = vmatpush1.bf16.xpose.msra.mxu0 %v788
  %799 = vmatprep.subr.bf16.mxu0 0
  %800 = vmatpush1.bf16.xpose.msra.mxu0 %v791
  %801 = vmatprep.subr.bf16.mxu0 0
  %802 = vmatpush1.bf16.xpose.msra.mxu0 0
  %803 = vmatprep.subr.bf16.mxu0 0
  %804 = vmatpush1.bf16.xpose.msra.mxu0 0
  %805 = vmatprep.subr.bf16.mxu0 0
  %806 = vmatpush1.bf16.xpose.msra.mxu0 0
  %807 = vmatprep.subr.bf16.mxu0 0
  %808 = vmatpush1.bf16.xpose.msra.mxu0 0
  %809 = vmatprep.subr.bf16.mxu0 0
  %810 = vmatpush1.bf16.xpose.msra.mxu0 0
  %811 = vmatprep.subr.bf16.mxu0 0
  %812 = vmatpush1.bf16.xpose.msra.mxu0 0
  %813 = vmatprep.subr.bf16.mxu0 0
  %814 = vmatpush1.bf16.xpose.msra.mxu0 0
  %815 = vmatprep.subr.bf16.mxu0 0
  %816 = vmatpush1.bf16.xpose.msra.mxu0 0
  %817 = vmatprep.subr.bf16.mxu0 0
  %818 = vmatpush1.bf16.xpose.msra.mxu0 0
  %819 = vmatprep.subr.bf16.mxu0 0
  %820 = vmatpush1.bf16.xpose.msra.mxu0 0
  %821 = vmatprep.subr.bf16.mxu0 0
  %822 = vmatpush1.bf16.xpose.msra.mxu0 0
  %823 = vmatprep.subr.bf16.mxu0 0
  %824 = vmatpush1.bf16.xpose.msra.mxu0 0
  %825 = vmatprep.mubr.bf16.mxu0 0
  %826 = vmatmul.mubr.bf16.gmra.mrb[0].mxu0 %v686
  %v827 = vpop.f32.mrb[0].mxu0
  %v828 = vadd.f32 0.0, %v827
  %v829 = vpop.f32.mrb[0].mxu0
  %v830 = vpop.f32.mrb[0].mxu0
  %v831 = vadd.f32 0.0, %v830
  %v832 = vpop.f32.mrb[0].mxu0
  %833 = vmatprep.mubr.bf16.mxu0 0
  %834 = vmatmul.mubr.bf16.gmra.mrb[0].mxu0 %v689
  %v835 = vpop.f32.mrb[0].mxu0
  %v836 = vadd.f32 0.0, %v835
  %v837 = vpop.f32.mrb[0].mxu0
  %v838 = vpop.f32.mrb[0].mxu0
  %v839 = vadd.f32 0.0, %v838
  %v840 = vpop.f32.mrb[0].mxu0
  %841 = vmatprep.mubr.bf16.mxu0 0
  %842 = vmatmul.mubr.bf16.gmra.mrb[0].mxu0 %v692
  %v843 = vpop.f32.mrb[0].mxu0
  %v844 = vadd.f32 0.0, %v843
  %v845 = vpop.f32.mrb[0].mxu0
  %v846 = vpop.f32.mrb[0].mxu0
  %v847 = vadd.f32 0.0, %v846
  %v848 = vpop.f32.mrb[0].mxu0
  %849 = vmatprep.mubr.bf16.mxu0 0
  %850 = vmatmul.mubr.bf16.gmra.mrb[0].mxu0 %v695
  %v851 = vpop.f32.mrb[0].mxu0
  %v852 = vadd.f32 0.0, %v851
  %v853 = vpop.f32.mrb[0].mxu0
  %v854 = vpop.f32.mrb[0].mxu0
  %v855 = vadd.f32 0.0, %v854
  %v856 = vpop.f32.mrb[0].mxu0
  %857 = vmatprep.mubr.bf16.mxu0 0
  %858 = vmatmul.mubr.bf16.gmra.mrb[0].mxu0 %v698
  %v859 = vpop.f32.mrb[0].mxu0
  %v860 = vadd.f32 0.0, %v859
  %v861 = vpop.f32.mrb[0].mxu0
  %v862 = vpop.f32.mrb[0].mxu0
  %v863 = vadd.f32 0.0, %v862
  %v864 = vpop.f32.mrb[0].mxu0
  %865 = vmatprep.mubr.bf16.mxu0 0
  %866 = vmatmul.mubr.bf16.gmra.mrb[0].mxu0 %v701
  %v867 = vpop.f32.mrb[0].mxu0
  %v868 = vadd.f32 0.0, %v867
  %v869 = vpop.f32.mrb[0].mxu0
  %v870 = vpop.f32.mrb[0].mxu0
  %v871 = vadd.f32 0.0, %v870
  %v872 = vpop.f32.mrb[0].mxu0
  %873 = vmatprep.mubr.bf16.mxu0 0
  %874 = vmatmul.mubr.bf16.gmra.mrb[0].mxu0 %v704
  %v875 = vpop.f32.mrb[0].mxu0
  %v876 = vadd.f32 0.0, %v875
  %v877 = vpop.f32.mrb[0].mxu0
  %v878 = vpop.f32.mrb[0].mxu0
  %v879 = vadd.f32 0.0, %v878
  %v880 = vpop.f32.mrb[0].mxu0
  %881 = vmatprep.mubr.bf16.mxu0 0
  %882 = vmatmul.mubr.bf16.gmra.mrb[0].mxu0 %v707
  %v883 = vpop.f32.mrb[0].mxu0
  %v884 = vadd.f32 0.0, %v883
  %v885 = vpop.f32.mrb[0].mxu0
  %v886 = vpop.f32.mrb[0].mxu0
  %v887 = vadd.f32 0.0, %v886
  %v888 = vpop.f32.mrb[0].mxu0
  %889 = vmatprep.mubr.bf16.mxu0 0
  %890 = vmatmul.mubr.bf16.gmra.mrb[0].mxu0 %v710
  %v891 = vpop.f32.mrb[0].mxu0
  %v892 = vadd.f32 0.0, %v891
  %v893 = vpop.f32.mrb[0].mxu0
  %v894 = vpop.f32.mrb[0].mxu0
  %v895 = vadd.f32 0.0, %v894
  %v896 = vpop.f32.mrb[0].mxu0
  %897 = vmatprep.mubr.bf16.mxu0 0
  %898 = vmatmul.mubr.bf16.gmra.mrb[0].mxu0 %v713
  %v899 = vpop.f32.mrb[0].mxu0
  %v900 = vadd.f32 0.0, %v899
  %v901 = vpop.f32.mrb[0].mxu0
  %v902 = vpop.f32.mrb[0].mxu0
  %v903 = vadd.f32 0.0, %v902
  %v904 = vpop.f32.mrb[0].mxu0
  %905 = vmatprep.mubr.bf16.mxu0 0
  %906 = vmatmul.mubr.bf16.gmra.mrb[0].mxu0 %v716
  %v907 = vpop.f32.mrb[0].mxu0
  %v908 = vadd.f32 0.0, %v907
  %v909 = vpop.f32.mrb[0].mxu0
  %v910 = vpop.f32.mrb[0].mxu0
  %v911 = vadd.f32 0.0, %v910
  %v912 = vpop.f32.mrb[0].mxu0
  %913 = vmatprep.mubr.bf16.mxu0 0
  %914 = vmatmul.mubr.bf16.gmra.mrb[0].mxu0 %v719
  %v915 = vpop.f32.mrb[0].mxu0
  %v916 = vadd.f32 0.0, %v915
  %v917 = vpop.f32.mrb[0].mxu0
  %v918 = vpop.f32.mrb[0].mxu0
  %v919 = vadd.f32 0.0, %v918
  %v920 = vpop.f32.mrb[0].mxu0
  %921 = vmatprep.mubr.bf16.mxu0 0
  %922 = vmatmul.mubr.bf16.gmra.mrb[0].mxu0 %v722
  %v923 = vpop.f32.mrb[0].mxu0
  %v924 = vadd.f32 0.0, %v923
  %v925 = vpop.f32.mrb[0].mxu0
  %v926 = vpop.f32.mrb[0].mxu0
  %v927 = vadd.f32 0.0, %v926
  %v928 = vpop.f32.mrb[0].mxu0
  %929 = vmatprep.mubr.bf16.mxu0 0
  %930 = vmatmul.mubr.bf16.gmra.mrb[0].mxu0 %v725
  %v931 = vpop.f32.mrb[0].mxu0
  %v932 = vadd.f32 0.0, %v931
  %v933 = vpop.f32.mrb[0].mxu0
  %v934 = vpop.f32.mrb[0].mxu0
  %v935 = vadd.f32 0.0, %v934
  %v936 = vpop.f32.mrb[0].mxu0
  %937 = vmatprep.mubr.bf16.mxu0 0
  %938 = vmatmul.mubr.bf16.gmra.mrb[0].mxu0 %v728
  %v939 = vpop.f32.mrb[0].mxu0
  %v940 = vadd.f32 0.0, %v939
  %v941 = vpop.f32.mrb[0].mxu0
  %v942 = vpop.f32.mrb[0].mxu0
  %v943 = vadd.f32 0.0, %v942
  %v944 = vpop.f32.mrb[0].mxu0
  %945 = vmatprep.mubr.bf16.mxu0 0
  %946 = vmatmul.mubr.bf16.gmra.mrb[0].mxu0 %v731
  %v947 = vpop.f32.mrb[0].mxu0
  %v948 = vadd.f32 0.0, %v947
  %v949 = vpop.f32.mrb[0].mxu0
  %v950 = vpop.f32.mrb[0].mxu0
  %v951 = vadd.f32 0.0, %v950
  %v952 = vpop.f32.mrb[0].mxu0
  %953 = vmatprep.mubr.bf16.mxu0 0
  %954 = vmatmul.mubr.bf16.gmra.mrb[0].mxu0 %v734
  %v955 = vpop.f32.mrb[0].mxu0
  %v956 = vadd.f32 0.0, %v955
  %v957 = vpop.f32.mrb[0].mxu0
  %v958 = vpop.f32.mrb[0].mxu0
  %v959 = vadd.f32 0.0, %v958
  %v960 = vpop.f32.mrb[0].mxu0
  %961 = vmatprep.mubr.bf16.mxu0 0
  %962 = vmatmul.mubr.bf16.gmra.mrb[0].mxu0 %v737
  %v963 = vpop.f32.mrb[0].mxu0
  %v964 = vadd.f32 0.0, %v963
  %v965 = vpop.f32.mrb[0].mxu0
  %v966 = vpop.f32.mrb[0].mxu0
  %v967 = vadd.f32 0.0, %v966
  %v968 = vpop.f32.mrb[0].mxu0
  %969 = vmatprep.mubr.bf16.mxu0 0
  %970 = vmatmul.mubr.bf16.gmra.mrb[0].mxu0 %v740
  %v971 = vpop.f32.mrb[0].mxu0
  %v972 = vadd.f32 0.0, %v971
  %v973 = vpop.f32.mrb[0].mxu0
  %v974 = vpop.f32.mrb[0].mxu0
  %v975 = vadd.f32 0.0, %v974
  %v976 = vpop.f32.mrb[0].mxu0
  %977 = vmatprep.mubr.bf16.mxu0 0
  %978 = vmatmul.mubr.bf16.gmra.mrb[0].mxu0 %v743
  %v979 = vpop.f32.mrb[0].mxu0
  %v980 = vadd.f32 0.0, %v979
  %v981 = vpop.f32.mrb[0].mxu0
  %v982 = vpop.f32.mrb[0].mxu0
  %v983 = vadd.f32 0.0, %v982
  %v984 = vpop.f32.mrb[0].mxu0
  %985 = vmatprep.mubr.bf16.mxu0 0
  %986 = vmatmul.mubr.bf16.gmra.mrb[0].mxu0 %v746
  %v987 = vpop.f32.mrb[0].mxu0
  %v988 = vadd.f32 0.0, %v987
  %v989 = vpop.f32.mrb[0].mxu0
  %v990 = vpop.f32.mrb[0].mxu0
  %v991 = vadd.f32 0.0, %v990
  %v992 = vpop.f32.mrb[0].mxu0
  %993 = vmatprep.mubr.bf16.mxu0 0
  %994 = vmatmul.mubr.bf16.gmra.mrb[0].mxu0 %v749
  %v995 = vpop.f32.mrb[0].mxu0
  %v996 = vadd.f32 0.0, %v995
  %v997 = vpop.f32.mrb[0].mxu0
  %v998 = vpop.f32.mrb[0].mxu0
  %v999 = vadd.f32 0.0, %v998
  %v1000 = vpop.f32.mrb[0].mxu0
  %1001 = vmatprep.mubr.bf16.mxu0 0
  %1002 = vmatmul.mubr.bf16.gmra.mrb[0].mxu0 %v752
  %v1003 = vpop.f32.mrb[0].mxu0
  %v1004 = vadd.f32 0.0, %v1003
  %v1005 = vpop.f32.mrb[0].mxu0
  %v1006 = vpop.f32.mrb[0].mxu0
  %v1007 = vadd.f32 0.0, %v1006
  %v1008 = vpop.f32.mrb[0].mxu0
  %1009 = vmatprep.mubr.bf16.mxu0 0
  %1010 = vmatmul.mubr.bf16.gmra.mrb[0].mxu0 %v755
  %v1011 = vpop.f32.mrb[0].mxu0
  %v1012 = vadd.f32 0.0, %v1011
  %v1013 = vpop.f32.mrb[0].mxu0
  %v1014 = vpop.f32.mrb[0].mxu0
  %v1015 = vadd.f32 0.0, %v1014
  %v1016 = vpop.f32.mrb[0].mxu0
  %1017 = vmatprep.mubr.bf16.mxu0 0
  %1018 = vmatmul.mubr.bf16.gmra.mrb[0].mxu0 %v758
  %v1019 = vpop.f32.mrb[0].mxu0
  %v1020 = vadd.f32 0.0, %v1019
  %v1021 = vpop.f32.mrb[0].mxu0
  %v1022 = vpop.f32.mrb[0].mxu0
  %v1023 = vadd.f32 0.0, %v1022
  %v1024 = vpop.f32.mrb[0].mxu0
  %1025 = vmatprep.mubr.bf16.mxu0 0
  %1026 = vmatmul.mubr.bf16.gmra.mrb[0].mxu0 %v761
  %v1027 = vpop.f32.mrb[0].mxu0
  %v1028 = vadd.f32 0.0, %v1027
  %v1029 = vpop.f32.mrb[0].mxu0
  %v1030 = vpop.f32.mrb[0].mxu0
  %v1031 = vadd.f32 0.0, %v1030
  %v1032 = vpop.f32.mrb[0].mxu0
  %1033 = vmatprep.mubr.bf16.mxu0 0
  %1034 = vmatmul.mubr.bf16.gmra.mrb[0].mxu0 %v764
  %v1035 = vpop.f32.mrb[0].mxu0
  %v1036 = vadd.f32 0.0, %v1035
  %v1037 = vpop.f32.mrb[0].mxu0
  %v1038 = vpop.f32.mrb[0].mxu0
  %v1039 = vadd.f32 0.0, %v1038
  %v1040 = vpop.f32.mrb[0].mxu0
  %1041 = vmatprep.mubr.bf16.mxu0 0
  %1042 = vmatmul.mubr.bf16.gmra.mrb[0].mxu0 %v767
  %v1043 = vpop.f32.mrb[0].mxu0
  %v1044 = vadd.f32 0.0, %v1043
  %v1045 = vpop.f32.mrb[0].mxu0
  %v1046 = vpop.f32.mrb[0].mxu0
  %v1047 = vadd.f32 0.0, %v1046
  %v1048 = vpop.f32.mrb[0].mxu0
  %1049 = vmatprep.mubr.bf16.mxu0 0
  %1050 = vmatmul.mubr.bf16.gmra.mrb[0].mxu0 %v770
  %v1051 = vpop.f32.mrb[0].mxu0
  %v1052 = vadd.f32 0.0, %v1051
  %v1053 = vpop.f32.mrb[0].mxu0
  %v1054 = vpop.f32.mrb[0].mxu0
  %v1055 = vadd.f32 0.0, %v1054
  %v1056 = vpop.f32.mrb[0].mxu0
  %1057 = vmatprep.mubr.bf16.mxu0 0
  %1058 = vmatmul.mubr.bf16.gmra.mrb[0].mxu0 %v773
  %v1059 = vpop.f32.mrb[0].mxu0
  %v1060 = vadd.f32 0.0, %v1059
  %v1061 = vpop.f32.mrb[0].mxu0
  %v1062 = vpop.f32.mrb[0].mxu0
  %v1063 = vadd.f32 0.0, %v1062
  %v1064 = vpop.f32.mrb[0].mxu0
  %1065 = vmatprep.mubr.bf16.mxu0 0
  %1066 = vmatmul.mubr.bf16.gmra.mrb[0].mxu0 %v776
  %v1067 = vpop.f32.mrb[0].mxu0
  %v1068 = vadd.f32 0.0, %v1067
  %v1069 = vpop.f32.mrb[0].mxu0
  %v1070 = vpop.f32.mrb[0].mxu0
  %v1071 = vadd.f32 0.0, %v1070
  %v1072 = vpop.f32.mrb[0].mxu0
  %1073 = vmatprep.mubr.bf16.mxu0 0
  %1074 = vmatmul.mubr.bf16.gmra.mrb[0].mxu0 %v779
  %v1075 = vpop.f32.mrb[0].mxu0
  %v1076 = vadd.f32 0.0, %v1075
  %v1077 = vpop.f32.mrb[0].mxu0
  %v1078 = vpop.f32.mrb[0].mxu0
  %v1079 = vadd.f32 0.0, %v1078
  %v1080 = vpop.f32.mrb[0].mxu0
  %1081 = vdwg.mxu0
  %v1082 = vmul.f32 %v828, 0.5
  %v1083 = vmul.f32 %v831, 0.5
  %v1084 = vmul.f32 %v836, 0.5
  %v1085 = vmul.f32 %v839, 0.5
  %v1086 = vmul.f32 %v844, 0.5
  %v1087 = vmul.f32 %v847, 0.5
  %v1088 = vmul.f32 %v852, 0.5
  %v1089 = vmul.f32 %v855, 0.5
  %v1090 = vmul.f32 %v860, 0.5
  %v1091 = vmul.f32 %v863, 0.5
  %v1092 = vmul.f32 %v868, 0.5
  %v1093 = vmul.f32 %v871, 0.5
  %v1094 = vmul.f32 %v876, 0.5
  %v1095 = vmul.f32 %v879, 0.5
  %v1096 = vmul.f32 %v884, 0.5
  %v1097 = vmul.f32 %v887, 0.5
  %v1098 = vmul.f32 %v892, 0.5
  %v1099 = vmul.f32 %v895, 0.5
  %v1100 = vmul.f32 %v900, 0.5
  %v1101 = vmul.f32 %v903, 0.5
  %v1102 = vmul.f32 %v908, 0.5
  %v1103 = vmul.f32 %v911, 0.5
  %v1104 = vmul.f32 %v916, 0.5
  %v1105 = vmul.f32 %v919, 0.5
  %v1106 = vmul.f32 %v924, 0.5
  %v1107 = vmul.f32 %v927, 0.5
  %v1108 = vmul.f32 %v932, 0.5
  %v1109 = vmul.f32 %v935, 0.5
  %v1110 = vmul.f32 %v940, 0.5
  %v1111 = vmul.f32 %v943, 0.5
  %v1112 = vmul.f32 %v948, 0.5
  %v1113 = vmul.f32 %v951, 0.5
  %v1114 = vmul.f32 %v956, 0.5
  %v1115 = vmul.f32 %v959, 0.5
  %v1116 = vmul.f32 %v964, 0.5
  %v1117 = vmul.f32 %v967, 0.5
  %v1118 = vmul.f32 %v972, 0.5
  %v1119 = vmul.f32 %v975, 0.5
  %v1120 = vmul.f32 %v980, 0.5
  %v1121 = vmul.f32 %v983, 0.5
  %v1122 = vmul.f32 %v988, 0.5
  %v1123 = vmul.f32 %v991, 0.5
  %v1124 = vmul.f32 %v996, 0.5
  %v1125 = vmul.f32 %v999, 0.5
  %v1126 = vmul.f32 %v1004, 0.5
  %v1127 = vmul.f32 %v1007, 0.5
  %v1128 = vmul.f32 %v1012, 0.5
  %v1129 = vmul.f32 %v1015, 0.5
  %v1130 = vmul.f32 %v1020, 0.5
  %v1131 = vmul.f32 %v1023, 0.5
  %v1132 = vmul.f32 %v1028, 0.5
  %v1133 = vmul.f32 %v1031, 0.5
  %v1134 = vmul.f32 %v1036, 0.5
  %v1135 = vmul.f32 %v1039, 0.5
  %v1136 = vmul.f32 %v1044, 0.5
  %v1137 = vmul.f32 %v1047, 0.5
  %v1138 = vmul.f32 %v1052, 0.5
  %v1139 = vmul.f32 %v1055, 0.5
  %v1140 = vmul.f32 %v1060, 0.5
  %v1141 = vmul.f32 %v1063, 0.5
  %v1142 = vmul.f32 %v1068, 0.5
  %v1143 = vmul.f32 %v1071, 0.5
  %v1144 = vmul.f32 %v1076, 0.5
  %v1145 = vmul.f32 %v1079, 0.5
  %v1146 = vadd.f32 %v1082, %v249
  %v1147 = vadd.f32 %v1083, %v250
  %v1148 = vadd.f32 %v1084, %v251
  %v1149 = vadd.f32 %v1085, %v252
  %v1150 = vadd.f32 %v1086, %v253
  %v1151 = vadd.f32 %v1087, %v254
  %v1152 = vadd.f32 %v1088, %v255
  %v1153 = vadd.f32 %v1089, %v256
  %v1154 = vadd.f32 %v1090, %v257
  %v1155 = vadd.f32 %v1091, %v258
  %v1156 = vadd.f32 %v1092, %v259
  %v1157 = vadd.f32 %v1093, %v260
  %v1158 = vadd.f32 %v1094, %v261
  %v1159 = vadd.f32 %v1095, %v262
  %v1160 = vadd.f32 %v1096, %v263
  %v1161 = vadd.f32 %v1097, %v264
  %v1162 = vadd.f32 %v1098, %v265
  %v1163 = vadd.f32 %v1099, %v266
  %v1164 = vadd.f32 %v1100, %v267
  %v1165 = vadd.f32 %v1101, %v268
  %v1166 = vadd.f32 %v1102, %v269
  %v1167 = vadd.f32 %v1103, %v270
  %v1168 = vadd.f32 %v1104, %v271
  %v1169 = vadd.f32 %v1105, %v272
  %v1170 = vadd.f32 %v1106, %v273
  %v1171 = vadd.f32 %v1107, %v274
  %v1172 = vadd.f32 %v1108, %v275
  %v1173 = vadd.f32 %v1109, %v276
  %v1174 = vadd.f32 %v1110, %v277
  %v1175 = vadd.f32 %v1111, %v278
  %v1176 = vadd.f32 %v1112, %v279
  %v1177 = vadd.f32 %v1113, %v280
  %v1178 = vadd.f32 %v1114, %v281
  %v1179 = vadd.f32 %v1115, %v282
  %v1180 = vadd.f32 %v1116, %v283
  %v1181 = vadd.f32 %v1117, %v284
  %v1182 = vadd.f32 %v1118, %v285
  %v1183 = vadd.f32 %v1119, %v286
  %v1184 = vadd.f32 %v1120, %v287
  %v1185 = vadd.f32 %v1121, %v288
  %v1186 = vadd.f32 %v1122, %v289
  %v1187 = vadd.f32 %v1123, %v290
  %v1188 = vadd.f32 %v1124, %v291
  %v1189 = vadd.f32 %v1125, %v292
  %v1190 = vadd.f32 %v1126, %v293
  %v1191 = vadd.f32 %v1127, %v294
  %v1192 = vadd.f32 %v1128, %v295
  %v1193 = vadd.f32 %v1129, %v296
  %v1194 = vadd.f32 %v1130, %v297
  %v1195 = vadd.f32 %v1131, %v298
  %v1196 = vadd.f32 %v1132, %v299
  %v1197 = vadd.f32 %v1133, %v300
  %v1198 = vadd.f32 %v1134, %v301
  %v1199 = vadd.f32 %v1135, %v302
  %v1200 = vadd.f32 %v1136, %v303
  %v1201 = vadd.f32 %v1137, %v304
  %v1202 = vadd.f32 %v1138, %v305
  %v1203 = vadd.f32 %v1139, %v306
  %v1204 = vadd.f32 %v1140, %v307
  %v1205 = vadd.f32 %v1141, %v308
  %v1206 = vadd.f32 %v1142, %v309
  %v1207 = vadd.f32 %v1143, %v310
  %v1208 = vadd.f32 %v1144, %v311
  %v1209 = vadd.f32 %v1145, %v312
  %vm1210 = vcmask 523264
  %v1211 = vsel %vm1210, %v1146, -inf
  %1212 = vmax.xlane.f32.xlu0 %v1211
  %v1213 = vpop.xlane.xlu0 %1212
  %v1214 = vsel %vm1210, %v1147, -inf
  %1215 = vmax.xlane.f32.xlu0 %v1214
  %v1216 = vpop.xlane.xlu0 %1215
  %v1217 = vsel %vm1210, %v1148, -inf
  %1218 = vmax.xlane.f32.xlu0 %v1217
  %v1219 = vpop.xlane.xlu0 %1218
  %v1220 = vsel %vm1210, %v1149, -inf
  %1221 = vmax.xlane.f32.xlu0 %v1220
  %v1222 = vpop.xlane.xlu0 %1221
  %v1223 = vsel %vm1210, %v1150, -inf
  %1224 = vmax.xlane.f32.xlu0 %v1223
  %v1225 = vpop.xlane.xlu0 %1224
  %v1226 = vsel %vm1210, %v1151, -inf
  %1227 = vmax.xlane.f32.xlu0 %v1226
  %v1228 = vpop.xlane.xlu0 %1227
  %v1229 = vsel %vm1210, %v1152, -inf
  %1230 = vmax.xlane.f32.xlu0 %v1229
  %v1231 = vpop.xlane.xlu0 %1230
  %v1232 = vsel %vm1210, %v1153, -inf
  %1233 = vmax.xlane.f32.xlu0 %v1232
  %v1234 = vpop.xlane.xlu0 %1233
  %v1235 = vsel %vm1210, %v1154, -inf
  %1236 = vmax.xlane.f32.xlu0 %v1235
  %v1237 = vpop.xlane.xlu0 %1236
  %v1238 = vsel %vm1210, %v1155, -inf
  %1239 = vmax.xlane.f32.xlu0 %v1238
  %v1240 = vpop.xlane.xlu0 %1239
  %v1241 = vsel %vm1210, %v1156, -inf
  %1242 = vmax.xlane.f32.xlu0 %v1241
  %v1243 = vpop.xlane.xlu0 %1242
  %v1244 = vsel %vm1210, %v1157, -inf
  %1245 = vmax.xlane.f32.xlu0 %v1244
  %v1246 = vpop.xlane.xlu0 %1245
  %v1247 = vsel %vm1210, %v1158, -inf
  %1248 = vmax.xlane.f32.xlu0 %v1247
  %v1249 = vpop.xlane.xlu0 %1248
  %v1250 = vsel %vm1210, %v1159, -inf
  %1251 = vmax.xlane.f32.xlu0 %v1250
  %v1252 = vpop.xlane.xlu0 %1251
  %v1253 = vsel %vm1210, %v1160, -inf
  %1254 = vmax.xlane.f32.xlu0 %v1253
  %v1255 = vpop.xlane.xlu0 %1254
  %v1256 = vsel %vm1210, %v1161, -inf
  %1257 = vmax.xlane.f32.xlu0 %v1256
  %v1258 = vpop.xlane.xlu0 %1257
  %v1259 = vsel %vm1210, %v1162, -inf
  %1260 = vmax.xlane.f32.xlu0 %v1259
  %v1261 = vpop.xlane.xlu0 %1260
  %v1262 = vsel %vm1210, %v1163, -inf
  %1263 = vmax.xlane.f32.xlu0 %v1262
  %v1264 = vpop.xlane.xlu0 %1263
  %v1265 = vsel %vm1210, %v1164, -inf
  %1266 = vmax.xlane.f32.xlu0 %v1265
  %v1267 = vpop.xlane.xlu0 %1266
  %v1268 = vsel %vm1210, %v1165, -inf
  %1269 = vmax.xlane.f32.xlu0 %v1268
  %v1270 = vpop.xlane.xlu0 %1269
  %v1271 = vsel %vm1210, %v1166, -inf
  %1272 = vmax.xlane.f32.xlu0 %v1271
  %v1273 = vpop.xlane.xlu0 %1272
  %v1274 = vsel %vm1210, %v1167, -inf
  %1275 = vmax.xlane.f32.xlu0 %v1274
  %v1276 = vpop.xlane.xlu0 %1275
  %v1277 = vsel %vm1210, %v1168, -inf
  %1278 = vmax.xlane.f32.xlu0 %v1277
  %v1279 = vpop.xlane.xlu0 %1278
  %v1280 = vsel %vm1210, %v1169, -inf
  %1281 = vmax.xlane.f32.xlu0 %v1280
  %v1282 = vpop.xlane.xlu0 %1281
  %v1283 = vsel %vm1210, %v1170, -inf
  %1284 = vmax.xlane.f32.xlu0 %v1283
  %v1285 = vpop.xlane.xlu0 %1284
  %v1286 = vsel %vm1210, %v1171, -inf
  %1287 = vmax.xlane.f32.xlu0 %v1286
  %v1288 = vpop.xlane.xlu0 %1287
  %v1289 = vsel %vm1210, %v1172, -inf
  %1290 = vmax.xlane.f32.xlu0 %v1289
  %v1291 = vpop.xlane.xlu0 %1290
  %v1292 = vsel %vm1210, %v1173, -inf
  %1293 = vmax.xlane.f32.xlu0 %v1292
  %v1294 = vpop.xlane.xlu0 %1293
  %v1295 = vsel %vm1210, %v1174, -inf
  %1296 = vmax.xlane.f32.xlu0 %v1295
  %v1297 = vpop.xlane.xlu0 %1296
  %v1298 = vsel %vm1210, %v1175, -inf
  %1299 = vmax.xlane.f32.xlu0 %v1298
  %v1300 = vpop.xlane.xlu0 %1299
  %v1301 = vsel %vm1210, %v1176, -inf
  %1302 = vmax.xlane.f32.xlu0 %v1301
  %v1303 = vpop.xlane.xlu0 %1302
  %v1304 = vsel %vm1210, %v1177, -inf
  %1305 = vmax.xlane.f32.xlu0 %v1304
  %v1306 = vpop.xlane.xlu0 %1305
  %v1307 = vsel %vm1210, %v1178, -inf
  %1308 = vmax.xlane.f32.xlu0 %v1307
  %v1309 = vpop.xlane.xlu0 %1308
  %v1310 = vsel %vm1210, %v1179, -inf
  %1311 = vmax.xlane.f32.xlu0 %v1310
  %v1312 = vpop.xlane.xlu0 %1311
  %v1313 = vsel %vm1210, %v1180, -inf
  %1314 = vmax.xlane.f32.xlu0 %v1313
  %v1315 = vpop.xlane.xlu0 %1314
  %v1316 = vsel %vm1210, %v1181, -inf
  %1317 = vmax.xlane.f32.xlu0 %v1316
  %v1318 = vpop.xlane.xlu0 %1317
  %v1319 = vsel %vm1210, %v1182, -inf
  %1320 = vmax.xlane.f32.xlu0 %v1319
  %v1321 = vpop.xlane.xlu0 %1320
  %v1322 = vsel %vm1210, %v1183, -inf
  %1323 = vmax.xlane.f32.xlu0 %v1322
  %v1324 = vpop.xlane.xlu0 %1323
  %v1325 = vsel %vm1210, %v1184, -inf
  %1326 = vmax.xlane.f32.xlu0 %v1325
  %v1327 = vpop.xlane.xlu0 %1326
  %v1328 = vsel %vm1210, %v1185, -inf
  %1329 = vmax.xlane.f32.xlu0 %v1328
  %v1330 = vpop.xlane.xlu0 %1329
  %v1331 = vsel %vm1210, %v1186, -inf
  %1332 = vmax.xlane.f32.xlu0 %v1331
  %v1333 = vpop.xlane.xlu0 %1332
  %v1334 = vsel %vm1210, %v1187, -inf
  %1335 = vmax.xlane.f32.xlu0 %v1334
  %v1336 = vpop.xlane.xlu0 %1335
  %v1337 = vsel %vm1210, %v1188, -inf
  %1338 = vmax.xlane.f32.xlu0 %v1337
  %v1339 = vpop.xlane.xlu0 %1338
  %v1340 = vsel %vm1210, %v1189, -inf
  %1341 = vmax.xlane.f32.xlu0 %v1340
  %v1342 = vpop.xlane.xlu0 %1341
  %v1343 = vsel %vm1210, %v1190, -inf
  %1344 = vmax.xlane.f32.xlu0 %v1343
  %v1345 = vpop.xlane.xlu0 %1344
  %v1346 = vsel %vm1210, %v1191, -inf
  %1347 = vmax.xlane.f32.xlu0 %v1346
  %v1348 = vpop.xlane.xlu0 %1347
  %v1349 = vsel %vm1210, %v1192, -inf
  %1350 = vmax.xlane.f32.xlu0 %v1349
  %v1351 = vpop.xlane.xlu0 %1350
  %v1352 = vsel %vm1210, %v1193, -inf
  %1353 = vmax.xlane.f32.xlu0 %v1352
  %v1354 = vpop.xlane.xlu0 %1353
  %v1355 = vsel %vm1210, %v1194, -inf
  %1356 = vmax.xlane.f32.xlu0 %v1355
  %v1357 = vpop.xlane.xlu0 %1356
  %v1358 = vsel %vm1210, %v1195, -inf
  %1359 = vmax.xlane.f32.xlu0 %v1358
  %v1360 = vpop.xlane.xlu0 %1359
  %v1361 = vsel %vm1210, %v1196, -inf
  %1362 = vmax.xlane.f32.xlu0 %v1361
  %v1363 = vpop.xlane.xlu0 %1362
  %v1364 = vsel %vm1210, %v1197, -inf
  %1365 = vmax.xlane.f32.xlu0 %v1364
  %v1366 = vpop.xlane.xlu0 %1365
  %v1367 = vsel %vm1210, %v1198, -inf
  %1368 = vmax.xlane.f32.xlu0 %v1367
  %v1369 = vpop.xlane.xlu0 %1368
  %v1370 = vsel %vm1210, %v1199, -inf
  %1371 = vmax.xlane.f32.xlu0 %v1370
  %v1372 = vpop.xlane.xlu0 %1371
  %v1373 = vsel %vm1210, %v1200, -inf
  %1374 = vmax.xlane.f32.xlu0 %v1373
  %v1375 = vpop.xlane.xlu0 %1374
  %v1376 = vsel %vm1210, %v1201, -inf
  %1377 = vmax.xlane.f32.xlu0 %v1376
  %v1378 = vpop.xlane.xlu0 %1377
  %v1379 = vsel %vm1210, %v1202, -inf
  %1380 = vmax.xlane.f32.xlu0 %v1379
  %v1381 = vpop.xlane.xlu0 %1380
  %v1382 = vsel %vm1210, %v1203, -inf
  %1383 = vmax.xlane.f32.xlu0 %v1382
  %v1384 = vpop.xlane.xlu0 %1383
  %v1385 = vsel %vm1210, %v1204, -inf
  %1386 = vmax.xlane.f32.xlu0 %v1385
  %v1387 = vpop.xlane.xlu0 %1386
  %v1388 = vsel %vm1210, %v1205, -inf
  %1389 = vmax.xlane.f32.xlu0 %v1388
  %v1390 = vpop.xlane.xlu0 %1389
  %v1391 = vsel %vm1210, %v1206, -inf
  %1392 = vmax.xlane.f32.xlu0 %v1391
  %v1393 = vpop.xlane.xlu0 %1392
  %v1394 = vsel %vm1210, %v1207, -inf
  %1395 = vmax.xlane.f32.xlu0 %v1394
  %v1396 = vpop.xlane.xlu0 %1395
  %v1397 = vsel %vm1210, %v1208, -inf
  %1398 = vmax.xlane.f32.xlu0 %v1397
  %v1399 = vpop.xlane.xlu0 %1398
  %v1400 = vsel %vm1210, %v1209, -inf
  %1401 = vmax.xlane.f32.xlu0 %v1400
  %v1402 = vpop.xlane.xlu0 %1401
  %v1403 = vsub.f32 %v1146, %v1213
  %v1404 = vsub.f32 %v1147, %v1216
  %v1405 = vsub.f32 %v1148, %v1219
  %v1406 = vsub.f32 %v1149, %v1222
  %v1407 = vsub.f32 %v1150, %v1225
  %v1408 = vsub.f32 %v1151, %v1228
  %v1409 = vsub.f32 %v1152, %v1231
  %v1410 = vsub.f32 %v1153, %v1234
  %v1411 = vsub.f32 %v1154, %v1237
  %v1412 = vsub.f32 %v1155, %v1240
  %v1413 = vsub.f32 %v1156, %v1243
  %v1414 = vsub.f32 %v1157, %v1246
  %v1415 = vsub.f32 %v1158, %v1249
  %v1416 = vsub.f32 %v1159, %v1252
  %v1417 = vsub.f32 %v1160, %v1255
  %v1418 = vsub.f32 %v1161, %v1258
  %v1419 = vsub.f32 %v1162, %v1261
  %v1420 = vsub.f32 %v1163, %v1264
  %v1421 = vsub.f32 %v1164, %v1267
  %v1422 = vsub.f32 %v1165, %v1270
  %v1423 = vsub.f32 %v1166, %v1273
  %v1424 = vsub.f32 %v1167, %v1276
  %v1425 = vsub.f32 %v1168, %v1279
  %v1426 = vsub.f32 %v1169, %v1282
  %v1427 = vsub.f32 %v1170, %v1285
  %v1428 = vsub.f32 %v1171, %v1288
  %v1429 = vsub.f32 %v1172, %v1291
  %v1430 = vsub.f32 %v1173, %v1294
  %v1431 = vsub.f32 %v1174, %v1297
  %v1432 = vsub.f32 %v1175, %v1300
  %v1433 = vsub.f32 %v1176, %v1303
  %v1434 = vsub.f32 %v1177, %v1306
  %v1435 = vsub.f32 %v1178, %v1309
  %v1436 = vsub.f32 %v1179, %v1312
  %v1437 = vsub.f32 %v1180, %v1315
  %v1438 = vsub.f32 %v1181, %v1318
  %v1439 = vsub.f32 %v1182, %v1321
  %v1440 = vsub.f32 %v1183, %v1324
  %v1441 = vsub.f32 %v1184, %v1327
  %v1442 = vsub.f32 %v1185, %v1330
  %v1443 = vsub.f32 %v1186, %v1333
  %v1444 = vsub.f32 %v1187, %v1336
  %v1445 = vsub.f32 %v1188, %v1339
  %v1446 = vsub.f32 %v1189, %v1342
  %v1447 = vsub.f32 %v1190, %v1345
  %v1448 = vsub.f32 %v1191, %v1348
  %v1449 = vsub.f32 %v1192, %v1351
  %v1450 = vsub.f32 %v1193, %v1354
  %v1451 = vsub.f32 %v1194, %v1357
  %v1452 = vsub.f32 %v1195, %v1360
  %v1453 = vsub.f32 %v1196, %v1363
  %v1454 = vsub.f32 %v1197, %v1366
  %v1455 = vsub.f32 %v1198, %v1369
  %v1456 = vsub.f32 %v1199, %v1372
  %v1457 = vsub.f32 %v1200, %v1375
  %v1458 = vsub.f32 %v1201, %v1378
  %v1459 = vsub.f32 %v1202, %v1381
  %v1460 = vsub.f32 %v1203, %v1384
  %v1461 = vsub.f32 %v1204, %v1387
  %v1462 = vsub.f32 %v1205, %v1390
  %v1463 = vsub.f32 %v1206, %v1393
  %v1464 = vsub.f32 %v1207, %v1396
  %v1465 = vsub.f32 %v1208, %v1399
  %v1466 = vsub.f32 %v1209, %v1402
  %v1467 = vmul.f32 %v1403, 1.442695
  %v1468 = vpow.pop %v1467
  %v1469 = vmul.f32 %v1404, 1.442695
  %v1470 = vpow.pop %v1469
  %v1471 = vmul.f32 %v1405, 1.442695
  %v1472 = vpow.pop %v1471
  %v1473 = vmul.f32 %v1406, 1.442695
  %v1474 = vpow.pop %v1473
  %v1475 = vmul.f32 %v1407, 1.442695
  %v1476 = vpow.pop %v1475
  %v1477 = vmul.f32 %v1408, 1.442695
  %v1478 = vpow.pop %v1477
  %v1479 = vmul.f32 %v1409, 1.442695
  %v1480 = vpow.pop %v1479
  %v1481 = vmul.f32 %v1410, 1.442695
  %v1482 = vpow.pop %v1481
  %v1483 = vmul.f32 %v1411, 1.442695
  %v1484 = vpow.pop %v1483
  %v1485 = vmul.f32 %v1412, 1.442695
  %v1486 = vpow.pop %v1485
  %v1487 = vmul.f32 %v1413, 1.442695
  %v1488 = vpow.pop %v1487
  %v1489 = vmul.f32 %v1414, 1.442695
  %v1490 = vpow.pop %v1489
  %v1491 = vmul.f32 %v1415, 1.442695
  %v1492 = vpow.pop %v1491
  %v1493 = vmul.f32 %v1416, 1.442695
  %v1494 = vpow.pop %v1493
  %v1495 = vmul.f32 %v1417, 1.442695
  %v1496 = vpow.pop %v1495
  %v1497 = vmul.f32 %v1418, 1.442695
  %v1498 = vpow.pop %v1497
  %v1499 = vmul.f32 %v1419, 1.442695
  %v1500 = vpow.pop %v1499
  %v1501 = vmul.f32 %v1420, 1.442695
  %v1502 = vpow.pop %v1501
  %v1503 = vmul.f32 %v1421, 1.442695
  %v1504 = vpow.pop %v1503
  %v1505 = vmul.f32 %v1422, 1.442695
  %v1506 = vpow.pop %v1505
  %v1507 = vmul.f32 %v1423, 1.442695
  %v1508 = vpow.pop %v1507
  %v1509 = vmul.f32 %v1424, 1.442695
  %v1510 = vpow.pop %v1509
  %v1511 = vmul.f32 %v1425, 1.442695
  %v1512 = vpow.pop %v1511
  %v1513 = vmul.f32 %v1426, 1.442695
  %v1514 = vpow.pop %v1513
  %v1515 = vmul.f32 %v1427, 1.442695
  %v1516 = vpow.pop %v1515
  %v1517 = vmul.f32 %v1428, 1.442695
  %v1518 = vpow.pop %v1517
  %v1519 = vmul.f32 %v1429, 1.442695
  %v1520 = vpow.pop %v1519
  %v1521 = vmul.f32 %v1430, 1.442695
  %v1522 = vpow.pop %v1521
  %v1523 = vmul.f32 %v1431, 1.442695
  %v1524 = vpow.pop %v1523
  %v1525 = vmul.f32 %v1432, 1.442695
  %v1526 = vpow.pop %v1525
  %v1527 = vmul.f32 %v1433, 1.442695
  %v1528 = vpow.pop %v1527
  %v1529 = vmul.f32 %v1434, 1.442695
  %v1530 = vpow.pop %v1529
  %v1531 = vmul.f32 %v1435, 1.442695
  %v1532 = vpow.pop %v1531
  %v1533 = vmul.f32 %v1436, 1.442695
  %v1534 = vpow.pop %v1533
  %v1535 = vmul.f32 %v1437, 1.442695
  %v1536 = vpow.pop %v1535
  %v1537 = vmul.f32 %v1438, 1.442695
  %v1538 = vpow.pop %v1537
  %v1539 = vmul.f32 %v1439, 1.442695
  %v1540 = vpow.pop %v1539
  %v1541 = vmul.f32 %v1440, 1.442695
  %v1542 = vpow.pop %v1541
  %v1543 = vmul.f32 %v1441, 1.442695
  %v1544 = vpow.pop %v1543
  %v1545 = vmul.f32 %v1442, 1.442695
  %v1546 = vpow.pop %v1545
  %v1547 = vmul.f32 %v1443, 1.442695
  %v1548 = vpow.pop %v1547
  %v1549 = vmul.f32 %v1444, 1.442695
  %v1550 = vpow.pop %v1549
  %v1551 = vmul.f32 %v1445, 1.442695
  %v1552 = vpow.pop %v1551
  %v1553 = vmul.f32 %v1446, 1.442695
  %v1554 = vpow.pop %v1553
  %v1555 = vmul.f32 %v1447, 1.442695
  %v1556 = vpow.pop %v1555
  %v1557 = vmul.f32 %v1448, 1.442695
  %v1558 = vpow.pop %v1557
  %v1559 = vmul.f32 %v1449, 1.442695
  %v1560 = vpow.pop %v1559
  %v1561 = vmul.f32 %v1450, 1.442695
  %v1562 = vpow.pop %v1561
  %v1563 = vmul.f32 %v1451, 1.442695
  %v1564 = vpow.pop %v1563
  %v1565 = vmul.f32 %v1452, 1.442695
  %v1566 = vpow.pop %v1565
  %v1567 = vmul.f32 %v1453, 1.442695
  %v1568 = vpow.pop %v1567
  %v1569 = vmul.f32 %v1454, 1.442695
  %v1570 = vpow.pop %v1569
  %v1571 = vmul.f32 %v1455, 1.442695
  %v1572 = vpow.pop %v1571
  %v1573 = vmul.f32 %v1456, 1.442695
  %v1574 = vpow.pop %v1573
  %v1575 = vmul.f32 %v1457, 1.442695
  %v1576 = vpow.pop %v1575
  %v1577 = vmul.f32 %v1458, 1.442695
  %v1578 = vpow.pop %v1577
  %v1579 = vmul.f32 %v1459, 1.442695
  %v1580 = vpow.pop %v1579
  %v1581 = vmul.f32 %v1460, 1.442695
  %v1582 = vpow.pop %v1581
  %v1583 = vmul.f32 %v1461, 1.442695
  %v1584 = vpow.pop %v1583
  %v1585 = vmul.f32 %v1462, 1.442695
  %v1586 = vpow.pop %v1585
  %v1587 = vmul.f32 %v1463, 1.442695
  %v1588 = vpow.pop %v1587
  %v1589 = vmul.f32 %v1464, 1.442695
  %v1590 = vpow.pop %v1589
  %v1591 = vmul.f32 %v1465, 1.442695
  %v1592 = vpow.pop %v1591
  %v1593 = vmul.f32 %v1466, 1.442695
  %v1594 = vpow.pop %v1593
  %v1595 = vsel %vm1210, %v1468, 0.0
  %1596 = vadd.xlane.f32.xlu0 %v1595
  %v1597 = vpop.xlane.xlu0 %1596
  %v1598 = vsel %vm1210, %v1470, 0.0
  %1599 = vadd.xlane.f32.xlu0 %v1598
  %v1600 = vpop.xlane.xlu0 %1599
  %v1601 = vsel %vm1210, %v1472, 0.0
  %1602 = vadd.xlane.f32.xlu0 %v1601
  %v1603 = vpop.xlane.xlu0 %1602
  %v1604 = vsel %vm1210, %v1474, 0.0
  %1605 = vadd.xlane.f32.xlu0 %v1604
  %v1606 = vpop.xlane.xlu0 %1605
  %v1607 = vsel %vm1210, %v1476, 0.0
  %1608 = vadd.xlane.f32.xlu0 %v1607
  %v1609 = vpop.xlane.xlu0 %1608
  %v1610 = vsel %vm1210, %v1478, 0.0
  %1611 = vadd.xlane.f32.xlu0 %v1610
  %v1612 = vpop.xlane.xlu0 %1611
  %v1613 = vsel %vm1210, %v1480, 0.0
  %1614 = vadd.xlane.f32.xlu0 %v1613
  %v1615 = vpop.xlane.xlu0 %1614
  %v1616 = vsel %vm1210, %v1482, 0.0
  %1617 = vadd.xlane.f32.xlu0 %v1616
  %v1618 = vpop.xlane.xlu0 %1617
  %v1619 = vsel %vm1210, %v1484, 0.0
  %1620 = vadd.xlane.f32.xlu0 %v1619
  %v1621 = vpop.xlane.xlu0 %1620
  %v1622 = vsel %vm1210, %v1486, 0.0
  %1623 = vadd.xlane.f32.xlu0 %v1622
  %v1624 = vpop.xlane.xlu0 %1623
  %v1625 = vsel %vm1210, %v1488, 0.0
  %1626 = vadd.xlane.f32.xlu0 %v1625
  %v1627 = vpop.xlane.xlu0 %1626
  %v1628 = vsel %vm1210, %v1490, 0.0
  %1629 = vadd.xlane.f32.xlu0 %v1628
  %v1630 = vpop.xlane.xlu0 %1629
  %v1631 = vsel %vm1210, %v1492, 0.0
  %1632 = vadd.xlane.f32.xlu0 %v1631
  %v1633 = vpop.xlane.xlu0 %1632
  %v1634 = vsel %vm1210, %v1494, 0.0
  %1635 = vadd.xlane.f32.xlu0 %v1634
  %v1636 = vpop.xlane.xlu0 %1635
  %v1637 = vsel %vm1210, %v1496, 0.0
  %1638 = vadd.xlane.f32.xlu0 %v1637
  %v1639 = vpop.xlane.xlu0 %1638
  %v1640 = vsel %vm1210, %v1498, 0.0
  %1641 = vadd.xlane.f32.xlu0 %v1640
  %v1642 = vpop.xlane.xlu0 %1641
  %v1643 = vsel %vm1210, %v1500, 0.0
  %1644 = vadd.xlane.f32.xlu0 %v1643
  %v1645 = vpop.xlane.xlu0 %1644
  %v1646 = vsel %vm1210, %v1502, 0.0
  %1647 = vadd.xlane.f32.xlu0 %v1646
  %v1648 = vpop.xlane.xlu0 %1647
  %v1649 = vsel %vm1210, %v1504, 0.0
  %1650 = vadd.xlane.f32.xlu0 %v1649
  %v1651 = vpop.xlane.xlu0 %1650
  %v1652 = vsel %vm1210, %v1506, 0.0
  %1653 = vadd.xlane.f32.xlu0 %v1652
  %v1654 = vpop.xlane.xlu0 %1653
  %v1655 = vsel %vm1210, %v1508, 0.0
  %1656 = vadd.xlane.f32.xlu0 %v1655
  %v1657 = vpop.xlane.xlu0 %1656
  %v1658 = vsel %vm1210, %v1510, 0.0
  %1659 = vadd.xlane.f32.xlu0 %v1658
  %v1660 = vpop.xlane.xlu0 %1659
  %v1661 = vsel %vm1210, %v1512, 0.0
  %1662 = vadd.xlane.f32.xlu0 %v1661
  %v1663 = vpop.xlane.xlu0 %1662
  %v1664 = vsel %vm1210, %v1514, 0.0
  %1665 = vadd.xlane.f32.xlu0 %v1664
  %v1666 = vpop.xlane.xlu0 %1665
  %v1667 = vsel %vm1210, %v1516, 0.0
  %1668 = vadd.xlane.f32.xlu0 %v1667
  %v1669 = vpop.xlane.xlu0 %1668
  %v1670 = vsel %vm1210, %v1518, 0.0
  %1671 = vadd.xlane.f32.xlu0 %v1670
  %v1672 = vpop.xlane.xlu0 %1671
  %v1673 = vsel %vm1210, %v1520, 0.0
  %1674 = vadd.xlane.f32.xlu0 %v1673
  %v1675 = vpop.xlane.xlu0 %1674
  %v1676 = vsel %vm1210, %v1522, 0.0
  %1677 = vadd.xlane.f32.xlu0 %v1676
  %v1678 = vpop.xlane.xlu0 %1677
  %v1679 = vsel %vm1210, %v1524, 0.0
  %1680 = vadd.xlane.f32.xlu0 %v1679
  %v1681 = vpop.xlane.xlu0 %1680
  %v1682 = vsel %vm1210, %v1526, 0.0
  %1683 = vadd.xlane.f32.xlu0 %v1682
  %v1684 = vpop.xlane.xlu0 %1683
  %v1685 = vsel %vm1210, %v1528, 0.0
  %1686 = vadd.xlane.f32.xlu0 %v1685
  %v1687 = vpop.xlane.xlu0 %1686
  %v1688 = vsel %vm1210, %v1530, 0.0
  %1689 = vadd.xlane.f32.xlu0 %v1688
  %v1690 = vpop.xlane.xlu0 %1689
  %v1691 = vsel %vm1210, %v1532, 0.0
  %1692 = vadd.xlane.f32.xlu0 %v1691
  %v1693 = vpop.xlane.xlu0 %1692
  %v1694 = vsel %vm1210, %v1534, 0.0
  %1695 = vadd.xlane.f32.xlu0 %v1694
  %v1696 = vpop.xlane.xlu0 %1695
  %v1697 = vsel %vm1210, %v1536, 0.0
  %1698 = vadd.xlane.f32.xlu0 %v1697
  %v1699 = vpop.xlane.xlu0 %1698
  %v1700 = vsel %vm1210, %v1538, 0.0
  %1701 = vadd.xlane.f32.xlu0 %v1700
  %v1702 = vpop.xlane.xlu0 %1701
  %v1703 = vsel %vm1210, %v1540, 0.0
  %1704 = vadd.xlane.f32.xlu0 %v1703
  %v1705 = vpop.xlane.xlu0 %1704
  %v1706 = vsel %vm1210, %v1542, 0.0
  %1707 = vadd.xlane.f32.xlu0 %v1706
  %v1708 = vpop.xlane.xlu0 %1707
  %v1709 = vsel %vm1210, %v1544, 0.0
  %1710 = vadd.xlane.f32.xlu0 %v1709
  %v1711 = vpop.xlane.xlu0 %1710
  %v1712 = vsel %vm1210, %v1546, 0.0
  %1713 = vadd.xlane.f32.xlu0 %v1712
  %v1714 = vpop.xlane.xlu0 %1713
  %v1715 = vsel %vm1210, %v1548, 0.0
  %1716 = vadd.xlane.f32.xlu0 %v1715
  %v1717 = vpop.xlane.xlu0 %1716
  %v1718 = vsel %vm1210, %v1550, 0.0
  %1719 = vadd.xlane.f32.xlu0 %v1718
  %v1720 = vpop.xlane.xlu0 %1719
  %v1721 = vsel %vm1210, %v1552, 0.0
  %1722 = vadd.xlane.f32.xlu0 %v1721
  %v1723 = vpop.xlane.xlu0 %1722
  %v1724 = vsel %vm1210, %v1554, 0.0
  %1725 = vadd.xlane.f32.xlu0 %v1724
  %v1726 = vpop.xlane.xlu0 %1725
  %v1727 = vsel %vm1210, %v1556, 0.0
  %1728 = vadd.xlane.f32.xlu0 %v1727
  %v1729 = vpop.xlane.xlu0 %1728
  %v1730 = vsel %vm1210, %v1558, 0.0
  %1731 = vadd.xlane.f32.xlu0 %v1730
  %v1732 = vpop.xlane.xlu0 %1731
  %v1733 = vsel %vm1210, %v1560, 0.0
  %1734 = vadd.xlane.f32.xlu0 %v1733
  %v1735 = vpop.xlane.xlu0 %1734
  %v1736 = vsel %vm1210, %v1562, 0.0
  %1737 = vadd.xlane.f32.xlu0 %v1736
  %v1738 = vpop.xlane.xlu0 %1737
  %v1739 = vsel %vm1210, %v1564, 0.0
  %1740 = vadd.xlane.f32.xlu0 %v1739
  %v1741 = vpop.xlane.xlu0 %1740
  %v1742 = vsel %vm1210, %v1566, 0.0
  %1743 = vadd.xlane.f32.xlu0 %v1742
  %v1744 = vpop.xlane.xlu0 %1743
  %v1745 = vsel %vm1210, %v1568, 0.0
  %1746 = vadd.xlane.f32.xlu0 %v1745
  %v1747 = vpop.xlane.xlu0 %1746
  %v1748 = vsel %vm1210, %v1570, 0.0
  %1749 = vadd.xlane.f32.xlu0 %v1748
  %v1750 = vpop.xlane.xlu0 %1749
  %v1751 = vsel %vm1210, %v1572, 0.0
  %1752 = vadd.xlane.f32.xlu0 %v1751
  %v1753 = vpop.xlane.xlu0 %1752
  %v1754 = vsel %vm1210, %v1574, 0.0
  %1755 = vadd.xlane.f32.xlu0 %v1754
  %v1756 = vpop.xlane.xlu0 %1755
  %v1757 = vsel %vm1210, %v1576, 0.0
  %1758 = vadd.xlane.f32.xlu0 %v1757
  %v1759 = vpop.xlane.xlu0 %1758
  %v1760 = vsel %vm1210, %v1578, 0.0
  %1761 = vadd.xlane.f32.xlu0 %v1760
  %v1762 = vpop.xlane.xlu0 %1761
  %v1763 = vsel %vm1210, %v1580, 0.0
  %1764 = vadd.xlane.f32.xlu0 %v1763
  %v1765 = vpop.xlane.xlu0 %1764
  %v1766 = vsel %vm1210, %v1582, 0.0
  %1767 = vadd.xlane.f32.xlu0 %v1766
  %v1768 = vpop.xlane.xlu0 %1767
  %v1769 = vsel %vm1210, %v1584, 0.0
  %1770 = vadd.xlane.f32.xlu0 %v1769
  %v1771 = vpop.xlane.xlu0 %1770
  %v1772 = vsel %vm1210, %v1586, 0.0
  %1773 = vadd.xlane.f32.xlu0 %v1772
  %v1774 = vpop.xlane.xlu0 %1773
  %v1775 = vsel %vm1210, %v1588, 0.0
  %1776 = vadd.xlane.f32.xlu0 %v1775
  %v1777 = vpop.xlane.xlu0 %1776
  %v1778 = vsel %vm1210, %v1590, 0.0
  %1779 = vadd.xlane.f32.xlu0 %v1778
  %v1780 = vpop.xlane.xlu0 %1779
  %v1781 = vsel %vm1210, %v1592, 0.0
  %1782 = vadd.xlane.f32.xlu0 %v1781
  %v1783 = vpop.xlane.xlu0 %1782
  %v1784 = vsel %vm1210, %v1594, 0.0
  %1785 = vadd.xlane.f32.xlu0 %v1784
  %v1786 = vpop.xlane.xlu0 %1785
  %v1787 = vrcp.pop %v1597
  %v1788 = vrcp.pop %v1600
  %v1789 = vrcp.pop %v1603
  %v1790 = vrcp.pop %v1606
  %v1791 = vrcp.pop %v1609
  %v1792 = vrcp.pop %v1612
  %v1793 = vrcp.pop %v1615
  %v1794 = vrcp.pop %v1618
  %v1795 = vrcp.pop %v1621
  %v1796 = vrcp.pop %v1624
  %v1797 = vrcp.pop %v1627
  %v1798 = vrcp.pop %v1630
  %v1799 = vrcp.pop %v1633
  %v1800 = vrcp.pop %v1636
  %v1801 = vrcp.pop %v1639
  %v1802 = vrcp.pop %v1642
  %v1803 = vrcp.pop %v1645
  %v1804 = vrcp.pop %v1648
  %v1805 = vrcp.pop %v1651
  %v1806 = vrcp.pop %v1654
  %v1807 = vrcp.pop %v1657
  %v1808 = vrcp.pop %v1660
  %v1809 = vrcp.pop %v1663
  %v1810 = vrcp.pop %v1666
  %v1811 = vrcp.pop %v1669
  %v1812 = vrcp.pop %v1672
  %v1813 = vrcp.pop %v1675
  %v1814 = vrcp.pop %v1678
  %v1815 = vrcp.pop %v1681
  %v1816 = vrcp.pop %v1684
  %v1817 = vrcp.pop %v1687
  %v1818 = vrcp.pop %v1690
  %v1819 = vrcp.pop %v1693
  %v1820 = vrcp.pop %v1696
  %v1821 = vrcp.pop %v1699
  %v1822 = vrcp.pop %v1702
  %v1823 = vrcp.pop %v1705
  %v1824 = vrcp.pop %v1708
  %v1825 = vrcp.pop %v1711
  %v1826 = vrcp.pop %v1714
  %v1827 = vrcp.pop %v1717
  %v1828 = vrcp.pop %v1720
  %v1829 = vrcp.pop %v1723
  %v1830 = vrcp.pop %v1726
  %v1831 = vrcp.pop %v1729
  %v1832 = vrcp.pop %v1732
  %v1833 = vrcp.pop %v1735
  %v1834 = vrcp.pop %v1738
  %v1835 = vrcp.pop %v1741
  %v1836 = vrcp.pop %v1744
  %v1837 = vrcp.pop %v1747
  %v1838 = vrcp.pop %v1750
  %v1839 = vrcp.pop %v1753
  %v1840 = vrcp.pop %v1756
  %v1841 = vrcp.pop %v1759
  %v1842 = vrcp.pop %v1762
  %v1843 = vrcp.pop %v1765
  %v1844 = vrcp.pop %v1768
  %v1845 = vrcp.pop %v1771
  %v1846 = vrcp.pop %v1774
  %v1847 = vrcp.pop %v1777
  %v1848 = vrcp.pop %v1780
  %v1849 = vrcp.pop %v1783
  %v1850 = vrcp.pop %v1786
  %v1851 = vmul.f32 %v1468, %v1787
  %v1852 = vmul.f32 %v1470, %v1788
  %v1853 = vmul.f32 %v1472, %v1789
  %v1854 = vmul.f32 %v1474, %v1790
  %v1855 = vmul.f32 %v1476, %v1791
  %v1856 = vmul.f32 %v1478, %v1792
  %v1857 = vmul.f32 %v1480, %v1793
  %v1858 = vmul.f32 %v1482, %v1794
  %v1859 = vmul.f32 %v1484, %v1795
  %v1860 = vmul.f32 %v1486, %v1796
  %v1861 = vmul.f32 %v1488, %v1797
  %v1862 = vmul.f32 %v1490, %v1798
  %v1863 = vmul.f32 %v1492, %v1799
  %v1864 = vmul.f32 %v1494, %v1800
  %v1865 = vmul.f32 %v1496, %v1801
  %v1866 = vmul.f32 %v1498, %v1802
  %v1867 = vmul.f32 %v1500, %v1803
  %v1868 = vmul.f32 %v1502, %v1804
  %v1869 = vmul.f32 %v1504, %v1805
  %v1870 = vmul.f32 %v1506, %v1806
  %v1871 = vmul.f32 %v1508, %v1807
  %v1872 = vmul.f32 %v1510, %v1808
  %v1873 = vmul.f32 %v1512, %v1809
  %v1874 = vmul.f32 %v1514, %v1810
  %v1875 = vmul.f32 %v1516, %v1811
  %v1876 = vmul.f32 %v1518, %v1812
  %v1877 = vmul.f32 %v1520, %v1813
  %v1878 = vmul.f32 %v1522, %v1814
  %v1879 = vmul.f32 %v1524, %v1815
  %v1880 = vmul.f32 %v1526, %v1816
  %v1881 = vmul.f32 %v1528, %v1817
  %v1882 = vmul.f32 %v1530, %v1818
  %v1883 = vmul.f32 %v1532, %v1819
  %v1884 = vmul.f32 %v1534, %v1820
  %v1885 = vmul.f32 %v1536, %v1821
  %v1886 = vmul.f32 %v1538, %v1822
  %v1887 = vmul.f32 %v1540, %v1823
  %v1888 = vmul.f32 %v1542, %v1824
  %v1889 = vmul.f32 %v1544, %v1825
  %v1890 = vmul.f32 %v1546, %v1826
  %v1891 = vmul.f32 %v1548, %v1827
  %v1892 = vmul.f32 %v1550, %v1828
  %v1893 = vmul.f32 %v1552, %v1829
  %v1894 = vmul.f32 %v1554, %v1830
  %v1895 = vmul.f32 %v1556, %v1831
  %v1896 = vmul.f32 %v1558, %v1832
  %v1897 = vmul.f32 %v1560, %v1833
  %v1898 = vmul.f32 %v1562, %v1834
  %v1899 = vmul.f32 %v1564, %v1835
  %v1900 = vmul.f32 %v1566, %v1836
  %v1901 = vmul.f32 %v1568, %v1837
  %v1902 = vmul.f32 %v1570, %v1838
  %v1903 = vmul.f32 %v1572, %v1839
  %v1904 = vmul.f32 %v1574, %v1840
  %v1905 = vmul.f32 %v1576, %v1841
  %v1906 = vmul.f32 %v1578, %v1842
  %v1907 = vmul.f32 %v1580, %v1843
  %v1908 = vmul.f32 %v1582, %v1844
  %v1909 = vmul.f32 %v1584, %v1845
  %v1910 = vmul.f32 %v1586, %v1846
  %v1911 = vmul.f32 %v1588, %v1847
  %v1912 = vmul.f32 %v1590, %v1848
  %v1913 = vmul.f32 %v1592, %v1849
  %v1914 = vmul.f32 %v1594, %v1850
  %v1915 = vpack.c.bf16 %v1852, %v1851
  %v1916 = vpack.c.bf16 %v1854, %v1853
  %v1917 = vpack.c.bf16 %v1856, %v1855
  %v1918 = vpack.c.bf16 %v1858, %v1857
  %v1919 = vpack.c.bf16 %v1860, %v1859
  %v1920 = vpack.c.bf16 %v1862, %v1861
  %v1921 = vpack.c.bf16 %v1864, %v1863
  %v1922 = vpack.c.bf16 %v1866, %v1865
  %v1923 = vpack.c.bf16 %v1868, %v1867
  %v1924 = vpack.c.bf16 %v1870, %v1869
  %v1925 = vpack.c.bf16 %v1872, %v1871
  %v1926 = vpack.c.bf16 %v1874, %v1873
  %v1927 = vpack.c.bf16 %v1876, %v1875
  %v1928 = vpack.c.bf16 %v1878, %v1877
  %v1929 = vpack.c.bf16 %v1880, %v1879
  %v1930 = vpack.c.bf16 %v1882, %v1881
  %v1931 = vpack.c.bf16 %v1884, %v1883
  %v1932 = vpack.c.bf16 %v1886, %v1885
  %v1933 = vpack.c.bf16 %v1888, %v1887
  %v1934 = vpack.c.bf16 %v1890, %v1889
  %v1935 = vpack.c.bf16 %v1892, %v1891
  %v1936 = vpack.c.bf16 %v1894, %v1893
  %v1937 = vpack.c.bf16 %v1896, %v1895
  %v1938 = vpack.c.bf16 %v1898, %v1897
  %v1939 = vpack.c.bf16 %v1900, %v1899
  %v1940 = vpack.c.bf16 %v1902, %v1901
  %v1941 = vpack.c.bf16 %v1904, %v1903
  %v1942 = vpack.c.bf16 %v1906, %v1905
  %v1943 = vpack.c.bf16 %v1908, %v1907
  %v1944 = vpack.c.bf16 %v1910, %v1909
  %v1945 = vpack.c.bf16 %v1912, %v1911
  %v1946 = vpack.c.bf16 %v1914, %v1913
  %v1947 = vpack.c.bf16 %v558, %v555
  %v1948 = vpack.c.bf16 %v566, %v563
  %v1949 = vpack.c.bf16 %v574, %v571
  %v1950 = vpack.c.bf16 %v582, %v579
  %v1952 = vsel %vm1210, %v1915, 0
  %v1955 = vsel %vm1210, %v1916, 0
  %v1958 = vsel %vm1210, %v1917, 0
  %v1961 = vsel %vm1210, %v1918, 0
  %v1964 = vsel %vm1210, %v1919, 0
  %v1967 = vsel %vm1210, %v1920, 0
  %v1970 = vsel %vm1210, %v1921, 0
  %v1973 = vsel %vm1210, %v1922, 0
  %v1976 = vsel %vm1210, %v1923, 0
  %v1979 = vsel %vm1210, %v1924, 0
  %v1982 = vsel %vm1210, %v1925, 0
  %v1985 = vsel %vm1210, %v1926, 0
  %v1988 = vsel %vm1210, %v1927, 0
  %v1991 = vsel %vm1210, %v1928, 0
  %v1994 = vsel %vm1210, %v1929, 0
  %v1997 = vsel %vm1210, %v1930, 0
  %v2000 = vsel %vm1210, %v1931, 0
  %v2003 = vsel %vm1210, %v1932, 0
  %v2006 = vsel %vm1210, %v1933, 0
  %v2009 = vsel %vm1210, %v1934, 0
  %v2012 = vsel %vm1210, %v1935, 0
  %v2015 = vsel %vm1210, %v1936, 0
  %v2018 = vsel %vm1210, %v1937, 0
  %v2021 = vsel %vm1210, %v1938, 0
  %v2024 = vsel %vm1210, %v1939, 0
  %v2027 = vsel %vm1210, %v1940, 0
  %v2030 = vsel %vm1210, %v1941, 0
  %v2033 = vsel %vm1210, %v1942, 0
  %v2036 = vsel %vm1210, %v1943, 0
  %v2039 = vsel %vm1210, %v1944, 0
  %v2042 = vsel %vm1210, %v1945, 0
  %v2045 = vsel %vm1210, %v1946, 0
  %2047 = vmatprep.subr.bf16.mxu0 0
  %2048 = vmatpush1.bf16.msra.mxu0 %v1947
  %2049 = vmatprep.subr.bf16.mxu0 0
  %2050 = vmatpush1.bf16.msra.mxu0 %v1948
  %2051 = vmatprep.subr.bf16.mxu0 0
  %2052 = vmatpush1.bf16.msra.mxu0 %v1949
  %2053 = vmatprep.subr.bf16.mxu0 0
  %2054 = vmatpush1.bf16.msra.mxu0 %v1950
  %2055 = vmatprep.subr.bf16.mxu0 0
  %2056 = vmatpush1.bf16.msra.mxu0 0
  %2057 = vmatprep.subr.bf16.mxu0 0
  %2058 = vmatpush1.bf16.msra.mxu0 0
  %2059 = vmatprep.subr.bf16.mxu0 0
  %2060 = vmatpush1.bf16.msra.mxu0 0
  %2061 = vmatprep.subr.bf16.mxu0 0
  %2062 = vmatpush1.bf16.msra.mxu0 0
  %2063 = vmatprep.subr.bf16.mxu0 0
  %2064 = vmatpush1.bf16.msra.mxu0 0
  %2065 = vmatprep.subr.bf16.mxu0 0
  %2066 = vmatpush1.bf16.msra.mxu0 0
  %2067 = vmatprep.subr.bf16.mxu0 0
  %2068 = vmatpush1.bf16.msra.mxu0 0
  %2069 = vmatprep.subr.bf16.mxu0 0
  %2070 = vmatpush1.bf16.msra.mxu0 0
  %2071 = vmatprep.subr.bf16.mxu0 0
  %2072 = vmatpush1.bf16.msra.mxu0 0
  %2073 = vmatprep.subr.bf16.mxu0 0
  %2074 = vmatpush1.bf16.msra.mxu0 0
  %2075 = vmatprep.subr.bf16.mxu0 0
  %2076 = vmatpush1.bf16.msra.mxu0 0
  %2077 = vmatprep.subr.bf16.mxu0 0
  %2078 = vmatpush1.bf16.msra.mxu0 0
  %2079 = vmatprep.mubr.bf16.mxu0 0
  %2080 = vmatmul.mubr.bf16.gmra.mrb[0].mxu0 %v1952
  %v2081 = vpop.f32.mrb[0].mxu0
  %v2082 = vadd.f32 0.0, %v2081
  %v2083 = vpop.f32.mrb[0].mxu0
  %v2084 = vpop.f32.mrb[0].mxu0
  %v2085 = vadd.f32 0.0, %v2084
  %v2086 = vpop.f32.mrb[0].mxu0
  %2087 = vmatprep.mubr.bf16.mxu0 0
  %2088 = vmatmul.mubr.bf16.gmra.mrb[0].mxu0 %v1955
  %v2089 = vpop.f32.mrb[0].mxu0
  %v2090 = vadd.f32 0.0, %v2089
  %v2091 = vpop.f32.mrb[0].mxu0
  %v2092 = vpop.f32.mrb[0].mxu0
  %v2093 = vadd.f32 0.0, %v2092
  %v2094 = vpop.f32.mrb[0].mxu0
  %2095 = vmatprep.mubr.bf16.mxu0 0
  %2096 = vmatmul.mubr.bf16.gmra.mrb[0].mxu0 %v1958
  %v2097 = vpop.f32.mrb[0].mxu0
  %v2098 = vadd.f32 0.0, %v2097
  %v2099 = vpop.f32.mrb[0].mxu0
  %v2100 = vpop.f32.mrb[0].mxu0
  %v2101 = vadd.f32 0.0, %v2100
  %v2102 = vpop.f32.mrb[0].mxu0
  %2103 = vmatprep.mubr.bf16.mxu0 0
  %2104 = vmatmul.mubr.bf16.gmra.mrb[0].mxu0 %v1961
  %v2105 = vpop.f32.mrb[0].mxu0
  %v2106 = vadd.f32 0.0, %v2105
  %v2107 = vpop.f32.mrb[0].mxu0
  %v2108 = vpop.f32.mrb[0].mxu0
  %v2109 = vadd.f32 0.0, %v2108
  %v2110 = vpop.f32.mrb[0].mxu0
  %2111 = vmatprep.mubr.bf16.mxu0 0
  %2112 = vmatmul.mubr.bf16.gmra.mrb[0].mxu0 %v1964
  %v2113 = vpop.f32.mrb[0].mxu0
  %v2114 = vadd.f32 0.0, %v2113
  %v2115 = vpop.f32.mrb[0].mxu0
  %v2116 = vpop.f32.mrb[0].mxu0
  %v2117 = vadd.f32 0.0, %v2116
  %v2118 = vpop.f32.mrb[0].mxu0
  %2119 = vmatprep.mubr.bf16.mxu0 0
  %2120 = vmatmul.mubr.bf16.gmra.mrb[0].mxu0 %v1967
  %v2121 = vpop.f32.mrb[0].mxu0
  %v2122 = vadd.f32 0.0, %v2121
  %v2123 = vpop.f32.mrb[0].mxu0
  %v2124 = vpop.f32.mrb[0].mxu0
  %v2125 = vadd.f32 0.0, %v2124
  %v2126 = vpop.f32.mrb[0].mxu0
  %2127 = vmatprep.mubr.bf16.mxu0 0
  %2128 = vmatmul.mubr.bf16.gmra.mrb[0].mxu0 %v1970
  %v2129 = vpop.f32.mrb[0].mxu0
  %v2130 = vadd.f32 0.0, %v2129
  %v2131 = vpop.f32.mrb[0].mxu0
  %v2132 = vpop.f32.mrb[0].mxu0
  %v2133 = vadd.f32 0.0, %v2132
  %v2134 = vpop.f32.mrb[0].mxu0
  %2135 = vmatprep.mubr.bf16.mxu0 0
  %2136 = vmatmul.mubr.bf16.gmra.mrb[0].mxu0 %v1973
  %v2137 = vpop.f32.mrb[0].mxu0
  %v2138 = vadd.f32 0.0, %v2137
  %v2139 = vpop.f32.mrb[0].mxu0
  %v2140 = vpop.f32.mrb[0].mxu0
  %v2141 = vadd.f32 0.0, %v2140
  %v2142 = vpop.f32.mrb[0].mxu0
  %2143 = vmatprep.mubr.bf16.mxu0 0
  %2144 = vmatmul.mubr.bf16.gmra.mrb[0].mxu0 %v1976
  %v2145 = vpop.f32.mrb[0].mxu0
  %v2146 = vadd.f32 0.0, %v2145
  %v2147 = vpop.f32.mrb[0].mxu0
  %v2148 = vpop.f32.mrb[0].mxu0
  %v2149 = vadd.f32 0.0, %v2148
  %v2150 = vpop.f32.mrb[0].mxu0
  %2151 = vmatprep.mubr.bf16.mxu0 0
  %2152 = vmatmul.mubr.bf16.gmra.mrb[0].mxu0 %v1979
  %v2153 = vpop.f32.mrb[0].mxu0
  %v2154 = vadd.f32 0.0, %v2153
  %v2155 = vpop.f32.mrb[0].mxu0
  %v2156 = vpop.f32.mrb[0].mxu0
  %v2157 = vadd.f32 0.0, %v2156
  %v2158 = vpop.f32.mrb[0].mxu0
  %2159 = vmatprep.mubr.bf16.mxu0 0
  %2160 = vmatmul.mubr.bf16.gmra.mrb[0].mxu0 %v1982
  %v2161 = vpop.f32.mrb[0].mxu0
  %v2162 = vadd.f32 0.0, %v2161
  %v2163 = vpop.f32.mrb[0].mxu0
  %v2164 = vpop.f32.mrb[0].mxu0
  %v2165 = vadd.f32 0.0, %v2164
  %v2166 = vpop.f32.mrb[0].mxu0
  %2167 = vmatprep.mubr.bf16.mxu0 0
  %2168 = vmatmul.mubr.bf16.gmra.mrb[0].mxu0 %v1985
  %v2169 = vpop.f32.mrb[0].mxu0
  %v2170 = vadd.f32 0.0, %v2169
  %v2171 = vpop.f32.mrb[0].mxu0
  %v2172 = vpop.f32.mrb[0].mxu0
  %v2173 = vadd.f32 0.0, %v2172
  %v2174 = vpop.f32.mrb[0].mxu0
  %2175 = vmatprep.mubr.bf16.mxu0 0
  %2176 = vmatmul.mubr.bf16.gmra.mrb[0].mxu0 %v1988
  %v2177 = vpop.f32.mrb[0].mxu0
  %v2178 = vadd.f32 0.0, %v2177
  %v2179 = vpop.f32.mrb[0].mxu0
  %v2180 = vpop.f32.mrb[0].mxu0
  %v2181 = vadd.f32 0.0, %v2180
  %v2182 = vpop.f32.mrb[0].mxu0
  %2183 = vmatprep.mubr.bf16.mxu0 0
  %2184 = vmatmul.mubr.bf16.gmra.mrb[0].mxu0 %v1991
  %v2185 = vpop.f32.mrb[0].mxu0
  %v2186 = vadd.f32 0.0, %v2185
  %v2187 = vpop.f32.mrb[0].mxu0
  %v2188 = vpop.f32.mrb[0].mxu0
  %v2189 = vadd.f32 0.0, %v2188
  %v2190 = vpop.f32.mrb[0].mxu0
  %2191 = vmatprep.mubr.bf16.mxu0 0
  %2192 = vmatmul.mubr.bf16.gmra.mrb[0].mxu0 %v1994
  %v2193 = vpop.f32.mrb[0].mxu0
  %v2194 = vadd.f32 0.0, %v2193
  %v2195 = vpop.f32.mrb[0].mxu0
  %v2196 = vpop.f32.mrb[0].mxu0
  %v2197 = vadd.f32 0.0, %v2196
  %v2198 = vpop.f32.mrb[0].mxu0
  %2199 = vmatprep.mubr.bf16.mxu0 0
  %2200 = vmatmul.mubr.bf16.gmra.mrb[0].mxu0 %v1997
  %v2201 = vpop.f32.mrb[0].mxu0
  %v2202 = vadd.f32 0.0, %v2201
  %v2203 = vpop.f32.mrb[0].mxu0
  %v2204 = vpop.f32.mrb[0].mxu0
  %v2205 = vadd.f32 0.0, %v2204
  %v2206 = vpop.f32.mrb[0].mxu0
  %2207 = vmatprep.mubr.bf16.mxu0 0
  %2208 = vmatmul.mubr.bf16.gmra.mrb[0].mxu0 %v2000
  %v2209 = vpop.f32.mrb[0].mxu0
  %v2210 = vadd.f32 0.0, %v2209
  %v2211 = vpop.f32.mrb[0].mxu0
  %v2212 = vpop.f32.mrb[0].mxu0
  %v2213 = vadd.f32 0.0, %v2212
  %v2214 = vpop.f32.mrb[0].mxu0
  %2215 = vmatprep.mubr.bf16.mxu0 0
  %2216 = vmatmul.mubr.bf16.gmra.mrb[0].mxu0 %v2003
  %v2217 = vpop.f32.mrb[0].mxu0
  %v2218 = vadd.f32 0.0, %v2217
  %v2219 = vpop.f32.mrb[0].mxu0
  %v2220 = vpop.f32.mrb[0].mxu0
  %v2221 = vadd.f32 0.0, %v2220
  %v2222 = vpop.f32.mrb[0].mxu0
  %2223 = vmatprep.mubr.bf16.mxu0 0
  %2224 = vmatmul.mubr.bf16.gmra.mrb[0].mxu0 %v2006
  %v2225 = vpop.f32.mrb[0].mxu0
  %v2226 = vadd.f32 0.0, %v2225
  %v2227 = vpop.f32.mrb[0].mxu0
  %v2228 = vpop.f32.mrb[0].mxu0
  %v2229 = vadd.f32 0.0, %v2228
  %v2230 = vpop.f32.mrb[0].mxu0
  %2231 = vmatprep.mubr.bf16.mxu0 0
  %2232 = vmatmul.mubr.bf16.gmra.mrb[0].mxu0 %v2009
  %v2233 = vpop.f32.mrb[0].mxu0
  %v2234 = vadd.f32 0.0, %v2233
  %v2235 = vpop.f32.mrb[0].mxu0
  %v2236 = vpop.f32.mrb[0].mxu0
  %v2237 = vadd.f32 0.0, %v2236
  %v2238 = vpop.f32.mrb[0].mxu0
  %2239 = vmatprep.mubr.bf16.mxu0 0
  %2240 = vmatmul.mubr.bf16.gmra.mrb[0].mxu0 %v2012
  %v2241 = vpop.f32.mrb[0].mxu0
  %v2242 = vadd.f32 0.0, %v2241
  %v2243 = vpop.f32.mrb[0].mxu0
  %v2244 = vpop.f32.mrb[0].mxu0
  %v2245 = vadd.f32 0.0, %v2244
  %v2246 = vpop.f32.mrb[0].mxu0
  %2247 = vmatprep.mubr.bf16.mxu0 0
  %2248 = vmatmul.mubr.bf16.gmra.mrb[0].mxu0 %v2015
  %v2249 = vpop.f32.mrb[0].mxu0
  %v2250 = vadd.f32 0.0, %v2249
  %v2251 = vpop.f32.mrb[0].mxu0
  %v2252 = vpop.f32.mrb[0].mxu0
  %v2253 = vadd.f32 0.0, %v2252
  %v2254 = vpop.f32.mrb[0].mxu0
  %2255 = vmatprep.mubr.bf16.mxu0 0
  %2256 = vmatmul.mubr.bf16.gmra.mrb[0].mxu0 %v2018
  %v2257 = vpop.f32.mrb[0].mxu0
  %v2258 = vadd.f32 0.0, %v2257
  %v2259 = vpop.f32.mrb[0].mxu0
  %v2260 = vpop.f32.mrb[0].mxu0
  %v2261 = vadd.f32 0.0, %v2260
  %v2262 = vpop.f32.mrb[0].mxu0
  %2263 = vmatprep.mubr.bf16.mxu0 0
  %2264 = vmatmul.mubr.bf16.gmra.mrb[0].mxu0 %v2021
  %v2265 = vpop.f32.mrb[0].mxu0
  %v2266 = vadd.f32 0.0, %v2265
  %v2267 = vpop.f32.mrb[0].mxu0
  %v2268 = vpop.f32.mrb[0].mxu0
  %v2269 = vadd.f32 0.0, %v2268
  %v2270 = vpop.f32.mrb[0].mxu0
  %2271 = vmatprep.mubr.bf16.mxu0 0
  %2272 = vmatmul.mubr.bf16.gmra.mrb[0].mxu0 %v2024
  %v2273 = vpop.f32.mrb[0].mxu0
  %v2274 = vadd.f32 0.0, %v2273
  %v2275 = vpop.f32.mrb[0].mxu0
  %v2276 = vpop.f32.mrb[0].mxu0
  %v2277 = vadd.f32 0.0, %v2276
  %v2278 = vpop.f32.mrb[0].mxu0
  %2279 = vmatprep.mubr.bf16.mxu0 0
  %2280 = vmatmul.mubr.bf16.gmra.mrb[0].mxu0 %v2027
  %v2281 = vpop.f32.mrb[0].mxu0
  %v2282 = vadd.f32 0.0, %v2281
  %v2283 = vpop.f32.mrb[0].mxu0
  %v2284 = vpop.f32.mrb[0].mxu0
  %v2285 = vadd.f32 0.0, %v2284
  %v2286 = vpop.f32.mrb[0].mxu0
  %2287 = vmatprep.mubr.bf16.mxu0 0
  %2288 = vmatmul.mubr.bf16.gmra.mrb[0].mxu0 %v2030
  %v2289 = vpop.f32.mrb[0].mxu0
  %v2290 = vadd.f32 0.0, %v2289
  %v2291 = vpop.f32.mrb[0].mxu0
  %v2292 = vpop.f32.mrb[0].mxu0
  %v2293 = vadd.f32 0.0, %v2292
  %v2294 = vpop.f32.mrb[0].mxu0
  %2295 = vmatprep.mubr.bf16.mxu0 0
  %2296 = vmatmul.mubr.bf16.gmra.mrb[0].mxu0 %v2033
  %v2297 = vpop.f32.mrb[0].mxu0
  %v2298 = vadd.f32 0.0, %v2297
  %v2299 = vpop.f32.mrb[0].mxu0
  %v2300 = vpop.f32.mrb[0].mxu0
  %v2301 = vadd.f32 0.0, %v2300
  %v2302 = vpop.f32.mrb[0].mxu0
  %2303 = vmatprep.mubr.bf16.mxu0 0
  %2304 = vmatmul.mubr.bf16.gmra.mrb[0].mxu0 %v2036
  %v2305 = vpop.f32.mrb[0].mxu0
  %v2306 = vadd.f32 0.0, %v2305
  %v2307 = vpop.f32.mrb[0].mxu0
  %v2308 = vpop.f32.mrb[0].mxu0
  %v2309 = vadd.f32 0.0, %v2308
  %v2310 = vpop.f32.mrb[0].mxu0
  %2311 = vmatprep.mubr.bf16.mxu0 0
  %2312 = vmatmul.mubr.bf16.gmra.mrb[0].mxu0 %v2039
  %v2313 = vpop.f32.mrb[0].mxu0
  %v2314 = vadd.f32 0.0, %v2313
  %v2315 = vpop.f32.mrb[0].mxu0
  %v2316 = vpop.f32.mrb[0].mxu0
  %v2317 = vadd.f32 0.0, %v2316
  %v2318 = vpop.f32.mrb[0].mxu0
  %2319 = vmatprep.mubr.bf16.mxu0 0
  %2320 = vmatmul.mubr.bf16.gmra.mrb[0].mxu0 %v2042
  %v2321 = vpop.f32.mrb[0].mxu0
  %v2322 = vadd.f32 0.0, %v2321
  %v2323 = vpop.f32.mrb[0].mxu0
  %v2324 = vpop.f32.mrb[0].mxu0
  %v2325 = vadd.f32 0.0, %v2324
  %v2326 = vpop.f32.mrb[0].mxu0
  %2327 = vmatprep.mubr.bf16.mxu0 0
  %2328 = vmatmul.mubr.bf16.gmra.mrb[0].mxu0 %v2045
  %v2329 = vpop.f32.mrb[0].mxu0
  %v2330 = vadd.f32 0.0, %v2329
  %v2331 = vpop.f32.mrb[0].mxu0
  %v2332 = vpop.f32.mrb[0].mxu0
  %v2333 = vadd.f32 0.0, %v2332
  %v2334 = vpop.f32.mrb[0].mxu0
  %2335 = vdwg.mxu0
  %v2336 = vmul.f32 %v2082, %v169
  %v2337 = vmul.f32 %v2085, %v170
  %v2338 = vmul.f32 %v2090, %v171
  %v2339 = vmul.f32 %v2093, %v172
  %v2340 = vmul.f32 %v2098, %v173
  %v2341 = vmul.f32 %v2101, %v174
  %v2342 = vmul.f32 %v2106, %v175
  %v2343 = vmul.f32 %v2109, %v176
  %v2344 = vmul.f32 %v2114, %v177
  %v2345 = vmul.f32 %v2117, %v178
  %v2346 = vmul.f32 %v2122, %v179
  %v2347 = vmul.f32 %v2125, %v180
  %v2348 = vmul.f32 %v2130, %v181
  %v2349 = vmul.f32 %v2133, %v182
  %v2350 = vmul.f32 %v2138, %v183
  %v2351 = vmul.f32 %v2141, %v184
  %v2352 = vmul.f32 %v2146, %v185
  %v2353 = vmul.f32 %v2149, %v186
  %v2354 = vmul.f32 %v2154, %v187
  %v2355 = vmul.f32 %v2157, %v188
  %v2356 = vmul.f32 %v2162, %v189
  %v2357 = vmul.f32 %v2165, %v190
  %v2358 = vmul.f32 %v2170, %v191
  %v2359 = vmul.f32 %v2173, %v192
  %v2360 = vmul.f32 %v2178, %v193
  %v2361 = vmul.f32 %v2181, %v194
  %v2362 = vmul.f32 %v2186, %v195
  %v2363 = vmul.f32 %v2189, %v196
  %v2364 = vmul.f32 %v2194, %v197
  %v2365 = vmul.f32 %v2197, %v198
  %v2366 = vmul.f32 %v2202, %v199
  %v2367 = vmul.f32 %v2205, %v200
  %v2368 = vmul.f32 %v2210, %v201
  %v2369 = vmul.f32 %v2213, %v202
  %v2370 = vmul.f32 %v2218, %v203
  %v2371 = vmul.f32 %v2221, %v204
  %v2372 = vmul.f32 %v2226, %v205
  %v2373 = vmul.f32 %v2229, %v206
  %v2374 = vmul.f32 %v2234, %v207
  %v2375 = vmul.f32 %v2237, %v208
  %v2376 = vmul.f32 %v2242, %v209
  %v2377 = vmul.f32 %v2245, %v210
  %v2378 = vmul.f32 %v2250, %v211
  %v2379 = vmul.f32 %v2253, %v212
  %v2380 = vmul.f32 %v2258, %v213
  %v2381 = vmul.f32 %v2261, %v214
  %v2382 = vmul.f32 %v2266, %v215
  %v2383 = vmul.f32 %v2269, %v216
  %v2384 = vmul.f32 %v2274, %v217
  %v2385 = vmul.f32 %v2277, %v218
  %v2386 = vmul.f32 %v2282, %v219
  %v2387 = vmul.f32 %v2285, %v220
  %v2388 = vmul.f32 %v2290, %v221
  %v2389 = vmul.f32 %v2293, %v222
  %v2390 = vmul.f32 %v2298, %v223
  %v2391 = vmul.f32 %v2301, %v224
  %v2392 = vmul.f32 %v2306, %v225
  %v2393 = vmul.f32 %v2309, %v226
  %v2394 = vmul.f32 %v2314, %v227
  %v2395 = vmul.f32 %v2317, %v228
  %v2396 = vmul.f32 %v2322, %v229
  %v2397 = vmul.f32 %v2325, %v230
  %v2398 = vmul.f32 %v2330, %v231
  %v2399 = vmul.f32 %v2333, %v232
  %v2400 = vadd.f32 %v2336, %v2344
  %v2401 = vadd.f32 %v2337, %v2345
  %v2402 = vadd.f32 %v2338, %v2346
  %v2403 = vadd.f32 %v2339, %v2347
  %v2404 = vadd.f32 %v2340, %v2348
  %v2405 = vadd.f32 %v2341, %v2349
  %v2406 = vadd.f32 %v2342, %v2350
  %v2407 = vadd.f32 %v2343, %v2351
  %v2408 = vadd.f32 %v2400, %v2352
  %v2409 = vadd.f32 %v2401, %v2353
  %v2410 = vadd.f32 %v2402, %v2354
  %v2411 = vadd.f32 %v2403, %v2355
  %v2412 = vadd.f32 %v2404, %v2356
  %v2413 = vadd.f32 %v2405, %v2357
  %v2414 = vadd.f32 %v2406, %v2358
  %v2415 = vadd.f32 %v2407, %v2359
  %v2416 = vadd.f32 %v2408, %v2360
  %v2417 = vadd.f32 %v2409, %v2361
  %v2418 = vadd.f32 %v2410, %v2362
  %v2419 = vadd.f32 %v2411, %v2363
  %v2420 = vadd.f32 %v2412, %v2364
  %v2421 = vadd.f32 %v2413, %v2365
  %v2422 = vadd.f32 %v2414, %v2366
  %v2423 = vadd.f32 %v2415, %v2367
  %v2424 = vadd.f32 %v2416, %v2368
  %v2425 = vadd.f32 %v2417, %v2369
  %v2426 = vadd.f32 %v2418, %v2370
  %v2427 = vadd.f32 %v2419, %v2371
  %v2428 = vadd.f32 %v2420, %v2372
  %v2429 = vadd.f32 %v2421, %v2373
  %v2430 = vadd.f32 %v2422, %v2374
  %v2431 = vadd.f32 %v2423, %v2375
  %v2432 = vadd.f32 %v2424, %v2376
  %v2433 = vadd.f32 %v2425, %v2377
  %v2434 = vadd.f32 %v2426, %v2378
  %v2435 = vadd.f32 %v2427, %v2379
  %v2436 = vadd.f32 %v2428, %v2380
  %v2437 = vadd.f32 %v2429, %v2381
  %v2438 = vadd.f32 %v2430, %v2382
  %v2439 = vadd.f32 %v2431, %v2383
  %v2440 = vadd.f32 %v2432, %v2384
  %v2441 = vadd.f32 %v2433, %v2385
  %v2442 = vadd.f32 %v2434, %v2386
  %v2443 = vadd.f32 %v2435, %v2387
  %v2444 = vadd.f32 %v2436, %v2388
  %v2445 = vadd.f32 %v2437, %v2389
  %v2446 = vadd.f32 %v2438, %v2390
  %v2447 = vadd.f32 %v2439, %v2391
  %v2448 = vadd.f32 %v2440, %v2392
  %v2449 = vadd.f32 %v2441, %v2393
  %v2450 = vadd.f32 %v2442, %v2394
  %v2451 = vadd.f32 %v2443, %v2395
  %v2452 = vadd.f32 %v2444, %v2396
  %v2453 = vadd.f32 %v2445, %v2397
  %v2454 = vadd.f32 %v2446, %v2398
  %v2455 = vadd.f32 %v2447, %v2399
  %v2456 = vpack.c.bf16 %v2449, %v2448
  %v2457 = vpack.c.bf16 %v2451, %v2450
  %v2458 = vpack.c.bf16 %v2453, %v2452
  %v2459 = vpack.c.bf16 %v2455, %v2454
  %v2460 = vlaneseq
  %v2461 = vshrl.u32 %v2460, 7
  %v2462 = vsub.s32 3, %v2461
  %v2463 = vrot.slane %v167, %v2462
  %v2468 = vunpack.c.l.b16 %v147
  %v2469 = vunpack.c.l.b16 %v148
  %v2470 = vunpack.c.l.b16 %v149
  %v2471 = vunpack.c.l.b16 %v150
  %v2472 = vpack.c.b16 %v2469, %v2468
  %v2473 = vpack.c.b16 %v2471, %v2470
  %v2475 = vsel %vm331, %v2456, 0
  %v2478 = vsel %vm331, %v2457, 0
  %v2481 = vsel %vm331, %v2458, 0
  %v2484 = vsel %vm331, %v2459, 0
  %v2487 = vsel %vm331, %v2472, 0
  %v2490 = vsel %vm331, %v2473, 0
  %2492 = vmatprep.subr.bf16.mxu0 0
  %2493 = vmatpush1.bf16.xpose.msra.mxu0 %v2487
  %2494 = vmatprep.subr.bf16.mxu0 0
  %2495 = vmatpush1.bf16.xpose.msra.mxu0 %v2490
  %2496 = vmatprep.subr.bf16.mxu0 0
  %2497 = vmatpush1.bf16.xpose.msra.mxu0 0
  %2498 = vmatprep.subr.bf16.mxu0 0
  %2499 = vmatpush1.bf16.xpose.msra.mxu0 0
  %2500 = vmatprep.subr.bf16.mxu0 0
  %2501 = vmatpush1.bf16.xpose.msra.mxu0 0
  %2502 = vmatprep.subr.bf16.mxu0 0
  %2503 = vmatpush1.bf16.xpose.msra.mxu0 0
  %2504 = vmatprep.subr.bf16.mxu0 0
  %2505 = vmatpush1.bf16.xpose.msra.mxu0 0
  %2506 = vmatprep.subr.bf16.mxu0 0
  %2507 = vmatpush1.bf16.xpose.msra.mxu0 0
  %2508 = vmatprep.subr.bf16.mxu0 0
  %2509 = vmatpush1.bf16.xpose.msra.mxu0 0
  %2510 = vmatprep.subr.bf16.mxu0 0
  %2511 = vmatpush1.bf16.xpose.msra.mxu0 0
  %2512 = vmatprep.subr.bf16.mxu0 0
  %2513 = vmatpush1.bf16.xpose.msra.mxu0 0
  %2514 = vmatprep.subr.bf16.mxu0 0
  %2515 = vmatpush1.bf16.xpose.msra.mxu0 0
  %2516 = vmatprep.subr.bf16.mxu0 0
  %2517 = vmatpush1.bf16.xpose.msra.mxu0 0
  %2518 = vmatprep.subr.bf16.mxu0 0
  %2519 = vmatpush1.bf16.xpose.msra.mxu0 0
  %2520 = vmatprep.subr.bf16.mxu0 0
  %2521 = vmatpush1.bf16.xpose.msra.mxu0 0
  %2522 = vmatprep.subr.bf16.mxu0 0
  %2523 = vmatpush1.bf16.xpose.msra.mxu0 0
  %2524 = vmatprep.mubr.bf16.mxu0 0
  %2525 = vmatmul.mubr.bf16.gmra.mrb[0].mxu0 %v2475
  %v2526 = vpop.f32.mrb[0].mxu0
  %v2527 = vadd.f32 %v2463, %v2526
  %v2528 = vpop.f32.mrb[0].mxu0
  %v2529 = vpop.f32.mrb[0].mxu0
  %v2530 = vadd.f32 %v2463, %v2529
  %v2531 = vpop.f32.mrb[0].mxu0
  %2532 = vmatprep.mubr.bf16.mxu0 0
  %2533 = vmatmul.mubr.bf16.gmra.mrb[0].mxu0 %v2478
  %v2534 = vpop.f32.mrb[0].mxu0
  %v2535 = vadd.f32 %v2463, %v2534
  %v2536 = vpop.f32.mrb[0].mxu0
  %v2537 = vpop.f32.mrb[0].mxu0
  %v2538 = vadd.f32 %v2463, %v2537
  %v2539 = vpop.f32.mrb[0].mxu0
  %2540 = vmatprep.mubr.bf16.mxu0 0
  %2541 = vmatmul.mubr.bf16.gmra.mrb[0].mxu0 %v2481
  %v2542 = vpop.f32.mrb[0].mxu0
  %v2543 = vadd.f32 %v2463, %v2542
  %v2544 = vpop.f32.mrb[0].mxu0
  %v2545 = vpop.f32.mrb[0].mxu0
  %v2546 = vadd.f32 %v2463, %v2545
  %v2547 = vpop.f32.mrb[0].mxu0
  %2548 = vmatprep.mubr.bf16.mxu0 0
  %2549 = vmatmul.mubr.bf16.gmra.mrb[0].mxu0 %v2484
  %v2550 = vpop.f32.mrb[0].mxu0
  %v2551 = vadd.f32 %v2463, %v2550
  %v2552 = vpop.f32.mrb[0].mxu0
  %v2553 = vpop.f32.mrb[0].mxu0
  %v2554 = vadd.f32 %v2463, %v2553
  %v2555 = vpop.f32.mrb[0].mxu0
  %2556 = vdwg.mxu0
  %v2557 = vadd.f32 %v27, %v2527
  %v2558 = vadd.f32 %v28, %v2530
  %v2559 = vadd.f32 %v29, %v2535
  %v2560 = vadd.f32 %v30, %v2538
  %v2561 = vadd.f32 %v31, %v2543
  %v2562 = vadd.f32 %v32, %v2546
  %v2563 = vadd.f32 %v33, %v2551
  %v2564 = vadd.f32 %v34, %v2554
  %v2565 = vsel %vm331, %v2557, 0.0
  %2566 = vadd.xlane.f32.xlu0 %v2565
  %v2567 = vpop.xlane.xlu0 %2566
  %v2568 = vsel %vm331, %v2558, 0.0
  %2569 = vadd.xlane.f32.xlu0 %v2568
  %v2570 = vpop.xlane.xlu0 %2569
  %v2571 = vsel %vm331, %v2559, 0.0
  %2572 = vadd.xlane.f32.xlu0 %v2571
  %v2573 = vpop.xlane.xlu0 %2572
  %v2574 = vsel %vm331, %v2560, 0.0
  %2575 = vadd.xlane.f32.xlu0 %v2574
  %v2576 = vpop.xlane.xlu0 %2575
  %v2577 = vsel %vm331, %v2561, 0.0
  %2578 = vadd.xlane.f32.xlu0 %v2577
  %v2579 = vpop.xlane.xlu0 %2578
  %v2580 = vsel %vm331, %v2562, 0.0
  %2581 = vadd.xlane.f32.xlu0 %v2580
  %v2582 = vpop.xlane.xlu0 %2581
  %v2583 = vsel %vm331, %v2563, 0.0
  %2584 = vadd.xlane.f32.xlu0 %v2583
  %v2585 = vpop.xlane.xlu0 %2584
  %v2586 = vsel %vm331, %v2564, 0.0
  %2587 = vadd.xlane.f32.xlu0 %v2586
  %v2588 = vpop.xlane.xlu0 %2587
  %v2589 = vrcp.pop 32.0
  %v2590 = vmul.f32 %v2567, %v2589
  %v2591 = vmul.f32 %v2570, %v2589
  %v2592 = vmul.f32 %v2573, %v2589
  %v2593 = vmul.f32 %v2576, %v2589
  %v2594 = vmul.f32 %v2579, %v2589
  %v2595 = vmul.f32 %v2582, %v2589
  %v2596 = vmul.f32 %v2585, %v2589
  %v2597 = vmul.f32 %v2588, %v2589
  %v2598 = vsub.f32 %v2557, %v2590
  %v2599 = vsub.f32 %v2558, %v2591
  %v2600 = vsub.f32 %v2559, %v2592
  %v2601 = vsub.f32 %v2560, %v2593
  %v2602 = vsub.f32 %v2561, %v2594
  %v2603 = vsub.f32 %v2562, %v2595
  %v2604 = vsub.f32 %v2563, %v2596
  %v2605 = vsub.f32 %v2564, %v2597
  %v2606 = vmul.f32 %v2598, %v2598
  %v2607 = vmul.f32 %v2599, %v2599
  %v2608 = vmul.f32 %v2600, %v2600
  %v2609 = vmul.f32 %v2601, %v2601
  %v2610 = vmul.f32 %v2602, %v2602
  %v2611 = vmul.f32 %v2603, %v2603
  %v2612 = vmul.f32 %v2604, %v2604
  %v2613 = vmul.f32 %v2605, %v2605
  %v2614 = vsel %vm331, %v2606, 0.0
  %2615 = vadd.xlane.f32.xlu0 %v2614
  %v2616 = vpop.xlane.xlu0 %2615
  %v2617 = vsel %vm331, %v2607, 0.0
  %2618 = vadd.xlane.f32.xlu0 %v2617
  %v2619 = vpop.xlane.xlu0 %2618
  %v2620 = vsel %vm331, %v2608, 0.0
  %2621 = vadd.xlane.f32.xlu0 %v2620
  %v2622 = vpop.xlane.xlu0 %2621
  %v2623 = vsel %vm331, %v2609, 0.0
  %2624 = vadd.xlane.f32.xlu0 %v2623
  %v2625 = vpop.xlane.xlu0 %2624
  %v2626 = vsel %vm331, %v2610, 0.0
  %2627 = vadd.xlane.f32.xlu0 %v2626
  %v2628 = vpop.xlane.xlu0 %2627
  %v2629 = vsel %vm331, %v2611, 0.0
  %2630 = vadd.xlane.f32.xlu0 %v2629
  %v2631 = vpop.xlane.xlu0 %2630
  %v2632 = vsel %vm331, %v2612, 0.0
  %2633 = vadd.xlane.f32.xlu0 %v2632
  %v2634 = vpop.xlane.xlu0 %2633
  %v2635 = vsel %vm331, %v2613, 0.0
  %2636 = vadd.xlane.f32.xlu0 %v2635
  %v2637 = vpop.xlane.xlu0 %2636
  %v2638 = vmul.f32 %v2616, %v2589
  %v2639 = vmul.f32 %v2619, %v2589
  %v2640 = vmul.f32 %v2622, %v2589
  %v2641 = vmul.f32 %v2625, %v2589
  %v2642 = vmul.f32 %v2628, %v2589
  %v2643 = vmul.f32 %v2631, %v2589
  %v2644 = vmul.f32 %v2634, %v2589
  %v2645 = vmul.f32 %v2637, %v2589
  %v2646 = vadd.f32 %v2638, 1e-05
  %v2647 = vadd.f32 %v2639, 1e-05
  %v2648 = vadd.f32 %v2640, 1e-05
  %v2649 = vadd.f32 %v2641, 1e-05
  %v2650 = vadd.f32 %v2642, 1e-05
  %v2651 = vadd.f32 %v2643, 1e-05
  %v2652 = vadd.f32 %v2644, 1e-05
  %v2653 = vadd.f32 %v2645, 1e-05
  %v2654 = vrsqrt.pop %v2646
  %v2655 = vrsqrt.pop %v2647
  %v2656 = vrsqrt.pop %v2648
  %v2657 = vrsqrt.pop %v2649
  %v2658 = vrsqrt.pop %v2650
  %v2659 = vrsqrt.pop %v2651
  %v2660 = vrsqrt.pop %v2652
  %v2661 = vrsqrt.pop %v2653
  %v2662 = vmul.f32 %v2598, %v2654
  %v2663 = vmul.f32 %v2599, %v2655
  %v2664 = vmul.f32 %v2600, %v2656
  %v2665 = vmul.f32 %v2601, %v2657
  %v2666 = vmul.f32 %v2602, %v2658
  %v2667 = vmul.f32 %v2603, %v2659
  %v2668 = vmul.f32 %v2604, %v2660
  %v2669 = vmul.f32 %v2605, %v2661
  %v2670 = vlaneseq
  %v2671 = vshrl.u32 %v2670, 7
  %v2672 = vsub.s32 4, %v2671
  %v2673 = vrot.slane %v167, %v2672
  %v2674 = vmul.f32 %v2662, %v2673
  %v2675 = vmul.f32 %v2663, %v2673
  %v2676 = vmul.f32 %v2664, %v2673
  %v2677 = vmul.f32 %v2665, %v2673
  %v2678 = vmul.f32 %v2666, %v2673
  %v2679 = vmul.f32 %v2667, %v2673
  %v2680 = vmul.f32 %v2668, %v2673
  %v2681 = vmul.f32 %v2669, %v2673
  %v2682 = vlaneseq
  %v2683 = vshrl.u32 %v2682, 7
  %v2684 = vsub.s32 5, %v2683
  %v2685 = vrot.slane %v167, %v2684
  %v2686 = vadd.f32 %v2674, %v2685
  %v2687 = vadd.f32 %v2675, %v2685
  %v2688 = vadd.f32 %v2676, %v2685
  %v2689 = vadd.f32 %v2677, %v2685
  %v2690 = vadd.f32 %v2678, %v2685
  %v2691 = vadd.f32 %v2679, %v2685
  %v2692 = vadd.f32 %v2680, %v2685
  %v2693 = vadd.f32 %v2681, %v2685
  %v2694 = vpack.c.bf16 %v36, %v35
  %v2695 = vpack.c.bf16 %v38, %v37
  %v2696 = vpack.c.bf16 %v40, %v39
  %v2697 = vpack.c.bf16 %v42, %v41
  %v2698 = vpack.c.bf16 %v44, %v43
  %v2699 = vpack.c.bf16 %v46, %v45
  %v2700 = vpack.c.bf16 %v48, %v47
  %v2701 = vpack.c.bf16 %v50, %v49
  %v2702 = vpack.c.bf16 %v52, %v51
  %v2703 = vpack.c.bf16 %v54, %v53
  %v2704 = vpack.c.bf16 %v56, %v55
  %v2705 = vpack.c.bf16 %v58, %v57
  %v2706 = vpack.c.bf16 %v60, %v59
  %v2707 = vpack.c.bf16 %v62, %v61
  %v2708 = vpack.c.bf16 %v64, %v63
  %v2709 = vpack.c.bf16 %v66, %v65
  %v2710 = vpack.c.bf16 %v68, %v67
  %v2711 = vpack.c.bf16 %v70, %v69
  %v2712 = vpack.c.bf16 %v72, %v71
  %v2713 = vpack.c.bf16 %v74, %v73
  %v2714 = vpack.c.bf16 %v76, %v75
  %v2715 = vpack.c.bf16 %v78, %v77
  %v2716 = vpack.c.bf16 %v80, %v79
  %v2717 = vpack.c.bf16 %v82, %v81
  %v2718 = vpack.c.bf16 %v84, %v83
  %v2719 = vpack.c.bf16 %v86, %v85
  %v2720 = vpack.c.bf16 %v88, %v87
  %v2721 = vpack.c.bf16 %v90, %v89
  %v2722 = vpack.c.bf16 %v92, %v91
  %v2723 = vpack.c.bf16 %v94, %v93
  %v2724 = vpack.c.bf16 %v96, %v95
  %v2725 = vpack.c.bf16 %v98, %v97
  %v2726 = vpack.c.bf16 %v100, %v99
  %v2727 = vpack.c.bf16 %v102, %v101
  %v2728 = vpack.c.bf16 %v104, %v103
  %v2729 = vpack.c.bf16 %v106, %v105
  %v2730 = vpack.c.bf16 %v108, %v107
  %v2731 = vpack.c.bf16 %v110, %v109
  %v2732 = vpack.c.bf16 %v112, %v111
  %v2733 = vpack.c.bf16 %v114, %v113
  %v2734 = vpack.c.bf16 %v116, %v115
  %v2735 = vpack.c.bf16 %v118, %v117
  %v2736 = vpack.c.bf16 %v120, %v119
  %v2737 = vpack.c.bf16 %v122, %v121
  %v2738 = vpack.c.bf16 %v124, %v123
  %v2739 = vpack.c.bf16 %v126, %v125
  %v2740 = vpack.c.bf16 %v128, %v127
  %v2741 = vpack.c.bf16 %v130, %v129
  %v2742 = vpack.c.bf16 %v132, %v131
  %v2743 = vpack.c.bf16 %v134, %v133
  %v2744 = vpack.c.bf16 %v2687, %v2686
  %v2745 = vpack.c.bf16 %v2689, %v2688
  %v2746 = vpack.c.bf16 %v2691, %v2690
  %v2747 = vpack.c.bf16 %v2693, %v2692
  %v2748 = vlaneseq
  %v2749 = vshrl.u32 %v2748, 7
  %v2750 = vsub.s32 6, %v2749
  %v2751 = vrot.slane %v167, %v2750
  %v2756 = vunpack.c.l.b16 %v151
  %v2757 = vunpack.c.l.b16 %v152
  %v2758 = vunpack.c.l.b16 %v153
  %v2759 = vunpack.c.l.b16 %v154
  %v2760 = vpack.c.b16 %v2757, %v2756
  %v2761 = vpack.c.b16 %v2759, %v2758
  %v2763 = vsel %vm331, %v2744, 0
  %v2766 = vsel %vm331, %v2745, 0
  %v2769 = vsel %vm331, %v2746, 0
  %v2772 = vsel %vm331, %v2747, 0
  %v2775 = vsel %vm331, %v2760, 0
  %v2778 = vsel %vm331, %v2761, 0
  %2780 = vmatprep.subr.bf16.mxu0 0
  %2781 = vmatpush1.bf16.xpose.msra.mxu0 %v2775
  %2782 = vmatprep.subr.bf16.mxu0 0
  %2783 = vmatpush1.bf16.xpose.msra.mxu0 %v2778
  %2784 = vmatprep.subr.bf16.mxu0 0
  %2785 = vmatpush1.bf16.xpose.msra.mxu0 0
  %2786 = vmatprep.subr.bf16.mxu0 0
  %2787 = vmatpush1.bf16.xpose.msra.mxu0 0
  %2788 = vmatprep.subr.bf16.mxu0 0
  %2789 = vmatpush1.bf16.xpose.msra.mxu0 0
  %2790 = vmatprep.subr.bf16.mxu0 0
  %2791 = vmatpush1.bf16.xpose.msra.mxu0 0
  %2792 = vmatprep.subr.bf16.mxu0 0
  %2793 = vmatpush1.bf16.xpose.msra.mxu0 0
  %2794 = vmatprep.subr.bf16.mxu0 0
  %2795 = vmatpush1.bf16.xpose.msra.mxu0 0
  %2796 = vmatprep.subr.bf16.mxu0 0
  %2797 = vmatpush1.bf16.xpose.msra.mxu0 0
  %2798 = vmatprep.subr.bf16.mxu0 0
  %2799 = vmatpush1.bf16.xpose.msra.mxu0 0
  %2800 = vmatprep.subr.bf16.mxu0 0
  %2801 = vmatpush1.bf16.xpose.msra.mxu0 0
  %2802 = vmatprep.subr.bf16.mxu0 0
  %2803 = vmatpush1.bf16.xpose.msra.mxu0 0
  %2804 = vmatprep.subr.bf16.mxu0 0
  %2805 = vmatpush1.bf16.xpose.msra.mxu0 0
  %2806 = vmatprep.subr.bf16.mxu0 0
  %2807 = vmatpush1.bf16.xpose.msra.mxu0 0
  %2808 = vmatprep.subr.bf16.mxu0 0
  %2809 = vmatpush1.bf16.xpose.msra.mxu0 0
  %2810 = vmatprep.subr.bf16.mxu0 0
  %2811 = vmatpush1.bf16.xpose.msra.mxu0 0
  %2812 = vmatprep.mubr.bf16.mxu0 0
  %2813 = vmatmul.mubr.bf16.gmra.mrb[0].mxu0 %v2763
  %v2814 = vpop.f32.mrb[0].mxu0
  %v2815 = vadd.f32 %v2751, %v2814
  %v2816 = vpop.f32.mrb[0].mxu0
  %v2817 = vpop.f32.mrb[0].mxu0
  %v2818 = vadd.f32 %v2751, %v2817
  %v2819 = vpop.f32.mrb[0].mxu0
  %2820 = vmatprep.mubr.bf16.mxu0 0
  %2821 = vmatmul.mubr.bf16.gmra.mrb[0].mxu0 %v2766
  %v2822 = vpop.f32.mrb[0].mxu0
  %v2823 = vadd.f32 %v2751, %v2822
  %v2824 = vpop.f32.mrb[0].mxu0
  %v2825 = vpop.f32.mrb[0].mxu0
  %v2826 = vadd.f32 %v2751, %v2825
  %v2827 = vpop.f32.mrb[0].mxu0
  %2828 = vmatprep.mubr.bf16.mxu0 0
  %2829 = vmatmul.mubr.bf16.gmra.mrb[0].mxu0 %v2769
  %v2830 = vpop.f32.mrb[0].mxu0
  %v2831 = vadd.f32 %v2751, %v2830
  %v2832 = vpop.f32.mrb[0].mxu0
  %v2833 = vpop.f32.mrb[0].mxu0
  %v2834 = vadd.f32 %v2751, %v2833
  %v2835 = vpop.f32.mrb[0].mxu0
  %2836 = vmatprep.mubr.bf16.mxu0 0
  %2837 = vmatmul.mubr.bf16.gmra.mrb[0].mxu0 %v2772
  %v2838 = vpop.f32.mrb[0].mxu0
  %v2839 = vadd.f32 %v2751, %v2838
  %v2840 = vpop.f32.mrb[0].mxu0
  %v2841 = vpop.f32.mrb[0].mxu0
  %v2842 = vadd.f32 %v2751, %v2841
  %v2843 = vpop.f32.mrb[0].mxu0
  %2844 = vdwg.mxu0
  %v2845 = vlaneseq
  %v2846 = vshrl.u32 %v2845, 7
  %v2847 = vsub.s32 7, %v2846
  %v2848 = vrot.slane %v167, %v2847
  %v2853 = vunpack.c.l.b16 %v155
  %v2854 = vunpack.c.l.b16 %v156
  %v2855 = vunpack.c.l.b16 %v157
  %v2856 = vunpack.c.l.b16 %v158
  %v2857 = vpack.c.b16 %v2854, %v2853
  %v2858 = vpack.c.b16 %v2856, %v2855
  %v2860 = vsel %vm331, %v2694, 0
  %v2863 = vsel %vm331, %v2695, 0
  %v2866 = vsel %vm331, %v2696, 0
  %v2869 = vsel %vm331, %v2697, 0
  %v2872 = vsel %vm331, %v2698, 0
  %v2875 = vsel %vm331, %v2699, 0
  %v2878 = vsel %vm331, %v2700, 0
  %v2881 = vsel %vm331, %v2701, 0
  %v2884 = vsel %vm331, %v2702, 0
  %v2887 = vsel %vm331, %v2703, 0
  %v2890 = vsel %vm331, %v2704, 0
  %v2893 = vsel %vm331, %v2705, 0
  %v2896 = vsel %vm331, %v2706, 0
  %v2899 = vsel %vm331, %v2707, 0
  %v2902 = vsel %vm331, %v2708, 0
  %v2905 = vsel %vm331, %v2709, 0
  %v2908 = vsel %vm331, %v2710, 0
  %v2911 = vsel %vm331, %v2711, 0
  %v2914 = vsel %vm331, %v2712, 0
  %v2917 = vsel %vm331, %v2713, 0
  %v2920 = vsel %vm331, %v2714, 0
  %v2923 = vsel %vm331, %v2715, 0
  %v2926 = vsel %vm331, %v2716, 0
  %v2929 = vsel %vm331, %v2717, 0
  %v2932 = vsel %vm331, %v2718, 0
  %v2935 = vsel %vm331, %v2719, 0
  %v2938 = vsel %vm331, %v2720, 0
  %v2941 = vsel %vm331, %v2721, 0
  %v2944 = vsel %vm331, %v2722, 0
  %v2947 = vsel %vm331, %v2723, 0
  %v2950 = vsel %vm331, %v2724, 0
  %v2953 = vsel %vm331, %v2725, 0
  %v2956 = vsel %vm331, %v2726, 0
  %v2959 = vsel %vm331, %v2727, 0
  %v2962 = vsel %vm331, %v2728, 0
  %v2965 = vsel %vm331, %v2729, 0
  %v2968 = vsel %vm331, %v2730, 0
  %v2971 = vsel %vm331, %v2731, 0
  %v2974 = vsel %vm331, %v2732, 0
  %v2977 = vsel %vm331, %v2733, 0
  %v2980 = vsel %vm331, %v2734, 0
  %v2983 = vsel %vm331, %v2735, 0
  %v2986 = vsel %vm331, %v2736, 0
  %v2989 = vsel %vm331, %v2737, 0
  %v2992 = vsel %vm331, %v2738, 0
  %v2995 = vsel %vm331, %v2739, 0
  %v2998 = vsel %vm331, %v2740, 0
  %v3001 = vsel %vm331, %v2741, 0
  %v3004 = vsel %vm331, %v2742, 0
  %v3007 = vsel %vm331, %v2743, 0
  %v3010 = vsel %vm331, %v2857, 0
  %v3013 = vsel %vm331, %v2858, 0
  %3015 = vmatprep.subr.bf16.mxu0 0
  %3016 = vmatpush1.bf16.xpose.msra.mxu0 %v3010
  %3017 = vmatprep.subr.bf16.mxu0 0
  %3018 = vmatpush1.bf16.xpose.msra.mxu0 %v3013
  %3019 = vmatprep.subr.bf16.mxu0 0
  %3020 = vmatpush1.bf16.xpose.msra.mxu0 0
  %3021 = vmatprep.subr.bf16.mxu0 0
  %3022 = vmatpush1.bf16.xpose.msra.mxu0 0
  %3023 = vmatprep.subr.bf16.mxu0 0
  %3024 = vmatpush1.bf16.xpose.msra.mxu0 0
  %3025 = vmatprep.subr.bf16.mxu0 0
  %3026 = vmatpush1.bf16.xpose.msra.mxu0 0
  %3027 = vmatprep.subr.bf16.mxu0 0
  %3028 = vmatpush1.bf16.xpose.msra.mxu0 0
  %3029 = vmatprep.subr.bf16.mxu0 0
  %3030 = vmatpush1.bf16.xpose.msra.mxu0 0
  %3031 = vmatprep.subr.bf16.mxu0 0
  %3032 = vmatpush1.bf16.xpose.msra.mxu0 0
  %3033 = vmatprep.subr.bf16.mxu0 0
  %3034 = vmatpush1.bf16.xpose.msra.mxu0 0
  %3035 = vmatprep.subr.bf16.mxu0 0
  %3036 = vmatpush1.bf16.xpose.msra.mxu0 0
  %3037 = vmatprep.subr.bf16.mxu0 0
  %3038 = vmatpush1.bf16.xpose.msra.mxu0 0
  %3039 = vmatprep.subr.bf16.mxu0 0
  %3040 = vmatpush1.bf16.xpose.msra.mxu0 0
  %3041 = vmatprep.subr.bf16.mxu0 0
  %3042 = vmatpush1.bf16.xpose.msra.mxu0 0
  %3043 = vmatprep.subr.bf16.mxu0 0
  %3044 = vmatpush1.bf16.xpose.msra.mxu0 0
  %3045 = vmatprep.subr.bf16.mxu0 0
  %3046 = vmatpush1.bf16.xpose.msra.mxu0 0
  %3047 = vmatprep.mubr.bf16.mxu0 0
  %3048 = vmatmul.mubr.bf16.gmra.mrb[0].mxu0 %v2860
  %v3049 = vpop.f32.mrb[0].mxu0
  %v3050 = vadd.f32 %v2848, %v3049
  %v3051 = vpop.f32.mrb[0].mxu0
  %v3052 = vpop.f32.mrb[0].mxu0
  %v3053 = vadd.f32 %v2848, %v3052
  %v3054 = vpop.f32.mrb[0].mxu0
  %3055 = vmatprep.mubr.bf16.mxu0 0
  %3056 = vmatmul.mubr.bf16.gmra.mrb[0].mxu0 %v2863
  %v3057 = vpop.f32.mrb[0].mxu0
  %v3058 = vadd.f32 %v2848, %v3057
  %v3059 = vpop.f32.mrb[0].mxu0
  %v3060 = vpop.f32.mrb[0].mxu0
  %v3061 = vadd.f32 %v2848, %v3060
  %v3062 = vpop.f32.mrb[0].mxu0
  %3063 = vmatprep.mubr.bf16.mxu0 0
  %3064 = vmatmul.mubr.bf16.gmra.mrb[0].mxu0 %v2866
  %v3065 = vpop.f32.mrb[0].mxu0
  %v3066 = vadd.f32 %v2848, %v3065
  %v3067 = vpop.f32.mrb[0].mxu0
  %v3068 = vpop.f32.mrb[0].mxu0
  %v3069 = vadd.f32 %v2848, %v3068
  %v3070 = vpop.f32.mrb[0].mxu0
  %3071 = vmatprep.mubr.bf16.mxu0 0
  %3072 = vmatmul.mubr.bf16.gmra.mrb[0].mxu0 %v2869
  %v3073 = vpop.f32.mrb[0].mxu0
  %v3074 = vadd.f32 %v2848, %v3073
  %v3075 = vpop.f32.mrb[0].mxu0
  %v3076 = vpop.f32.mrb[0].mxu0
  %v3077 = vadd.f32 %v2848, %v3076
  %v3078 = vpop.f32.mrb[0].mxu0
  %3079 = vmatprep.mubr.bf16.mxu0 0
  %3080 = vmatmul.mubr.bf16.gmra.mrb[0].mxu0 %v2872
  %v3081 = vpop.f32.mrb[0].mxu0
  %v3082 = vadd.f32 %v2848, %v3081
  %v3083 = vpop.f32.mrb[0].mxu0
  %v3084 = vpop.f32.mrb[0].mxu0
  %v3085 = vadd.f32 %v2848, %v3084
  %v3086 = vpop.f32.mrb[0].mxu0
  %3087 = vmatprep.mubr.bf16.mxu0 0
  %3088 = vmatmul.mubr.bf16.gmra.mrb[0].mxu0 %v2875
  %v3089 = vpop.f32.mrb[0].mxu0
  %v3090 = vadd.f32 %v2848, %v3089
  %v3091 = vpop.f32.mrb[0].mxu0
  %v3092 = vpop.f32.mrb[0].mxu0
  %v3093 = vadd.f32 %v2848, %v3092
  %v3094 = vpop.f32.mrb[0].mxu0
  %3095 = vmatprep.mubr.bf16.mxu0 0
  %3096 = vmatmul.mubr.bf16.gmra.mrb[0].mxu0 %v2878
  %v3097 = vpop.f32.mrb[0].mxu0
  %v3098 = vadd.f32 %v2848, %v3097
  %v3099 = vpop.f32.mrb[0].mxu0
  %v3100 = vpop.f32.mrb[0].mxu0
  %v3101 = vadd.f32 %v2848, %v3100
  %v3102 = vpop.f32.mrb[0].mxu0
  %3103 = vmatprep.mubr.bf16.mxu0 0
  %3104 = vmatmul.mubr.bf16.gmra.mrb[0].mxu0 %v2881
  %v3105 = vpop.f32.mrb[0].mxu0
  %v3106 = vadd.f32 %v2848, %v3105
  %v3107 = vpop.f32.mrb[0].mxu0
  %v3108 = vpop.f32.mrb[0].mxu0
  %v3109 = vadd.f32 %v2848, %v3108
  %v3110 = vpop.f32.mrb[0].mxu0
  %3111 = vmatprep.mubr.bf16.mxu0 0
  %3112 = vmatmul.mubr.bf16.gmra.mrb[0].mxu0 %v2884
  %v3113 = vpop.f32.mrb[0].mxu0
  %v3114 = vadd.f32 %v2848, %v3113
  %v3115 = vpop.f32.mrb[0].mxu0
  %v3116 = vpop.f32.mrb[0].mxu0
  %v3117 = vadd.f32 %v2848, %v3116
  %v3118 = vpop.f32.mrb[0].mxu0
  %3119 = vmatprep.mubr.bf16.mxu0 0
  %3120 = vmatmul.mubr.bf16.gmra.mrb[0].mxu0 %v2887
  %v3121 = vpop.f32.mrb[0].mxu0
  %v3122 = vadd.f32 %v2848, %v3121
  %v3123 = vpop.f32.mrb[0].mxu0
  %v3124 = vpop.f32.mrb[0].mxu0
  %v3125 = vadd.f32 %v2848, %v3124
  %v3126 = vpop.f32.mrb[0].mxu0
  %3127 = vmatprep.mubr.bf16.mxu0 0
  %3128 = vmatmul.mubr.bf16.gmra.mrb[0].mxu0 %v2890
  %v3129 = vpop.f32.mrb[0].mxu0
  %v3130 = vadd.f32 %v2848, %v3129
  %v3131 = vpop.f32.mrb[0].mxu0
  %v3132 = vpop.f32.mrb[0].mxu0
  %v3133 = vadd.f32 %v2848, %v3132
  %v3134 = vpop.f32.mrb[0].mxu0
  %3135 = vmatprep.mubr.bf16.mxu0 0
  %3136 = vmatmul.mubr.bf16.gmra.mrb[0].mxu0 %v2893
  %v3137 = vpop.f32.mrb[0].mxu0
  %v3138 = vadd.f32 %v2848, %v3137
  %v3139 = vpop.f32.mrb[0].mxu0
  %v3140 = vpop.f32.mrb[0].mxu0
  %v3141 = vadd.f32 %v2848, %v3140
  %v3142 = vpop.f32.mrb[0].mxu0
  %3143 = vmatprep.mubr.bf16.mxu0 0
  %3144 = vmatmul.mubr.bf16.gmra.mrb[0].mxu0 %v2896
  %v3145 = vpop.f32.mrb[0].mxu0
  %v3146 = vadd.f32 %v2848, %v3145
  %v3147 = vpop.f32.mrb[0].mxu0
  %v3148 = vpop.f32.mrb[0].mxu0
  %v3149 = vadd.f32 %v2848, %v3148
  %v3150 = vpop.f32.mrb[0].mxu0
  %3151 = vmatprep.mubr.bf16.mxu0 0
  %3152 = vmatmul.mubr.bf16.gmra.mrb[0].mxu0 %v2899
  %v3153 = vpop.f32.mrb[0].mxu0
  %v3154 = vadd.f32 %v2848, %v3153
  %v3155 = vpop.f32.mrb[0].mxu0
  %v3156 = vpop.f32.mrb[0].mxu0
  %v3157 = vadd.f32 %v2848, %v3156
  %v3158 = vpop.f32.mrb[0].mxu0
  %3159 = vmatprep.mubr.bf16.mxu0 0
  %3160 = vmatmul.mubr.bf16.gmra.mrb[0].mxu0 %v2902
  %v3161 = vpop.f32.mrb[0].mxu0
  %v3162 = vadd.f32 %v2848, %v3161
  %v3163 = vpop.f32.mrb[0].mxu0
  %v3164 = vpop.f32.mrb[0].mxu0
  %v3165 = vadd.f32 %v2848, %v3164
  %v3166 = vpop.f32.mrb[0].mxu0
  %3167 = vmatprep.mubr.bf16.mxu0 0
  %3168 = vmatmul.mubr.bf16.gmra.mrb[0].mxu0 %v2905
  %v3169 = vpop.f32.mrb[0].mxu0
  %v3170 = vadd.f32 %v2848, %v3169
  %v3171 = vpop.f32.mrb[0].mxu0
  %v3172 = vpop.f32.mrb[0].mxu0
  %v3173 = vadd.f32 %v2848, %v3172
  %v3174 = vpop.f32.mrb[0].mxu0
  %3175 = vmatprep.mubr.bf16.mxu0 0
  %3176 = vmatmul.mubr.bf16.gmra.mrb[0].mxu0 %v2908
  %v3177 = vpop.f32.mrb[0].mxu0
  %v3178 = vadd.f32 %v2848, %v3177
  %v3179 = vpop.f32.mrb[0].mxu0
  %v3180 = vpop.f32.mrb[0].mxu0
  %v3181 = vadd.f32 %v2848, %v3180
  %v3182 = vpop.f32.mrb[0].mxu0
  %3183 = vmatprep.mubr.bf16.mxu0 0
  %3184 = vmatmul.mubr.bf16.gmra.mrb[0].mxu0 %v2911
  %v3185 = vpop.f32.mrb[0].mxu0
  %v3186 = vadd.f32 %v2848, %v3185
  %v3187 = vpop.f32.mrb[0].mxu0
  %v3188 = vpop.f32.mrb[0].mxu0
  %v3189 = vadd.f32 %v2848, %v3188
  %v3190 = vpop.f32.mrb[0].mxu0
  %3191 = vmatprep.mubr.bf16.mxu0 0
  %3192 = vmatmul.mubr.bf16.gmra.mrb[0].mxu0 %v2914
  %v3193 = vpop.f32.mrb[0].mxu0
  %v3194 = vadd.f32 %v2848, %v3193
  %v3195 = vpop.f32.mrb[0].mxu0
  %v3196 = vpop.f32.mrb[0].mxu0
  %v3197 = vadd.f32 %v2848, %v3196
  %v3198 = vpop.f32.mrb[0].mxu0
  %3199 = vmatprep.mubr.bf16.mxu0 0
  %3200 = vmatmul.mubr.bf16.gmra.mrb[0].mxu0 %v2917
  %v3201 = vpop.f32.mrb[0].mxu0
  %v3202 = vadd.f32 %v2848, %v3201
  %v3203 = vpop.f32.mrb[0].mxu0
  %v3204 = vpop.f32.mrb[0].mxu0
  %v3205 = vadd.f32 %v2848, %v3204
  %v3206 = vpop.f32.mrb[0].mxu0
  %3207 = vmatprep.mubr.bf16.mxu0 0
  %3208 = vmatmul.mubr.bf16.gmra.mrb[0].mxu0 %v2920
  %v3209 = vpop.f32.mrb[0].mxu0
  %v3210 = vadd.f32 %v2848, %v3209
  %v3211 = vpop.f32.mrb[0].mxu0
  %v3212 = vpop.f32.mrb[0].mxu0
  %v3213 = vadd.f32 %v2848, %v3212
  %v3214 = vpop.f32.mrb[0].mxu0
  %3215 = vmatprep.mubr.bf16.mxu0 0
  %3216 = vmatmul.mubr.bf16.gmra.mrb[0].mxu0 %v2923
  %v3217 = vpop.f32.mrb[0].mxu0
  %v3218 = vadd.f32 %v2848, %v3217
  %v3219 = vpop.f32.mrb[0].mxu0
  %v3220 = vpop.f32.mrb[0].mxu0
  %v3221 = vadd.f32 %v2848, %v3220
  %v3222 = vpop.f32.mrb[0].mxu0
  %3223 = vmatprep.mubr.bf16.mxu0 0
  %3224 = vmatmul.mubr.bf16.gmra.mrb[0].mxu0 %v2926
  %v3225 = vpop.f32.mrb[0].mxu0
  %v3226 = vadd.f32 %v2848, %v3225
  %v3227 = vpop.f32.mrb[0].mxu0
  %v3228 = vpop.f32.mrb[0].mxu0
  %v3229 = vadd.f32 %v2848, %v3228
  %v3230 = vpop.f32.mrb[0].mxu0
  %3231 = vmatprep.mubr.bf16.mxu0 0
  %3232 = vmatmul.mubr.bf16.gmra.mrb[0].mxu0 %v2929
  %v3233 = vpop.f32.mrb[0].mxu0
  %v3234 = vadd.f32 %v2848, %v3233
  %v3235 = vpop.f32.mrb[0].mxu0
  %v3236 = vpop.f32.mrb[0].mxu0
  %v3237 = vadd.f32 %v2848, %v3236
  %v3238 = vpop.f32.mrb[0].mxu0
  %3239 = vmatprep.mubr.bf16.mxu0 0
  %3240 = vmatmul.mubr.bf16.gmra.mrb[0].mxu0 %v2932
  %v3241 = vpop.f32.mrb[0].mxu0
  %v3242 = vadd.f32 %v2848, %v3241
  %v3243 = vpop.f32.mrb[0].mxu0
  %v3244 = vpop.f32.mrb[0].mxu0
  %v3245 = vadd.f32 %v2848, %v3244
  %v3246 = vpop.f32.mrb[0].mxu0
  %3247 = vmatprep.mubr.bf16.mxu0 0
  %3248 = vmatmul.mubr.bf16.gmra.mrb[0].mxu0 %v2935
  %v3249 = vpop.f32.mrb[0].mxu0
  %v3250 = vadd.f32 %v2848, %v3249
  %v3251 = vpop.f32.mrb[0].mxu0
  %v3252 = vpop.f32.mrb[0].mxu0
  %v3253 = vadd.f32 %v2848, %v3252
  %v3254 = vpop.f32.mrb[0].mxu0
  %3255 = vmatprep.mubr.bf16.mxu0 0
  %3256 = vmatmul.mubr.bf16.gmra.mrb[0].mxu0 %v2938
  %v3257 = vpop.f32.mrb[0].mxu0
  %v3258 = vadd.f32 %v2848, %v3257
  %v3259 = vpop.f32.mrb[0].mxu0
  %v3260 = vpop.f32.mrb[0].mxu0
  %v3261 = vadd.f32 %v2848, %v3260
  %v3262 = vpop.f32.mrb[0].mxu0
  %3263 = vmatprep.mubr.bf16.mxu0 0
  %3264 = vmatmul.mubr.bf16.gmra.mrb[0].mxu0 %v2941
  %v3265 = vpop.f32.mrb[0].mxu0
  %v3266 = vadd.f32 %v2848, %v3265
  %v3267 = vpop.f32.mrb[0].mxu0
  %v3268 = vpop.f32.mrb[0].mxu0
  %v3269 = vadd.f32 %v2848, %v3268
  %v3270 = vpop.f32.mrb[0].mxu0
  %3271 = vmatprep.mubr.bf16.mxu0 0
  %3272 = vmatmul.mubr.bf16.gmra.mrb[0].mxu0 %v2944
  %v3273 = vpop.f32.mrb[0].mxu0
  %v3274 = vadd.f32 %v2848, %v3273
  %v3275 = vpop.f32.mrb[0].mxu0
  %v3276 = vpop.f32.mrb[0].mxu0
  %v3277 = vadd.f32 %v2848, %v3276
  %v3278 = vpop.f32.mrb[0].mxu0
  %3279 = vmatprep.mubr.bf16.mxu0 0
  %3280 = vmatmul.mubr.bf16.gmra.mrb[0].mxu0 %v2947
  %v3281 = vpop.f32.mrb[0].mxu0
  %v3282 = vadd.f32 %v2848, %v3281
  %v3283 = vpop.f32.mrb[0].mxu0
  %v3284 = vpop.f32.mrb[0].mxu0
  %v3285 = vadd.f32 %v2848, %v3284
  %v3286 = vpop.f32.mrb[0].mxu0
  %3287 = vmatprep.mubr.bf16.mxu0 0
  %3288 = vmatmul.mubr.bf16.gmra.mrb[0].mxu0 %v2950
  %v3289 = vpop.f32.mrb[0].mxu0
  %v3290 = vadd.f32 %v2848, %v3289
  %v3291 = vpop.f32.mrb[0].mxu0
  %v3292 = vpop.f32.mrb[0].mxu0
  %v3293 = vadd.f32 %v2848, %v3292
  %v3294 = vpop.f32.mrb[0].mxu0
  %3295 = vmatprep.mubr.bf16.mxu0 0
  %3296 = vmatmul.mubr.bf16.gmra.mrb[0].mxu0 %v2953
  %v3297 = vpop.f32.mrb[0].mxu0
  %v3298 = vadd.f32 %v2848, %v3297
  %v3299 = vpop.f32.mrb[0].mxu0
  %v3300 = vpop.f32.mrb[0].mxu0
  %v3301 = vadd.f32 %v2848, %v3300
  %v3302 = vpop.f32.mrb[0].mxu0
  %3303 = vmatprep.mubr.bf16.mxu0 0
  %3304 = vmatmul.mubr.bf16.gmra.mrb[0].mxu0 %v2956
  %v3305 = vpop.f32.mrb[0].mxu0
  %v3306 = vadd.f32 %v2848, %v3305
  %v3307 = vpop.f32.mrb[0].mxu0
  %v3308 = vpop.f32.mrb[0].mxu0
  %v3309 = vadd.f32 %v2848, %v3308
  %v3310 = vpop.f32.mrb[0].mxu0
  %3311 = vmatprep.mubr.bf16.mxu0 0
  %3312 = vmatmul.mubr.bf16.gmra.mrb[0].mxu0 %v2959
  %v3313 = vpop.f32.mrb[0].mxu0
  %v3314 = vadd.f32 %v2848, %v3313
  %v3315 = vpop.f32.mrb[0].mxu0
  %v3316 = vpop.f32.mrb[0].mxu0
  %v3317 = vadd.f32 %v2848, %v3316
  %v3318 = vpop.f32.mrb[0].mxu0
  %3319 = vmatprep.mubr.bf16.mxu0 0
  %3320 = vmatmul.mubr.bf16.gmra.mrb[0].mxu0 %v2962
  %v3321 = vpop.f32.mrb[0].mxu0
  %v3322 = vadd.f32 %v2848, %v3321
  %v3323 = vpop.f32.mrb[0].mxu0
  %v3324 = vpop.f32.mrb[0].mxu0
  %v3325 = vadd.f32 %v2848, %v3324
  %v3326 = vpop.f32.mrb[0].mxu0
  %3327 = vmatprep.mubr.bf16.mxu0 0
  %3328 = vmatmul.mubr.bf16.gmra.mrb[0].mxu0 %v2965
  %v3329 = vpop.f32.mrb[0].mxu0
  %v3330 = vadd.f32 %v2848, %v3329
  %v3331 = vpop.f32.mrb[0].mxu0
  %v3332 = vpop.f32.mrb[0].mxu0
  %v3333 = vadd.f32 %v2848, %v3332
  %v3334 = vpop.f32.mrb[0].mxu0
  %3335 = vmatprep.mubr.bf16.mxu0 0
  %3336 = vmatmul.mubr.bf16.gmra.mrb[0].mxu0 %v2968
  %v3337 = vpop.f32.mrb[0].mxu0
  %v3338 = vadd.f32 %v2848, %v3337
  %v3339 = vpop.f32.mrb[0].mxu0
  %v3340 = vpop.f32.mrb[0].mxu0
  %v3341 = vadd.f32 %v2848, %v3340
  %v3342 = vpop.f32.mrb[0].mxu0
  %3343 = vmatprep.mubr.bf16.mxu0 0
  %3344 = vmatmul.mubr.bf16.gmra.mrb[0].mxu0 %v2971
  %v3345 = vpop.f32.mrb[0].mxu0
  %v3346 = vadd.f32 %v2848, %v3345
  %v3347 = vpop.f32.mrb[0].mxu0
  %v3348 = vpop.f32.mrb[0].mxu0
  %v3349 = vadd.f32 %v2848, %v3348
  %v3350 = vpop.f32.mrb[0].mxu0
  %3351 = vmatprep.mubr.bf16.mxu0 0
  %3352 = vmatmul.mubr.bf16.gmra.mrb[0].mxu0 %v2974
  %v3353 = vpop.f32.mrb[0].mxu0
  %v3354 = vadd.f32 %v2848, %v3353
  %v3355 = vpop.f32.mrb[0].mxu0
  %v3356 = vpop.f32.mrb[0].mxu0
  %v3357 = vadd.f32 %v2848, %v3356
  %v3358 = vpop.f32.mrb[0].mxu0
  %3359 = vmatprep.mubr.bf16.mxu0 0
  %3360 = vmatmul.mubr.bf16.gmra.mrb[0].mxu0 %v2977
  %v3361 = vpop.f32.mrb[0].mxu0
  %v3362 = vadd.f32 %v2848, %v3361
  %v3363 = vpop.f32.mrb[0].mxu0
  %v3364 = vpop.f32.mrb[0].mxu0
  %v3365 = vadd.f32 %v2848, %v3364
  %v3366 = vpop.f32.mrb[0].mxu0
  %3367 = vmatprep.mubr.bf16.mxu0 0
  %3368 = vmatmul.mubr.bf16.gmra.mrb[0].mxu0 %v2980
  %v3369 = vpop.f32.mrb[0].mxu0
  %v3370 = vadd.f32 %v2848, %v3369
  %v3371 = vpop.f32.mrb[0].mxu0
  %v3372 = vpop.f32.mrb[0].mxu0
  %v3373 = vadd.f32 %v2848, %v3372
  %v3374 = vpop.f32.mrb[0].mxu0
  %3375 = vmatprep.mubr.bf16.mxu0 0
  %3376 = vmatmul.mubr.bf16.gmra.mrb[0].mxu0 %v2983
  %v3377 = vpop.f32.mrb[0].mxu0
  %v3378 = vadd.f32 %v2848, %v3377
  %v3379 = vpop.f32.mrb[0].mxu0
  %v3380 = vpop.f32.mrb[0].mxu0
  %v3381 = vadd.f32 %v2848, %v3380
  %v3382 = vpop.f32.mrb[0].mxu0
  %3383 = vmatprep.mubr.bf16.mxu0 0
  %3384 = vmatmul.mubr.bf16.gmra.mrb[0].mxu0 %v2986
  %v3385 = vpop.f32.mrb[0].mxu0
  %v3386 = vadd.f32 %v2848, %v3385
  %v3387 = vpop.f32.mrb[0].mxu0
  %v3388 = vpop.f32.mrb[0].mxu0
  %v3389 = vadd.f32 %v2848, %v3388
  %v3390 = vpop.f32.mrb[0].mxu0
  %3391 = vmatprep.mubr.bf16.mxu0 0
  %3392 = vmatmul.mubr.bf16.gmra.mrb[0].mxu0 %v2989
  %v3393 = vpop.f32.mrb[0].mxu0
  %v3394 = vadd.f32 %v2848, %v3393
  %v3395 = vpop.f32.mrb[0].mxu0
  %v3396 = vpop.f32.mrb[0].mxu0
  %v3397 = vadd.f32 %v2848, %v3396
  %v3398 = vpop.f32.mrb[0].mxu0
  %3399 = vmatprep.mubr.bf16.mxu0 0
  %3400 = vmatmul.mubr.bf16.gmra.mrb[0].mxu0 %v2992
  %v3401 = vpop.f32.mrb[0].mxu0
  %v3402 = vadd.f32 %v2848, %v3401
  %v3403 = vpop.f32.mrb[0].mxu0
  %v3404 = vpop.f32.mrb[0].mxu0
  %v3405 = vadd.f32 %v2848, %v3404
  %v3406 = vpop.f32.mrb[0].mxu0
  %3407 = vmatprep.mubr.bf16.mxu0 0
  %3408 = vmatmul.mubr.bf16.gmra.mrb[0].mxu0 %v2995
  %v3409 = vpop.f32.mrb[0].mxu0
  %v3410 = vadd.f32 %v2848, %v3409
  %v3411 = vpop.f32.mrb[0].mxu0
  %v3412 = vpop.f32.mrb[0].mxu0
  %v3413 = vadd.f32 %v2848, %v3412
  %v3414 = vpop.f32.mrb[0].mxu0
  %3415 = vmatprep.mubr.bf16.mxu0 0
  %3416 = vmatmul.mubr.bf16.gmra.mrb[0].mxu0 %v2998
  %v3417 = vpop.f32.mrb[0].mxu0
  %v3418 = vadd.f32 %v2848, %v3417
  %v3419 = vpop.f32.mrb[0].mxu0
  %v3420 = vpop.f32.mrb[0].mxu0
  %v3421 = vadd.f32 %v2848, %v3420
  %v3422 = vpop.f32.mrb[0].mxu0
  %3423 = vmatprep.mubr.bf16.mxu0 0
  %3424 = vmatmul.mubr.bf16.gmra.mrb[0].mxu0 %v3001
  %v3425 = vpop.f32.mrb[0].mxu0
  %v3426 = vadd.f32 %v2848, %v3425
  %v3427 = vpop.f32.mrb[0].mxu0
  %v3428 = vpop.f32.mrb[0].mxu0
  %v3429 = vadd.f32 %v2848, %v3428
  %v3430 = vpop.f32.mrb[0].mxu0
  %3431 = vmatprep.mubr.bf16.mxu0 0
  %3432 = vmatmul.mubr.bf16.gmra.mrb[0].mxu0 %v3004
  %v3433 = vpop.f32.mrb[0].mxu0
  %v3434 = vadd.f32 %v2848, %v3433
  %v3435 = vpop.f32.mrb[0].mxu0
  %v3436 = vpop.f32.mrb[0].mxu0
  %v3437 = vadd.f32 %v2848, %v3436
  %v3438 = vpop.f32.mrb[0].mxu0
  %3439 = vmatprep.mubr.bf16.mxu0 0
  %3440 = vmatmul.mubr.bf16.gmra.mrb[0].mxu0 %v3007
  %v3441 = vpop.f32.mrb[0].mxu0
  %v3442 = vadd.f32 %v2848, %v3441
  %v3443 = vpop.f32.mrb[0].mxu0
  %v3444 = vpop.f32.mrb[0].mxu0
  %v3445 = vadd.f32 %v2848, %v3444
  %v3446 = vpop.f32.mrb[0].mxu0
  %3447 = vdwg.mxu0
  %v3448 = vlaneseq
  %v3449 = vshrl.u32 %v3448, 7
  %v3450 = vsub.s32 0, %v3449
  %v3451 = vrot.slane %v168, %v3450
  %v3456 = vunpack.c.l.b16 %v159
  %v3457 = vunpack.c.l.b16 %v160
  %v3458 = vunpack.c.l.b16 %v161
  %v3459 = vunpack.c.l.b16 %v162
  %v3460 = vpack.c.b16 %v3457, %v3456
  %v3461 = vpack.c.b16 %v3459, %v3458
  %v3463 = vsel %vm331, %v3460, 0
  %v3466 = vsel %vm331, %v3461, 0
  %3468 = vmatprep.subr.bf16.mxu0 0
  %3469 = vmatpush1.bf16.xpose.msra.mxu0 %v3463
  %3470 = vmatprep.subr.bf16.mxu0 0
  %3471 = vmatpush1.bf16.xpose.msra.mxu0 %v3466
  %3472 = vmatprep.subr.bf16.mxu0 0
  %3473 = vmatpush1.bf16.xpose.msra.mxu0 0
  %3474 = vmatprep.subr.bf16.mxu0 0
  %3475 = vmatpush1.bf16.xpose.msra.mxu0 0
  %3476 = vmatprep.subr.bf16.mxu0 0
  %3477 = vmatpush1.bf16.xpose.msra.mxu0 0
  %3478 = vmatprep.subr.bf16.mxu0 0
  %3479 = vmatpush1.bf16.xpose.msra.mxu0 0
  %3480 = vmatprep.subr.bf16.mxu0 0
  %3481 = vmatpush1.bf16.xpose.msra.mxu0 0
  %3482 = vmatprep.subr.bf16.mxu0 0
  %3483 = vmatpush1.bf16.xpose.msra.mxu0 0
  %3484 = vmatprep.subr.bf16.mxu0 0
  %3485 = vmatpush1.bf16.xpose.msra.mxu0 0
  %3486 = vmatprep.subr.bf16.mxu0 0
  %3487 = vmatpush1.bf16.xpose.msra.mxu0 0
  %3488 = vmatprep.subr.bf16.mxu0 0
  %3489 = vmatpush1.bf16.xpose.msra.mxu0 0
  %3490 = vmatprep.subr.bf16.mxu0 0
  %3491 = vmatpush1.bf16.xpose.msra.mxu0 0
  %3492 = vmatprep.subr.bf16.mxu0 0
  %3493 = vmatpush1.bf16.xpose.msra.mxu0 0
  %3494 = vmatprep.subr.bf16.mxu0 0
  %3495 = vmatpush1.bf16.xpose.msra.mxu0 0
  %3496 = vmatprep.subr.bf16.mxu0 0
  %3497 = vmatpush1.bf16.xpose.msra.mxu0 0
  %3498 = vmatprep.subr.bf16.mxu0 0
  %3499 = vmatpush1.bf16.xpose.msra.mxu0 0
  %3500 = vmatprep.mubr.bf16.mxu0 0
  %3501 = vmatmul.mubr.bf16.gmra.mrb[0].mxu0 %v2860
  %v3502 = vpop.f32.mrb[0].mxu0
  %v3503 = vadd.f32 %v3451, %v3502
  %v3504 = vpop.f32.mrb[0].mxu0
  %v3505 = vpop.f32.mrb[0].mxu0
  %v3506 = vadd.f32 %v3451, %v3505
  %v3507 = vpop.f32.mrb[0].mxu0
  %3508 = vmatprep.mubr.bf16.mxu0 0
  %3509 = vmatmul.mubr.bf16.gmra.mrb[0].mxu0 %v2863
  %v3510 = vpop.f32.mrb[0].mxu0
  %v3511 = vadd.f32 %v3451, %v3510
  %v3512 = vpop.f32.mrb[0].mxu0
  %v3513 = vpop.f32.mrb[0].mxu0
  %v3514 = vadd.f32 %v3451, %v3513
  %v3515 = vpop.f32.mrb[0].mxu0
  %3516 = vmatprep.mubr.bf16.mxu0 0
  %3517 = vmatmul.mubr.bf16.gmra.mrb[0].mxu0 %v2866
  %v3518 = vpop.f32.mrb[0].mxu0
  %v3519 = vadd.f32 %v3451, %v3518
  %v3520 = vpop.f32.mrb[0].mxu0
  %v3521 = vpop.f32.mrb[0].mxu0
  %v3522 = vadd.f32 %v3451, %v3521
  %v3523 = vpop.f32.mrb[0].mxu0
  %3524 = vmatprep.mubr.bf16.mxu0 0
  %3525 = vmatmul.mubr.bf16.gmra.mrb[0].mxu0 %v2869
  %v3526 = vpop.f32.mrb[0].mxu0
  %v3527 = vadd.f32 %v3451, %v3526
  %v3528 = vpop.f32.mrb[0].mxu0
  %v3529 = vpop.f32.mrb[0].mxu0
  %v3530 = vadd.f32 %v3451, %v3529
  %v3531 = vpop.f32.mrb[0].mxu0
  %3532 = vmatprep.mubr.bf16.mxu0 0
  %3533 = vmatmul.mubr.bf16.gmra.mrb[0].mxu0 %v2872
  %v3534 = vpop.f32.mrb[0].mxu0
  %v3535 = vadd.f32 %v3451, %v3534
  %v3536 = vpop.f32.mrb[0].mxu0
  %v3537 = vpop.f32.mrb[0].mxu0
  %v3538 = vadd.f32 %v3451, %v3537
  %v3539 = vpop.f32.mrb[0].mxu0
  %3540 = vmatprep.mubr.bf16.mxu0 0
  %3541 = vmatmul.mubr.bf16.gmra.mrb[0].mxu0 %v2875
  %v3542 = vpop.f32.mrb[0].mxu0
  %v3543 = vadd.f32 %v3451, %v3542
  %v3544 = vpop.f32.mrb[0].mxu0
  %v3545 = vpop.f32.mrb[0].mxu0
  %v3546 = vadd.f32 %v3451, %v3545
  %v3547 = vpop.f32.mrb[0].mxu0
  %3548 = vmatprep.mubr.bf16.mxu0 0
  %3549 = vmatmul.mubr.bf16.gmra.mrb[0].mxu0 %v2878
  %v3550 = vpop.f32.mrb[0].mxu0
  %v3551 = vadd.f32 %v3451, %v3550
  %v3552 = vpop.f32.mrb[0].mxu0
  %v3553 = vpop.f32.mrb[0].mxu0
  %v3554 = vadd.f32 %v3451, %v3553
  %v3555 = vpop.f32.mrb[0].mxu0
  %3556 = vmatprep.mubr.bf16.mxu0 0
  %3557 = vmatmul.mubr.bf16.gmra.mrb[0].mxu0 %v2881
  %v3558 = vpop.f32.mrb[0].mxu0
  %v3559 = vadd.f32 %v3451, %v3558
  %v3560 = vpop.f32.mrb[0].mxu0
  %v3561 = vpop.f32.mrb[0].mxu0
  %v3562 = vadd.f32 %v3451, %v3561
  %v3563 = vpop.f32.mrb[0].mxu0
  %3564 = vmatprep.mubr.bf16.mxu0 0
  %3565 = vmatmul.mubr.bf16.gmra.mrb[0].mxu0 %v2884
  %v3566 = vpop.f32.mrb[0].mxu0
  %v3567 = vadd.f32 %v3451, %v3566
  %v3568 = vpop.f32.mrb[0].mxu0
  %v3569 = vpop.f32.mrb[0].mxu0
  %v3570 = vadd.f32 %v3451, %v3569
  %v3571 = vpop.f32.mrb[0].mxu0
  %3572 = vmatprep.mubr.bf16.mxu0 0
  %3573 = vmatmul.mubr.bf16.gmra.mrb[0].mxu0 %v2887
  %v3574 = vpop.f32.mrb[0].mxu0
  %v3575 = vadd.f32 %v3451, %v3574
  %v3576 = vpop.f32.mrb[0].mxu0
  %v3577 = vpop.f32.mrb[0].mxu0
  %v3578 = vadd.f32 %v3451, %v3577
  %v3579 = vpop.f32.mrb[0].mxu0
  %3580 = vmatprep.mubr.bf16.mxu0 0
  %3581 = vmatmul.mubr.bf16.gmra.mrb[0].mxu0 %v2890
  %v3582 = vpop.f32.mrb[0].mxu0
  %v3583 = vadd.f32 %v3451, %v3582
  %v3584 = vpop.f32.mrb[0].mxu0
  %v3585 = vpop.f32.mrb[0].mxu0
  %v3586 = vadd.f32 %v3451, %v3585
  %v3587 = vpop.f32.mrb[0].mxu0
  %3588 = vmatprep.mubr.bf16.mxu0 0
  %3589 = vmatmul.mubr.bf16.gmra.mrb[0].mxu0 %v2893
  %v3590 = vpop.f32.mrb[0].mxu0
  %v3591 = vadd.f32 %v3451, %v3590
  %v3592 = vpop.f32.mrb[0].mxu0
  %v3593 = vpop.f32.mrb[0].mxu0
  %v3594 = vadd.f32 %v3451, %v3593
  %v3595 = vpop.f32.mrb[0].mxu0
  %3596 = vmatprep.mubr.bf16.mxu0 0
  %3597 = vmatmul.mubr.bf16.gmra.mrb[0].mxu0 %v2896
  %v3598 = vpop.f32.mrb[0].mxu0
  %v3599 = vadd.f32 %v3451, %v3598
  %v3600 = vpop.f32.mrb[0].mxu0
  %v3601 = vpop.f32.mrb[0].mxu0
  %v3602 = vadd.f32 %v3451, %v3601
  %v3603 = vpop.f32.mrb[0].mxu0
  %3604 = vmatprep.mubr.bf16.mxu0 0
  %3605 = vmatmul.mubr.bf16.gmra.mrb[0].mxu0 %v2899
  %v3606 = vpop.f32.mrb[0].mxu0
  %v3607 = vadd.f32 %v3451, %v3606
  %v3608 = vpop.f32.mrb[0].mxu0
  %v3609 = vpop.f32.mrb[0].mxu0
  %v3610 = vadd.f32 %v3451, %v3609
  %v3611 = vpop.f32.mrb[0].mxu0
  %3612 = vmatprep.mubr.bf16.mxu0 0
  %3613 = vmatmul.mubr.bf16.gmra.mrb[0].mxu0 %v2902
  %v3614 = vpop.f32.mrb[0].mxu0
  %v3615 = vadd.f32 %v3451, %v3614
  %v3616 = vpop.f32.mrb[0].mxu0
  %v3617 = vpop.f32.mrb[0].mxu0
  %v3618 = vadd.f32 %v3451, %v3617
  %v3619 = vpop.f32.mrb[0].mxu0
  %3620 = vmatprep.mubr.bf16.mxu0 0
  %3621 = vmatmul.mubr.bf16.gmra.mrb[0].mxu0 %v2905
  %v3622 = vpop.f32.mrb[0].mxu0
  %v3623 = vadd.f32 %v3451, %v3622
  %v3624 = vpop.f32.mrb[0].mxu0
  %v3625 = vpop.f32.mrb[0].mxu0
  %v3626 = vadd.f32 %v3451, %v3625
  %v3627 = vpop.f32.mrb[0].mxu0
  %3628 = vmatprep.mubr.bf16.mxu0 0
  %3629 = vmatmul.mubr.bf16.gmra.mrb[0].mxu0 %v2908
  %v3630 = vpop.f32.mrb[0].mxu0
  %v3631 = vadd.f32 %v3451, %v3630
  %v3632 = vpop.f32.mrb[0].mxu0
  %v3633 = vpop.f32.mrb[0].mxu0
  %v3634 = vadd.f32 %v3451, %v3633
  %v3635 = vpop.f32.mrb[0].mxu0
  %3636 = vmatprep.mubr.bf16.mxu0 0
  %3637 = vmatmul.mubr.bf16.gmra.mrb[0].mxu0 %v2911
  %v3638 = vpop.f32.mrb[0].mxu0
  %v3639 = vadd.f32 %v3451, %v3638
  %v3640 = vpop.f32.mrb[0].mxu0
  %v3641 = vpop.f32.mrb[0].mxu0
  %v3642 = vadd.f32 %v3451, %v3641
  %v3643 = vpop.f32.mrb[0].mxu0
  %3644 = vmatprep.mubr.bf16.mxu0 0
  %3645 = vmatmul.mubr.bf16.gmra.mrb[0].mxu0 %v2914
  %v3646 = vpop.f32.mrb[0].mxu0
  %v3647 = vadd.f32 %v3451, %v3646
  %v3648 = vpop.f32.mrb[0].mxu0
  %v3649 = vpop.f32.mrb[0].mxu0
  %v3650 = vadd.f32 %v3451, %v3649
  %v3651 = vpop.f32.mrb[0].mxu0
  %3652 = vmatprep.mubr.bf16.mxu0 0
  %3653 = vmatmul.mubr.bf16.gmra.mrb[0].mxu0 %v2917
  %v3654 = vpop.f32.mrb[0].mxu0
  %v3655 = vadd.f32 %v3451, %v3654
  %v3656 = vpop.f32.mrb[0].mxu0
  %v3657 = vpop.f32.mrb[0].mxu0
  %v3658 = vadd.f32 %v3451, %v3657
  %v3659 = vpop.f32.mrb[0].mxu0
  %3660 = vmatprep.mubr.bf16.mxu0 0
  %3661 = vmatmul.mubr.bf16.gmra.mrb[0].mxu0 %v2920
  %v3662 = vpop.f32.mrb[0].mxu0
  %v3663 = vadd.f32 %v3451, %v3662
  %v3664 = vpop.f32.mrb[0].mxu0
  %v3665 = vpop.f32.mrb[0].mxu0
  %v3666 = vadd.f32 %v3451, %v3665
  %v3667 = vpop.f32.mrb[0].mxu0
  %3668 = vmatprep.mubr.bf16.mxu0 0
  %3669 = vmatmul.mubr.bf16.gmra.mrb[0].mxu0 %v2923
  %v3670 = vpop.f32.mrb[0].mxu0
  %v3671 = vadd.f32 %v3451, %v3670
  %v3672 = vpop.f32.mrb[0].mxu0
  %v3673 = vpop.f32.mrb[0].mxu0
  %v3674 = vadd.f32 %v3451, %v3673
  %v3675 = vpop.f32.mrb[0].mxu0
  %3676 = vmatprep.mubr.bf16.mxu0 0
  %3677 = vmatmul.mubr.bf16.gmra.mrb[0].mxu0 %v2926
  %v3678 = vpop.f32.mrb[0].mxu0
  %v3679 = vadd.f32 %v3451, %v3678
  %v3680 = vpop.f32.mrb[0].mxu0
  %v3681 = vpop.f32.mrb[0].mxu0
  %v3682 = vadd.f32 %v3451, %v3681
  %v3683 = vpop.f32.mrb[0].mxu0
  %3684 = vmatprep.mubr.bf16.mxu0 0
  %3685 = vmatmul.mubr.bf16.gmra.mrb[0].mxu0 %v2929
  %v3686 = vpop.f32.mrb[0].mxu0
  %v3687 = vadd.f32 %v3451, %v3686
  %v3688 = vpop.f32.mrb[0].mxu0
  %v3689 = vpop.f32.mrb[0].mxu0
  %v3690 = vadd.f32 %v3451, %v3689
  %v3691 = vpop.f32.mrb[0].mxu0
  %3692 = vmatprep.mubr.bf16.mxu0 0
  %3693 = vmatmul.mubr.bf16.gmra.mrb[0].mxu0 %v2932
  %v3694 = vpop.f32.mrb[0].mxu0
  %v3695 = vadd.f32 %v3451, %v3694
  %v3696 = vpop.f32.mrb[0].mxu0
  %v3697 = vpop.f32.mrb[0].mxu0
  %v3698 = vadd.f32 %v3451, %v3697
  %v3699 = vpop.f32.mrb[0].mxu0
  %3700 = vmatprep.mubr.bf16.mxu0 0
  %3701 = vmatmul.mubr.bf16.gmra.mrb[0].mxu0 %v2935
  %v3702 = vpop.f32.mrb[0].mxu0
  %v3703 = vadd.f32 %v3451, %v3702
  %v3704 = vpop.f32.mrb[0].mxu0
  %v3705 = vpop.f32.mrb[0].mxu0
  %v3706 = vadd.f32 %v3451, %v3705
  %v3707 = vpop.f32.mrb[0].mxu0
  %3708 = vmatprep.mubr.bf16.mxu0 0
  %3709 = vmatmul.mubr.bf16.gmra.mrb[0].mxu0 %v2938
  %v3710 = vpop.f32.mrb[0].mxu0
  %v3711 = vadd.f32 %v3451, %v3710
  %v3712 = vpop.f32.mrb[0].mxu0
  %v3713 = vpop.f32.mrb[0].mxu0
  %v3714 = vadd.f32 %v3451, %v3713
  %v3715 = vpop.f32.mrb[0].mxu0
  %3716 = vmatprep.mubr.bf16.mxu0 0
  %3717 = vmatmul.mubr.bf16.gmra.mrb[0].mxu0 %v2941
  %v3718 = vpop.f32.mrb[0].mxu0
  %v3719 = vadd.f32 %v3451, %v3718
  %v3720 = vpop.f32.mrb[0].mxu0
  %v3721 = vpop.f32.mrb[0].mxu0
  %v3722 = vadd.f32 %v3451, %v3721
  %v3723 = vpop.f32.mrb[0].mxu0
  %3724 = vmatprep.mubr.bf16.mxu0 0
  %3725 = vmatmul.mubr.bf16.gmra.mrb[0].mxu0 %v2944
  %v3726 = vpop.f32.mrb[0].mxu0
  %v3727 = vadd.f32 %v3451, %v3726
  %v3728 = vpop.f32.mrb[0].mxu0
  %v3729 = vpop.f32.mrb[0].mxu0
  %v3730 = vadd.f32 %v3451, %v3729
  %v3731 = vpop.f32.mrb[0].mxu0
  %3732 = vmatprep.mubr.bf16.mxu0 0
  %3733 = vmatmul.mubr.bf16.gmra.mrb[0].mxu0 %v2947
  %v3734 = vpop.f32.mrb[0].mxu0
  %v3735 = vadd.f32 %v3451, %v3734
  %v3736 = vpop.f32.mrb[0].mxu0
  %v3737 = vpop.f32.mrb[0].mxu0
  %v3738 = vadd.f32 %v3451, %v3737
  %v3739 = vpop.f32.mrb[0].mxu0
  %3740 = vmatprep.mubr.bf16.mxu0 0
  %3741 = vmatmul.mubr.bf16.gmra.mrb[0].mxu0 %v2950
  %v3742 = vpop.f32.mrb[0].mxu0
  %v3743 = vadd.f32 %v3451, %v3742
  %v3744 = vpop.f32.mrb[0].mxu0
  %v3745 = vpop.f32.mrb[0].mxu0
  %v3746 = vadd.f32 %v3451, %v3745
  %v3747 = vpop.f32.mrb[0].mxu0
  %3748 = vmatprep.mubr.bf16.mxu0 0
  %3749 = vmatmul.mubr.bf16.gmra.mrb[0].mxu0 %v2953
  %v3750 = vpop.f32.mrb[0].mxu0
  %v3751 = vadd.f32 %v3451, %v3750
  %v3752 = vpop.f32.mrb[0].mxu0
  %v3753 = vpop.f32.mrb[0].mxu0
  %v3754 = vadd.f32 %v3451, %v3753
  %v3755 = vpop.f32.mrb[0].mxu0
  %3756 = vmatprep.mubr.bf16.mxu0 0
  %3757 = vmatmul.mubr.bf16.gmra.mrb[0].mxu0 %v2956
  %v3758 = vpop.f32.mrb[0].mxu0
  %v3759 = vadd.f32 %v3451, %v3758
  %v3760 = vpop.f32.mrb[0].mxu0
  %v3761 = vpop.f32.mrb[0].mxu0
  %v3762 = vadd.f32 %v3451, %v3761
  %v3763 = vpop.f32.mrb[0].mxu0
  %3764 = vmatprep.mubr.bf16.mxu0 0
  %3765 = vmatmul.mubr.bf16.gmra.mrb[0].mxu0 %v2959
  %v3766 = vpop.f32.mrb[0].mxu0
  %v3767 = vadd.f32 %v3451, %v3766
  %v3768 = vpop.f32.mrb[0].mxu0
  %v3769 = vpop.f32.mrb[0].mxu0
  %v3770 = vadd.f32 %v3451, %v3769
  %v3771 = vpop.f32.mrb[0].mxu0
  %3772 = vmatprep.mubr.bf16.mxu0 0
  %3773 = vmatmul.mubr.bf16.gmra.mrb[0].mxu0 %v2962
  %v3774 = vpop.f32.mrb[0].mxu0
  %v3775 = vadd.f32 %v3451, %v3774
  %v3776 = vpop.f32.mrb[0].mxu0
  %v3777 = vpop.f32.mrb[0].mxu0
  %v3778 = vadd.f32 %v3451, %v3777
  %v3779 = vpop.f32.mrb[0].mxu0
  %3780 = vmatprep.mubr.bf16.mxu0 0
  %3781 = vmatmul.mubr.bf16.gmra.mrb[0].mxu0 %v2965
  %v3782 = vpop.f32.mrb[0].mxu0
  %v3783 = vadd.f32 %v3451, %v3782
  %v3784 = vpop.f32.mrb[0].mxu0
  %v3785 = vpop.f32.mrb[0].mxu0
  %v3786 = vadd.f32 %v3451, %v3785
  %v3787 = vpop.f32.mrb[0].mxu0
  %3788 = vmatprep.mubr.bf16.mxu0 0
  %3789 = vmatmul.mubr.bf16.gmra.mrb[0].mxu0 %v2968
  %v3790 = vpop.f32.mrb[0].mxu0
  %v3791 = vadd.f32 %v3451, %v3790
  %v3792 = vpop.f32.mrb[0].mxu0
  %v3793 = vpop.f32.mrb[0].mxu0
  %v3794 = vadd.f32 %v3451, %v3793
  %v3795 = vpop.f32.mrb[0].mxu0
  %3796 = vmatprep.mubr.bf16.mxu0 0
  %3797 = vmatmul.mubr.bf16.gmra.mrb[0].mxu0 %v2971
  %v3798 = vpop.f32.mrb[0].mxu0
  %v3799 = vadd.f32 %v3451, %v3798
  %v3800 = vpop.f32.mrb[0].mxu0
  %v3801 = vpop.f32.mrb[0].mxu0
  %v3802 = vadd.f32 %v3451, %v3801
  %v3803 = vpop.f32.mrb[0].mxu0
  %3804 = vmatprep.mubr.bf16.mxu0 0
  %3805 = vmatmul.mubr.bf16.gmra.mrb[0].mxu0 %v2974
  %v3806 = vpop.f32.mrb[0].mxu0
  %v3807 = vadd.f32 %v3451, %v3806
  %v3808 = vpop.f32.mrb[0].mxu0
  %v3809 = vpop.f32.mrb[0].mxu0
  %v3810 = vadd.f32 %v3451, %v3809
  %v3811 = vpop.f32.mrb[0].mxu0
  %3812 = vmatprep.mubr.bf16.mxu0 0
  %3813 = vmatmul.mubr.bf16.gmra.mrb[0].mxu0 %v2977
  %v3814 = vpop.f32.mrb[0].mxu0
  %v3815 = vadd.f32 %v3451, %v3814
  %v3816 = vpop.f32.mrb[0].mxu0
  %v3817 = vpop.f32.mrb[0].mxu0
  %v3818 = vadd.f32 %v3451, %v3817
  %v3819 = vpop.f32.mrb[0].mxu0
  %3820 = vmatprep.mubr.bf16.mxu0 0
  %3821 = vmatmul.mubr.bf16.gmra.mrb[0].mxu0 %v2980
  %v3822 = vpop.f32.mrb[0].mxu0
  %v3823 = vadd.f32 %v3451, %v3822
  %v3824 = vpop.f32.mrb[0].mxu0
  %v3825 = vpop.f32.mrb[0].mxu0
  %v3826 = vadd.f32 %v3451, %v3825
  %v3827 = vpop.f32.mrb[0].mxu0
  %3828 = vmatprep.mubr.bf16.mxu0 0
  %3829 = vmatmul.mubr.bf16.gmra.mrb[0].mxu0 %v2983
  %v3830 = vpop.f32.mrb[0].mxu0
  %v3831 = vadd.f32 %v3451, %v3830
  %v3832 = vpop.f32.mrb[0].mxu0
  %v3833 = vpop.f32.mrb[0].mxu0
  %v3834 = vadd.f32 %v3451, %v3833
  %v3835 = vpop.f32.mrb[0].mxu0
  %3836 = vmatprep.mubr.bf16.mxu0 0
  %3837 = vmatmul.mubr.bf16.gmra.mrb[0].mxu0 %v2986
  %v3838 = vpop.f32.mrb[0].mxu0
  %v3839 = vadd.f32 %v3451, %v3838
  %v3840 = vpop.f32.mrb[0].mxu0
  %v3841 = vpop.f32.mrb[0].mxu0
  %v3842 = vadd.f32 %v3451, %v3841
  %v3843 = vpop.f32.mrb[0].mxu0
  %3844 = vmatprep.mubr.bf16.mxu0 0
  %3845 = vmatmul.mubr.bf16.gmra.mrb[0].mxu0 %v2989
  %v3846 = vpop.f32.mrb[0].mxu0
  %v3847 = vadd.f32 %v3451, %v3846
  %v3848 = vpop.f32.mrb[0].mxu0
  %v3849 = vpop.f32.mrb[0].mxu0
  %v3850 = vadd.f32 %v3451, %v3849
  %v3851 = vpop.f32.mrb[0].mxu0
  %3852 = vmatprep.mubr.bf16.mxu0 0
  %3853 = vmatmul.mubr.bf16.gmra.mrb[0].mxu0 %v2992
  %v3854 = vpop.f32.mrb[0].mxu0
  %v3855 = vadd.f32 %v3451, %v3854
  %v3856 = vpop.f32.mrb[0].mxu0
  %v3857 = vpop.f32.mrb[0].mxu0
  %v3858 = vadd.f32 %v3451, %v3857
  %v3859 = vpop.f32.mrb[0].mxu0
  %3860 = vmatprep.mubr.bf16.mxu0 0
  %3861 = vmatmul.mubr.bf16.gmra.mrb[0].mxu0 %v2995
  %v3862 = vpop.f32.mrb[0].mxu0
  %v3863 = vadd.f32 %v3451, %v3862
  %v3864 = vpop.f32.mrb[0].mxu0
  %v3865 = vpop.f32.mrb[0].mxu0
  %v3866 = vadd.f32 %v3451, %v3865
  %v3867 = vpop.f32.mrb[0].mxu0
  %3868 = vmatprep.mubr.bf16.mxu0 0
  %3869 = vmatmul.mubr.bf16.gmra.mrb[0].mxu0 %v2998
  %v3870 = vpop.f32.mrb[0].mxu0
  %v3871 = vadd.f32 %v3451, %v3870
  %v3872 = vpop.f32.mrb[0].mxu0
  %v3873 = vpop.f32.mrb[0].mxu0
  %v3874 = vadd.f32 %v3451, %v3873
  %v3875 = vpop.f32.mrb[0].mxu0
  %3876 = vmatprep.mubr.bf16.mxu0 0
  %3877 = vmatmul.mubr.bf16.gmra.mrb[0].mxu0 %v3001
  %v3878 = vpop.f32.mrb[0].mxu0
  %v3879 = vadd.f32 %v3451, %v3878
  %v3880 = vpop.f32.mrb[0].mxu0
  %v3881 = vpop.f32.mrb[0].mxu0
  %v3882 = vadd.f32 %v3451, %v3881
  %v3883 = vpop.f32.mrb[0].mxu0
  %3884 = vmatprep.mubr.bf16.mxu0 0
  %3885 = vmatmul.mubr.bf16.gmra.mrb[0].mxu0 %v3004
  %v3886 = vpop.f32.mrb[0].mxu0
  %v3887 = vadd.f32 %v3451, %v3886
  %v3888 = vpop.f32.mrb[0].mxu0
  %v3889 = vpop.f32.mrb[0].mxu0
  %v3890 = vadd.f32 %v3451, %v3889
  %v3891 = vpop.f32.mrb[0].mxu0
  %3892 = vmatprep.mubr.bf16.mxu0 0
  %3893 = vmatmul.mubr.bf16.gmra.mrb[0].mxu0 %v3007
  %v3894 = vpop.f32.mrb[0].mxu0
  %v3895 = vadd.f32 %v3451, %v3894
  %v3896 = vpop.f32.mrb[0].mxu0
  %v3897 = vpop.f32.mrb[0].mxu0
  %v3898 = vadd.f32 %v3451, %v3897
  %v3899 = vpop.f32.mrb[0].mxu0
  %3900 = vdwg.mxu0
  %v3901 = vpack.c.bf16 %v3053, %v3050
  %v3902 = vpack.c.bf16 %v3061, %v3058
  %v3903 = vpack.c.bf16 %v3069, %v3066
  %v3904 = vpack.c.bf16 %v3077, %v3074
  %v3905 = vpack.c.bf16 %v3085, %v3082
  %v3906 = vpack.c.bf16 %v3093, %v3090
  %v3907 = vpack.c.bf16 %v3101, %v3098
  %v3908 = vpack.c.bf16 %v3109, %v3106
  %v3909 = vpack.c.bf16 %v3117, %v3114
  %v3910 = vpack.c.bf16 %v3125, %v3122
  %v3911 = vpack.c.bf16 %v3133, %v3130
  %v3912 = vpack.c.bf16 %v3141, %v3138
  %v3913 = vpack.c.bf16 %v3146, %v3146
  %v3914 = vpack.c.bf16 %v3506, %v3503
  %v3915 = vpack.c.bf16 %v3514, %v3511
  %v3916 = vpack.c.bf16 %v3522, %v3519
  %v3917 = vpack.c.bf16 %v3530, %v3527
  %v3918 = vpack.c.bf16 %v3538, %v3535
  %v3919 = vpack.c.bf16 %v3546, %v3543
  %v3920 = vpack.c.bf16 %v3554, %v3551
  %v3921 = vpack.c.bf16 %v3562, %v3559
  %v3922 = vpack.c.bf16 %v3570, %v3567
  %v3923 = vpack.c.bf16 %v3578, %v3575
  %v3924 = vpack.c.bf16 %v3586, %v3583
  %v3925 = vpack.c.bf16 %v3594, %v3591
  %v3926 = vpack.c.bf16 %v3599, %v3599
  %v3927 = vmul.f32 %v2815, %v233
  %v3928 = vmul.f32 %v2818, %v234
  %v3929 = vmul.f32 %v2815, %v235
  %v3930 = vmul.f32 %v2818, %v236
  %v3931 = vmul.f32 %v2815, %v237
  %v3932 = vmul.f32 %v2818, %v238
  %v3933 = vmul.f32 %v2815, %v239
  %v3934 = vmul.f32 %v2818, %v240
  %v3935 = vmul.f32 %v2815, %v241
  %v3936 = vmul.f32 %v2818, %v242
  %v3937 = vmul.f32 %v2815, %v243
  %v3938 = vmul.f32 %v2818, %v244
  %v3939 = vmul.f32 %v2815, %v245
  %v3940 = vmul.f32 %v2818, %v246
  %v3941 = vmul.f32 %v2815, %v247
  %v3942 = vmul.f32 %v2818, %v248
  %v3943 = vpack.c.bf16 %v3928, %v3927
  %v3944 = vpack.c.bf16 %v3930, %v3929
  %v3945 = vpack.c.bf16 %v3932, %v3931
  %v3946 = vpack.c.bf16 %v3934, %v3933
  %v3947 = vpack.c.bf16 %v3936, %v3935
  %v3948 = vpack.c.bf16 %v3938, %v3937
  %v3949 = vpack.c.bf16 %v3940, %v3939
  %v3950 = vpack.c.bf16 %v3942, %v3941
  %v3952 = vsel %vm331, %v3943, 0
  %v3955 = vsel %vm331, %v3944, 0
  %v3958 = vsel %vm331, %v3945, 0
  %v3961 = vsel %vm331, %v3946, 0
  %v3964 = vsel %vm331, %v3947, 0
  %v3967 = vsel %vm331, %v3948, 0
  %v3970 = vsel %vm331, %v3949, 0
  %v3973 = vsel %vm331, %v3950, 0
  %v3976 = vsel %vm331, %v3901, 0
  %v3979 = vsel %vm331, %v3902, 0
  %v3982 = vsel %vm331, %v3903, 0
  %v3985 = vsel %vm331, %v3904, 0
  %v3988 = vsel %vm331, %v3905, 0
  %v3991 = vsel %vm331, %v3906, 0
  %v3994 = vsel %vm331, %v3907, 0
  %v3997 = vsel %vm331, %v3908, 0
  %v4000 = vsel %vm331, %v3909, 0
  %v4003 = vsel %vm331, %v3910, 0
  %v4006 = vsel %vm331, %v3911, 0
  %v4009 = vsel %vm331, %v3912, 0
  %v4012 = vsel %vm331, %v3913, 0
  %4014 = vmatprep.subr.bf16.mxu0 0
  %4015 = vmatpush1.bf16.xpose.msra.mxu0 %v3976
  %4016 = vmatprep.subr.bf16.mxu0 0
  %4017 = vmatpush1.bf16.xpose.msra.mxu0 %v3979
  %4018 = vmatprep.subr.bf16.mxu0 0
  %4019 = vmatpush1.bf16.xpose.msra.mxu0 %v3982
  %4020 = vmatprep.subr.bf16.mxu0 0
  %4021 = vmatpush1.bf16.xpose.msra.mxu0 %v3985
  %4022 = vmatprep.subr.bf16.mxu0 0
  %4023 = vmatpush1.bf16.xpose.msra.mxu0 %v3988
  %4024 = vmatprep.subr.bf16.mxu0 0
  %4025 = vmatpush1.bf16.xpose.msra.mxu0 %v3991
  %4026 = vmatprep.subr.bf16.mxu0 0
  %4027 = vmatpush1.bf16.xpose.msra.mxu0 %v3994
  %4028 = vmatprep.subr.bf16.mxu0 0
  %4029 = vmatpush1.bf16.xpose.msra.mxu0 %v3997
  %4030 = vmatprep.subr.bf16.mxu0 0
  %4031 = vmatpush1.bf16.xpose.msra.mxu0 %v4000
  %4032 = vmatprep.subr.bf16.mxu0 0
  %4033 = vmatpush1.bf16.xpose.msra.mxu0 %v4003
  %4034 = vmatprep.subr.bf16.mxu0 0
  %4035 = vmatpush1.bf16.xpose.msra.mxu0 %v4006
  %4036 = vmatprep.subr.bf16.mxu0 0
  %4037 = vmatpush1.bf16.xpose.msra.mxu0 %v4009
  %4038 = vmatprep.subr.bf16.mxu0 0
  %4039 = vmatpush1.bf16.xpose.msra.mxu0 %v4012
  %4040 = vmatprep.subr.bf16.mxu0 0
  %4041 = vmatpush1.bf16.xpose.msra.mxu0 0
  %4042 = vmatprep.subr.bf16.mxu0 0
  %4043 = vmatpush1.bf16.xpose.msra.mxu0 0
  %4044 = vmatprep.subr.bf16.mxu0 0
  %4045 = vmatpush1.bf16.xpose.msra.mxu0 0
  %4046 = vmatprep.mubr.bf16.mxu0 0
  %4047 = vmatmul.mubr.bf16.gmra.mrb[0].mxu0 %v3952
  %v4048 = vpop.f32.mrb[0].mxu0
  %v4049 = vadd.f32 0.0, %v4048
  %v4050 = vpop.f32.mrb[0].mxu0
  %v4051 = vadd.f32 0.0, %v4050
  %v4052 = vpop.f32.mrb[0].mxu0
  %v4053 = vadd.f32 0.0, %v4052
  %v4054 = vpop.f32.mrb[0].mxu0
  %v4055 = vadd.f32 0.0, %v4054
  %4056 = vmatprep.mubr.bf16.mxu0 0
  %4057 = vmatmul.mubr.bf16.gmra.mrb[0].mxu0 %v3955
  %v4058 = vpop.f32.mrb[0].mxu0
  %v4059 = vadd.f32 0.0, %v4058
  %v4060 = vpop.f32.mrb[0].mxu0
  %v4061 = vadd.f32 0.0, %v4060
  %v4062 = vpop.f32.mrb[0].mxu0
  %v4063 = vadd.f32 0.0, %v4062
  %v4064 = vpop.f32.mrb[0].mxu0
  %v4065 = vadd.f32 0.0, %v4064
  %4066 = vmatprep.mubr.bf16.mxu0 0
  %4067 = vmatmul.mubr.bf16.gmra.mrb[0].mxu0 %v3958
  %v4068 = vpop.f32.mrb[0].mxu0
  %v4069 = vadd.f32 0.0, %v4068
  %v4070 = vpop.f32.mrb[0].mxu0
  %v4071 = vadd.f32 0.0, %v4070
  %v4072 = vpop.f32.mrb[0].mxu0
  %v4073 = vadd.f32 0.0, %v4072
  %v4074 = vpop.f32.mrb[0].mxu0
  %v4075 = vadd.f32 0.0, %v4074
  %4076 = vmatprep.mubr.bf16.mxu0 0
  %4077 = vmatmul.mubr.bf16.gmra.mrb[0].mxu0 %v3961
  %v4078 = vpop.f32.mrb[0].mxu0
  %v4079 = vadd.f32 0.0, %v4078
  %v4080 = vpop.f32.mrb[0].mxu0
  %v4081 = vadd.f32 0.0, %v4080
  %v4082 = vpop.f32.mrb[0].mxu0
  %v4083 = vadd.f32 0.0, %v4082
  %v4084 = vpop.f32.mrb[0].mxu0
  %v4085 = vadd.f32 0.0, %v4084
  %4086 = vmatprep.mubr.bf16.mxu0 0
  %4087 = vmatmul.mubr.bf16.gmra.mrb[0].mxu0 %v3964
  %v4088 = vpop.f32.mrb[0].mxu0
  %v4089 = vadd.f32 0.0, %v4088
  %v4090 = vpop.f32.mrb[0].mxu0
  %v4091 = vadd.f32 0.0, %v4090
  %v4092 = vpop.f32.mrb[0].mxu0
  %v4093 = vadd.f32 0.0, %v4092
  %v4094 = vpop.f32.mrb[0].mxu0
  %v4095 = vadd.f32 0.0, %v4094
  %4096 = vmatprep.mubr.bf16.mxu0 0
  %4097 = vmatmul.mubr.bf16.gmra.mrb[0].mxu0 %v3967
  %v4098 = vpop.f32.mrb[0].mxu0
  %v4099 = vadd.f32 0.0, %v4098
  %v4100 = vpop.f32.mrb[0].mxu0
  %v4101 = vadd.f32 0.0, %v4100
  %v4102 = vpop.f32.mrb[0].mxu0
  %v4103 = vadd.f32 0.0, %v4102
  %v4104 = vpop.f32.mrb[0].mxu0
  %v4105 = vadd.f32 0.0, %v4104
  %4106 = vmatprep.mubr.bf16.mxu0 0
  %4107 = vmatmul.mubr.bf16.gmra.mrb[0].mxu0 %v3970
  %v4108 = vpop.f32.mrb[0].mxu0
  %v4109 = vadd.f32 0.0, %v4108
  %v4110 = vpop.f32.mrb[0].mxu0
  %v4111 = vadd.f32 0.0, %v4110
  %v4112 = vpop.f32.mrb[0].mxu0
  %v4113 = vadd.f32 0.0, %v4112
  %v4114 = vpop.f32.mrb[0].mxu0
  %v4115 = vadd.f32 0.0, %v4114
  %4116 = vmatprep.mubr.bf16.mxu0 0
  %4117 = vmatmul.mubr.bf16.gmra.mrb[0].mxu0 %v3973
  %v4118 = vpop.f32.mrb[0].mxu0
  %v4119 = vadd.f32 0.0, %v4118
  %v4120 = vpop.f32.mrb[0].mxu0
  %v4121 = vadd.f32 0.0, %v4120
  %v4122 = vpop.f32.mrb[0].mxu0
  %v4123 = vadd.f32 0.0, %v4122
  %v4124 = vpop.f32.mrb[0].mxu0
  %v4125 = vadd.f32 0.0, %v4124
  %4126 = vdwg.mxu0
  %v4127 = vmul.f32 %v4049, 0.5
  %v4128 = vmul.f32 %v4051, 0.5
  %v4129 = vmul.f32 %v4053, 0.5
  %v4130 = vmul.f32 %v4055, 0.5
  %v4131 = vmul.f32 %v4059, 0.5
  %v4132 = vmul.f32 %v4061, 0.5
  %v4133 = vmul.f32 %v4063, 0.5
  %v4134 = vmul.f32 %v4065, 0.5
  %v4135 = vmul.f32 %v4069, 0.5
  %v4136 = vmul.f32 %v4071, 0.5
  %v4137 = vmul.f32 %v4073, 0.5
  %v4138 = vmul.f32 %v4075, 0.5
  %v4139 = vmul.f32 %v4079, 0.5
  %v4140 = vmul.f32 %v4081, 0.5
  %v4141 = vmul.f32 %v4083, 0.5
  %v4142 = vmul.f32 %v4085, 0.5
  %v4143 = vmul.f32 %v4089, 0.5
  %v4144 = vmul.f32 %v4091, 0.5
  %v4145 = vmul.f32 %v4093, 0.5
  %v4146 = vmul.f32 %v4095, 0.5
  %v4147 = vmul.f32 %v4099, 0.5
  %v4148 = vmul.f32 %v4101, 0.5
  %v4149 = vmul.f32 %v4103, 0.5
  %v4150 = vmul.f32 %v4105, 0.5
  %v4151 = vmul.f32 %v4109, 0.5
  %v4152 = vmul.f32 %v4111, 0.5
  %v4153 = vmul.f32 %v4113, 0.5
  %v4154 = vmul.f32 %v4115, 0.5
  %v4155 = vmul.f32 %v4119, 0.5
  %v4156 = vmul.f32 %v4121, 0.5
  %v4157 = vmul.f32 %v4123, 0.5
  %v4158 = vmul.f32 %v4125, 0.5
  %vm4159 = vcmask 588800
  %v4160 = vsel %vm4159, %v4128, -inf
  %v4161 = vmax.f32 %v4127, %v4160
  %4162 = vmax.xlane.f32.xlu0 %v4161
  %v4163 = vpop.xlane.xlu0 %4162
  %v4164 = vsel %vm4159, %v4130, -inf
  %v4165 = vmax.f32 %v4129, %v4164
  %4166 = vmax.xlane.f32.xlu0 %v4165
  %v4167 = vpop.xlane.xlu0 %4166
  %v4168 = vsel %vm4159, %v4132, -inf
  %v4169 = vmax.f32 %v4131, %v4168
  %4170 = vmax.xlane.f32.xlu0 %v4169
  %v4171 = vpop.xlane.xlu0 %4170
  %v4172 = vsel %vm4159, %v4134, -inf
  %v4173 = vmax.f32 %v4133, %v4172
  %4174 = vmax.xlane.f32.xlu0 %v4173
  %v4175 = vpop.xlane.xlu0 %4174
  %v4176 = vsel %vm4159, %v4136, -inf
  %v4177 = vmax.f32 %v4135, %v4176
  %4178 = vmax.xlane.f32.xlu0 %v4177
  %v4179 = vpop.xlane.xlu0 %4178
  %v4180 = vsel %vm4159, %v4138, -inf
  %v4181 = vmax.f32 %v4137, %v4180
  %4182 = vmax.xlane.f32.xlu0 %v4181
  %v4183 = vpop.xlane.xlu0 %4182
  %v4184 = vsel %vm4159, %v4140, -inf
  %v4185 = vmax.f32 %v4139, %v4184
  %4186 = vmax.xlane.f32.xlu0 %v4185
  %v4187 = vpop.xlane.xlu0 %4186
  %v4188 = vsel %vm4159, %v4142, -inf
  %v4189 = vmax.f32 %v4141, %v4188
  %4190 = vmax.xlane.f32.xlu0 %v4189
  %v4191 = vpop.xlane.xlu0 %4190
  %v4192 = vsel %vm4159, %v4144, -inf
  %v4193 = vmax.f32 %v4143, %v4192
  %4194 = vmax.xlane.f32.xlu0 %v4193
  %v4195 = vpop.xlane.xlu0 %4194
  %v4196 = vsel %vm4159, %v4146, -inf
  %v4197 = vmax.f32 %v4145, %v4196
  %4198 = vmax.xlane.f32.xlu0 %v4197
  %v4199 = vpop.xlane.xlu0 %4198
  %v4200 = vsel %vm4159, %v4148, -inf
  %v4201 = vmax.f32 %v4147, %v4200
  %4202 = vmax.xlane.f32.xlu0 %v4201
  %v4203 = vpop.xlane.xlu0 %4202
  %v4204 = vsel %vm4159, %v4150, -inf
  %v4205 = vmax.f32 %v4149, %v4204
  %4206 = vmax.xlane.f32.xlu0 %v4205
  %v4207 = vpop.xlane.xlu0 %4206
  %v4208 = vsel %vm4159, %v4152, -inf
  %v4209 = vmax.f32 %v4151, %v4208
  %4210 = vmax.xlane.f32.xlu0 %v4209
  %v4211 = vpop.xlane.xlu0 %4210
  %v4212 = vsel %vm4159, %v4154, -inf
  %v4213 = vmax.f32 %v4153, %v4212
  %4214 = vmax.xlane.f32.xlu0 %v4213
  %v4215 = vpop.xlane.xlu0 %4214
  %v4216 = vsel %vm4159, %v4156, -inf
  %v4217 = vmax.f32 %v4155, %v4216
  %4218 = vmax.xlane.f32.xlu0 %v4217
  %v4219 = vpop.xlane.xlu0 %4218
  %v4220 = vsel %vm4159, %v4158, -inf
  %v4221 = vmax.f32 %v4157, %v4220
  %4222 = vmax.xlane.f32.xlu0 %v4221
  %v4223 = vpop.xlane.xlu0 %4222
  %v4224 = vsub.f32 %v4127, %v4163
  %v4225 = vsub.f32 %v4128, %v4163
  %v4226 = vsub.f32 %v4129, %v4167
  %v4227 = vsub.f32 %v4130, %v4167
  %v4228 = vsub.f32 %v4131, %v4171
  %v4229 = vsub.f32 %v4132, %v4171
  %v4230 = vsub.f32 %v4133, %v4175
  %v4231 = vsub.f32 %v4134, %v4175
  %v4232 = vsub.f32 %v4135, %v4179
  %v4233 = vsub.f32 %v4136, %v4179
  %v4234 = vsub.f32 %v4137, %v4183
  %v4235 = vsub.f32 %v4138, %v4183
  %v4236 = vsub.f32 %v4139, %v4187
  %v4237 = vsub.f32 %v4140, %v4187
  %v4238 = vsub.f32 %v4141, %v4191
  %v4239 = vsub.f32 %v4142, %v4191
  %v4240 = vsub.f32 %v4143, %v4195
  %v4241 = vsub.f32 %v4144, %v4195
  %v4242 = vsub.f32 %v4145, %v4199
  %v4243 = vsub.f32 %v4146, %v4199
  %v4244 = vsub.f32 %v4147, %v4203
  %v4245 = vsub.f32 %v4148, %v4203
  %v4246 = vsub.f32 %v4149, %v4207
  %v4247 = vsub.f32 %v4150, %v4207
  %v4248 = vsub.f32 %v4151, %v4211
  %v4249 = vsub.f32 %v4152, %v4211
  %v4250 = vsub.f32 %v4153, %v4215
  %v4251 = vsub.f32 %v4154, %v4215
  %v4252 = vsub.f32 %v4155, %v4219
  %v4253 = vsub.f32 %v4156, %v4219
  %v4254 = vsub.f32 %v4157, %v4223
  %v4255 = vsub.f32 %v4158, %v4223
  %v4256 = vmul.f32 %v4224, 1.442695
  %v4257 = vpow.pop %v4256
  %v4258 = vmul.f32 %v4225, 1.442695
  %v4259 = vpow.pop %v4258
  %v4260 = vmul.f32 %v4226, 1.442695
  %v4261 = vpow.pop %v4260
  %v4262 = vmul.f32 %v4227, 1.442695
  %v4263 = vpow.pop %v4262
  %v4264 = vmul.f32 %v4228, 1.442695
  %v4265 = vpow.pop %v4264
  %v4266 = vmul.f32 %v4229, 1.442695
  %v4267 = vpow.pop %v4266
  %v4268 = vmul.f32 %v4230, 1.442695
  %v4269 = vpow.pop %v4268
  %v4270 = vmul.f32 %v4231, 1.442695
  %v4271 = vpow.pop %v4270
  %v4272 = vmul.f32 %v4232, 1.442695
  %v4273 = vpow.pop %v4272
  %v4274 = vmul.f32 %v4233, 1.442695
  %v4275 = vpow.pop %v4274
  %v4276 = vmul.f32 %v4234, 1.442695
  %v4277 = vpow.pop %v4276
  %v4278 = vmul.f32 %v4235, 1.442695
  %v4279 = vpow.pop %v4278
  %v4280 = vmul.f32 %v4236, 1.442695
  %v4281 = vpow.pop %v4280
  %v4282 = vmul.f32 %v4237, 1.442695
  %v4283 = vpow.pop %v4282
  %v4284 = vmul.f32 %v4238, 1.442695
  %v4285 = vpow.pop %v4284
  %v4286 = vmul.f32 %v4239, 1.442695
  %v4287 = vpow.pop %v4286
  %v4288 = vmul.f32 %v4240, 1.442695
  %v4289 = vpow.pop %v4288
  %v4290 = vmul.f32 %v4241, 1.442695
  %v4291 = vpow.pop %v4290
  %v4292 = vmul.f32 %v4242, 1.442695
  %v4293 = vpow.pop %v4292
  %v4294 = vmul.f32 %v4243, 1.442695
  %v4295 = vpow.pop %v4294
  %v4296 = vmul.f32 %v4244, 1.442695
  %v4297 = vpow.pop %v4296
  %v4298 = vmul.f32 %v4245, 1.442695
  %v4299 = vpow.pop %v4298
  %v4300 = vmul.f32 %v4246, 1.442695
  %v4301 = vpow.pop %v4300
  %v4302 = vmul.f32 %v4247, 1.442695
  %v4303 = vpow.pop %v4302
  %v4304 = vmul.f32 %v4248, 1.442695
  %v4305 = vpow.pop %v4304
  %v4306 = vmul.f32 %v4249, 1.442695
  %v4307 = vpow.pop %v4306
  %v4308 = vmul.f32 %v4250, 1.442695
  %v4309 = vpow.pop %v4308
  %v4310 = vmul.f32 %v4251, 1.442695
  %v4311 = vpow.pop %v4310
  %v4312 = vmul.f32 %v4252, 1.442695
  %v4313 = vpow.pop %v4312
  %v4314 = vmul.f32 %v4253, 1.442695
  %v4315 = vpow.pop %v4314
  %v4316 = vmul.f32 %v4254, 1.442695
  %v4317 = vpow.pop %v4316
  %v4318 = vmul.f32 %v4255, 1.442695
  %v4319 = vpow.pop %v4318
  %v4320 = vsel %vm4159, %v4259, 0.0
  %v4321 = vadd.f32 %v4257, %v4320
  %4322 = vadd.xlane.f32.xlu0 %v4321
  %v4323 = vpop.xlane.xlu0 %4322
  %v4324 = vsel %vm4159, %v4263, 0.0
  %v4325 = vadd.f32 %v4261, %v4324
  %4326 = vadd.xlane.f32.xlu0 %v4325
  %v4327 = vpop.xlane.xlu0 %4326
  %v4328 = vsel %vm4159, %v4267, 0.0
  %v4329 = vadd.f32 %v4265, %v4328
  %4330 = vadd.xlane.f32.xlu0 %v4329
  %v4331 = vpop.xlane.xlu0 %4330
  %v4332 = vsel %vm4159, %v4271, 0.0
  %v4333 = vadd.f32 %v4269, %v4332
  %4334 = vadd.xlane.f32.xlu0 %v4333
  %v4335 = vpop.xlane.xlu0 %4334
  %v4336 = vsel %vm4159, %v4275, 0.0
  %v4337 = vadd.f32 %v4273, %v4336
  %4338 = vadd.xlane.f32.xlu0 %v4337
  %v4339 = vpop.xlane.xlu0 %4338
  %v4340 = vsel %vm4159, %v4279, 0.0
  %v4341 = vadd.f32 %v4277, %v4340
  %4342 = vadd.xlane.f32.xlu0 %v4341
  %v4343 = vpop.xlane.xlu0 %4342
  %v4344 = vsel %vm4159, %v4283, 0.0
  %v4345 = vadd.f32 %v4281, %v4344
  %4346 = vadd.xlane.f32.xlu0 %v4345
  %v4347 = vpop.xlane.xlu0 %4346
  %v4348 = vsel %vm4159, %v4287, 0.0
  %v4349 = vadd.f32 %v4285, %v4348
  %4350 = vadd.xlane.f32.xlu0 %v4349
  %v4351 = vpop.xlane.xlu0 %4350
  %v4352 = vsel %vm4159, %v4291, 0.0
  %v4353 = vadd.f32 %v4289, %v4352
  %4354 = vadd.xlane.f32.xlu0 %v4353
  %v4355 = vpop.xlane.xlu0 %4354
  %v4356 = vsel %vm4159, %v4295, 0.0
  %v4357 = vadd.f32 %v4293, %v4356
  %4358 = vadd.xlane.f32.xlu0 %v4357
  %v4359 = vpop.xlane.xlu0 %4358
  %v4360 = vsel %vm4159, %v4299, 0.0
  %v4361 = vadd.f32 %v4297, %v4360
  %4362 = vadd.xlane.f32.xlu0 %v4361
  %v4363 = vpop.xlane.xlu0 %4362
  %v4364 = vsel %vm4159, %v4303, 0.0
  %v4365 = vadd.f32 %v4301, %v4364
  %4366 = vadd.xlane.f32.xlu0 %v4365
  %v4367 = vpop.xlane.xlu0 %4366
  %v4368 = vsel %vm4159, %v4307, 0.0
  %v4369 = vadd.f32 %v4305, %v4368
  %4370 = vadd.xlane.f32.xlu0 %v4369
  %v4371 = vpop.xlane.xlu0 %4370
  %v4372 = vsel %vm4159, %v4311, 0.0
  %v4373 = vadd.f32 %v4309, %v4372
  %4374 = vadd.xlane.f32.xlu0 %v4373
  %v4375 = vpop.xlane.xlu0 %4374
  %v4376 = vsel %vm4159, %v4315, 0.0
  %v4377 = vadd.f32 %v4313, %v4376
  %4378 = vadd.xlane.f32.xlu0 %v4377
  %v4379 = vpop.xlane.xlu0 %4378
  %v4380 = vsel %vm4159, %v4319, 0.0
  %v4381 = vadd.f32 %v4317, %v4380
  %4382 = vadd.xlane.f32.xlu0 %v4381
  %v4383 = vpop.xlane.xlu0 %4382
  %v4384 = vrcp.pop %v4323
  %v4385 = vrcp.pop %v4327
  %v4386 = vrcp.pop %v4331
  %v4387 = vrcp.pop %v4335
  %v4388 = vrcp.pop %v4339
  %v4389 = vrcp.pop %v4343
  %v4390 = vrcp.pop %v4347
  %v4391 = vrcp.pop %v4351
  %v4392 = vrcp.pop %v4355
  %v4393 = vrcp.pop %v4359
  %v4394 = vrcp.pop %v4363
  %v4395 = vrcp.pop %v4367
  %v4396 = vrcp.pop %v4371
  %v4397 = vrcp.pop %v4375
  %v4398 = vrcp.pop %v4379
  %v4399 = vrcp.pop %v4383
  %v4400 = vmul.f32 %v4257, %v4384
  %v4401 = vmul.f32 %v4259, %v4384
  %v4402 = vmul.f32 %v4261, %v4385
  %v4403 = vmul.f32 %v4263, %v4385
  %v4404 = vmul.f32 %v4265, %v4386
  %v4405 = vmul.f32 %v4267, %v4386
  %v4406 = vmul.f32 %v4269, %v4387
  %v4407 = vmul.f32 %v4271, %v4387
  %v4408 = vmul.f32 %v4273, %v4388
  %v4409 = vmul.f32 %v4275, %v4388
  %v4410 = vmul.f32 %v4277, %v4389
  %v4411 = vmul.f32 %v4279, %v4389
  %v4412 = vmul.f32 %v4281, %v4390
  %v4413 = vmul.f32 %v4283, %v4390
  %v4414 = vmul.f32 %v4285, %v4391
  %v4415 = vmul.f32 %v4287, %v4391
  %v4416 = vmul.f32 %v4289, %v4392
  %v4417 = vmul.f32 %v4291, %v4392
  %v4418 = vmul.f32 %v4293, %v4393
  %v4419 = vmul.f32 %v4295, %v4393
  %v4420 = vmul.f32 %v4297, %v4394
  %v4421 = vmul.f32 %v4299, %v4394
  %v4422 = vmul.f32 %v4301, %v4395
  %v4423 = vmul.f32 %v4303, %v4395
  %v4424 = vmul.f32 %v4305, %v4396
  %v4425 = vmul.f32 %v4307, %v4396
  %v4426 = vmul.f32 %v4309, %v4397
  %v4427 = vmul.f32 %v4311, %v4397
  %v4428 = vmul.f32 %v4313, %v4398
  %v4429 = vmul.f32 %v4315, %v4398
  %v4430 = vmul.f32 %v4317, %v4399
  %v4431 = vmul.f32 %v4319, %v4399
  %v4432 = vpack.c.bf16 %v4402, %v4400
  %v4433 = vpack.c.bf16 %v4403, %v4401
  %v4434 = vpack.c.bf16 %v4406, %v4404
  %v4435 = vpack.c.bf16 %v4407, %v4405
  %v4436 = vpack.c.bf16 %v4410, %v4408
  %v4437 = vpack.c.bf16 %v4411, %v4409
  %v4438 = vpack.c.bf16 %v4414, %v4412
  %v4439 = vpack.c.bf16 %v4415, %v4413
  %v4440 = vpack.c.bf16 %v4418, %v4416
  %v4441 = vpack.c.bf16 %v4419, %v4417
  %v4442 = vpack.c.bf16 %v4422, %v4420
  %v4443 = vpack.c.bf16 %v4423, %v4421
  %v4444 = vpack.c.bf16 %v4426, %v4424
  %v4445 = vpack.c.bf16 %v4427, %v4425
  %v4446 = vpack.c.bf16 %v4430, %v4428
  %v4447 = vpack.c.bf16 %v4431, %v4429
  %v4449 = vsel %vm4159, %v4433, 0
  %v4452 = vsel %vm4159, %v4435, 0
  %v4455 = vsel %vm4159, %v4437, 0
  %v4458 = vsel %vm4159, %v4439, 0
  %v4461 = vsel %vm4159, %v4441, 0
  %v4464 = vsel %vm4159, %v4443, 0
  %v4467 = vsel %vm4159, %v4445, 0
  %v4470 = vsel %vm4159, %v4447, 0
  %vm4472 = vcmask 1043456
  %v4474 = vsel %vm4472, %v3926, 0
  %4476 = vmatprep.subr.bf16.mxu0 0
  %4477 = vmatpush1.bf16.msra.mxu0 %v3914
  %4478 = vmatprep.subr.bf16.mxu0 0
  %4479 = vmatpush1.bf16.msra.mxu0 %v3915
  %4480 = vmatprep.subr.bf16.mxu0 0
  %4481 = vmatpush1.bf16.msra.mxu0 %v3916
  %4482 = vmatprep.subr.bf16.mxu0 0
  %4483 = vmatpush1.bf16.msra.mxu0 %v3917
  %4484 = vmatprep.subr.bf16.mxu0 0
  %4485 = vmatpush1.bf16.msra.mxu0 %v3918
  %4486 = vmatprep.subr.bf16.mxu0 0
  %4487 = vmatpush1.bf16.msra.mxu0 %v3919
  %4488 = vmatprep.subr.bf16.mxu0 0
  %4489 = vmatpush1.bf16.msra.mxu0 %v3920
  %4490 = vmatprep.subr.bf16.mxu0 0
  %4491 = vmatpush1.bf16.msra.mxu0 %v3921
  %4492 = vmatprep.subr.bf16.mxu0 0
  %4493 = vmatpush1.bf16.msra.mxu0 %v3922
  %4494 = vmatprep.subr.bf16.mxu0 0
  %4495 = vmatpush1.bf16.msra.mxu0 %v3923
  %4496 = vmatprep.subr.bf16.mxu0 0
  %4497 = vmatpush1.bf16.msra.mxu0 %v3924
  %4498 = vmatprep.subr.bf16.mxu0 0
  %4499 = vmatpush1.bf16.msra.mxu0 %v3925
  %4500 = vmatprep.subr.bf16.mxu0 0
  %4501 = vmatpush1.bf16.msra.mxu0 %v4474
  %4502 = vmatprep.subr.bf16.mxu0 0
  %4503 = vmatpush1.bf16.msra.mxu0 0
  %4504 = vmatprep.subr.bf16.mxu0 0
  %4505 = vmatpush1.bf16.msra.mxu0 0
  %4506 = vmatprep.subr.bf16.mxu0 0
  %4507 = vmatpush1.bf16.msra.mxu0 0
  %4508 = vmatprep.mubr.bf16.mxu0 %v4449
  %4509 = vmatmul.mubr.bf16.gmra.mrb[0].mxu0 %v4432
  %v4510 = vpop.f32.mrb[0].mxu0
  %v4511 = vadd.f32 0.0, %v4510
  %v4512 = vpop.f32.mrb[0].mxu0
  %v4513 = vpop.f32.mrb[0].mxu0
  %v4514 = vadd.f32 0.0, %v4513
  %v4515 = vpop.f32.mrb[0].mxu0
  %4516 = vmatprep.mubr.bf16.mxu0 %v4452
  %4517 = vmatmul.mubr.bf16.gmra.mrb[0].mxu0 %v4434
  %v4518 = vpop.f32.mrb[0].mxu0
  %v4519 = vadd.f32 0.0, %v4518
  %v4520 = vpop.f32.mrb[0].mxu0
  %v4521 = vpop.f32.mrb[0].mxu0
  %v4522 = vadd.f32 0.0, %v4521
  %v4523 = vpop.f32.mrb[0].mxu0
  %4524 = vmatprep.mubr.bf16.mxu0 %v4455
  %4525 = vmatmul.mubr.bf16.gmra.mrb[0].mxu0 %v4436
  %v4526 = vpop.f32.mrb[0].mxu0
  %v4527 = vadd.f32 0.0, %v4526
  %v4528 = vpop.f32.mrb[0].mxu0
  %v4529 = vpop.f32.mrb[0].mxu0
  %v4530 = vadd.f32 0.0, %v4529
  %v4531 = vpop.f32.mrb[0].mxu0
  %4532 = vmatprep.mubr.bf16.mxu0 %v4458
  %4533 = vmatmul.mubr.bf16.gmra.mrb[0].mxu0 %v4438
  %v4534 = vpop.f32.mrb[0].mxu0
  %v4535 = vadd.f32 0.0, %v4534
  %v4536 = vpop.f32.mrb[0].mxu0
  %v4537 = vpop.f32.mrb[0].mxu0
  %v4538 = vadd.f32 0.0, %v4537
  %v4539 = vpop.f32.mrb[0].mxu0
  %4540 = vmatprep.mubr.bf16.mxu0 %v4461
  %4541 = vmatmul.mubr.bf16.gmra.mrb[0].mxu0 %v4440
  %v4542 = vpop.f32.mrb[0].mxu0
  %v4543 = vadd.f32 0.0, %v4542
  %v4544 = vpop.f32.mrb[0].mxu0
  %v4545 = vpop.f32.mrb[0].mxu0
  %v4546 = vadd.f32 0.0, %v4545
  %v4547 = vpop.f32.mrb[0].mxu0
  %4548 = vmatprep.mubr.bf16.mxu0 %v4464
  %4549 = vmatmul.mubr.bf16.gmra.mrb[0].mxu0 %v4442
  %v4550 = vpop.f32.mrb[0].mxu0
  %v4551 = vadd.f32 0.0, %v4550
  %v4552 = vpop.f32.mrb[0].mxu0
  %v4553 = vpop.f32.mrb[0].mxu0
  %v4554 = vadd.f32 0.0, %v4553
  %v4555 = vpop.f32.mrb[0].mxu0
  %4556 = vmatprep.mubr.bf16.mxu0 %v4467
  %4557 = vmatmul.mubr.bf16.gmra.mrb[0].mxu0 %v4444
  %v4558 = vpop.f32.mrb[0].mxu0
  %v4559 = vadd.f32 0.0, %v4558
  %v4560 = vpop.f32.mrb[0].mxu0
  %v4561 = vpop.f32.mrb[0].mxu0
  %v4562 = vadd.f32 0.0, %v4561
  %v4563 = vpop.f32.mrb[0].mxu0
  %4564 = vmatprep.mubr.bf16.mxu0 %v4470
  %4565 = vmatmul.mubr.bf16.gmra.mrb[0].mxu0 %v4446
  %v4566 = vpop.f32.mrb[0].mxu0
  %v4567 = vadd.f32 0.0, %v4566
  %v4568 = vpop.f32.mrb[0].mxu0
  %v4569 = vpop.f32.mrb[0].mxu0
  %v4570 = vadd.f32 0.0, %v4569
  %v4571 = vpop.f32.mrb[0].mxu0
  %4572 = vdwg.mxu0
  %v4573 = vmul.f32 %v4511, %v233
  %v4574 = vmul.f32 %v4514, %v234
  %v4575 = vmul.f32 %v4519, %v235
  %v4576 = vmul.f32 %v4522, %v236
  %v4577 = vmul.f32 %v4527, %v237
  %v4578 = vmul.f32 %v4530, %v238
  %v4579 = vmul.f32 %v4535, %v239
  %v4580 = vmul.f32 %v4538, %v240
  %v4581 = vmul.f32 %v4543, %v241
  %v4582 = vmul.f32 %v4546, %v242
  %v4583 = vmul.f32 %v4551, %v243
  %v4584 = vmul.f32 %v4554, %v244
  %v4585 = vmul.f32 %v4559, %v245
  %v4586 = vmul.f32 %v4562, %v246
  %v4587 = vmul.f32 %v4567, %v247
  %v4588 = vmul.f32 %v4570, %v248
  %v4589 = vadd.f32 %v4573, %v4575
  %v4590 = vadd.f32 %v4574, %v4576
  %v4591 = vadd.f32 %v4589, %v4577
  %v4592 = vadd.f32 %v4590, %v4578
  %v4593 = vadd.f32 %v4591, %v4579
  %v4594 = vadd.f32 %v4592, %v4580
  %v4595 = vadd.f32 %v4593, %v4581
  %v4596 = vadd.f32 %v4594, %v4582
  %v4597 = vadd.f32 %v4595, %v4583
  %v4598 = vadd.f32 %v4596, %v4584
  %v4599 = vadd.f32 %v4597, %v4585
  %v4600 = vadd.f32 %v4598, %v4586
  %v4601 = vadd.f32 %v4599, %v4587
  %v4602 = vadd.f32 %v4600, %v4588
  %v4603 = vpack.c.bf16 %v3154, %v3149
  %v4604 = vpack.c.bf16 %v3162, %v3157
  %v4605 = vpack.c.bf16 %v3170, %v3165
  %v4606 = vpack.c.bf16 %v3178, %v3173
  %v4607 = vpack.c.bf16 %v3186, %v3181
  %v4608 = vpack.c.bf16 %v3194, %v3189
  %v4609 = vpack.c.bf16 %v3202, %v3197
  %v4610 = vpack.c.bf16 %v3210, %v3205
  %v4611 = vpack.c.bf16 %v3218, %v3213
  %v4612 = vpack.c.bf16 %v3226, %v3221
  %v4613 = vpack.c.bf16 %v3234, %v3229
  %v4614 = vpack.c.bf16 %v3242, %v3237
  %v4615 = vpack.c.bf16 %v3245, %v3245
  %v4616 = vpack.c.bf16 %v3607, %v3602
  %v4617 = vpack.c.bf16 %v3615, %v3610
  %v4618 = vpack.c.bf16 %v3623, %v3618
  %v4619 = vpack.c.bf16 %v3631, %v3626
  %v4620 = vpack.c.bf16 %v3639, %v3634
  %v4621 = vpack.c.bf16 %v3647, %v3642
  %v4622 = vpack.c.bf16 %v3655, %v3650
  %v4623 = vpack.c.bf16 %v3663, %v3658
  %v4624 = vpack.c.bf16 %v3671, %v3666
  %v4625 = vpack.c.bf16 %v3679, %v3674
  %v4626 = vpack.c.bf16 %v3687, %v3682
  %v4627 = vpack.c.bf16 %v3695, %v3690
  %v4628 = vpack.c.bf16 %v3698, %v3698
  %v4629 = vmul.f32 %v2823, %v233
  %v4630 = vmul.f32 %v2826, %v234
  %v4631 = vmul.f32 %v2823, %v235
  %v4632 = vmul.f32 %v2826, %v236
  %v4633 = vmul.f32 %v2823, %v237
  %v4634 = vmul.f32 %v2826, %v238
  %v4635 = vmul.f32 %v2823, %v239
  %v4636 = vmul.f32 %v2826, %v240
  %v4637 = vmul.f32 %v2823, %v241
  %v4638 = vmul.f32 %v2826, %v242
  %v4639 = vmul.f32 %v2823, %v243
  %v4640 = vmul.f32 %v2826, %v244
  %v4641 = vmul.f32 %v2823, %v245
  %v4642 = vmul.f32 %v2826, %v246
  %v4643 = vmul.f32 %v2823, %v247
  %v4644 = vmul.f32 %v2826, %v248
  %v4645 = vpack.c.bf16 %v4630, %v4629
  %v4646 = vpack.c.bf16 %v4632, %v4631
  %v4647 = vpack.c.bf16 %v4634, %v4633
  %v4648 = vpack.c.bf16 %v4636, %v4635
  %v4649 = vpack.c.bf16 %v4638, %v4637
  %v4650 = vpack.c.bf16 %v4640, %v4639
  %v4651 = vpack.c.bf16 %v4642, %v4641
  %v4652 = vpack.c.bf16 %v4644, %v4643
  %v4654 = vsel %vm331, %v4645, 0
  %v4657 = vsel %vm331, %v4646, 0
  %v4660 = vsel %vm331, %v4647, 0
  %v4663 = vsel %vm331, %v4648, 0
  %v4666 = vsel %vm331, %v4649, 0
  %v4669 = vsel %vm331, %v4650, 0
  %v4672 = vsel %vm331, %v4651, 0
  %v4675 = vsel %vm331, %v4652, 0
  %v4678 = vsel %vm331, %v4603, 0
  %v4681 = vsel %vm331, %v4604, 0
  %v4684 = vsel %vm331, %v4605, 0
  %v4687 = vsel %vm331, %v4606, 0
  %v4690 = vsel %vm331, %v4607, 0
  %v4693 = vsel %vm331, %v4608, 0
  %v4696 = vsel %vm331, %v4609, 0
  %v4699 = vsel %vm331, %v4610, 0
  %v4702 = vsel %vm331, %v4611, 0
  %v4705 = vsel %vm331, %v4612, 0
  %v4708 = vsel %vm331, %v4613, 0
  %v4711 = vsel %vm331, %v4614, 0
  %v4714 = vsel %vm331, %v4615, 0
  %4716 = vmatprep.subr.bf16.mxu0 0
  %4717 = vmatpush1.bf16.xpose.msra.mxu0 %v4678
  %4718 = vmatprep.subr.bf16.mxu0 0
  %4719 = vmatpush1.bf16.xpose.msra.mxu0 %v4681
  %4720 = vmatprep.subr.bf16.mxu0 0
  %4721 = vmatpush1.bf16.xpose.msra.mxu0 %v4684
  %4722 = vmatprep.subr.bf16.mxu0 0
  %4723 = vmatpush1.bf16.xpose.msra.mxu0 %v4687
  %4724 = vmatprep.subr.bf16.mxu0 0
  %4725 = vmatpush1.bf16.xpose.msra.mxu0 %v4690
  %4726 = vmatprep.subr.bf16.mxu0 0
  %4727 = vmatpush1.bf16.xpose.msra.mxu0 %v4693
  %4728 = vmatprep.subr.bf16.mxu0 0
  %4729 = vmatpush1.bf16.xpose.msra.mxu0 %v4696
  %4730 = vmatprep.subr.bf16.mxu0 0
  %4731 = vmatpush1.bf16.xpose.msra.mxu0 %v4699
  %4732 = vmatprep.subr.bf16.mxu0 0
  %4733 = vmatpush1.bf16.xpose.msra.mxu0 %v4702
  %4734 = vmatprep.subr.bf16.mxu0 0
  %4735 = vmatpush1.bf16.xpose.msra.mxu0 %v4705
  %4736 = vmatprep.subr.bf16.mxu0 0
  %4737 = vmatpush1.bf16.xpose.msra.mxu0 %v4708
  %4738 = vmatprep.subr.bf16.mxu0 0
  %4739 = vmatpush1.bf16.xpose.msra.mxu0 %v4711
  %4740 = vmatprep.subr.bf16.mxu0 0
  %4741 = vmatpush1.bf16.xpose.msra.mxu0 %v4714
  %4742 = vmatprep.subr.bf16.mxu0 0
  %4743 = vmatpush1.bf16.xpose.msra.mxu0 0
  %4744 = vmatprep.subr.bf16.mxu0 0
  %4745 = vmatpush1.bf16.xpose.msra.mxu0 0
  %4746 = vmatprep.subr.bf16.mxu0 0
  %4747 = vmatpush1.bf16.xpose.msra.mxu0 0
  %4748 = vmatprep.mubr.bf16.mxu0 0
  %4749 = vmatmul.mubr.bf16.gmra.mrb[0].mxu0 %v4654
  %v4750 = vpop.f32.mrb[0].mxu0
  %v4751 = vadd.f32 0.0, %v4750
  %v4752 = vpop.f32.mrb[0].mxu0
  %v4753 = vadd.f32 0.0, %v4752
  %v4754 = vpop.f32.mrb[0].mxu0
  %v4755 = vadd.f32 0.0, %v4754
  %v4756 = vpop.f32.mrb[0].mxu0
  %v4757 = vadd.f32 0.0, %v4756
  %4758 = vmatprep.mubr.bf16.mxu0 0
  %4759 = vmatmul.mubr.bf16.gmra.mrb[0].mxu0 %v4657
  %v4760 = vpop.f32.mrb[0].mxu0
  %v4761 = vadd.f32 0.0, %v4760
  %v4762 = vpop.f32.mrb[0].mxu0
  %v4763 = vadd.f32 0.0, %v4762
  %v4764 = vpop.f32.mrb[0].mxu0
  %v4765 = vadd.f32 0.0, %v4764
  %v4766 = vpop.f32.mrb[0].mxu0
  %v4767 = vadd.f32 0.0, %v4766
  %4768 = vmatprep.mubr.bf16.mxu0 0
  %4769 = vmatmul.mubr.bf16.gmra.mrb[0].mxu0 %v4660
  %v4770 = vpop.f32.mrb[0].mxu0
  %v4771 = vadd.f32 0.0, %v4770
  %v4772 = vpop.f32.mrb[0].mxu0
  %v4773 = vadd.f32 0.0, %v4772
  %v4774 = vpop.f32.mrb[0].mxu0
  %v4775 = vadd.f32 0.0, %v4774
  %v4776 = vpop.f32.mrb[0].mxu0
  %v4777 = vadd.f32 0.0, %v4776
  %4778 = vmatprep.mubr.bf16.mxu0 0
  %4779 = vmatmul.mubr.bf16.gmra.mrb[0].mxu0 %v4663
  %v4780 = vpop.f32.mrb[0].mxu0
  %v4781 = vadd.f32 0.0, %v4780
  %v4782 = vpop.f32.mrb[0].mxu0
  %v4783 = vadd.f32 0.0, %v4782
  %v4784 = vpop.f32.mrb[0].mxu0
  %v4785 = vadd.f32 0.0, %v4784
  %v4786 = vpop.f32.mrb[0].mxu0
  %v4787 = vadd.f32 0.0, %v4786
  %4788 = vmatprep.mubr.bf16.mxu0 0
  %4789 = vmatmul.mubr.bf16.gmra.mrb[0].mxu0 %v4666
  %v4790 = vpop.f32.mrb[0].mxu0
  %v4791 = vadd.f32 0.0, %v4790
  %v4792 = vpop.f32.mrb[0].mxu0
  %v4793 = vadd.f32 0.0, %v4792
  %v4794 = vpop.f32.mrb[0].mxu0
  %v4795 = vadd.f32 0.0, %v4794
  %v4796 = vpop.f32.mrb[0].mxu0
  %v4797 = vadd.f32 0.0, %v4796
  %4798 = vmatprep.mubr.bf16.mxu0 0
  %4799 = vmatmul.mubr.bf16.gmra.mrb[0].mxu0 %v4669
  %v4800 = vpop.f32.mrb[0].mxu0
  %v4801 = vadd.f32 0.0, %v4800
  %v4802 = vpop.f32.mrb[0].mxu0
  %v4803 = vadd.f32 0.0, %v4802
  %v4804 = vpop.f32.mrb[0].mxu0
  %v4805 = vadd.f32 0.0, %v4804
  %v4806 = vpop.f32.mrb[0].mxu0
  %v4807 = vadd.f32 0.0, %v4806
  %4808 = vmatprep.mubr.bf16.mxu0 0
  %4809 = vmatmul.mubr.bf16.gmra.mrb[0].mxu0 %v4672
  %v4810 = vpop.f32.mrb[0].mxu0
  %v4811 = vadd.f32 0.0, %v4810
  %v4812 = vpop.f32.mrb[0].mxu0
  %v4813 = vadd.f32 0.0, %v4812
  %v4814 = vpop.f32.mrb[0].mxu0
  %v4815 = vadd.f32 0.0, %v4814
  %v4816 = vpop.f32.mrb[0].mxu0
  %v4817 = vadd.f32 0.0, %v4816
  %4818 = vmatprep.mubr.bf16.mxu0 0
  %4819 = vmatmul.mubr.bf16.gmra.mrb[0].mxu0 %v4675
  %v4820 = vpop.f32.mrb[0].mxu0
  %v4821 = vadd.f32 0.0, %v4820
  %v4822 = vpop.f32.mrb[0].mxu0
  %v4823 = vadd.f32 0.0, %v4822
  %v4824 = vpop.f32.mrb[0].mxu0
  %v4825 = vadd.f32 0.0, %v4824
  %v4826 = vpop.f32.mrb[0].mxu0
  %v4827 = vadd.f32 0.0, %v4826
  %4828 = vdwg.mxu0
  %v4829 = vmul.f32 %v4751, 0.5
  %v4830 = vmul.f32 %v4753, 0.5
  %v4831 = vmul.f32 %v4755, 0.5
  %v4832 = vmul.f32 %v4757, 0.5
  %v4833 = vmul.f32 %v4761, 0.5
  %v4834 = vmul.f32 %v4763, 0.5
  %v4835 = vmul.f32 %v4765, 0.5
  %v4836 = vmul.f32 %v4767, 0.5
  %v4837 = vmul.f32 %v4771, 0.5
  %v4838 = vmul.f32 %v4773, 0.5
  %v4839 = vmul.f32 %v4775, 0.5
  %v4840 = vmul.f32 %v4777, 0.5
  %v4841 = vmul.f32 %v4781, 0.5
  %v4842 = vmul.f32 %v4783, 0.5
  %v4843 = vmul.f32 %v4785, 0.5
  %v4844 = vmul.f32 %v4787, 0.5
  %v4845 = vmul.f32 %v4791, 0.5
  %v4846 = vmul.f32 %v4793, 0.5
  %v4847 = vmul.f32 %v4795, 0.5
  %v4848 = vmul.f32 %v4797, 0.5
  %v4849 = vmul.f32 %v4801, 0.5
  %v4850 = vmul.f32 %v4803, 0.5
  %v4851 = vmul.f32 %v4805, 0.5
  %v4852 = vmul.f32 %v4807, 0.5
  %v4853 = vmul.f32 %v4811, 0.5
  %v4854 = vmul.f32 %v4813, 0.5
  %v4855 = vmul.f32 %v4815, 0.5
  %v4856 = vmul.f32 %v4817, 0.5
  %v4857 = vmul.f32 %v4821, 0.5
  %v4858 = vmul.f32 %v4823, 0.5
  %v4859 = vmul.f32 %v4825, 0.5
  %v4860 = vmul.f32 %v4827, 0.5
  %v4861 = vsel %vm4159, %v4830, -inf
  %v4862 = vmax.f32 %v4829, %v4861
  %4863 = vmax.xlane.f32.xlu0 %v4862
  %v4864 = vpop.xlane.xlu0 %4863
  %v4865 = vsel %vm4159, %v4832, -inf
  %v4866 = vmax.f32 %v4831, %v4865
  %4867 = vmax.xlane.f32.xlu0 %v4866
  %v4868 = vpop.xlane.xlu0 %4867
  %v4869 = vsel %vm4159, %v4834, -inf
  %v4870 = vmax.f32 %v4833, %v4869
  %4871 = vmax.xlane.f32.xlu0 %v4870
  %v4872 = vpop.xlane.xlu0 %4871
  %v4873 = vsel %vm4159, %v4836, -inf
  %v4874 = vmax.f32 %v4835, %v4873
  %4875 = vmax.xlane.f32.xlu0 %v4874
  %v4876 = vpop.xlane.xlu0 %4875
  %v4877 = vsel %vm4159, %v4838, -inf
  %v4878 = vmax.f32 %v4837, %v4877
  %4879 = vmax.xlane.f32.xlu0 %v4878
  %v4880 = vpop.xlane.xlu0 %4879
  %v4881 = vsel %vm4159, %v4840, -inf
  %v4882 = vmax.f32 %v4839, %v4881
  %4883 = vmax.xlane.f32.xlu0 %v4882
  %v4884 = vpop.xlane.xlu0 %4883
  %v4885 = vsel %vm4159, %v4842, -inf
  %v4886 = vmax.f32 %v4841, %v4885
  %4887 = vmax.xlane.f32.xlu0 %v4886
  %v4888 = vpop.xlane.xlu0 %4887
  %v4889 = vsel %vm4159, %v4844, -inf
  %v4890 = vmax.f32 %v4843, %v4889
  %4891 = vmax.xlane.f32.xlu0 %v4890
  %v4892 = vpop.xlane.xlu0 %4891
  %v4893 = vsel %vm4159, %v4846, -inf
  %v4894 = vmax.f32 %v4845, %v4893
  %4895 = vmax.xlane.f32.xlu0 %v4894
  %v4896 = vpop.xlane.xlu0 %4895
  %v4897 = vsel %vm4159, %v4848, -inf
  %v4898 = vmax.f32 %v4847, %v4897
  %4899 = vmax.xlane.f32.xlu0 %v4898
  %v4900 = vpop.xlane.xlu0 %4899
  %v4901 = vsel %vm4159, %v4850, -inf
  %v4902 = vmax.f32 %v4849, %v4901
  %4903 = vmax.xlane.f32.xlu0 %v4902
  %v4904 = vpop.xlane.xlu0 %4903
  %v4905 = vsel %vm4159, %v4852, -inf
  %v4906 = vmax.f32 %v4851, %v4905
  %4907 = vmax.xlane.f32.xlu0 %v4906
  %v4908 = vpop.xlane.xlu0 %4907
  %v4909 = vsel %vm4159, %v4854, -inf
  %v4910 = vmax.f32 %v4853, %v4909
  %4911 = vmax.xlane.f32.xlu0 %v4910
  %v4912 = vpop.xlane.xlu0 %4911
  %v4913 = vsel %vm4159, %v4856, -inf
  %v4914 = vmax.f32 %v4855, %v4913
  %4915 = vmax.xlane.f32.xlu0 %v4914
  %v4916 = vpop.xlane.xlu0 %4915
  %v4917 = vsel %vm4159, %v4858, -inf
  %v4918 = vmax.f32 %v4857, %v4917
  %4919 = vmax.xlane.f32.xlu0 %v4918
  %v4920 = vpop.xlane.xlu0 %4919
  %v4921 = vsel %vm4159, %v4860, -inf
  %v4922 = vmax.f32 %v4859, %v4921
  %4923 = vmax.xlane.f32.xlu0 %v4922
  %v4924 = vpop.xlane.xlu0 %4923
  %v4925 = vsub.f32 %v4829, %v4864
  %v4926 = vsub.f32 %v4830, %v4864
  %v4927 = vsub.f32 %v4831, %v4868
  %v4928 = vsub.f32 %v4832, %v4868
  %v4929 = vsub.f32 %v4833, %v4872
  %v4930 = vsub.f32 %v4834, %v4872
  %v4931 = vsub.f32 %v4835, %v4876
  %v4932 = vsub.f32 %v4836, %v4876
  %v4933 = vsub.f32 %v4837, %v4880
  %v4934 = vsub.f32 %v4838, %v4880
  %v4935 = vsub.f32 %v4839, %v4884
  %v4936 = vsub.f32 %v4840, %v4884
  %v4937 = vsub.f32 %v4841, %v4888
  %v4938 = vsub.f32 %v4842, %v4888
  %v4939 = vsub.f32 %v4843, %v4892
  %v4940 = vsub.f32 %v4844, %v4892
  %v4941 = vsub.f32 %v4845, %v4896
  %v4942 = vsub.f32 %v4846, %v4896
  %v4943 = vsub.f32 %v4847, %v4900
  %v4944 = vsub.f32 %v4848, %v4900
  %v4945 = vsub.f32 %v4849, %v4904
  %v4946 = vsub.f32 %v4850, %v4904
  %v4947 = vsub.f32 %v4851, %v4908
  %v4948 = vsub.f32 %v4852, %v4908
  %v4949 = vsub.f32 %v4853, %v4912
  %v4950 = vsub.f32 %v4854, %v4912
  %v4951 = vsub.f32 %v4855, %v4916
  %v4952 = vsub.f32 %v4856, %v4916
  %v4953 = vsub.f32 %v4857, %v4920
  %v4954 = vsub.f32 %v4858, %v4920
  %v4955 = vsub.f32 %v4859, %v4924
  %v4956 = vsub.f32 %v4860, %v4924
  %v4957 = vmul.f32 %v4925, 1.442695
  %v4958 = vpow.pop %v4957
  %v4959 = vmul.f32 %v4926, 1.442695
  %v4960 = vpow.pop %v4959
  %v4961 = vmul.f32 %v4927, 1.442695
  %v4962 = vpow.pop %v4961
  %v4963 = vmul.f32 %v4928, 1.442695
  %v4964 = vpow.pop %v4963
  %v4965 = vmul.f32 %v4929, 1.442695
  %v4966 = vpow.pop %v4965
  %v4967 = vmul.f32 %v4930, 1.442695
  %v4968 = vpow.pop %v4967
  %v4969 = vmul.f32 %v4931, 1.442695
  %v4970 = vpow.pop %v4969
  %v4971 = vmul.f32 %v4932, 1.442695
  %v4972 = vpow.pop %v4971
  %v4973 = vmul.f32 %v4933, 1.442695
  %v4974 = vpow.pop %v4973
  %v4975 = vmul.f32 %v4934, 1.442695
  %v4976 = vpow.pop %v4975
  %v4977 = vmul.f32 %v4935, 1.442695
  %v4978 = vpow.pop %v4977
  %v4979 = vmul.f32 %v4936, 1.442695
  %v4980 = vpow.pop %v4979
  %v4981 = vmul.f32 %v4937, 1.442695
  %v4982 = vpow.pop %v4981
  %v4983 = vmul.f32 %v4938, 1.442695
  %v4984 = vpow.pop %v4983
  %v4985 = vmul.f32 %v4939, 1.442695
  %v4986 = vpow.pop %v4985
  %v4987 = vmul.f32 %v4940, 1.442695
  %v4988 = vpow.pop %v4987
  %v4989 = vmul.f32 %v4941, 1.442695
  %v4990 = vpow.pop %v4989
  %v4991 = vmul.f32 %v4942, 1.442695
  %v4992 = vpow.pop %v4991
  %v4993 = vmul.f32 %v4943, 1.442695
  %v4994 = vpow.pop %v4993
  %v4995 = vmul.f32 %v4944, 1.442695
  %v4996 = vpow.pop %v4995
  %v4997 = vmul.f32 %v4945, 1.442695
  %v4998 = vpow.pop %v4997
  %v4999 = vmul.f32 %v4946, 1.442695
  %v5000 = vpow.pop %v4999
  %v5001 = vmul.f32 %v4947, 1.442695
  %v5002 = vpow.pop %v5001
  %v5003 = vmul.f32 %v4948, 1.442695
  %v5004 = vpow.pop %v5003
  %v5005 = vmul.f32 %v4949, 1.442695
  %v5006 = vpow.pop %v5005
  %v5007 = vmul.f32 %v4950, 1.442695
  %v5008 = vpow.pop %v5007
  %v5009 = vmul.f32 %v4951, 1.442695
  %v5010 = vpow.pop %v5009
  %v5011 = vmul.f32 %v4952, 1.442695
  %v5012 = vpow.pop %v5011
  %v5013 = vmul.f32 %v4953, 1.442695
  %v5014 = vpow.pop %v5013
  %v5015 = vmul.f32 %v4954, 1.442695
  %v5016 = vpow.pop %v5015
  %v5017 = vmul.f32 %v4955, 1.442695
  %v5018 = vpow.pop %v5017
  %v5019 = vmul.f32 %v4956, 1.442695
  %v5020 = vpow.pop %v5019
  %v5021 = vsel %vm4159, %v4960, 0.0
  %v5022 = vadd.f32 %v4958, %v5021
  %5023 = vadd.xlane.f32.xlu0 %v5022
  %v5024 = vpop.xlane.xlu0 %5023
  %v5025 = vsel %vm4159, %v4964, 0.0
  %v5026 = vadd.f32 %v4962, %v5025
  %5027 = vadd.xlane.f32.xlu0 %v5026
  %v5028 = vpop.xlane.xlu0 %5027
  %v5029 = vsel %vm4159, %v4968, 0.0
  %v5030 = vadd.f32 %v4966, %v5029
  %5031 = vadd.xlane.f32.xlu0 %v5030
  %v5032 = vpop.xlane.xlu0 %5031
  %v5033 = vsel %vm4159, %v4972, 0.0
  %v5034 = vadd.f32 %v4970, %v5033
  %5035 = vadd.xlane.f32.xlu0 %v5034
  %v5036 = vpop.xlane.xlu0 %5035
  %v5037 = vsel %vm4159, %v4976, 0.0
  %v5038 = vadd.f32 %v4974, %v5037
  %5039 = vadd.xlane.f32.xlu0 %v5038
  %v5040 = vpop.xlane.xlu0 %5039
  %v5041 = vsel %vm4159, %v4980, 0.0
  %v5042 = vadd.f32 %v4978, %v5041
  %5043 = vadd.xlane.f32.xlu0 %v5042
  %v5044 = vpop.xlane.xlu0 %5043
  %v5045 = vsel %vm4159, %v4984, 0.0
  %v5046 = vadd.f32 %v4982, %v5045
  %5047 = vadd.xlane.f32.xlu0 %v5046
  %v5048 = vpop.xlane.xlu0 %5047
  %v5049 = vsel %vm4159, %v4988, 0.0
  %v5050 = vadd.f32 %v4986, %v5049
  %5051 = vadd.xlane.f32.xlu0 %v5050
  %v5052 = vpop.xlane.xlu0 %5051
  %v5053 = vsel %vm4159, %v4992, 0.0
  %v5054 = vadd.f32 %v4990, %v5053
  %5055 = vadd.xlane.f32.xlu0 %v5054
  %v5056 = vpop.xlane.xlu0 %5055
  %v5057 = vsel %vm4159, %v4996, 0.0
  %v5058 = vadd.f32 %v4994, %v5057
  %5059 = vadd.xlane.f32.xlu0 %v5058
  %v5060 = vpop.xlane.xlu0 %5059
  %v5061 = vsel %vm4159, %v5000, 0.0
  %v5062 = vadd.f32 %v4998, %v5061
  %5063 = vadd.xlane.f32.xlu0 %v5062
  %v5064 = vpop.xlane.xlu0 %5063
  %v5065 = vsel %vm4159, %v5004, 0.0
  %v5066 = vadd.f32 %v5002, %v5065
  %5067 = vadd.xlane.f32.xlu0 %v5066
  %v5068 = vpop.xlane.xlu0 %5067
  %v5069 = vsel %vm4159, %v5008, 0.0
  %v5070 = vadd.f32 %v5006, %v5069
  %5071 = vadd.xlane.f32.xlu0 %v5070
  %v5072 = vpop.xlane.xlu0 %5071
  %v5073 = vsel %vm4159, %v5012, 0.0
  %v5074 = vadd.f32 %v5010, %v5073
  %5075 = vadd.xlane.f32.xlu0 %v5074
  %v5076 = vpop.xlane.xlu0 %5075
  %v5077 = vsel %vm4159, %v5016, 0.0
  %v5078 = vadd.f32 %v5014, %v5077
  %5079 = vadd.xlane.f32.xlu0 %v5078
  %v5080 = vpop.xlane.xlu0 %5079
  %v5081 = vsel %vm4159, %v5020, 0.0
  %v5082 = vadd.f32 %v5018, %v5081
  %5083 = vadd.xlane.f32.xlu0 %v5082
  %v5084 = vpop.xlane.xlu0 %5083
  %v5085 = vrcp.pop %v5024
  %v5086 = vrcp.pop %v5028
  %v5087 = vrcp.pop %v5032
  %v5088 = vrcp.pop %v5036
  %v5089 = vrcp.pop %v5040
  %v5090 = vrcp.pop %v5044
  %v5091 = vrcp.pop %v5048
  %v5092 = vrcp.pop %v5052
  %v5093 = vrcp.pop %v5056
  %v5094 = vrcp.pop %v5060
  %v5095 = vrcp.pop %v5064
  %v5096 = vrcp.pop %v5068
  %v5097 = vrcp.pop %v5072
  %v5098 = vrcp.pop %v5076
  %v5099 = vrcp.pop %v5080
  %v5100 = vrcp.pop %v5084
  %v5101 = vmul.f32 %v4958, %v5085
  %v5102 = vmul.f32 %v4960, %v5085
  %v5103 = vmul.f32 %v4962, %v5086
  %v5104 = vmul.f32 %v4964, %v5086
  %v5105 = vmul.f32 %v4966, %v5087
  %v5106 = vmul.f32 %v4968, %v5087
  %v5107 = vmul.f32 %v4970, %v5088
  %v5108 = vmul.f32 %v4972, %v5088
  %v5109 = vmul.f32 %v4974, %v5089
  %v5110 = vmul.f32 %v4976, %v5089
  %v5111 = vmul.f32 %v4978, %v5090
  %v5112 = vmul.f32 %v4980, %v5090
  %v5113 = vmul.f32 %v4982, %v5091
  %v5114 = vmul.f32 %v4984, %v5091
  %v5115 = vmul.f32 %v4986, %v5092
  %v5116 = vmul.f32 %v4988, %v5092
  %v5117 = vmul.f32 %v4990, %v5093
  %v5118 = vmul.f32 %v4992, %v5093
  %v5119 = vmul.f32 %v4994, %v5094
  %v5120 = vmul.f32 %v4996, %v5094
  %v5121 = vmul.f32 %v4998, %v5095
  %v5122 = vmul.f32 %v5000, %v5095
  %v5123 = vmul.f32 %v5002, %v5096
  %v5124 = vmul.f32 %v5004, %v5096
  %v5125 = vmul.f32 %v5006, %v5097
  %v5126 = vmul.f32 %v5008, %v5097
  %v5127 = vmul.f32 %v5010, %v5098
  %v5128 = vmul.f32 %v5012, %v5098
  %v5129 = vmul.f32 %v5014, %v5099
  %v5130 = vmul.f32 %v5016, %v5099
  %v5131 = vmul.f32 %v5018, %v5100
  %v5132 = vmul.f32 %v5020, %v5100
  %v5133 = vpack.c.bf16 %v5103, %v5101
  %v5134 = vpack.c.bf16 %v5104, %v5102
  %v5135 = vpack.c.bf16 %v5107, %v5105
  %v5136 = vpack.c.bf16 %v5108, %v5106
  %v5137 = vpack.c.bf16 %v5111, %v5109
  %v5138 = vpack.c.bf16 %v5112, %v5110
  %v5139 = vpack.c.bf16 %v5115, %v5113
  %v5140 = vpack.c.bf16 %v5116, %v5114
  %v5141 = vpack.c.bf16 %v5119, %v5117
  %v5142 = vpack.c.bf16 %v5120, %v5118
  %v5143 = vpack.c.bf16 %v5123, %v5121
  %v5144 = vpack.c.bf16 %v5124, %v5122
  %v5145 = vpack.c.bf16 %v5127, %v5125
  %v5146 = vpack.c.bf16 %v5128, %v5126
  %v5147 = vpack.c.bf16 %v5131, %v5129
  %v5148 = vpack.c.bf16 %v5132, %v5130
  %v5150 = vsel %vm4159, %v5134, 0
  %v5153 = vsel %vm4159, %v5136, 0
  %v5156 = vsel %vm4159, %v5138, 0
  %v5159 = vsel %vm4159, %v5140, 0
  %v5162 = vsel %vm4159, %v5142, 0
  %v5165 = vsel %vm4159, %v5144, 0
  %v5168 = vsel %vm4159, %v5146, 0
  %v5171 = vsel %vm4159, %v5148, 0
  %v5174 = vsel %vm4472, %v4628, 0
  %5176 = vmatprep.subr.bf16.mxu0 0
  %5177 = vmatpush1.bf16.msra.mxu0 %v4616
  %5178 = vmatprep.subr.bf16.mxu0 0
  %5179 = vmatpush1.bf16.msra.mxu0 %v4617
  %5180 = vmatprep.subr.bf16.mxu0 0
  %5181 = vmatpush1.bf16.msra.mxu0 %v4618
  %5182 = vmatprep.subr.bf16.mxu0 0
  %5183 = vmatpush1.bf16.msra.mxu0 %v4619
  %5184 = vmatprep.subr.bf16.mxu0 0
  %5185 = vmatpush1.bf16.msra.mxu0 %v4620
  %5186 = vmatprep.subr.bf16.mxu0 0
  %5187 = vmatpush1.bf16.msra.mxu0 %v4621
  %5188 = vmatprep.subr.bf16.mxu0 0
  %5189 = vmatpush1.bf16.msra.mxu0 %v4622
  %5190 = vmatprep.subr.bf16.mxu0 0
  %5191 = vmatpush1.bf16.msra.mxu0 %v4623
  %5192 = vmatprep.subr.bf16.mxu0 0
  %5193 = vmatpush1.bf16.msra.mxu0 %v4624
  %5194 = vmatprep.subr.bf16.mxu0 0
  %5195 = vmatpush1.bf16.msra.mxu0 %v4625
  %5196 = vmatprep.subr.bf16.mxu0 0
  %5197 = vmatpush1.bf16.msra.mxu0 %v4626
  %5198 = vmatprep.subr.bf16.mxu0 0
  %5199 = vmatpush1.bf16.msra.mxu0 %v4627
  %5200 = vmatprep.subr.bf16.mxu0 0
  %5201 = vmatpush1.bf16.msra.mxu0 %v5174
  %5202 = vmatprep.subr.bf16.mxu0 0
  %5203 = vmatpush1.bf16.msra.mxu0 0
  %5204 = vmatprep.subr.bf16.mxu0 0
  %5205 = vmatpush1.bf16.msra.mxu0 0
  %5206 = vmatprep.subr.bf16.mxu0 0
  %5207 = vmatpush1.bf16.msra.mxu0 0
  %5208 = vmatprep.mubr.bf16.mxu0 %v5150
  %5209 = vmatmul.mubr.bf16.gmra.mrb[0].mxu0 %v5133
  %v5210 = vpop.f32.mrb[0].mxu0
  %v5211 = vadd.f32 0.0, %v5210
  %v5212 = vpop.f32.mrb[0].mxu0
  %v5213 = vpop.f32.mrb[0].mxu0
  %v5214 = vadd.f32 0.0, %v5213
  %v5215 = vpop.f32.mrb[0].mxu0
  %5216 = vmatprep.mubr.bf16.mxu0 %v5153
  %5217 = vmatmul.mubr.bf16.gmra.mrb[0].mxu0 %v5135
  %v5218 = vpop.f32.mrb[0].mxu0
  %v5219 = vadd.f32 0.0, %v5218
  %v5220 = vpop.f32.mrb[0].mxu0
  %v5221 = vpop.f32.mrb[0].mxu0
  %v5222 = vadd.f32 0.0, %v5221
  %v5223 = vpop.f32.mrb[0].mxu0
  %5224 = vmatprep.mubr.bf16.mxu0 %v5156
  %5225 = vmatmul.mubr.bf16.gmra.mrb[0].mxu0 %v5137
  %v5226 = vpop.f32.mrb[0].mxu0
  %v5227 = vadd.f32 0.0, %v5226
  %v5228 = vpop.f32.mrb[0].mxu0
  %v5229 = vpop.f32.mrb[0].mxu0
  %v5230 = vadd.f32 0.0, %v5229
  %v5231 = vpop.f32.mrb[0].mxu0
  %5232 = vmatprep.mubr.bf16.mxu0 %v5159
  %5233 = vmatmul.mubr.bf16.gmra.mrb[0].mxu0 %v5139
  %v5234 = vpop.f32.mrb[0].mxu0
  %v5235 = vadd.f32 0.0, %v5234
  %v5236 = vpop.f32.mrb[0].mxu0
  %v5237 = vpop.f32.mrb[0].mxu0
  %v5238 = vadd.f32 0.0, %v5237
  %v5239 = vpop.f32.mrb[0].mxu0
  %5240 = vmatprep.mubr.bf16.mxu0 %v5162
  %5241 = vmatmul.mubr.bf16.gmra.mrb[0].mxu0 %v5141
  %v5242 = vpop.f32.mrb[0].mxu0
  %v5243 = vadd.f32 0.0, %v5242
  %v5244 = vpop.f32.mrb[0].mxu0
  %v5245 = vpop.f32.mrb[0].mxu0
  %v5246 = vadd.f32 0.0, %v5245
  %v5247 = vpop.f32.mrb[0].mxu0
  %5248 = vmatprep.mubr.bf16.mxu0 %v5165
  %5249 = vmatmul.mubr.bf16.gmra.mrb[0].mxu0 %v5143
  %v5250 = vpop.f32.mrb[0].mxu0
  %v5251 = vadd.f32 0.0, %v5250
  %v5252 = vpop.f32.mrb[0].mxu0
  %v5253 = vpop.f32.mrb[0].mxu0
  %v5254 = vadd.f32 0.0, %v5253
  %v5255 = vpop.f32.mrb[0].mxu0
  %5256 = vmatprep.mubr.bf16.mxu0 %v5168
  %5257 = vmatmul.mubr.bf16.gmra.mrb[0].mxu0 %v5145
  %v5258 = vpop.f32.mrb[0].mxu0
  %v5259 = vadd.f32 0.0, %v5258
  %v5260 = vpop.f32.mrb[0].mxu0
  %v5261 = vpop.f32.mrb[0].mxu0
  %v5262 = vadd.f32 0.0, %v5261
  %v5263 = vpop.f32.mrb[0].mxu0
  %5264 = vmatprep.mubr.bf16.mxu0 %v5171
  %5265 = vmatmul.mubr.bf16.gmra.mrb[0].mxu0 %v5147
  %v5266 = vpop.f32.mrb[0].mxu0
  %v5267 = vadd.f32 0.0, %v5266
  %v5268 = vpop.f32.mrb[0].mxu0
  %v5269 = vpop.f32.mrb[0].mxu0
  %v5270 = vadd.f32 0.0, %v5269
  %v5271 = vpop.f32.mrb[0].mxu0
  %5272 = vdwg.mxu0
  %v5273 = vmul.f32 %v5211, %v233
  %v5274 = vmul.f32 %v5214, %v234
  %v5275 = vmul.f32 %v5219, %v235
  %v5276 = vmul.f32 %v5222, %v236
  %v5277 = vmul.f32 %v5227, %v237
  %v5278 = vmul.f32 %v5230, %v238
  %v5279 = vmul.f32 %v5235, %v239
  %v5280 = vmul.f32 %v5238, %v240
  %v5281 = vmul.f32 %v5243, %v241
  %v5282 = vmul.f32 %v5246, %v242
  %v5283 = vmul.f32 %v5251, %v243
  %v5284 = vmul.f32 %v5254, %v244
  %v5285 = vmul.f32 %v5259, %v245
  %v5286 = vmul.f32 %v5262, %v246
  %v5287 = vmul.f32 %v5267, %v247
  %v5288 = vmul.f32 %v5270, %v248
  %v5289 = vadd.f32 %v5273, %v5275
  %v5290 = vadd.f32 %v5274, %v5276
  %v5291 = vadd.f32 %v5289, %v5277
  %v5292 = vadd.f32 %v5290, %v5278
  %v5293 = vadd.f32 %v5291, %v5279
  %v5294 = vadd.f32 %v5292, %v5280
  %v5295 = vadd.f32 %v5293, %v5281
  %v5296 = vadd.f32 %v5294, %v5282
  %v5297 = vadd.f32 %v5295, %v5283
  %v5298 = vadd.f32 %v5296, %v5284
  %v5299 = vadd.f32 %v5297, %v5285
  %v5300 = vadd.f32 %v5298, %v5286
  %v5301 = vadd.f32 %v5299, %v5287
  %v5302 = vadd.f32 %v5300, %v5288
  %v5303 = vpack.c.bf16 %v3253, %v3250
  %v5304 = vpack.c.bf16 %v3261, %v3258
  %v5305 = vpack.c.bf16 %v3269, %v3266
  %v5306 = vpack.c.bf16 %v3277, %v3274
  %v5307 = vpack.c.bf16 %v3285, %v3282
  %v5308 = vpack.c.bf16 %v3293, %v3290
  %v5309 = vpack.c.bf16 %v3301, %v3298
  %v5310 = vpack.c.bf16 %v3309, %v3306
  %v5311 = vpack.c.bf16 %v3317, %v3314
  %v5312 = vpack.c.bf16 %v3325, %v3322
  %v5313 = vpack.c.bf16 %v3333, %v3330
  %v5314 = vpack.c.bf16 %v3341, %v3338
  %v5315 = vpack.c.bf16 %v3346, %v3346
  %v5316 = vpack.c.bf16 %v3706, %v3703
  %v5317 = vpack.c.bf16 %v3714, %v3711
  %v5318 = vpack.c.bf16 %v3722, %v3719
  %v5319 = vpack.c.bf16 %v3730, %v3727
  %v5320 = vpack.c.bf16 %v3738, %v3735
  %v5321 = vpack.c.bf16 %v3746, %v3743
  %v5322 = vpack.c.bf16 %v3754, %v3751
  %v5323 = vpack.c.bf16 %v3762, %v3759
  %v5324 = vpack.c.bf16 %v3770, %v3767
  %v5325 = vpack.c.bf16 %v3778, %v3775
  %v5326 = vpack.c.bf16 %v3786, %v3783
  %v5327 = vpack.c.bf16 %v3794, %v3791
  %v5328 = vpack.c.bf16 %v3799, %v3799
  %v5329 = vmul.f32 %v2831, %v233
  %v5330 = vmul.f32 %v2834, %v234
  %v5331 = vmul.f32 %v2831, %v235
  %v5332 = vmul.f32 %v2834, %v236
  %v5333 = vmul.f32 %v2831, %v237
  %v5334 = vmul.f32 %v2834, %v238
  %v5335 = vmul.f32 %v2831, %v239
  %v5336 = vmul.f32 %v2834, %v240
  %v5337 = vmul.f32 %v2831, %v241
  %v5338 = vmul.f32 %v2834, %v242
  %v5339 = vmul.f32 %v2831, %v243
  %v5340 = vmul.f32 %v2834, %v244
  %v5341 = vmul.f32 %v2831, %v245
  %v5342 = vmul.f32 %v2834, %v246
  %v5343 = vmul.f32 %v2831, %v247
  %v5344 = vmul.f32 %v2834, %v248
  %v5345 = vpack.c.bf16 %v5330, %v5329
  %v5346 = vpack.c.bf16 %v5332, %v5331
  %v5347 = vpack.c.bf16 %v5334, %v5333
  %v5348 = vpack.c.bf16 %v5336, %v5335
  %v5349 = vpack.c.bf16 %v5338, %v5337
  %v5350 = vpack.c.bf16 %v5340, %v5339
  %v5351 = vpack.c.bf16 %v5342, %v5341
  %v5352 = vpack.c.bf16 %v5344, %v5343
  %v5354 = vsel %vm331, %v5345, 0
  %v5357 = vsel %vm331, %v5346, 0
  %v5360 = vsel %vm331, %v5347, 0
  %v5363 = vsel %vm331, %v5348, 0
  %v5366 = vsel %vm331, %v5349, 0
  %v5369 = vsel %vm331, %v5350, 0
  %v5372 = vsel %vm331, %v5351, 0
  %v5375 = vsel %vm331, %v5352, 0
  %v5378 = vsel %vm331, %v5303, 0
  %v5381 = vsel %vm331, %v5304, 0
  %v5384 = vsel %vm331, %v5305, 0
  %v5387 = vsel %vm331, %v5306, 0
  %v5390 = vsel %vm331, %v5307, 0
  %v5393 = vsel %vm331, %v5308, 0
  %v5396 = vsel %vm331, %v5309, 0
  %v5399 = vsel %vm331, %v5310, 0
  %v5402 = vsel %vm331, %v5311, 0
  %v5405 = vsel %vm331, %v5312, 0
  %v5408 = vsel %vm331, %v5313, 0
  %v5411 = vsel %vm331, %v5314, 0
  %v5414 = vsel %vm331, %v5315, 0
  %5416 = vmatprep.subr.bf16.mxu0 0
  %5417 = vmatpush1.bf16.xpose.msra.mxu0 %v5378
  %5418 = vmatprep.subr.bf16.mxu0 0
  %5419 = vmatpush1.bf16.xpose.msra.mxu0 %v5381
  %5420 = vmatprep.subr.bf16.mxu0 0
  %5421 = vmatpush1.bf16.xpose.msra.mxu0 %v5384
  %5422 = vmatprep.subr.bf16.mxu0 0
  %5423 = vmatpush1.bf16.xpose.msra.mxu0 %v5387
  %5424 = vmatprep.subr.bf16.mxu0 0
  %5425 = vmatpush1.bf16.xpose.msra.mxu0 %v5390
  %5426 = vmatprep.subr.bf16.mxu0 0
  %5427 = vmatpush1.bf16.xpose.msra.mxu0 %v5393
  %5428 = vmatprep.subr.bf16.mxu0 0
  %5429 = vmatpush1.bf16.xpose.msra.mxu0 %v5396
  %5430 = vmatprep.subr.bf16.mxu0 0
  %5431 = vmatpush1.bf16.xpose.msra.mxu0 %v5399
  %5432 = vmatprep.subr.bf16.mxu0 0
  %5433 = vmatpush1.bf16.xpose.msra.mxu0 %v5402
  %5434 = vmatprep.subr.bf16.mxu0 0
  %5435 = vmatpush1.bf16.xpose.msra.mxu0 %v5405
  %5436 = vmatprep.subr.bf16.mxu0 0
  %5437 = vmatpush1.bf16.xpose.msra.mxu0 %v5408
  %5438 = vmatprep.subr.bf16.mxu0 0
  %5439 = vmatpush1.bf16.xpose.msra.mxu0 %v5411
  %5440 = vmatprep.subr.bf16.mxu0 0
  %5441 = vmatpush1.bf16.xpose.msra.mxu0 %v5414
  %5442 = vmatprep.subr.bf16.mxu0 0
  %5443 = vmatpush1.bf16.xpose.msra.mxu0 0
  %5444 = vmatprep.subr.bf16.mxu0 0
  %5445 = vmatpush1.bf16.xpose.msra.mxu0 0
  %5446 = vmatprep.subr.bf16.mxu0 0
  %5447 = vmatpush1.bf16.xpose.msra.mxu0 0
  %5448 = vmatprep.mubr.bf16.mxu0 0
  %5449 = vmatmul.mubr.bf16.gmra.mrb[0].mxu0 %v5354
  %v5450 = vpop.f32.mrb[0].mxu0
  %v5451 = vadd.f32 0.0, %v5450
  %v5452 = vpop.f32.mrb[0].mxu0
  %v5453 = vadd.f32 0.0, %v5452
  %v5454 = vpop.f32.mrb[0].mxu0
  %v5455 = vadd.f32 0.0, %v5454
  %v5456 = vpop.f32.mrb[0].mxu0
  %v5457 = vadd.f32 0.0, %v5456
  %5458 = vmatprep.mubr.bf16.mxu0 0
  %5459 = vmatmul.mubr.bf16.gmra.mrb[0].mxu0 %v5357
  %v5460 = vpop.f32.mrb[0].mxu0
  %v5461 = vadd.f32 0.0, %v5460
  %v5462 = vpop.f32.mrb[0].mxu0
  %v5463 = vadd.f32 0.0, %v5462
  %v5464 = vpop.f32.mrb[0].mxu0
  %v5465 = vadd.f32 0.0, %v5464
  %v5466 = vpop.f32.mrb[0].mxu0
  %v5467 = vadd.f32 0.0, %v5466
  %5468 = vmatprep.mubr.bf16.mxu0 0
  %5469 = vmatmul.mubr.bf16.gmra.mrb[0].mxu0 %v5360
  %v5470 = vpop.f32.mrb[0].mxu0
  %v5471 = vadd.f32 0.0, %v5470
  %v5472 = vpop.f32.mrb[0].mxu0
  %v5473 = vadd.f32 0.0, %v5472
  %v5474 = vpop.f32.mrb[0].mxu0
  %v5475 = vadd.f32 0.0, %v5474
  %v5476 = vpop.f32.mrb[0].mxu0
  %v5477 = vadd.f32 0.0, %v5476
  %5478 = vmatprep.mubr.bf16.mxu0 0
  %5479 = vmatmul.mubr.bf16.gmra.mrb[0].mxu0 %v5363
  %v5480 = vpop.f32.mrb[0].mxu0
  %v5481 = vadd.f32 0.0, %v5480
  %v5482 = vpop.f32.mrb[0].mxu0
  %v5483 = vadd.f32 0.0, %v5482
  %v5484 = vpop.f32.mrb[0].mxu0
  %v5485 = vadd.f32 0.0, %v5484
  %v5486 = vpop.f32.mrb[0].mxu0
  %v5487 = vadd.f32 0.0, %v5486
  %5488 = vmatprep.mubr.bf16.mxu0 0
  %5489 = vmatmul.mubr.bf16.gmra.mrb[0].mxu0 %v5366
  %v5490 = vpop.f32.mrb[0].mxu0
  %v5491 = vadd.f32 0.0, %v5490
  %v5492 = vpop.f32.mrb[0].mxu0
  %v5493 = vadd.f32 0.0, %v5492
  %v5494 = vpop.f32.mrb[0].mxu0
  %v5495 = vadd.f32 0.0, %v5494
  %v5496 = vpop.f32.mrb[0].mxu0
  %v5497 = vadd.f32 0.0, %v5496
  %5498 = vmatprep.mubr.bf16.mxu0 0
  %5499 = vmatmul.mubr.bf16.gmra.mrb[0].mxu0 %v5369
  %v5500 = vpop.f32.mrb[0].mxu0
  %v5501 = vadd.f32 0.0, %v5500
  %v5502 = vpop.f32.mrb[0].mxu0
  %v5503 = vadd.f32 0.0, %v5502
  %v5504 = vpop.f32.mrb[0].mxu0
  %v5505 = vadd.f32 0.0, %v5504
  %v5506 = vpop.f32.mrb[0].mxu0
  %v5507 = vadd.f32 0.0, %v5506
  %5508 = vmatprep.mubr.bf16.mxu0 0
  %5509 = vmatmul.mubr.bf16.gmra.mrb[0].mxu0 %v5372
  %v5510 = vpop.f32.mrb[0].mxu0
  %v5511 = vadd.f32 0.0, %v5510
  %v5512 = vpop.f32.mrb[0].mxu0
  %v5513 = vadd.f32 0.0, %v5512
  %v5514 = vpop.f32.mrb[0].mxu0
  %v5515 = vadd.f32 0.0, %v5514
  %v5516 = vpop.f32.mrb[0].mxu0
  %v5517 = vadd.f32 0.0, %v5516
  %5518 = vmatprep.mubr.bf16.mxu0 0
  %5519 = vmatmul.mubr.bf16.gmra.mrb[0].mxu0 %v5375
  %v5520 = vpop.f32.mrb[0].mxu0
  %v5521 = vadd.f32 0.0, %v5520
  %v5522 = vpop.f32.mrb[0].mxu0
  %v5523 = vadd.f32 0.0, %v5522
  %v5524 = vpop.f32.mrb[0].mxu0
  %v5525 = vadd.f32 0.0, %v5524
  %v5526 = vpop.f32.mrb[0].mxu0
  %v5527 = vadd.f32 0.0, %v5526
  %5528 = vdwg.mxu0
  %v5529 = vmul.f32 %v5451, 0.5
  %v5530 = vmul.f32 %v5453, 0.5
  %v5531 = vmul.f32 %v5455, 0.5
  %v5532 = vmul.f32 %v5457, 0.5
  %v5533 = vmul.f32 %v5461, 0.5
  %v5534 = vmul.f32 %v5463, 0.5
  %v5535 = vmul.f32 %v5465, 0.5
  %v5536 = vmul.f32 %v5467, 0.5
  %v5537 = vmul.f32 %v5471, 0.5
  %v5538 = vmul.f32 %v5473, 0.5
  %v5539 = vmul.f32 %v5475, 0.5
  %v5540 = vmul.f32 %v5477, 0.5
  %v5541 = vmul.f32 %v5481, 0.5
  %v5542 = vmul.f32 %v5483, 0.5
  %v5543 = vmul.f32 %v5485, 0.5
  %v5544 = vmul.f32 %v5487, 0.5
  %v5545 = vmul.f32 %v5491, 0.5
  %v5546 = vmul.f32 %v5493, 0.5
  %v5547 = vmul.f32 %v5495, 0.5
  %v5548 = vmul.f32 %v5497, 0.5
  %v5549 = vmul.f32 %v5501, 0.5
  %v5550 = vmul.f32 %v5503, 0.5
  %v5551 = vmul.f32 %v5505, 0.5
  %v5552 = vmul.f32 %v5507, 0.5
  %v5553 = vmul.f32 %v5511, 0.5
  %v5554 = vmul.f32 %v5513, 0.5
  %v5555 = vmul.f32 %v5515, 0.5
  %v5556 = vmul.f32 %v5517, 0.5
  %v5557 = vmul.f32 %v5521, 0.5
  %v5558 = vmul.f32 %v5523, 0.5
  %v5559 = vmul.f32 %v5525, 0.5
  %v5560 = vmul.f32 %v5527, 0.5
  %v5561 = vsel %vm4159, %v5530, -inf
  %v5562 = vmax.f32 %v5529, %v5561
  %5563 = vmax.xlane.f32.xlu0 %v5562
  %v5564 = vpop.xlane.xlu0 %5563
  %v5565 = vsel %vm4159, %v5532, -inf
  %v5566 = vmax.f32 %v5531, %v5565
  %5567 = vmax.xlane.f32.xlu0 %v5566
  %v5568 = vpop.xlane.xlu0 %5567
  %v5569 = vsel %vm4159, %v5534, -inf
  %v5570 = vmax.f32 %v5533, %v5569
  %5571 = vmax.xlane.f32.xlu0 %v5570
  %v5572 = vpop.xlane.xlu0 %5571
  %v5573 = vsel %vm4159, %v5536, -inf
  %v5574 = vmax.f32 %v5535, %v5573
  %5575 = vmax.xlane.f32.xlu0 %v5574
  %v5576 = vpop.xlane.xlu0 %5575
  %v5577 = vsel %vm4159, %v5538, -inf
  %v5578 = vmax.f32 %v5537, %v5577
  %5579 = vmax.xlane.f32.xlu0 %v5578
  %v5580 = vpop.xlane.xlu0 %5579
  %v5581 = vsel %vm4159, %v5540, -inf
  %v5582 = vmax.f32 %v5539, %v5581
  %5583 = vmax.xlane.f32.xlu0 %v5582
  %v5584 = vpop.xlane.xlu0 %5583
  %v5585 = vsel %vm4159, %v5542, -inf
  %v5586 = vmax.f32 %v5541, %v5585
  %5587 = vmax.xlane.f32.xlu0 %v5586
  %v5588 = vpop.xlane.xlu0 %5587
  %v5589 = vsel %vm4159, %v5544, -inf
  %v5590 = vmax.f32 %v5543, %v5589
  %5591 = vmax.xlane.f32.xlu0 %v5590
  %v5592 = vpop.xlane.xlu0 %5591
  %v5593 = vsel %vm4159, %v5546, -inf
  %v5594 = vmax.f32 %v5545, %v5593
  %5595 = vmax.xlane.f32.xlu0 %v5594
  %v5596 = vpop.xlane.xlu0 %5595
  %v5597 = vsel %vm4159, %v5548, -inf
  %v5598 = vmax.f32 %v5547, %v5597
  %5599 = vmax.xlane.f32.xlu0 %v5598
  %v5600 = vpop.xlane.xlu0 %5599
  %v5601 = vsel %vm4159, %v5550, -inf
  %v5602 = vmax.f32 %v5549, %v5601
  %5603 = vmax.xlane.f32.xlu0 %v5602
  %v5604 = vpop.xlane.xlu0 %5603
  %v5605 = vsel %vm4159, %v5552, -inf
  %v5606 = vmax.f32 %v5551, %v5605
  %5607 = vmax.xlane.f32.xlu0 %v5606
  %v5608 = vpop.xlane.xlu0 %5607
  %v5609 = vsel %vm4159, %v5554, -inf
  %v5610 = vmax.f32 %v5553, %v5609
  %5611 = vmax.xlane.f32.xlu0 %v5610
  %v5612 = vpop.xlane.xlu0 %5611
  %v5613 = vsel %vm4159, %v5556, -inf
  %v5614 = vmax.f32 %v5555, %v5613
  %5615 = vmax.xlane.f32.xlu0 %v5614
  %v5616 = vpop.xlane.xlu0 %5615
  %v5617 = vsel %vm4159, %v5558, -inf
  %v5618 = vmax.f32 %v5557, %v5617
  %5619 = vmax.xlane.f32.xlu0 %v5618
  %v5620 = vpop.xlane.xlu0 %5619
  %v5621 = vsel %vm4159, %v5560, -inf
  %v5622 = vmax.f32 %v5559, %v5621
  %5623 = vmax.xlane.f32.xlu0 %v5622
  %v5624 = vpop.xlane.xlu0 %5623
  %v5625 = vsub.f32 %v5529, %v5564
  %v5626 = vsub.f32 %v5530, %v5564
  %v5627 = vsub.f32 %v5531, %v5568
  %v5628 = vsub.f32 %v5532, %v5568
  %v5629 = vsub.f32 %v5533, %v5572
  %v5630 = vsub.f32 %v5534, %v5572
  %v5631 = vsub.f32 %v5535, %v5576
  %v5632 = vsub.f32 %v5536, %v5576
  %v5633 = vsub.f32 %v5537, %v5580
  %v5634 = vsub.f32 %v5538, %v5580
  %v5635 = vsub.f32 %v5539, %v5584
  %v5636 = vsub.f32 %v5540, %v5584
  %v5637 = vsub.f32 %v5541, %v5588
  %v5638 = vsub.f32 %v5542, %v5588
  %v5639 = vsub.f32 %v5543, %v5592
  %v5640 = vsub.f32 %v5544, %v5592
  %v5641 = vsub.f32 %v5545, %v5596
  %v5642 = vsub.f32 %v5546, %v5596
  %v5643 = vsub.f32 %v5547, %v5600
  %v5644 = vsub.f32 %v5548, %v5600
  %v5645 = vsub.f32 %v5549, %v5604
  %v5646 = vsub.f32 %v5550, %v5604
  %v5647 = vsub.f32 %v5551, %v5608
  %v5648 = vsub.f32 %v5552, %v5608
  %v5649 = vsub.f32 %v5553, %v5612
  %v5650 = vsub.f32 %v5554, %v5612
  %v5651 = vsub.f32 %v5555, %v5616
  %v5652 = vsub.f32 %v5556, %v5616
  %v5653 = vsub.f32 %v5557, %v5620
  %v5654 = vsub.f32 %v5558, %v5620
  %v5655 = vsub.f32 %v5559, %v5624
  %v5656 = vsub.f32 %v5560, %v5624
  %v5657 = vmul.f32 %v5625, 1.442695
  %v5658 = vpow.pop %v5657
  %v5659 = vmul.f32 %v5626, 1.442695
  %v5660 = vpow.pop %v5659
  %v5661 = vmul.f32 %v5627, 1.442695
  %v5662 = vpow.pop %v5661
  %v5663 = vmul.f32 %v5628, 1.442695
  %v5664 = vpow.pop %v5663
  %v5665 = vmul.f32 %v5629, 1.442695
  %v5666 = vpow.pop %v5665
  %v5667 = vmul.f32 %v5630, 1.442695
  %v5668 = vpow.pop %v5667
  %v5669 = vmul.f32 %v5631, 1.442695
  %v5670 = vpow.pop %v5669
  %v5671 = vmul.f32 %v5632, 1.442695
  %v5672 = vpow.pop %v5671
  %v5673 = vmul.f32 %v5633, 1.442695
  %v5674 = vpow.pop %v5673
  %v5675 = vmul.f32 %v5634, 1.442695
  %v5676 = vpow.pop %v5675
  %v5677 = vmul.f32 %v5635, 1.442695
  %v5678 = vpow.pop %v5677
  %v5679 = vmul.f32 %v5636, 1.442695
  %v5680 = vpow.pop %v5679
  %v5681 = vmul.f32 %v5637, 1.442695
  %v5682 = vpow.pop %v5681
  %v5683 = vmul.f32 %v5638, 1.442695
  %v5684 = vpow.pop %v5683
  %v5685 = vmul.f32 %v5639, 1.442695
  %v5686 = vpow.pop %v5685
  %v5687 = vmul.f32 %v5640, 1.442695
  %v5688 = vpow.pop %v5687
  %v5689 = vmul.f32 %v5641, 1.442695
  %v5690 = vpow.pop %v5689
  %v5691 = vmul.f32 %v5642, 1.442695
  %v5692 = vpow.pop %v5691
  %v5693 = vmul.f32 %v5643, 1.442695
  %v5694 = vpow.pop %v5693
  %v5695 = vmul.f32 %v5644, 1.442695
  %v5696 = vpow.pop %v5695
  %v5697 = vmul.f32 %v5645, 1.442695
  %v5698 = vpow.pop %v5697
  %v5699 = vmul.f32 %v5646, 1.442695
  %v5700 = vpow.pop %v5699
  %v5701 = vmul.f32 %v5647, 1.442695
  %v5702 = vpow.pop %v5701
  %v5703 = vmul.f32 %v5648, 1.442695
  %v5704 = vpow.pop %v5703
  %v5705 = vmul.f32 %v5649, 1.442695
  %v5706 = vpow.pop %v5705
  %v5707 = vmul.f32 %v5650, 1.442695
  %v5708 = vpow.pop %v5707
  %v5709 = vmul.f32 %v5651, 1.442695
  %v5710 = vpow.pop %v5709
  %v5711 = vmul.f32 %v5652, 1.442695
  %v5712 = vpow.pop %v5711
  %v5713 = vmul.f32 %v5653, 1.442695
  %v5714 = vpow.pop %v5713
  %v5715 = vmul.f32 %v5654, 1.442695
  %v5716 = vpow.pop %v5715
  %v5717 = vmul.f32 %v5655, 1.442695
  %v5718 = vpow.pop %v5717
  %v5719 = vmul.f32 %v5656, 1.442695
  %v5720 = vpow.pop %v5719
  %v5721 = vsel %vm4159, %v5660, 0.0
  %v5722 = vadd.f32 %v5658, %v5721
  %5723 = vadd.xlane.f32.xlu0 %v5722
  %v5724 = vpop.xlane.xlu0 %5723
  %v5725 = vsel %vm4159, %v5664, 0.0
  %v5726 = vadd.f32 %v5662, %v5725
  %5727 = vadd.xlane.f32.xlu0 %v5726
  %v5728 = vpop.xlane.xlu0 %5727
  %v5729 = vsel %vm4159, %v5668, 0.0
  %v5730 = vadd.f32 %v5666, %v5729
  %5731 = vadd.xlane.f32.xlu0 %v5730
  %v5732 = vpop.xlane.xlu0 %5731
  %v5733 = vsel %vm4159, %v5672, 0.0
  %v5734 = vadd.f32 %v5670, %v5733
  %5735 = vadd.xlane.f32.xlu0 %v5734
  %v5736 = vpop.xlane.xlu0 %5735
  %v5737 = vsel %vm4159, %v5676, 0.0
  %v5738 = vadd.f32 %v5674, %v5737
  %5739 = vadd.xlane.f32.xlu0 %v5738
  %v5740 = vpop.xlane.xlu0 %5739
  %v5741 = vsel %vm4159, %v5680, 0.0
  %v5742 = vadd.f32 %v5678, %v5741
  %5743 = vadd.xlane.f32.xlu0 %v5742
  %v5744 = vpop.xlane.xlu0 %5743
  %v5745 = vsel %vm4159, %v5684, 0.0
  %v5746 = vadd.f32 %v5682, %v5745
  %5747 = vadd.xlane.f32.xlu0 %v5746
  %v5748 = vpop.xlane.xlu0 %5747
  %v5749 = vsel %vm4159, %v5688, 0.0
  %v5750 = vadd.f32 %v5686, %v5749
  %5751 = vadd.xlane.f32.xlu0 %v5750
  %v5752 = vpop.xlane.xlu0 %5751
  %v5753 = vsel %vm4159, %v5692, 0.0
  %v5754 = vadd.f32 %v5690, %v5753
  %5755 = vadd.xlane.f32.xlu0 %v5754
  %v5756 = vpop.xlane.xlu0 %5755
  %v5757 = vsel %vm4159, %v5696, 0.0
  %v5758 = vadd.f32 %v5694, %v5757
  %5759 = vadd.xlane.f32.xlu0 %v5758
  %v5760 = vpop.xlane.xlu0 %5759
  %v5761 = vsel %vm4159, %v5700, 0.0
  %v5762 = vadd.f32 %v5698, %v5761
  %5763 = vadd.xlane.f32.xlu0 %v5762
  %v5764 = vpop.xlane.xlu0 %5763
  %v5765 = vsel %vm4159, %v5704, 0.0
  %v5766 = vadd.f32 %v5702, %v5765
  %5767 = vadd.xlane.f32.xlu0 %v5766
  %v5768 = vpop.xlane.xlu0 %5767
  %v5769 = vsel %vm4159, %v5708, 0.0
  %v5770 = vadd.f32 %v5706, %v5769
  %5771 = vadd.xlane.f32.xlu0 %v5770
  %v5772 = vpop.xlane.xlu0 %5771
  %v5773 = vsel %vm4159, %v5712, 0.0
  %v5774 = vadd.f32 %v5710, %v5773
  %5775 = vadd.xlane.f32.xlu0 %v5774
  %v5776 = vpop.xlane.xlu0 %5775
  %v5777 = vsel %vm4159, %v5716, 0.0
  %v5778 = vadd.f32 %v5714, %v5777
  %5779 = vadd.xlane.f32.xlu0 %v5778
  %v5780 = vpop.xlane.xlu0 %5779
  %v5781 = vsel %vm4159, %v5720, 0.0
  %v5782 = vadd.f32 %v5718, %v5781
  %5783 = vadd.xlane.f32.xlu0 %v5782
  %v5784 = vpop.xlane.xlu0 %5783
  %v5785 = vrcp.pop %v5724
  %v5786 = vrcp.pop %v5728
  %v5787 = vrcp.pop %v5732
  %v5788 = vrcp.pop %v5736
  %v5789 = vrcp.pop %v5740
  %v5790 = vrcp.pop %v5744
  %v5791 = vrcp.pop %v5748
  %v5792 = vrcp.pop %v5752
  %v5793 = vrcp.pop %v5756
  %v5794 = vrcp.pop %v5760
  %v5795 = vrcp.pop %v5764
  %v5796 = vrcp.pop %v5768
  %v5797 = vrcp.pop %v5772
  %v5798 = vrcp.pop %v5776
  %v5799 = vrcp.pop %v5780
  %v5800 = vrcp.pop %v5784
  %v5801 = vmul.f32 %v5658, %v5785
  %v5802 = vmul.f32 %v5660, %v5785
  %v5803 = vmul.f32 %v5662, %v5786
  %v5804 = vmul.f32 %v5664, %v5786
  %v5805 = vmul.f32 %v5666, %v5787
  %v5806 = vmul.f32 %v5668, %v5787
  %v5807 = vmul.f32 %v5670, %v5788
  %v5808 = vmul.f32 %v5672, %v5788
  %v5809 = vmul.f32 %v5674, %v5789
  %v5810 = vmul.f32 %v5676, %v5789
  %v5811 = vmul.f32 %v5678, %v5790
  %v5812 = vmul.f32 %v5680, %v5790
  %v5813 = vmul.f32 %v5682, %v5791
  %v5814 = vmul.f32 %v5684, %v5791
  %v5815 = vmul.f32 %v5686, %v5792
  %v5816 = vmul.f32 %v5688, %v5792
  %v5817 = vmul.f32 %v5690, %v5793
  %v5818 = vmul.f32 %v5692, %v5793
  %v5819 = vmul.f32 %v5694, %v5794
  %v5820 = vmul.f32 %v5696, %v5794
  %v5821 = vmul.f32 %v5698, %v5795
  %v5822 = vmul.f32 %v5700, %v5795
  %v5823 = vmul.f32 %v5702, %v5796
  %v5824 = vmul.f32 %v5704, %v5796
  %v5825 = vmul.f32 %v5706, %v5797
  %v5826 = vmul.f32 %v5708, %v5797
  %v5827 = vmul.f32 %v5710, %v5798
  %v5828 = vmul.f32 %v5712, %v5798
  %v5829 = vmul.f32 %v5714, %v5799
  %v5830 = vmul.f32 %v5716, %v5799
  %v5831 = vmul.f32 %v5718, %v5800
  %v5832 = vmul.f32 %v5720, %v5800
  %v5833 = vpack.c.bf16 %v5803, %v5801
  %v5834 = vpack.c.bf16 %v5804, %v5802
  %v5835 = vpack.c.bf16 %v5807, %v5805
  %v5836 = vpack.c.bf16 %v5808, %v5806
  %v5837 = vpack.c.bf16 %v5811, %v5809
  %v5838 = vpack.c.bf16 %v5812, %v5810
  %v5839 = vpack.c.bf16 %v5815, %v5813
  %v5840 = vpack.c.bf16 %v5816, %v5814
  %v5841 = vpack.c.bf16 %v5819, %v5817
  %v5842 = vpack.c.bf16 %v5820, %v5818
  %v5843 = vpack.c.bf16 %v5823, %v5821
  %v5844 = vpack.c.bf16 %v5824, %v5822
  %v5845 = vpack.c.bf16 %v5827, %v5825
  %v5846 = vpack.c.bf16 %v5828, %v5826
  %v5847 = vpack.c.bf16 %v5831, %v5829
  %v5848 = vpack.c.bf16 %v5832, %v5830
  %v5850 = vsel %vm4159, %v5834, 0
  %v5853 = vsel %vm4159, %v5836, 0
  %v5856 = vsel %vm4159, %v5838, 0
  %v5859 = vsel %vm4159, %v5840, 0
  %v5862 = vsel %vm4159, %v5842, 0
  %v5865 = vsel %vm4159, %v5844, 0
  %v5868 = vsel %vm4159, %v5846, 0
  %v5871 = vsel %vm4159, %v5848, 0
  %v5874 = vsel %vm4472, %v5328, 0
  %5876 = vmatprep.subr.bf16.mxu0 0
  %5877 = vmatpush1.bf16.msra.mxu0 %v5316
  %5878 = vmatprep.subr.bf16.mxu0 0
  %5879 = vmatpush1.bf16.msra.mxu0 %v5317
  %5880 = vmatprep.subr.bf16.mxu0 0
  %5881 = vmatpush1.bf16.msra.mxu0 %v5318
  %5882 = vmatprep.subr.bf16.mxu0 0
  %5883 = vmatpush1.bf16.msra.mxu0 %v5319
  %5884 = vmatprep.subr.bf16.mxu0 0
  %5885 = vmatpush1.bf16.msra.mxu0 %v5320
  %5886 = vmatprep.subr.bf16.mxu0 0
  %5887 = vmatpush1.bf16.msra.mxu0 %v5321
  %5888 = vmatprep.subr.bf16.mxu0 0
  %5889 = vmatpush1.bf16.msra.mxu0 %v5322
  %5890 = vmatprep.subr.bf16.mxu0 0
  %5891 = vmatpush1.bf16.msra.mxu0 %v5323
  %5892 = vmatprep.subr.bf16.mxu0 0
  %5893 = vmatpush1.bf16.msra.mxu0 %v5324
  %5894 = vmatprep.subr.bf16.mxu0 0
  %5895 = vmatpush1.bf16.msra.mxu0 %v5325
  %5896 = vmatprep.subr.bf16.mxu0 0
  %5897 = vmatpush1.bf16.msra.mxu0 %v5326
  %5898 = vmatprep.subr.bf16.mxu0 0
  %5899 = vmatpush1.bf16.msra.mxu0 %v5327
  %5900 = vmatprep.subr.bf16.mxu0 0
  %5901 = vmatpush1.bf16.msra.mxu0 %v5874
  %5902 = vmatprep.subr.bf16.mxu0 0
  %5903 = vmatpush1.bf16.msra.mxu0 0
  %5904 = vmatprep.subr.bf16.mxu0 0
  %5905 = vmatpush1.bf16.msra.mxu0 0
  %5906 = vmatprep.subr.bf16.mxu0 0
  %5907 = vmatpush1.bf16.msra.mxu0 0
  %5908 = vmatprep.mubr.bf16.mxu0 %v5850
  %5909 = vmatmul.mubr.bf16.gmra.mrb[0].mxu0 %v5833
  %v5910 = vpop.f32.mrb[0].mxu0
  %v5911 = vadd.f32 0.0, %v5910
  %v5912 = vpop.f32.mrb[0].mxu0
  %v5913 = vpop.f32.mrb[0].mxu0
  %v5914 = vadd.f32 0.0, %v5913
  %v5915 = vpop.f32.mrb[0].mxu0
  %5916 = vmatprep.mubr.bf16.mxu0 %v5853
  %5917 = vmatmul.mubr.bf16.gmra.mrb[0].mxu0 %v5835
  %v5918 = vpop.f32.mrb[0].mxu0
  %v5919 = vadd.f32 0.0, %v5918
  %v5920 = vpop.f32.mrb[0].mxu0
  %v5921 = vpop.f32.mrb[0].mxu0
  %v5922 = vadd.f32 0.0, %v5921
  %v5923 = vpop.f32.mrb[0].mxu0
  %5924 = vmatprep.mubr.bf16.mxu0 %v5856
  %5925 = vmatmul.mubr.bf16.gmra.mrb[0].mxu0 %v5837
  %v5926 = vpop.f32.mrb[0].mxu0
  %v5927 = vadd.f32 0.0, %v5926
  %v5928 = vpop.f32.mrb[0].mxu0
  %v5929 = vpop.f32.mrb[0].mxu0
  %v5930 = vadd.f32 0.0, %v5929
  %v5931 = vpop.f32.mrb[0].mxu0
  %5932 = vmatprep.mubr.bf16.mxu0 %v5859
  %5933 = vmatmul.mubr.bf16.gmra.mrb[0].mxu0 %v5839
  %v5934 = vpop.f32.mrb[0].mxu0
  %v5935 = vadd.f32 0.0, %v5934
  %v5936 = vpop.f32.mrb[0].mxu0
  %v5937 = vpop.f32.mrb[0].mxu0
  %v5938 = vadd.f32 0.0, %v5937
  %v5939 = vpop.f32.mrb[0].mxu0
  %5940 = vmatprep.mubr.bf16.mxu0 %v5862
  %5941 = vmatmul.mubr.bf16.gmra.mrb[0].mxu0 %v5841
  %v5942 = vpop.f32.mrb[0].mxu0
  %v5943 = vadd.f32 0.0, %v5942
  %v5944 = vpop.f32.mrb[0].mxu0
  %v5945 = vpop.f32.mrb[0].mxu0
  %v5946 = vadd.f32 0.0, %v5945
  %v5947 = vpop.f32.mrb[0].mxu0
  %5948 = vmatprep.mubr.bf16.mxu0 %v5865
  %5949 = vmatmul.mubr.bf16.gmra.mrb[0].mxu0 %v5843
  %v5950 = vpop.f32.mrb[0].mxu0
  %v5951 = vadd.f32 0.0, %v5950
  %v5952 = vpop.f32.mrb[0].mxu0
  %v5953 = vpop.f32.mrb[0].mxu0
  %v5954 = vadd.f32 0.0, %v5953
  %v5955 = vpop.f32.mrb[0].mxu0
  %5956 = vmatprep.mubr.bf16.mxu0 %v5868
  %5957 = vmatmul.mubr.bf16.gmra.mrb[0].mxu0 %v5845
  %v5958 = vpop.f32.mrb[0].mxu0
  %v5959 = vadd.f32 0.0, %v5958
  %v5960 = vpop.f32.mrb[0].mxu0
  %v5961 = vpop.f32.mrb[0].mxu0
  %v5962 = vadd.f32 0.0, %v5961
  %v5963 = vpop.f32.mrb[0].mxu0
  %5964 = vmatprep.mubr.bf16.mxu0 %v5871
  %5965 = vmatmul.mubr.bf16.gmra.mrb[0].mxu0 %v5847
  %v5966 = vpop.f32.mrb[0].mxu0
  %v5967 = vadd.f32 0.0, %v5966
  %v5968 = vpop.f32.mrb[0].mxu0
  %v5969 = vpop.f32.mrb[0].mxu0
  %v5970 = vadd.f32 0.0, %v5969
  %v5971 = vpop.f32.mrb[0].mxu0
  %5972 = vdwg.mxu0
  %v5973 = vmul.f32 %v5911, %v233
  %v5974 = vmul.f32 %v5914, %v234
  %v5975 = vmul.f32 %v5919, %v235
  %v5976 = vmul.f32 %v5922, %v236
  %v5977 = vmul.f32 %v5927, %v237
  %v5978 = vmul.f32 %v5930, %v238
  %v5979 = vmul.f32 %v5935, %v239
  %v5980 = vmul.f32 %v5938, %v240
  %v5981 = vmul.f32 %v5943, %v241
  %v5982 = vmul.f32 %v5946, %v242
  %v5983 = vmul.f32 %v5951, %v243
  %v5984 = vmul.f32 %v5954, %v244
  %v5985 = vmul.f32 %v5959, %v245
  %v5986 = vmul.f32 %v5962, %v246
  %v5987 = vmul.f32 %v5967, %v247
  %v5988 = vmul.f32 %v5970, %v248
  %v5989 = vadd.f32 %v5973, %v5975
  %v5990 = vadd.f32 %v5974, %v5976
  %v5991 = vadd.f32 %v5989, %v5977
  %v5992 = vadd.f32 %v5990, %v5978
  %v5993 = vadd.f32 %v5991, %v5979
  %v5994 = vadd.f32 %v5992, %v5980
  %v5995 = vadd.f32 %v5993, %v5981
  %v5996 = vadd.f32 %v5994, %v5982
  %v5997 = vadd.f32 %v5995, %v5983
  %v5998 = vadd.f32 %v5996, %v5984
  %v5999 = vadd.f32 %v5997, %v5985
  %v6000 = vadd.f32 %v5998, %v5986
  %v6001 = vadd.f32 %v5999, %v5987
  %v6002 = vadd.f32 %v6000, %v5988
  %v6003 = vpack.c.bf16 %v3354, %v3349
  %v6004 = vpack.c.bf16 %v3362, %v3357
  %v6005 = vpack.c.bf16 %v3370, %v3365
  %v6006 = vpack.c.bf16 %v3378, %v3373
  %v6007 = vpack.c.bf16 %v3386, %v3381
  %v6008 = vpack.c.bf16 %v3394, %v3389
  %v6009 = vpack.c.bf16 %v3402, %v3397
  %v6010 = vpack.c.bf16 %v3410, %v3405
  %v6011 = vpack.c.bf16 %v3418, %v3413
  %v6012 = vpack.c.bf16 %v3426, %v3421
  %v6013 = vpack.c.bf16 %v3434, %v3429
  %v6014 = vpack.c.bf16 %v3442, %v3437
  %v6015 = vpack.c.bf16 %v3445, %v3445
  %v6016 = vpack.c.bf16 %v3807, %v3802
  %v6017 = vpack.c.bf16 %v3815, %v3810
  %v6018 = vpack.c.bf16 %v3823, %v3818
  %v6019 = vpack.c.bf16 %v3831, %v3826
  %v6020 = vpack.c.bf16 %v3839, %v3834
  %v6021 = vpack.c.bf16 %v3847, %v3842
  %v6022 = vpack.c.bf16 %v3855, %v3850
  %v6023 = vpack.c.bf16 %v3863, %v3858
  %v6024 = vpack.c.bf16 %v3871, %v3866
  %v6025 = vpack.c.bf16 %v3879, %v3874
  %v6026 = vpack.c.bf16 %v3887, %v3882
  %v6027 = vpack.c.bf16 %v3895, %v3890
  %v6028 = vpack.c.bf16 %v3898, %v3898
  %v6029 = vmul.f32 %v2839, %v233
  %v6030 = vmul.f32 %v2842, %v234
  %v6031 = vmul.f32 %v2839, %v235
  %v6032 = vmul.f32 %v2842, %v236
  %v6033 = vmul.f32 %v2839, %v237
  %v6034 = vmul.f32 %v2842, %v238
  %v6035 = vmul.f32 %v2839, %v239
  %v6036 = vmul.f32 %v2842, %v240
  %v6037 = vmul.f32 %v2839, %v241
  %v6038 = vmul.f32 %v2842, %v242
  %v6039 = vmul.f32 %v2839, %v243
  %v6040 = vmul.f32 %v2842, %v244
  %v6041 = vmul.f32 %v2839, %v245
  %v6042 = vmul.f32 %v2842, %v246
  %v6043 = vmul.f32 %v2839, %v247
  %v6044 = vmul.f32 %v2842, %v248
  %v6045 = vpack.c.bf16 %v6030, %v6029
  %v6046 = vpack.c.bf16 %v6032, %v6031
  %v6047 = vpack.c.bf16 %v6034, %v6033
  %v6048 = vpack.c.bf16 %v6036, %v6035
  %v6049 = vpack.c.bf16 %v6038, %v6037
  %v6050 = vpack.c.bf16 %v6040, %v6039
  %v6051 = vpack.c.bf16 %v6042, %v6041
  %v6052 = vpack.c.bf16 %v6044, %v6043
  %v6054 = vsel %vm331, %v6045, 0
  %v6057 = vsel %vm331, %v6046, 0
  %v6060 = vsel %vm331, %v6047, 0
  %v6063 = vsel %vm331, %v6048, 0
  %v6066 = vsel %vm331, %v6049, 0
  %v6069 = vsel %vm331, %v6050, 0
  %v6072 = vsel %vm331, %v6051, 0
  %v6075 = vsel %vm331, %v6052, 0
  %v6078 = vsel %vm331, %v6003, 0
  %v6081 = vsel %vm331, %v6004, 0
  %v6084 = vsel %vm331, %v6005, 0
  %v6087 = vsel %vm331, %v6006, 0
  %v6090 = vsel %vm331, %v6007, 0
  %v6093 = vsel %vm331, %v6008, 0
  %v6096 = vsel %vm331, %v6009, 0
  %v6099 = vsel %vm331, %v6010, 0
  %v6102 = vsel %vm331, %v6011, 0
  %v6105 = vsel %vm331, %v6012, 0
  %v6108 = vsel %vm331, %v6013, 0
  %v6111 = vsel %vm331, %v6014, 0
  %v6114 = vsel %vm331, %v6015, 0
  %6116 = vmatprep.subr.bf16.mxu0 0
  %6117 = vmatpush1.bf16.xpose.msra.mxu0 %v6078
  %6118 = vmatprep.subr.bf16.mxu0 0
  %6119 = vmatpush1.bf16.xpose.msra.mxu0 %v6081
  %6120 = vmatprep.subr.bf16.mxu0 0
  %6121 = vmatpush1.bf16.xpose.msra.mxu0 %v6084
  %6122 = vmatprep.subr.bf16.mxu0 0
  %6123 = vmatpush1.bf16.xpose.msra.mxu0 %v6087
  %6124 = vmatprep.subr.bf16.mxu0 0
  %6125 = vmatpush1.bf16.xpose.msra.mxu0 %v6090
  %6126 = vmatprep.subr.bf16.mxu0 0
  %6127 = vmatpush1.bf16.xpose.msra.mxu0 %v6093
  %6128 = vmatprep.subr.bf16.mxu0 0
  %6129 = vmatpush1.bf16.xpose.msra.mxu0 %v6096
  %6130 = vmatprep.subr.bf16.mxu0 0
  %6131 = vmatpush1.bf16.xpose.msra.mxu0 %v6099
  %6132 = vmatprep.subr.bf16.mxu0 0
  %6133 = vmatpush1.bf16.xpose.msra.mxu0 %v6102
  %6134 = vmatprep.subr.bf16.mxu0 0
  %6135 = vmatpush1.bf16.xpose.msra.mxu0 %v6105
  %6136 = vmatprep.subr.bf16.mxu0 0
  %6137 = vmatpush1.bf16.xpose.msra.mxu0 %v6108
  %6138 = vmatprep.subr.bf16.mxu0 0
  %6139 = vmatpush1.bf16.xpose.msra.mxu0 %v6111
  %6140 = vmatprep.subr.bf16.mxu0 0
  %6141 = vmatpush1.bf16.xpose.msra.mxu0 %v6114
  %6142 = vmatprep.subr.bf16.mxu0 0
  %6143 = vmatpush1.bf16.xpose.msra.mxu0 0
  %6144 = vmatprep.subr.bf16.mxu0 0
  %6145 = vmatpush1.bf16.xpose.msra.mxu0 0
  %6146 = vmatprep.subr.bf16.mxu0 0
  %6147 = vmatpush1.bf16.xpose.msra.mxu0 0
  %6148 = vmatprep.mubr.bf16.mxu0 0
  %6149 = vmatmul.mubr.bf16.gmra.mrb[0].mxu0 %v6054
  %v6150 = vpop.f32.mrb[0].mxu0
  %v6151 = vadd.f32 0.0, %v6150
  %v6152 = vpop.f32.mrb[0].mxu0
  %v6153 = vadd.f32 0.0, %v6152
  %v6154 = vpop.f32.mrb[0].mxu0
  %v6155 = vadd.f32 0.0, %v6154
  %v6156 = vpop.f32.mrb[0].mxu0
  %v6157 = vadd.f32 0.0, %v6156
  %6158 = vmatprep.mubr.bf16.mxu0 0
  %6159 = vmatmul.mubr.bf16.gmra.mrb[0].mxu0 %v6057
  %v6160 = vpop.f32.mrb[0].mxu0
  %v6161 = vadd.f32 0.0, %v6160
  %v6162 = vpop.f32.mrb[0].mxu0
  %v6163 = vadd.f32 0.0, %v6162
  %v6164 = vpop.f32.mrb[0].mxu0
  %v6165 = vadd.f32 0.0, %v6164
  %v6166 = vpop.f32.mrb[0].mxu0
  %v6167 = vadd.f32 0.0, %v6166
  %6168 = vmatprep.mubr.bf16.mxu0 0
  %6169 = vmatmul.mubr.bf16.gmra.mrb[0].mxu0 %v6060
  %v6170 = vpop.f32.mrb[0].mxu0
  %v6171 = vadd.f32 0.0, %v6170
  %v6172 = vpop.f32.mrb[0].mxu0
  %v6173 = vadd.f32 0.0, %v6172
  %v6174 = vpop.f32.mrb[0].mxu0
  %v6175 = vadd.f32 0.0, %v6174
  %v6176 = vpop.f32.mrb[0].mxu0
  %v6177 = vadd.f32 0.0, %v6176
  %6178 = vmatprep.mubr.bf16.mxu0 0
  %6179 = vmatmul.mubr.bf16.gmra.mrb[0].mxu0 %v6063
  %v6180 = vpop.f32.mrb[0].mxu0
  %v6181 = vadd.f32 0.0, %v6180
  %v6182 = vpop.f32.mrb[0].mxu0
  %v6183 = vadd.f32 0.0, %v6182
  %v6184 = vpop.f32.mrb[0].mxu0
  %v6185 = vadd.f32 0.0, %v6184
  %v6186 = vpop.f32.mrb[0].mxu0
  %v6187 = vadd.f32 0.0, %v6186
  %6188 = vmatprep.mubr.bf16.mxu0 0
  %6189 = vmatmul.mubr.bf16.gmra.mrb[0].mxu0 %v6066
  %v6190 = vpop.f32.mrb[0].mxu0
  %v6191 = vadd.f32 0.0, %v6190
  %v6192 = vpop.f32.mrb[0].mxu0
  %v6193 = vadd.f32 0.0, %v6192
  %v6194 = vpop.f32.mrb[0].mxu0
  %v6195 = vadd.f32 0.0, %v6194
  %v6196 = vpop.f32.mrb[0].mxu0
  %v6197 = vadd.f32 0.0, %v6196
  %6198 = vmatprep.mubr.bf16.mxu0 0
  %6199 = vmatmul.mubr.bf16.gmra.mrb[0].mxu0 %v6069
  %v6200 = vpop.f32.mrb[0].mxu0
  %v6201 = vadd.f32 0.0, %v6200
  %v6202 = vpop.f32.mrb[0].mxu0
  %v6203 = vadd.f32 0.0, %v6202
  %v6204 = vpop.f32.mrb[0].mxu0
  %v6205 = vadd.f32 0.0, %v6204
  %v6206 = vpop.f32.mrb[0].mxu0
  %v6207 = vadd.f32 0.0, %v6206
  %6208 = vmatprep.mubr.bf16.mxu0 0
  %6209 = vmatmul.mubr.bf16.gmra.mrb[0].mxu0 %v6072
  %v6210 = vpop.f32.mrb[0].mxu0
  %v6211 = vadd.f32 0.0, %v6210
  %v6212 = vpop.f32.mrb[0].mxu0
  %v6213 = vadd.f32 0.0, %v6212
  %v6214 = vpop.f32.mrb[0].mxu0
  %v6215 = vadd.f32 0.0, %v6214
  %v6216 = vpop.f32.mrb[0].mxu0
  %v6217 = vadd.f32 0.0, %v6216
  %6218 = vmatprep.mubr.bf16.mxu0 0
  %6219 = vmatmul.mubr.bf16.gmra.mrb[0].mxu0 %v6075
  %v6220 = vpop.f32.mrb[0].mxu0
  %v6221 = vadd.f32 0.0, %v6220
  %v6222 = vpop.f32.mrb[0].mxu0
  %v6223 = vadd.f32 0.0, %v6222
  %v6224 = vpop.f32.mrb[0].mxu0
  %v6225 = vadd.f32 0.0, %v6224
  %v6226 = vpop.f32.mrb[0].mxu0
  %v6227 = vadd.f32 0.0, %v6226
  %6228 = vdwg.mxu0
  %v6229 = vmul.f32 %v6151, 0.5
  %v6230 = vmul.f32 %v6153, 0.5
  %v6231 = vmul.f32 %v6155, 0.5
  %v6232 = vmul.f32 %v6157, 0.5
  %v6233 = vmul.f32 %v6161, 0.5
  %v6234 = vmul.f32 %v6163, 0.5
  %v6235 = vmul.f32 %v6165, 0.5
  %v6236 = vmul.f32 %v6167, 0.5
  %v6237 = vmul.f32 %v6171, 0.5
  %v6238 = vmul.f32 %v6173, 0.5
  %v6239 = vmul.f32 %v6175, 0.5
  %v6240 = vmul.f32 %v6177, 0.5
  %v6241 = vmul.f32 %v6181, 0.5
  %v6242 = vmul.f32 %v6183, 0.5
  %v6243 = vmul.f32 %v6185, 0.5
  %v6244 = vmul.f32 %v6187, 0.5
  %v6245 = vmul.f32 %v6191, 0.5
  %v6246 = vmul.f32 %v6193, 0.5
  %v6247 = vmul.f32 %v6195, 0.5
  %v6248 = vmul.f32 %v6197, 0.5
  %v6249 = vmul.f32 %v6201, 0.5
  %v6250 = vmul.f32 %v6203, 0.5
  %v6251 = vmul.f32 %v6205, 0.5
  %v6252 = vmul.f32 %v6207, 0.5
  %v6253 = vmul.f32 %v6211, 0.5
  %v6254 = vmul.f32 %v6213, 0.5
  %v6255 = vmul.f32 %v6215, 0.5
  %v6256 = vmul.f32 %v6217, 0.5
  %v6257 = vmul.f32 %v6221, 0.5
  %v6258 = vmul.f32 %v6223, 0.5
  %v6259 = vmul.f32 %v6225, 0.5
  %v6260 = vmul.f32 %v6227, 0.5
  %v6261 = vsel %vm4159, %v6230, -inf
  %v6262 = vmax.f32 %v6229, %v6261
  %6263 = vmax.xlane.f32.xlu0 %v6262
  %v6264 = vpop.xlane.xlu0 %6263
  %v6265 = vsel %vm4159, %v6232, -inf
  %v6266 = vmax.f32 %v6231, %v6265
  %6267 = vmax.xlane.f32.xlu0 %v6266
  %v6268 = vpop.xlane.xlu0 %6267
  %v6269 = vsel %vm4159, %v6234, -inf
  %v6270 = vmax.f32 %v6233, %v6269
  %6271 = vmax.xlane.f32.xlu0 %v6270
  %v6272 = vpop.xlane.xlu0 %6271
  %v6273 = vsel %vm4159, %v6236, -inf
  %v6274 = vmax.f32 %v6235, %v6273
  %6275 = vmax.xlane.f32.xlu0 %v6274
  %v6276 = vpop.xlane.xlu0 %6275
  %v6277 = vsel %vm4159, %v6238, -inf
  %v6278 = vmax.f32 %v6237, %v6277
  %6279 = vmax.xlane.f32.xlu0 %v6278
  %v6280 = vpop.xlane.xlu0 %6279
  %v6281 = vsel %vm4159, %v6240, -inf
  %v6282 = vmax.f32 %v6239, %v6281
  %6283 = vmax.xlane.f32.xlu0 %v6282
  %v6284 = vpop.xlane.xlu0 %6283
  %v6285 = vsel %vm4159, %v6242, -inf
  %v6286 = vmax.f32 %v6241, %v6285
  %6287 = vmax.xlane.f32.xlu0 %v6286
  %v6288 = vpop.xlane.xlu0 %6287
  %v6289 = vsel %vm4159, %v6244, -inf
  %v6290 = vmax.f32 %v6243, %v6289
  %6291 = vmax.xlane.f32.xlu0 %v6290
  %v6292 = vpop.xlane.xlu0 %6291
  %v6293 = vsel %vm4159, %v6246, -inf
  %v6294 = vmax.f32 %v6245, %v6293
  %6295 = vmax.xlane.f32.xlu0 %v6294
  %v6296 = vpop.xlane.xlu0 %6295
  %v6297 = vsel %vm4159, %v6248, -inf
  %v6298 = vmax.f32 %v6247, %v6297
  %6299 = vmax.xlane.f32.xlu0 %v6298
  %v6300 = vpop.xlane.xlu0 %6299
  %v6301 = vsel %vm4159, %v6250, -inf
  %v6302 = vmax.f32 %v6249, %v6301
  %6303 = vmax.xlane.f32.xlu0 %v6302
  %v6304 = vpop.xlane.xlu0 %6303
  %v6305 = vsel %vm4159, %v6252, -inf
  %v6306 = vmax.f32 %v6251, %v6305
  %6307 = vmax.xlane.f32.xlu0 %v6306
  %v6308 = vpop.xlane.xlu0 %6307
  %v6309 = vsel %vm4159, %v6254, -inf
  %v6310 = vmax.f32 %v6253, %v6309
  %6311 = vmax.xlane.f32.xlu0 %v6310
  %v6312 = vpop.xlane.xlu0 %6311
  %v6313 = vsel %vm4159, %v6256, -inf
  %v6314 = vmax.f32 %v6255, %v6313
  %6315 = vmax.xlane.f32.xlu0 %v6314
  %v6316 = vpop.xlane.xlu0 %6315
  %v6317 = vsel %vm4159, %v6258, -inf
  %v6318 = vmax.f32 %v6257, %v6317
  %6319 = vmax.xlane.f32.xlu0 %v6318
  %v6320 = vpop.xlane.xlu0 %6319
  %v6321 = vsel %vm4159, %v6260, -inf
  %v6322 = vmax.f32 %v6259, %v6321
  %6323 = vmax.xlane.f32.xlu0 %v6322
  %v6324 = vpop.xlane.xlu0 %6323
  %v6325 = vsub.f32 %v6229, %v6264
  %v6326 = vsub.f32 %v6230, %v6264
  %v6327 = vsub.f32 %v6231, %v6268
  %v6328 = vsub.f32 %v6232, %v6268
  %v6329 = vsub.f32 %v6233, %v6272
  %v6330 = vsub.f32 %v6234, %v6272
  %v6331 = vsub.f32 %v6235, %v6276
  %v6332 = vsub.f32 %v6236, %v6276
  %v6333 = vsub.f32 %v6237, %v6280
  %v6334 = vsub.f32 %v6238, %v6280
  %v6335 = vsub.f32 %v6239, %v6284
  %v6336 = vsub.f32 %v6240, %v6284
  %v6337 = vsub.f32 %v6241, %v6288
  %v6338 = vsub.f32 %v6242, %v6288
  %v6339 = vsub.f32 %v6243, %v6292
  %v6340 = vsub.f32 %v6244, %v6292
  %v6341 = vsub.f32 %v6245, %v6296
  %v6342 = vsub.f32 %v6246, %v6296
  %v6343 = vsub.f32 %v6247, %v6300
  %v6344 = vsub.f32 %v6248, %v6300
  %v6345 = vsub.f32 %v6249, %v6304
  %v6346 = vsub.f32 %v6250, %v6304
  %v6347 = vsub.f32 %v6251, %v6308
  %v6348 = vsub.f32 %v6252, %v6308
  %v6349 = vsub.f32 %v6253, %v6312
  %v6350 = vsub.f32 %v6254, %v6312
  %v6351 = vsub.f32 %v6255, %v6316
  %v6352 = vsub.f32 %v6256, %v6316
  %v6353 = vsub.f32 %v6257, %v6320
  %v6354 = vsub.f32 %v6258, %v6320
  %v6355 = vsub.f32 %v6259, %v6324
  %v6356 = vsub.f32 %v6260, %v6324
  %v6357 = vmul.f32 %v6325, 1.442695
  %v6358 = vpow.pop %v6357
  %v6359 = vmul.f32 %v6326, 1.442695
  %v6360 = vpow.pop %v6359
  %v6361 = vmul.f32 %v6327, 1.442695
  %v6362 = vpow.pop %v6361
  %v6363 = vmul.f32 %v6328, 1.442695
  %v6364 = vpow.pop %v6363
  %v6365 = vmul.f32 %v6329, 1.442695
  %v6366 = vpow.pop %v6365
  %v6367 = vmul.f32 %v6330, 1.442695
  %v6368 = vpow.pop %v6367
  %v6369 = vmul.f32 %v6331, 1.442695
  %v6370 = vpow.pop %v6369
  %v6371 = vmul.f32 %v6332, 1.442695
  %v6372 = vpow.pop %v6371
  %v6373 = vmul.f32 %v6333, 1.442695
  %v6374 = vpow.pop %v6373
  %v6375 = vmul.f32 %v6334, 1.442695
  %v6376 = vpow.pop %v6375
  %v6377 = vmul.f32 %v6335, 1.442695
  %v6378 = vpow.pop %v6377
  %v6379 = vmul.f32 %v6336, 1.442695
  %v6380 = vpow.pop %v6379
  %v6381 = vmul.f32 %v6337, 1.442695
  %v6382 = vpow.pop %v6381
  %v6383 = vmul.f32 %v6338, 1.442695
  %v6384 = vpow.pop %v6383
  %v6385 = vmul.f32 %v6339, 1.442695
  %v6386 = vpow.pop %v6385
  %v6387 = vmul.f32 %v6340, 1.442695
  %v6388 = vpow.pop %v6387
  %v6389 = vmul.f32 %v6341, 1.442695
  %v6390 = vpow.pop %v6389
  %v6391 = vmul.f32 %v6342, 1.442695
  %v6392 = vpow.pop %v6391
  %v6393 = vmul.f32 %v6343, 1.442695
  %v6394 = vpow.pop %v6393
  %v6395 = vmul.f32 %v6344, 1.442695
  %v6396 = vpow.pop %v6395
  %v6397 = vmul.f32 %v6345, 1.442695
  %v6398 = vpow.pop %v6397
  %v6399 = vmul.f32 %v6346, 1.442695
  %v6400 = vpow.pop %v6399
  %v6401 = vmul.f32 %v6347, 1.442695
  %v6402 = vpow.pop %v6401
  %v6403 = vmul.f32 %v6348, 1.442695
  %v6404 = vpow.pop %v6403
  %v6405 = vmul.f32 %v6349, 1.442695
  %v6406 = vpow.pop %v6405
  %v6407 = vmul.f32 %v6350, 1.442695
  %v6408 = vpow.pop %v6407
  %v6409 = vmul.f32 %v6351, 1.442695
  %v6410 = vpow.pop %v6409
  %v6411 = vmul.f32 %v6352, 1.442695
  %v6412 = vpow.pop %v6411
  %v6413 = vmul.f32 %v6353, 1.442695
  %v6414 = vpow.pop %v6413
  %v6415 = vmul.f32 %v6354, 1.442695
  %v6416 = vpow.pop %v6415
  %v6417 = vmul.f32 %v6355, 1.442695
  %v6418 = vpow.pop %v6417
  %v6419 = vmul.f32 %v6356, 1.442695
  %v6420 = vpow.pop %v6419
  %v6421 = vsel %vm4159, %v6360, 0.0
  %v6422 = vadd.f32 %v6358, %v6421
  %6423 = vadd.xlane.f32.xlu0 %v6422
  %v6424 = vpop.xlane.xlu0 %6423
  %v6425 = vsel %vm4159, %v6364, 0.0
  %v6426 = vadd.f32 %v6362, %v6425
  %6427 = vadd.xlane.f32.xlu0 %v6426
  %v6428 = vpop.xlane.xlu0 %6427
  %v6429 = vsel %vm4159, %v6368, 0.0
  %v6430 = vadd.f32 %v6366, %v6429
  %6431 = vadd.xlane.f32.xlu0 %v6430
  %v6432 = vpop.xlane.xlu0 %6431
  %v6433 = vsel %vm4159, %v6372, 0.0
  %v6434 = vadd.f32 %v6370, %v6433
  %6435 = vadd.xlane.f32.xlu0 %v6434
  %v6436 = vpop.xlane.xlu0 %6435
  %v6437 = vsel %vm4159, %v6376, 0.0
  %v6438 = vadd.f32 %v6374, %v6437
  %6439 = vadd.xlane.f32.xlu0 %v6438
  %v6440 = vpop.xlane.xlu0 %6439
  %v6441 = vsel %vm4159, %v6380, 0.0
  %v6442 = vadd.f32 %v6378, %v6441
  %6443 = vadd.xlane.f32.xlu0 %v6442
  %v6444 = vpop.xlane.xlu0 %6443
  %v6445 = vsel %vm4159, %v6384, 0.0
  %v6446 = vadd.f32 %v6382, %v6445
  %6447 = vadd.xlane.f32.xlu0 %v6446
  %v6448 = vpop.xlane.xlu0 %6447
  %v6449 = vsel %vm4159, %v6388, 0.0
  %v6450 = vadd.f32 %v6386, %v6449
  %6451 = vadd.xlane.f32.xlu0 %v6450
  %v6452 = vpop.xlane.xlu0 %6451
  %v6453 = vsel %vm4159, %v6392, 0.0
  %v6454 = vadd.f32 %v6390, %v6453
  %6455 = vadd.xlane.f32.xlu0 %v6454
  %v6456 = vpop.xlane.xlu0 %6455
  %v6457 = vsel %vm4159, %v6396, 0.0
  %v6458 = vadd.f32 %v6394, %v6457
  %6459 = vadd.xlane.f32.xlu0 %v6458
  %v6460 = vpop.xlane.xlu0 %6459
  %v6461 = vsel %vm4159, %v6400, 0.0
  %v6462 = vadd.f32 %v6398, %v6461
  %6463 = vadd.xlane.f32.xlu0 %v6462
  %v6464 = vpop.xlane.xlu0 %6463
  %v6465 = vsel %vm4159, %v6404, 0.0
  %v6466 = vadd.f32 %v6402, %v6465
  %6467 = vadd.xlane.f32.xlu0 %v6466
  %v6468 = vpop.xlane.xlu0 %6467
  %v6469 = vsel %vm4159, %v6408, 0.0
  %v6470 = vadd.f32 %v6406, %v6469
  %6471 = vadd.xlane.f32.xlu0 %v6470
  %v6472 = vpop.xlane.xlu0 %6471
  %v6473 = vsel %vm4159, %v6412, 0.0
  %v6474 = vadd.f32 %v6410, %v6473
  %6475 = vadd.xlane.f32.xlu0 %v6474
  %v6476 = vpop.xlane.xlu0 %6475
  %v6477 = vsel %vm4159, %v6416, 0.0
  %v6478 = vadd.f32 %v6414, %v6477
  %6479 = vadd.xlane.f32.xlu0 %v6478
  %v6480 = vpop.xlane.xlu0 %6479
  %v6481 = vsel %vm4159, %v6420, 0.0
  %v6482 = vadd.f32 %v6418, %v6481
  %6483 = vadd.xlane.f32.xlu0 %v6482
  %v6484 = vpop.xlane.xlu0 %6483
  %v6485 = vrcp.pop %v6424
  %v6486 = vrcp.pop %v6428
  %v6487 = vrcp.pop %v6432
  %v6488 = vrcp.pop %v6436
  %v6489 = vrcp.pop %v6440
  %v6490 = vrcp.pop %v6444
  %v6491 = vrcp.pop %v6448
  %v6492 = vrcp.pop %v6452
  %v6493 = vrcp.pop %v6456
  %v6494 = vrcp.pop %v6460
  %v6495 = vrcp.pop %v6464
  %v6496 = vrcp.pop %v6468
  %v6497 = vrcp.pop %v6472
  %v6498 = vrcp.pop %v6476
  %v6499 = vrcp.pop %v6480
  %v6500 = vrcp.pop %v6484
  %v6501 = vmul.f32 %v6358, %v6485
  %v6502 = vmul.f32 %v6360, %v6485
  %v6503 = vmul.f32 %v6362, %v6486
  %v6504 = vmul.f32 %v6364, %v6486
  %v6505 = vmul.f32 %v6366, %v6487
  %v6506 = vmul.f32 %v6368, %v6487
  %v6507 = vmul.f32 %v6370, %v6488
  %v6508 = vmul.f32 %v6372, %v6488
  %v6509 = vmul.f32 %v6374, %v6489
  %v6510 = vmul.f32 %v6376, %v6489
  %v6511 = vmul.f32 %v6378, %v6490
  %v6512 = vmul.f32 %v6380, %v6490
  %v6513 = vmul.f32 %v6382, %v6491
  %v6514 = vmul.f32 %v6384, %v6491
  %v6515 = vmul.f32 %v6386, %v6492
  %v6516 = vmul.f32 %v6388, %v6492
  %v6517 = vmul.f32 %v6390, %v6493
  %v6518 = vmul.f32 %v6392, %v6493
  %v6519 = vmul.f32 %v6394, %v6494
  %v6520 = vmul.f32 %v6396, %v6494
  %v6521 = vmul.f32 %v6398, %v6495
  %v6522 = vmul.f32 %v6400, %v6495
  %v6523 = vmul.f32 %v6402, %v6496
  %v6524 = vmul.f32 %v6404, %v6496
  %v6525 = vmul.f32 %v6406, %v6497
  %v6526 = vmul.f32 %v6408, %v6497
  %v6527 = vmul.f32 %v6410, %v6498
  %v6528 = vmul.f32 %v6412, %v6498
  %v6529 = vmul.f32 %v6414, %v6499
  %v6530 = vmul.f32 %v6416, %v6499
  %v6531 = vmul.f32 %v6418, %v6500
  %v6532 = vmul.f32 %v6420, %v6500
  %v6533 = vpack.c.bf16 %v6503, %v6501
  %v6534 = vpack.c.bf16 %v6504, %v6502
  %v6535 = vpack.c.bf16 %v6507, %v6505
  %v6536 = vpack.c.bf16 %v6508, %v6506
  %v6537 = vpack.c.bf16 %v6511, %v6509
  %v6538 = vpack.c.bf16 %v6512, %v6510
  %v6539 = vpack.c.bf16 %v6515, %v6513
  %v6540 = vpack.c.bf16 %v6516, %v6514
  %v6541 = vpack.c.bf16 %v6519, %v6517
  %v6542 = vpack.c.bf16 %v6520, %v6518
  %v6543 = vpack.c.bf16 %v6523, %v6521
  %v6544 = vpack.c.bf16 %v6524, %v6522
  %v6545 = vpack.c.bf16 %v6527, %v6525
  %v6546 = vpack.c.bf16 %v6528, %v6526
  %v6547 = vpack.c.bf16 %v6531, %v6529
  %v6548 = vpack.c.bf16 %v6532, %v6530
  %v6550 = vsel %vm4159, %v6534, 0
  %v6553 = vsel %vm4159, %v6536, 0
  %v6556 = vsel %vm4159, %v6538, 0
  %v6559 = vsel %vm4159, %v6540, 0
  %v6562 = vsel %vm4159, %v6542, 0
  %v6565 = vsel %vm4159, %v6544, 0
  %v6568 = vsel %vm4159, %v6546, 0
  %v6571 = vsel %vm4159, %v6548, 0
  %v6574 = vsel %vm4472, %v6028, 0
  %6576 = vmatprep.subr.bf16.mxu0 0
  %6577 = vmatpush1.bf16.msra.mxu0 %v6016
  %6578 = vmatprep.subr.bf16.mxu0 0
  %6579 = vmatpush1.bf16.msra.mxu0 %v6017
  %6580 = vmatprep.subr.bf16.mxu0 0
  %6581 = vmatpush1.bf16.msra.mxu0 %v6018
  %6582 = vmatprep.subr.bf16.mxu0 0
  %6583 = vmatpush1.bf16.msra.mxu0 %v6019
  %6584 = vmatprep.subr.bf16.mxu0 0
  %6585 = vmatpush1.bf16.msra.mxu0 %v6020
  %6586 = vmatprep.subr.bf16.mxu0 0
  %6587 = vmatpush1.bf16.msra.mxu0 %v6021
  %6588 = vmatprep.subr.bf16.mxu0 0
  %6589 = vmatpush1.bf16.msra.mxu0 %v6022
  %6590 = vmatprep.subr.bf16.mxu0 0
  %6591 = vmatpush1.bf16.msra.mxu0 %v6023
  %6592 = vmatprep.subr.bf16.mxu0 0
  %6593 = vmatpush1.bf16.msra.mxu0 %v6024
  %6594 = vmatprep.subr.bf16.mxu0 0
  %6595 = vmatpush1.bf16.msra.mxu0 %v6025
  %6596 = vmatprep.subr.bf16.mxu0 0
  %6597 = vmatpush1.bf16.msra.mxu0 %v6026
  %6598 = vmatprep.subr.bf16.mxu0 0
  %6599 = vmatpush1.bf16.msra.mxu0 %v6027
  %6600 = vmatprep.subr.bf16.mxu0 0
  %6601 = vmatpush1.bf16.msra.mxu0 %v6574
  %6602 = vmatprep.subr.bf16.mxu0 0
  %6603 = vmatpush1.bf16.msra.mxu0 0
  %6604 = vmatprep.subr.bf16.mxu0 0
  %6605 = vmatpush1.bf16.msra.mxu0 0
  %6606 = vmatprep.subr.bf16.mxu0 0
  %6607 = vmatpush1.bf16.msra.mxu0 0
  %6608 = vmatprep.mubr.bf16.mxu0 %v6550
  %6609 = vmatmul.mubr.bf16.gmra.mrb[0].mxu0 %v6533
  %v6610 = vpop.f32.mrb[0].mxu0
  %v6611 = vadd.f32 0.0, %v6610
  %v6612 = vpop.f32.mrb[0].mxu0
  %v6613 = vpop.f32.mrb[0].mxu0
  %v6614 = vadd.f32 0.0, %v6613
  %v6615 = vpop.f32.mrb[0].mxu0
  %6616 = vmatprep.mubr.bf16.mxu0 %v6553
  %6617 = vmatmul.mubr.bf16.gmra.mrb[0].mxu0 %v6535
  %v6618 = vpop.f32.mrb[0].mxu0
  %v6619 = vadd.f32 0.0, %v6618
  %v6620 = vpop.f32.mrb[0].mxu0
  %v6621 = vpop.f32.mrb[0].mxu0
  %v6622 = vadd.f32 0.0, %v6621
  %v6623 = vpop.f32.mrb[0].mxu0
  %6624 = vmatprep.mubr.bf16.mxu0 %v6556
  %6625 = vmatmul.mubr.bf16.gmra.mrb[0].mxu0 %v6537
  %v6626 = vpop.f32.mrb[0].mxu0
  %v6627 = vadd.f32 0.0, %v6626
  %v6628 = vpop.f32.mrb[0].mxu0
  %v6629 = vpop.f32.mrb[0].mxu0
  %v6630 = vadd.f32 0.0, %v6629
  %v6631 = vpop.f32.mrb[0].mxu0
  %6632 = vmatprep.mubr.bf16.mxu0 %v6559
  %6633 = vmatmul.mubr.bf16.gmra.mrb[0].mxu0 %v6539
  %v6634 = vpop.f32.mrb[0].mxu0
  %v6635 = vadd.f32 0.0, %v6634
  %v6636 = vpop.f32.mrb[0].mxu0
  %v6637 = vpop.f32.mrb[0].mxu0
  %v6638 = vadd.f32 0.0, %v6637
  %v6639 = vpop.f32.mrb[0].mxu0
  %6640 = vmatprep.mubr.bf16.mxu0 %v6562
  %6641 = vmatmul.mubr.bf16.gmra.mrb[0].mxu0 %v6541
  %v6642 = vpop.f32.mrb[0].mxu0
  %v6643 = vadd.f32 0.0, %v6642
  %v6644 = vpop.f32.mrb[0].mxu0
  %v6645 = vpop.f32.mrb[0].mxu0
  %v6646 = vadd.f32 0.0, %v6645
  %v6647 = vpop.f32.mrb[0].mxu0
  %6648 = vmatprep.mubr.bf16.mxu0 %v6565
  %6649 = vmatmul.mubr.bf16.gmra.mrb[0].mxu0 %v6543
  %v6650 = vpop.f32.mrb[0].mxu0
  %v6651 = vadd.f32 0.0, %v6650
  %v6652 = vpop.f32.mrb[0].mxu0
  %v6653 = vpop.f32.mrb[0].mxu0
  %v6654 = vadd.f32 0.0, %v6653
  %v6655 = vpop.f32.mrb[0].mxu0
  %6656 = vmatprep.mubr.bf16.mxu0 %v6568
  %6657 = vmatmul.mubr.bf16.gmra.mrb[0].mxu0 %v6545
  %v6658 = vpop.f32.mrb[0].mxu0
  %v6659 = vadd.f32 0.0, %v6658
  %v6660 = vpop.f32.mrb[0].mxu0
  %v6661 = vpop.f32.mrb[0].mxu0
  %v6662 = vadd.f32 0.0, %v6661
  %v6663 = vpop.f32.mrb[0].mxu0
  %6664 = vmatprep.mubr.bf16.mxu0 %v6571
  %6665 = vmatmul.mubr.bf16.gmra.mrb[0].mxu0 %v6547
  %v6666 = vpop.f32.mrb[0].mxu0
  %v6667 = vadd.f32 0.0, %v6666
  %v6668 = vpop.f32.mrb[0].mxu0
  %v6669 = vpop.f32.mrb[0].mxu0
  %v6670 = vadd.f32 0.0, %v6669
  %v6671 = vpop.f32.mrb[0].mxu0
  %6672 = vdwg.mxu0
  %v6673 = vmul.f32 %v6611, %v233
  %v6674 = vmul.f32 %v6614, %v234
  %v6675 = vmul.f32 %v6619, %v235
  %v6676 = vmul.f32 %v6622, %v236
  %v6677 = vmul.f32 %v6627, %v237
  %v6678 = vmul.f32 %v6630, %v238
  %v6679 = vmul.f32 %v6635, %v239
  %v6680 = vmul.f32 %v6638, %v240
  %v6681 = vmul.f32 %v6643, %v241
  %v6682 = vmul.f32 %v6646, %v242
  %v6683 = vmul.f32 %v6651, %v243
  %v6684 = vmul.f32 %v6654, %v244
  %v6685 = vmul.f32 %v6659, %v245
  %v6686 = vmul.f32 %v6662, %v246
  %v6687 = vmul.f32 %v6667, %v247
  %v6688 = vmul.f32 %v6670, %v248
  %v6689 = vadd.f32 %v6673, %v6675
  %v6690 = vadd.f32 %v6674, %v6676
  %v6691 = vadd.f32 %v6689, %v6677
  %v6692 = vadd.f32 %v6690, %v6678
  %v6693 = vadd.f32 %v6691, %v6679
  %v6694 = vadd.f32 %v6692, %v6680
  %v6695 = vadd.f32 %v6693, %v6681
  %v6696 = vadd.f32 %v6694, %v6682
  %v6697 = vadd.f32 %v6695, %v6683
  %v6698 = vadd.f32 %v6696, %v6684
  %v6699 = vadd.f32 %v6697, %v6685
  %v6700 = vadd.f32 %v6698, %v6686
  %v6701 = vadd.f32 %v6699, %v6687
  %v6702 = vadd.f32 %v6700, %v6688
  %v6703 = vpack.c.bf16 %v4602, %v4601
  %v6704 = vpack.c.bf16 %v5302, %v5301
  %v6705 = vpack.c.bf16 %v6002, %v6001
  %v6706 = vpack.c.bf16 %v6702, %v6701
  %v6707 = vlaneseq
  %v6708 = vshrl.u32 %v6707, 7
  %v6709 = vsub.s32 1, %v6708
  %v6710 = vrot.slane %v168, %v6709
  %v6715 = vunpack.c.l.b16 %v163
  %v6716 = vunpack.c.l.b16 %v164
  %v6717 = vunpack.c.l.b16 %v165
  %v6718 = vunpack.c.l.b16 %v166
  %v6719 = vpack.c.b16 %v6716, %v6715
  %v6720 = vpack.c.b16 %v6718, %v6717
  %v6722 = vsel %vm331, %v6703, 0
  %v6725 = vsel %vm331, %v6704, 0
  %v6728 = vsel %vm331, %v6705, 0
  %v6731 = vsel %vm331, %v6706, 0
  %v6734 = vsel %vm331, %v6719, 0
  %v6737 = vsel %vm331, %v6720, 0
  %6739 = vmatprep.subr.bf16.mxu0 0
  %6740 = vmatpush1.bf16.xpose.msra.mxu0 %v6734
  %6741 = vmatprep.subr.bf16.mxu0 0
  %6742 = vmatpush1.bf16.xpose.msra.mxu0 %v6737
  %6743 = vmatprep.subr.bf16.mxu0 0
  %6744 = vmatpush1.bf16.xpose.msra.mxu0 0
  %6745 = vmatprep.subr.bf16.mxu0 0
  %6746 = vmatpush1.bf16.xpose.msra.mxu0 0
  %6747 = vmatprep.subr.bf16.mxu0 0
  %6748 = vmatpush1.bf16.xpose.msra.mxu0 0
  %6749 = vmatprep.subr.bf16.mxu0 0
  %6750 = vmatpush1.bf16.xpose.msra.mxu0 0
  %6751 = vmatprep.subr.bf16.mxu0 0
  %6752 = vmatpush1.bf16.xpose.msra.mxu0 0
  %6753 = vmatprep.subr.bf16.mxu0 0
  %6754 = vmatpush1.bf16.xpose.msra.mxu0 0
  %6755 = vmatprep.subr.bf16.mxu0 0
  %6756 = vmatpush1.bf16.xpose.msra.mxu0 0
  %6757 = vmatprep.subr.bf16.mxu0 0
  %6758 = vmatpush1.bf16.xpose.msra.mxu0 0
  %6759 = vmatprep.subr.bf16.mxu0 0
  %6760 = vmatpush1.bf16.xpose.msra.mxu0 0
  %6761 = vmatprep.subr.bf16.mxu0 0
  %6762 = vmatpush1.bf16.xpose.msra.mxu0 0
  %6763 = vmatprep.subr.bf16.mxu0 0
  %6764 = vmatpush1.bf16.xpose.msra.mxu0 0
  %6765 = vmatprep.subr.bf16.mxu0 0
  %6766 = vmatpush1.bf16.xpose.msra.mxu0 0
  %6767 = vmatprep.subr.bf16.mxu0 0
  %6768 = vmatpush1.bf16.xpose.msra.mxu0 0
  %6769 = vmatprep.subr.bf16.mxu0 0
  %6770 = vmatpush1.bf16.xpose.msra.mxu0 0
  %6771 = vmatprep.mubr.bf16.mxu0 0
  %6772 = vmatmul.mubr.bf16.gmra.mrb[0].mxu0 %v6722
  %v6773 = vpop.f32.mrb[0].mxu0
  %v6774 = vadd.f32 %v6710, %v6773
  %v6775 = vpop.f32.mrb[0].mxu0
  %v6776 = vpop.f32.mrb[0].mxu0
  %v6777 = vadd.f32 %v6710, %v6776
  %v6778 = vpop.f32.mrb[0].mxu0
  %6779 = vmatprep.mubr.bf16.mxu0 0
  %6780 = vmatmul.mubr.bf16.gmra.mrb[0].mxu0 %v6725
  %v6781 = vpop.f32.mrb[0].mxu0
  %v6782 = vadd.f32 %v6710, %v6781
  %v6783 = vpop.f32.mrb[0].mxu0
  %v6784 = vpop.f32.mrb[0].mxu0
  %v6785 = vadd.f32 %v6710, %v6784
  %v6786 = vpop.f32.mrb[0].mxu0
  %6787 = vmatprep.mubr.bf16.mxu0 0
  %6788 = vmatmul.mubr.bf16.gmra.mrb[0].mxu0 %v6728
  %v6789 = vpop.f32.mrb[0].mxu0
  %v6790 = vadd.f32 %v6710, %v6789
  %v6791 = vpop.f32.mrb[0].mxu0
  %v6792 = vpop.f32.mrb[0].mxu0
  %v6793 = vadd.f32 %v6710, %v6792
  %v6794 = vpop.f32.mrb[0].mxu0
  %6795 = vmatprep.mubr.bf16.mxu0 0
  %6796 = vmatmul.mubr.bf16.gmra.mrb[0].mxu0 %v6731
  %v6797 = vpop.f32.mrb[0].mxu0
  %v6798 = vadd.f32 %v6710, %v6797
  %v6799 = vpop.f32.mrb[0].mxu0
  %v6800 = vpop.f32.mrb[0].mxu0
  %v6801 = vadd.f32 %v6710, %v6800
  %v6802 = vpop.f32.mrb[0].mxu0
  %6803 = vdwg.mxu0
  %v6804 = vadd.f32 %v2686, %v6774
  %v6805 = vadd.f32 %v2687, %v6777
  %v6806 = vadd.f32 %v2688, %v6782
  %v6807 = vadd.f32 %v2689, %v6785
  %v6808 = vadd.f32 %v2690, %v6790
  %v6809 = vadd.f32 %v2691, %v6793
  %v6810 = vadd.f32 %v2692, %v6798
  %v6811 = vadd.f32 %v2693, %v6801
  %v6812 = vsel %vm331, %v6804, 0.0
  %6813 = vadd.xlane.f32.xlu0 %v6812
  %v6814 = vpop.xlane.xlu0 %6813
  %v6815 = vsel %vm331, %v6805, 0.0
  %6816 = vadd.xlane.f32.xlu0 %v6815
  %v6817 = vpop.xlane.xlu0 %6816
  %v6818 = vsel %vm331, %v6806, 0.0
  %6819 = vadd.xlane.f32.xlu0 %v6818
  %v6820 = vpop.xlane.xlu0 %6819
  %v6821 = vsel %vm331, %v6807, 0.0
  %6822 = vadd.xlane.f32.xlu0 %v6821
  %v6823 = vpop.xlane.xlu0 %6822
  %v6824 = vsel %vm331, %v6808, 0.0
  %6825 = vadd.xlane.f32.xlu0 %v6824
  %v6826 = vpop.xlane.xlu0 %6825
  %v6827 = vsel %vm331, %v6809, 0.0
  %6828 = vadd.xlane.f32.xlu0 %v6827
  %v6829 = vpop.xlane.xlu0 %6828
  %v6830 = vsel %vm331, %v6810, 0.0
  %6831 = vadd.xlane.f32.xlu0 %v6830
  %v6832 = vpop.xlane.xlu0 %6831
  %v6833 = vsel %vm331, %v6811, 0.0
  %6834 = vadd.xlane.f32.xlu0 %v6833
  %v6835 = vpop.xlane.xlu0 %6834
  %v6836 = vmul.f32 %v6814, %v2589
  %v6837 = vmul.f32 %v6817, %v2589
  %v6838 = vmul.f32 %v6820, %v2589
  %v6839 = vmul.f32 %v6823, %v2589
  %v6840 = vmul.f32 %v6826, %v2589
  %v6841 = vmul.f32 %v6829, %v2589
  %v6842 = vmul.f32 %v6832, %v2589
  %v6843 = vmul.f32 %v6835, %v2589
  %v6844 = vsub.f32 %v6804, %v6836
  %v6845 = vsub.f32 %v6805, %v6837
  %v6846 = vsub.f32 %v6806, %v6838
  %v6847 = vsub.f32 %v6807, %v6839
  %v6848 = vsub.f32 %v6808, %v6840
  %v6849 = vsub.f32 %v6809, %v6841
  %v6850 = vsub.f32 %v6810, %v6842
  %v6851 = vsub.f32 %v6811, %v6843
  %v6852 = vmul.f32 %v6844, %v6844
  %v6853 = vmul.f32 %v6845, %v6845
  %v6854 = vmul.f32 %v6846, %v6846
  %v6855 = vmul.f32 %v6847, %v6847
  %v6856 = vmul.f32 %v6848, %v6848
  %v6857 = vmul.f32 %v6849, %v6849
  %v6858 = vmul.f32 %v6850, %v6850
  %v6859 = vmul.f32 %v6851, %v6851
  %v6860 = vsel %vm331, %v6852, 0.0
  %6861 = vadd.xlane.f32.xlu0 %v6860
  %v6862 = vpop.xlane.xlu0 %6861
  %v6863 = vsel %vm331, %v6853, 0.0
  %6864 = vadd.xlane.f32.xlu0 %v6863
  %v6865 = vpop.xlane.xlu0 %6864
  %v6866 = vsel %vm331, %v6854, 0.0
  %6867 = vadd.xlane.f32.xlu0 %v6866
  %v6868 = vpop.xlane.xlu0 %6867
  %v6869 = vsel %vm331, %v6855, 0.0
  %6870 = vadd.xlane.f32.xlu0 %v6869
  %v6871 = vpop.xlane.xlu0 %6870
  %v6872 = vsel %vm331, %v6856, 0.0
  %6873 = vadd.xlane.f32.xlu0 %v6872
  %v6874 = vpop.xlane.xlu0 %6873
  %v6875 = vsel %vm331, %v6857, 0.0
  %6876 = vadd.xlane.f32.xlu0 %v6875
  %v6877 = vpop.xlane.xlu0 %6876
  %v6878 = vsel %vm331, %v6858, 0.0
  %6879 = vadd.xlane.f32.xlu0 %v6878
  %v6880 = vpop.xlane.xlu0 %6879
  %v6881 = vsel %vm331, %v6859, 0.0
  %6882 = vadd.xlane.f32.xlu0 %v6881
  %v6883 = vpop.xlane.xlu0 %6882
  %v6884 = vmul.f32 %v6862, %v2589
  %v6885 = vmul.f32 %v6865, %v2589
  %v6886 = vmul.f32 %v6868, %v2589
  %v6887 = vmul.f32 %v6871, %v2589
  %v6888 = vmul.f32 %v6874, %v2589
  %v6889 = vmul.f32 %v6877, %v2589
  %v6890 = vmul.f32 %v6880, %v2589
  %v6891 = vmul.f32 %v6883, %v2589
  %v6892 = vadd.f32 %v6884, 1e-05
  %v6893 = vadd.f32 %v6885, 1e-05
  %v6894 = vadd.f32 %v6886, 1e-05
  %v6895 = vadd.f32 %v6887, 1e-05
  %v6896 = vadd.f32 %v6888, 1e-05
  %v6897 = vadd.f32 %v6889, 1e-05
  %v6898 = vadd.f32 %v6890, 1e-05
  %v6899 = vadd.f32 %v6891, 1e-05
  %v6900 = vrsqrt.pop %v6892
  %v6901 = vrsqrt.pop %v6893
  %v6902 = vrsqrt.pop %v6894
  %v6903 = vrsqrt.pop %v6895
  %v6904 = vrsqrt.pop %v6896
  %v6905 = vrsqrt.pop %v6897
  %v6906 = vrsqrt.pop %v6898
  %v6907 = vrsqrt.pop %v6899
  %v6908 = vmul.f32 %v6844, %v6900
  %v6909 = vmul.f32 %v6845, %v6901
  %v6910 = vmul.f32 %v6846, %v6902
  %v6911 = vmul.f32 %v6847, %v6903
  %v6912 = vmul.f32 %v6848, %v6904
  %v6913 = vmul.f32 %v6849, %v6905
  %v6914 = vmul.f32 %v6850, %v6906
  %v6915 = vmul.f32 %v6851, %v6907
  %v6916 = vlaneseq
  %v6917 = vshrl.u32 %v6916, 7
  %v6918 = vsub.s32 2, %v6917
  %v6919 = vrot.slane %v168, %v6918
  %v6920 = vmul.f32 %v6908, %v6919
  %v6921 = vmul.f32 %v6909, %v6919
  %v6922 = vmul.f32 %v6910, %v6919
  %v6923 = vmul.f32 %v6911, %v6919
  %v6924 = vmul.f32 %v6912, %v6919
  %v6925 = vmul.f32 %v6913, %v6919
  %v6926 = vmul.f32 %v6914, %v6919
  %v6927 = vmul.f32 %v6915, %v6919
  %v6928 = vlaneseq
  %v6929 = vshrl.u32 %v6928, 7
  %v6930 = vsub.s32 3, %v6929
  %v6931 = vrot.slane %v168, %v6930
  %v6932 = vadd.f32 %v6920, %v6931
  %v6933 = vadd.f32 %v6921, %v6931
  %v6934 = vadd.f32 %v6922, %v6931
  %v6935 = vadd.f32 %v6923, %v6931
  %v6936 = vadd.f32 %v6924, %v6931
  %v6937 = vadd.f32 %v6925, %v6931
  %v6938 = vadd.f32 %v6926, %v6931
  %v6939 = vadd.f32 %v6927, %v6931
  %6940 = vst.msk [vmem:[%s7] sm:$0xff] %vm331, %v6932
  %6941 = vst.msk [vmem:[%s7 + $0x8] sm:$0xff] %vm331, %v6933
  %6942 = vst.msk [vmem:[%s7 + $0x10] sm:$0xff] %vm331, %v6934
  %6943 = vst.msk [vmem:[%s7 + $0x18] sm:$0xff] %vm331, %v6935
  %6944 = vst.msk [vmem:[%s7 + $0x20] sm:$0xff] %vm331, %v6936
  %6945 = vst.msk [vmem:[%s7 + $0x28] sm:$0xff] %vm331, %v6937
  %6946 = vst.msk [vmem:[%s7 + $0x30] sm:$0xff] %vm331, %v6938
  %6947 = vst.msk [vmem:[%s7 + $0x38] sm:$0xff] %vm331, %v6939
  // Predicated region
  $region30: #{tpu_custom_call.1} parent=0 // pred_check
    _
  $region31: #{tpu_custom_call.1} parent=0 // pred_check_branch
    %6949 = sbr.rel (0) target = $region33
  $region32: #{tpu_custom_call.1} parent=0 // pred_region
    _
  $region33: #{tpu_custom_call.1} parent=0 // pred_fallthru
    _
  // Predicated region
  $region34: #{tpu_custom_call.1} parent=0 // pred_check
    _
  $region35: #{tpu_custom_call.1} parent=0 // pred_check_branch
    %6951 = sbr.rel (0) target = $region37
  $region36: #{tpu_custom_call.1} parent=0 // pred_region
    _
  $region37: #{tpu_custom_call.1} parent=0 // pred_fallthru
    _

</llo_original>
